<compile_context>
chip_gen: v7x
topology: tpu7x:2x2x1
jax: 0.10.0
libtpu: 0.0.40
codegen_flags: <defaults>
</compile_context>

<pallas_src>
import functools

import jax
import jax.numpy as jnp
from jax import lax
from jax.experimental import pallas as pl
from jax.experimental.pallas import tpu as pltpu


def _round_up(x, m):
    return (x + m - 1) // m * m


# --------------------------------------------------------------------------
# Fused kernel: conv1+bn1+relu -> conv2+bn2 -> +(1x1 conv+bn_r) -> relu
# --------------------------------------------------------------------------
def _fused_basic_block_kernel(x_ref, w1_ref, w2_ref, wr_ref,
                              s1_ref, b1_ref, s2_ref, b2_ref, sr_ref, br_ref,
                              o_ref, y1_ref, mid_ref, y2_ref,
                              *, Wp, wp_log2, lead, m_lo, o_lo,
                              pad_t, pad_l, H, W):
    Cmid = mid_ref.shape[1]
    Cout = o_ref.shape[2]
    Lmid = mid_ref.shape[0]
    Lout = o_ref.shape[1]
    # Flat tap offsets of a 3x3 stride-1 conv on the (row*Wp + col) grid.
    shifts = tuple(dy * Wp + dx for dy in (-1, 0, 1) for dx in (-1, 0, 1))

    # ---- conv1: ONE MXU matmul, taps packed along the output dimension ----
    y1_ref[...] = jnp.dot(x_ref[0], w1_ref[...],
                          preferred_element_type=jnp.float32)

    # Combine tap contributions: conv1[m] = sum_t y1[m + s_t, t-block].
    s0 = shifts[0]
    acc = y1_ref[m_lo + s0: m_lo + s0 + Lmid, 0:Cmid]
    for t in range(1, 9):
        s = shifts[t]
        acc = acc + y1_ref[m_lo + s: m_lo + s + Lmid,
                           t * Cmid:(t + 1) * Cmid]
    mid = jnp.maximum(acc * s1_ref[...] + b1_ref[...], 0.0)     # bn1 + relu

    # In-kernel validity mask (zero outside the true image): implements
    # conv2's zero padding and kills garbage in the padding ring.  Wp is a
    # power of two -> row/col via shift & mask (no vector integer division).
    idx = (m_lo - lead) + lax.broadcasted_iota(jnp.int32, (Lmid, 1), 0)
    row = jnp.right_shift(idx, wp_log2)
    col = jnp.bitwise_and(idx, Wp - 1)
    valid = ((row >= pad_t) & (row < pad_t + H) &
             (col >= pad_l) & (col < pad_l + W))
    mid_ref[...] = jnp.where(valid, mid, 0.0).astype(jnp.bfloat16)

    # ---- conv2: ONE MXU matmul on the VMEM-resident intermediate ----------
    y2_ref[...] = jnp.dot(mid_ref[...], w2_ref[...],
                          preferred_element_type=jnp.float32)
    base = o_lo - m_lo
    acc2 = y2_ref[base + s0: base + s0 + Lout, 0:Cout]
    for t in range(1, 9):
        s = shifts[t]
        acc2 = acc2 + y2_ref[base + s: base + s + Lout,
                             t * Cout:(t + 1) * Cout]
    main = acc2 * s2_ref[...] + b2_ref[...]

    # ---- residual: 1x1 conv + bn_r (aligned slice of the slab) ------------
    res = jnp.dot(x_ref[0, o_lo:o_lo + Lout, :], wr_ref[...],
                  preferred_element_type=jnp.float32)
    res = res * sr_ref[...] + br_ref[...]

    o_ref[0, :, :] = jnp.maximum(main + res, 0.0)


# --------------------------------------------------------------------------
# Plain-JAX glue: layout, weight packing, BN folding
# --------------------------------------------------------------------------
def _pack_taps_rhs(w_oihw):
    """(Cout, Cin, 3, 3) -> (Cin, 9*Cout) bf16; column block t = 3*ky + kx."""
    co, ci, kh, kw = w_oihw.shape
    w = jnp.transpose(w_oihw, (2, 3, 1, 0)).reshape(kh * kw, ci, co)
    w = jnp.transpose(w, (1, 0, 2)).reshape(ci, kh * kw * co)
    return w.astype(jnp.bfloat16)


def _conv1x1_mat(w_oihw):
    """(Cout, Cin, 1, 1) -> (Cin, Cout) bf16."""
    return jnp.transpose(w_oihw[:, :, 0, 0], (1, 0)).astype(jnp.bfloat16)


def _fold_bn(gamma, beta, mean, var, eps=1e-5):
    scale = gamma / jnp.sqrt(var + eps)
    bias = beta - mean * scale
    return (scale.reshape(1, -1).astype(jnp.float32),
            bias.reshape(1, -1).astype(jnp.float32))


def basic_block_forward(x_nchw, params):
    N, Cin, H, W = x_nchw.shape
    Cmid = params["w1"].shape[0]
    Cout = params["w2"].shape[0]

    # Geometry: power-of-two padded width (>= W + 4), 16-row flat lead pad,
    # mid / output flat ranges starting at multiples of 8.
    PAD_T, PAD_L = 2, 2
    Wp = max(8, pl.next_power_of_2(W + PAD_L + 2))
    wp_log2 = Wp.bit_length() - 1
    lead = 16
    o_lo = lead + PAD_T * Wp                 # flat start of the first real row
    Lout = H * Wp
    o_hi = o_lo + Lout
    m_lo = (o_lo - Wp - 1) // 8 * 8          # stored "mid" flat range start
    Lmid = _round_up(o_hi + Wp + 1 - m_lo, 16)
    T = _round_up(m_lo + Wp + 1 + Lmid, 16)  # total flat slab rows
    assert m_lo >= Wp + 1, "insufficient lead padding"

    # NCHW -> NHWC bf16, pad columns to Wp, flatten rows, pad flat rows.
    # Channels stay at their true count (no 128-lane padding in HBM).
    x = jnp.transpose(x_nchw, (0, 2, 3, 1)).astype(jnp.bfloat16)
    x = jnp.pad(x, ((0, 0), (0, 0), (PAD_L, Wp - PAD_L - W), (0, 0)))
    x = x.reshape(N, H * Wp, Cin)
    slab = jnp.pad(x, ((0, 0), (o_lo, T - o_hi), (0, 0)))        # (N, T, Cin)

    w1 = _pack_taps_rhs(params["w1"])        # (Cin,  9*Cmid) bf16
    w2 = _pack_taps_rhs(params["w2"])        # (Cmid, 9*Cout) bf16
    wr = _conv1x1_mat(params["wr"])          # (Cin,  Cout)   bf16
    s1, b1 = _fold_bn(*params["bn1"])
    s2, b2 = _fold_bn(*params["bn2"])
    sr, br = _fold_bn(*params["bnr"])

    kernel = functools.partial(
        _fused_basic_block_kernel, Wp=Wp, wp_log2=wp_log2, lead=lead,
        m_lo=m_lo, o_lo=o_lo, pad_t=PAD_T, pad_l=PAD_L, H=H, W=W)

    flops = 2 * N * (T * Cin * 9 * Cmid + Lmid * Cmid * 9 * Cout
                     + Lout * Cin * Cout)
    bytes_accessed = (slab.size * 2 + (w1.size + w2.size + wr.size) * 2
                      + (s1.size + b1.size + s2.size + b2.size
                         + sr.size + br.size) * 4
                      + N * Lout * Cout * 4)

    out_flat = pl.pallas_call(
        kernel,
        out_shape=jax.ShapeDtypeStruct((N, Lout, Cout), jnp.float32),
        grid=(N,),
        in_specs=[
            pl.BlockSpec((1, T, Cin), lambda n: (n, 0, 0)),      # x slab
            pl.BlockSpec((Cin, 9 * Cmid), lambda n: (0, 0)),     # w1 (packed)
            pl.BlockSpec((Cmid, 9 * Cout), lambda n: (0, 0)),    # w2 (packed)
            pl.BlockSpec((Cin, Cout), lambda n: (0, 0)),         # wr (1x1)
            pl.BlockSpec((1, Cmid), lambda n: (0, 0)),           # bn1 scale
            pl.BlockSpec((1, Cmid), lambda n: (0, 0)),           # bn1 bias
            pl.BlockSpec((1, Cout), lambda n: (0, 0)),           # bn2 scale
            pl.BlockSpec((1, Cout), lambda n: (0, 0)),           # bn2 bias
            pl.BlockSpec((1, Cout), lambda n: (0, 0)),           # bn_r scale
            pl.BlockSpec((1, Cout), lambda n: (0, 0)),           # bn_r bias
        ],
        out_specs=pl.BlockSpec((1, Lout, Cout), lambda n: (n, 0, 0)),
        scratch_shapes=[
            pltpu.VMEM((T, 9 * Cmid), jnp.float32),      # conv1 tap products
            pltpu.VMEM((Lmid, Cmid), jnp.bfloat16),      # fused intermediate
            pltpu.VMEM((Lmid, 9 * Cout), jnp.float32),   # conv2 tap products
        ],
        compiler_params=pltpu.CompilerParams(
            dimension_semantics=("parallel",)),
        cost_estimate=pl.CostEstimate(flops=flops, transcendentals=0,
                                      bytes_accessed=bytes_accessed),
    )(slab, w1, w2, wr, s1, b1, s2, b2, sr, br)

    # Free metadata reshape, crop the pad columns, back to NCHW f32
    # (f32 is what the original module produces / downstream consumes).
    out = out_flat.reshape(N, H, Wp, Cout)[:, :, PAD_L:PAD_L + W, :]
    return jnp.transpose(out, (0, 3, 1, 2))


# --------------------------------------------------------------------------
# Pure-JAX reference (mirrors the kernel's bf16 matmul-input precision)
# --------------------------------------------------------------------------
def basic_block_ref(x_nchw, params):
    x = jnp.transpose(x_nchw, (0, 2, 3, 1)).astype(jnp.bfloat16)

    def conv(inp, w_oihw, pad):
        w_hwio = jnp.transpose(w_oihw, (2, 3, 1, 0)).astype(jnp.bfloat16)
        return lax.conv_general_dilated(
            inp, w_hwio, (1, 1), [(pad, pad), (pad, pad)],
            dimension_numbers=("NHWC", "HWIO", "NHWC"),
            preferred_element_type=jnp.float32)

    def bn(y, gamma, beta, mean, var, eps=1e-5):
        return (y - mean) / jnp.sqrt(var + eps) * gamma + beta

    res = bn(conv(x, params["wr"], 0), *params["bnr"])
    mid = jax.nn.relu(bn(conv(x, params["w1"], 1), *params["bn1"]))
    out = bn(conv(mid.astype(jnp.bfloat16), params["w2"], 1), *params["bn2"])
    out = jax.nn.relu(out + res)
    return jnp.transpose(out, (0, 3, 1, 2))


# --------------------------------------------------------------------------
# Main
# --------------------------------------------------------------------------
if __name__ == "__main__":
    key = jax.random.PRNGKey(0)
    ks = jax.random.split(key, 8)

    N, Cin, Cmid, Cout, H, W = 2, 4, 8, 8, 16, 16

    def bn_params(k, c):
        k1, k2, k3, k4 = jax.random.split(k, 4)
        gamma = 1.0 + 0.1 * jax.random.normal(k1, (c,), jnp.float32)
        beta = 0.1 * jax.random.normal(k2, (c,), jnp.float32)
        mean = 0.1 * jax.random.normal(k3, (c,), jnp.float32)
        var = jnp.abs(jax.random.normal(k4, (c,), jnp.float32)) + 0.5
        return (gamma, beta, mean, var)

    params = {
        "w1": 0.2 * jax.random.normal(ks[0], (Cmid, Cin, 3, 3), jnp.float32),
        "bn1": bn_params(ks[1], Cmid),
        "w2": 0.2 * jax.random.normal(ks[2], (Cout, Cmid, 3, 3), jnp.float32),
        "bn2": bn_params(ks[3], Cout),
        "wr": 0.2 * jax.random.normal(ks[4], (Cout, Cin, 1, 1), jnp.float32),
        "bnr": bn_params(ks[5], Cout),
    }

    x = jax.random.normal(ks[6], (N, Cin, H, W), jnp.float32)

    out = jax.block_until_ready(jax.jit(basic_block_forward)(x, params))
    ref = jax.block_until_ready(basic_block_ref(x, params))

    assert out.shape == (N, Cout, H, W), out.shape
    max_err = float(jnp.max(jnp.abs(out - ref)))
    # bf16 matmul inputs (mirrored in the reference) -> sub-1e-2 agreement.
    assert max_err < 1e-2, f"mismatch vs reference: {max_err}"

    print("KERNEL_OK")
</pallas_src>

<mosaic_0001>
module attributes {stable_mosaic.version = 11 : i64} {
  func.func @_fused_basic_block_kernel(%arg0: i32, %arg1: memref<1x672x4xbf16, #tpu.memory_space<vmem>>, %arg2: memref<4x72xbf16, #tpu.memory_space<vmem>>, %arg3: memref<8x72xbf16, #tpu.memory_space<vmem>>, %arg4: memref<4x8xbf16, #tpu.memory_space<vmem>>, %arg5: memref<1x8xf32, #tpu.memory_space<vmem>>, %arg6: memref<1x8xf32, #tpu.memory_space<vmem>>, %arg7: memref<1x8xf32, #tpu.memory_space<vmem>>, %arg8: memref<1x8xf32, #tpu.memory_space<vmem>>, %arg9: memref<1x8xf32, #tpu.memory_space<vmem>>, %arg10: memref<1x8xf32, #tpu.memory_space<vmem>>, %arg11: memref<1x512x8xf32, #tpu.memory_space<vmem>>, %arg12: memref<672x72xf32, #tpu.memory_space<vmem>>, %arg13: memref<592x8xbf16, #tpu.memory_space<vmem>>, %arg14: memref<592x72xf32, #tpu.memory_space<vmem>>) attributes {dimension_semantics = [#tpu.dimension_semantics<parallel>], iteration_bounds = array<i64: 2>, scalar_prefetch = 0 : i64, scratch_operands = 3 : i64, tpu.core_type = #tpu.core_type<tc>, window_params = [{transform_indices = @transform_0, window_bounds = array<i64: 1, 672, 4>}, {pipeline_mode = #tpu.pipeline_mode<synchronous>, transform_indices = @transform_1, window_bounds = array<i64: 4, 72>}, {pipeline_mode = #tpu.pipeline_mode<synchronous>, transform_indices = @transform_2, window_bounds = array<i64: 8, 72>}, {pipeline_mode = #tpu.pipeline_mode<synchronous>, transform_indices = @transform_3, window_bounds = array<i64: 4, 8>}, {pipeline_mode = #tpu.pipeline_mode<synchronous>, transform_indices = @transform_4, window_bounds = array<i64: 1, 8>}, {pipeline_mode = #tpu.pipeline_mode<synchronous>, transform_indices = @transform_5, window_bounds = array<i64: 1, 8>}, {pipeline_mode = #tpu.pipeline_mode<synchronous>, transform_indices = @transform_6, window_bounds = array<i64: 1, 8>}, {pipeline_mode = #tpu.pipeline_mode<synchronous>, transform_indices = @transform_7, window_bounds = array<i64: 1, 8>}, {pipeline_mode = #tpu.pipeline_mode<synchronous>, transform_indices = @transform_8, window_bounds = array<i64: 1, 8>}, {pipeline_mode = #tpu.pipeline_mode<synchronous>, transform_indices = @transform_9, window_bounds = array<i64: 1, 8>}, {transform_indices = @transform_10, window_bounds = array<i64: 1, 512, 8>}]} {
    %c0 = arith.constant 0 : index
    %c0_0 = arith.constant 0 : index
    %c0_1 = arith.constant 0 : index
    %0 = vector.load %arg1[%c0, %c0_0, %c0_1] : memref<1x672x4xbf16, #tpu.memory_space<vmem>>, vector<1x672x4xbf16>
    %1 = vector.shape_cast %0 : vector<1x672x4xbf16> to vector<672x4xbf16>
    %c0_2 = arith.constant 0 : index
    %c0_3 = arith.constant 0 : index
    %2 = vector.load %arg2[%c0_2, %c0_3] : memref<4x72xbf16, #tpu.memory_space<vmem>>, vector<4x72xbf16>
    %cst = arith.constant dense<0.000000e+00> : vector<672x72xf32>
    %3 = tpu.matmul %1, %2, %cst {dimension_numbers = #tpu.dot_dimension_numbers<[1], [0], [0], [1], [0, 0, 1, 1], [], []>} : vector<672x4xbf16>, vector<4x72xbf16>, vector<672x72xf32> -> vector<672x72xf32>
    %c0_4 = arith.constant 0 : index
    %c0_5 = arith.constant 0 : index
    %4 = vector.load %arg12[%c0_4, %c0_5] : memref<672x72xf32, #tpu.memory_space<vmem>>, vector<672x72xf32>
    tpu.vector_store %arg12[%c0_4, %c0_5], %3 {strides = array<i32>} : memref<672x72xf32, #tpu.memory_space<vmem>>, vector<672x72xf32>,
    %c7 = arith.constant 7 : index
    %c0_6 = arith.constant 0 : index
    %5 = vector.load %arg12[%c7, %c0_6] : memref<672x72xf32, #tpu.memory_space<vmem>>, vector<592x8xf32>
    %c8 = arith.constant 8 : index
    %c8_7 = arith.constant 8 : index
    %6 = vector.load %arg12[%c8, %c8_7] : memref<672x72xf32, #tpu.memory_space<vmem>>, vector<592x8xf32>
    %7 = arith.addf %5, %6 : vector<592x8xf32>
    %c9 = arith.constant 9 : index
    %c16 = arith.constant 16 : index
    %8 = vector.load %arg12[%c9, %c16] : memref<672x72xf32, #tpu.memory_space<vmem>>, vector<592x8xf32>
    %9 = arith.addf %7, %8 : vector<592x8xf32>
    %c39 = arith.constant 39 : index
    %c24 = arith.constant 24 : index
    %10 = vector.load %arg12[%c39, %c24] : memref<672x72xf32, #tpu.memory_space<vmem>>, vector<592x8xf32>
    %11 = arith.addf %9, %10 : vector<592x8xf32>
    %c40 = arith.constant 40 : index
    %c32 = arith.constant 32 : index
    %12 = vector.load %arg12[%c40, %c32] : memref<672x72xf32, #tpu.memory_space<vmem>>, vector<592x8xf32>
    %13 = arith.addf %11, %12 : vector<592x8xf32>
    %c41 = arith.constant 41 : index
    %c40_8 = arith.constant 40 : index
    %14 = vector.load %arg12[%c41, %c40_8] : memref<672x72xf32, #tpu.memory_space<vmem>>, vector<592x8xf32>
    %15 = arith.addf %13, %14 : vector<592x8xf32>
    %c71 = arith.constant 71 : index
    %c48 = arith.constant 48 : index
    %16 = vector.load %arg12[%c71, %c48] : memref<672x72xf32, #tpu.memory_space<vmem>>, vector<592x8xf32>
    %17 = arith.addf %15, %16 : vector<592x8xf32>
    %c72 = arith.constant 72 : index
    %c56 = arith.constant 56 : index
    %18 = vector.load %arg12[%c72, %c56] : memref<672x72xf32, #tpu.memory_space<vmem>>, vector<592x8xf32>
    %19 = arith.addf %17, %18 : vector<592x8xf32>
    %c73 = arith.constant 73 : index
    %c64 = arith.constant 64 : index
    %20 = vector.load %arg12[%c73, %c64] : memref<672x72xf32, #tpu.memory_space<vmem>>, vector<592x8xf32>
    %21 = arith.addf %19, %20 : vector<592x8xf32>
    %c0_9 = arith.constant 0 : index
    %c0_10 = arith.constant 0 : index
    %22 = vector.load %arg5[%c0_9, %c0_10] : memref<1x8xf32, #tpu.memory_space<vmem>>, vector<1x8xf32>
    %23 = vector.broadcast %22 : vector<1x8xf32> to vector<592x8xf32>
    %24 = arith.mulf %21, %23 : vector<592x8xf32>
    %c0_11 = arith.constant 0 : index
    %c0_12 = arith.constant 0 : index
    %25 = vector.load %arg6[%c0_11, %c0_12] : memref<1x8xf32, #tpu.memory_space<vmem>>, vector<1x8xf32>
    %26 = vector.broadcast %25 : vector<1x8xf32> to vector<592x8xf32>
    %27 = arith.addf %24, %26 : vector<592x8xf32>
    %cst_13 = arith.constant 0.000000e+00 : f32
    %28 = vector.broadcast %cst_13 : f32 to vector<592x8xf32>
    %29 = arith.maximumf %27, %28 : vector<592x8xf32>
    %30 = tpu.iota {dimensions = array<i32: 0>} : vector<592x1xi32>
    %c24_i32 = arith.constant 24 : i32
    %31 = vector.broadcast %c24_i32 : i32 to vector<592x1xi32>
    %32 = arith.addi %31, %30 : vector<592x1xi32>
    %c5_i32 = arith.constant 5 : i32
    %33 = vector.broadcast %c5_i32 : i32 to vector<592x1xi32>
    %34 = arith.shrsi %32, %33 : vector<592x1xi32>
    %c31_i32 = arith.constant 31 : i32
    %35 = vector.broadcast %c31_i32 : i32 to vector<592x1xi32>
    %36 = arith.andi %32, %35 : vector<592x1xi32>
    %c2_i32 = arith.constant 2 : i32
    %37 = vector.broadcast %c2_i32 : i32 to vector<592x1xi32>
    %38 = arith.cmpi sge, %34, %37 : vector<592x1xi32>
    %c18_i32 = arith.constant 18 : i32
    %39 = vector.broadcast %c18_i32 : i32 to vector<592x1xi32>
    %40 = arith.cmpi slt, %34, %39 : vector<592x1xi32>
    %41 = arith.andi %38, %40 : vector<592x1xi1>
    %c2_i32_14 = arith.constant 2 : i32
    %42 = vector.broadcast %c2_i32_14 : i32 to vector<592x1xi32>
    %43 = arith.cmpi sge, %36, %42 : vector<592x1xi32>
    %44 = arith.andi %41, %43 : vector<592x1xi1>
    %c18_i32_15 = arith.constant 18 : i32
    %45 = vector.broadcast %c18_i32_15 : i32 to vector<592x1xi32>
    %46 = arith.cmpi slt, %36, %45 : vector<592x1xi32>
    %47 = arith.andi %44, %46 : vector<592x1xi1>
    %cst_16 = arith.constant 0.000000e+00 : f32
    %48 = vector.shape_cast %47 : vector<592x1xi1> to vector<592x1xi1>
    %49 = vector.broadcast %48 : vector<592x1xi1> to vector<592x8xi1>
    %50 = vector.broadcast %cst_16 : f32 to vector<592x8xf32>
    %51 = arith.select %49, %29, %50 : vector<592x8xi1>, vector<592x8xf32>
    %52 = arith.truncf %51 : vector<592x8xf32> to vector<592x8xbf16>
    %c0_17 = arith.constant 0 : index
    %c0_18 = arith.constant 0 : index
    %53 = vector.load %arg13[%c0_17, %c0_18] : memref<592x8xbf16, #tpu.memory_space<vmem>>, vector<592x8xbf16>
    tpu.vector_store %arg13[%c0_17, %c0_18], %52 {strides = array<i32>} : memref<592x8xbf16, #tpu.memory_space<vmem>>, vector<592x8xbf16>,
    %c0_19 = arith.constant 0 : index
    %c0_20 = arith.constant 0 : index
    %54 = vector.load %arg13[%c0_19, %c0_20] : memref<592x8xbf16, #tpu.memory_space<vmem>>, vector<592x8xbf16>
    %c0_21 = arith.constant 0 : index
    %c0_22 = arith.constant 0 : index
    %55 = vector.load %arg3[%c0_21, %c0_22] : memref<8x72xbf16, #tpu.memory_space<vmem>>, vector<8x72xbf16>
    %cst_23 = arith.constant dense<0.000000e+00> : vector<592x72xf32>
    %56 = tpu.matmul %54, %55, %cst_23 {dimension_numbers = #tpu.dot_dimension_numbers<[1], [0], [0], [1], [0, 0, 1, 1], [], []>} : vector<592x8xbf16>, vector<8x72xbf16>, vector<592x72xf32> -> vector<592x72xf32>
    %c0_24 = arith.constant 0 : index
    %c0_25 = arith.constant 0 : index
    %57 = vector.load %arg14[%c0_24, %c0_25] : memref<592x72xf32, #tpu.memory_space<vmem>>, vector<592x72xf32>
    tpu.vector_store %arg14[%c0_24, %c0_25], %56 {strides = array<i32>} : memref<592x72xf32, #tpu.memory_space<vmem>>, vector<592x72xf32>,
    %c7_26 = arith.constant 7 : index
    %c0_27 = arith.constant 0 : index
    %58 = vector.load %arg14[%c7_26, %c0_27] : memref<592x72xf32, #tpu.memory_space<vmem>>, vector<512x8xf32>
    %c8_28 = arith.constant 8 : index
    %c8_29 = arith.constant 8 : index
    %59 = vector.load %arg14[%c8_28, %c8_29] : memref<592x72xf32, #tpu.memory_space<vmem>>, vector<512x8xf32>
    %60 = arith.addf %58, %59 : vector<512x8xf32>
    %c9_30 = arith.constant 9 : index
    %c16_31 = arith.constant 16 : index
    %61 = vector.load %arg14[%c9_30, %c16_31] : memref<592x72xf32, #tpu.memory_space<vmem>>, vector<512x8xf32>
    %62 = arith.addf %60, %61 : vector<512x8xf32>
    %c39_32 = arith.constant 39 : index
    %c24_33 = arith.constant 24 : index
    %63 = vector.load %arg14[%c39_32, %c24_33] : memref<592x72xf32, #tpu.memory_space<vmem>>, vector<512x8xf32>
    %64 = arith.addf %62, %63 : vector<512x8xf32>
    %c40_34 = arith.constant 40 : index
    %c32_35 = arith.constant 32 : index
    %65 = vector.load %arg14[%c40_34, %c32_35] : memref<592x72xf32, #tpu.memory_space<vmem>>, vector<512x8xf32>
    %66 = arith.addf %64, %65 : vector<512x8xf32>
    %c41_36 = arith.constant 41 : index
    %c40_37 = arith.constant 40 : index
    %67 = vector.load %arg14[%c41_36, %c40_37] : memref<592x72xf32, #tpu.memory_space<vmem>>, vector<512x8xf32>
    %68 = arith.addf %66, %67 : vector<512x8xf32>
    %c71_38 = arith.constant 71 : index
    %c48_39 = arith.constant 48 : index
    %69 = vector.load %arg14[%c71_38, %c48_39] : memref<592x72xf32, #tpu.memory_space<vmem>>, vector<512x8xf32>
    %70 = arith.addf %68, %69 : vector<512x8xf32>
    %c72_40 = arith.constant 72 : index
    %c56_41 = arith.constant 56 : index
    %71 = vector.load %arg14[%c72_40, %c56_41] : memref<592x72xf32, #tpu.memory_space<vmem>>, vector<512x8xf32>
    %72 = arith.addf %70, %71 : vector<512x8xf32>
    %c73_42 = arith.constant 73 : index
    %c64_43 = arith.constant 64 : index
    %73 = vector.load %arg14[%c73_42, %c64_43] : memref<592x72xf32, #tpu.memory_space<vmem>>, vector<512x8xf32>
    %74 = arith.addf %72, %73 : vector<512x8xf32>
    %c0_44 = arith.constant 0 : index
    %c0_45 = arith.constant 0 : index
    %75 = vector.load %arg7[%c0_44, %c0_45] : memref<1x8xf32, #tpu.memory_space<vmem>>, vector<1x8xf32>
    %76 = vector.broadcast %75 : vector<1x8xf32> to vector<512x8xf32>
    %77 = arith.mulf %74, %76 : vector<512x8xf32>
    %c0_46 = arith.constant 0 : index
    %c0_47 = arith.constant 0 : index
    %78 = vector.load %arg8[%c0_46, %c0_47] : memref<1x8xf32, #tpu.memory_space<vmem>>, vector<1x8xf32>
    %79 = vector.broadcast %78 : vector<1x8xf32> to vector<512x8xf32>
    %80 = arith.addf %77, %79 : vector<512x8xf32>
    %c0_48 = arith.constant 0 : index
    %c80 = arith.constant 80 : index
    %c0_49 = arith.constant 0 : index
    %81 = vector.load %arg1[%c0_48, %c80, %c0_49] : memref<1x672x4xbf16, #tpu.memory_space<vmem>>, vector<1x512x4xbf16>
    %82 = vector.shape_cast %81 : vector<1x512x4xbf16> to vector<512x4xbf16>
    %c0_50 = arith.constant 0 : index
    %c0_51 = arith.constant 0 : index
    %83 = vector.load %arg4[%c0_50, %c0_51] : memref<4x8xbf16, #tpu.memory_space<vmem>>, vector<4x8xbf16>
    %cst_52 = arith.constant dense<0.000000e+00> : vector<512x8xf32>
    %84 = tpu.matmul %82, %83, %cst_52 {dimension_numbers = #tpu.dot_dimension_numbers<[1], [0], [0], [1], [0, 0, 1, 1], [], []>} : vector<512x4xbf16>, vector<4x8xbf16>, vector<512x8xf32> -> vector<512x8xf32>
    %c0_53 = arith.constant 0 : index
    %c0_54 = arith.constant 0 : index
    %85 = vector.load %arg9[%c0_53, %c0_54] : memref<1x8xf32, #tpu.memory_space<vmem>>, vector<1x8xf32>
    %86 = vector.broadcast %85 : vector<1x8xf32> to vector<512x8xf32>
    %87 = arith.mulf %84, %86 : vector<512x8xf32>
    %c0_55 = arith.constant 0 : index
    %c0_56 = arith.constant 0 : index
    %88 = vector.load %arg10[%c0_55, %c0_56] : memref<1x8xf32, #tpu.memory_space<vmem>>, vector<1x8xf32>
    %89 = vector.broadcast %88 : vector<1x8xf32> to vector<512x8xf32>
    %90 = arith.addf %87, %89 : vector<512x8xf32>
    %91 = arith.addf %80, %90 : vector<512x8xf32>
    %cst_57 = arith.constant 0.000000e+00 : f32
    %92 = vector.broadcast %cst_57 : f32 to vector<512x8xf32>
    %93 = arith.maximumf %91, %92 : vector<512x8xf32>
    %c0_58 = arith.constant 0 : index
    %c0_59 = arith.constant 0 : index
    %c0_60 = arith.constant 0 : index
    %94 = vector.load %arg11[%c0_58, %c0_59, %c0_60] : memref<1x512x8xf32, #tpu.memory_space<vmem>>, vector<1x512x8xf32>
    %95 = vector.shape_cast %94 : vector<1x512x8xf32> to vector<512x8xf32>
    %96 = vector.shape_cast %93 : vector<512x8xf32> to vector<1x512x8xf32>
    tpu.vector_store %arg11[%c0_58, %c0_59, %c0_60], %96 {strides = array<i32>} : memref<1x512x8xf32, #tpu.memory_space<vmem>>, vector<1x512x8xf32>,
    return
  }
  func.func @transform_0(%arg0: i32) -> (i32, i32, i32) {
    %c0_i32 = arith.constant 0 : i32
    %c0_i32_0 = arith.constant 0 : i32
    %c0_i32_1 = arith.constant 0 : i32
    return %arg0, %c0_i32, %c0_i32_0 : i32, i32, i32
  }
  func.func @transform_1(%arg0: i32) -> (i32, i32) {
    %c0_i32 = arith.constant 0 : i32
    %c0_i32_0 = arith.constant 0 : i32
    %c0_i32_1 = arith.constant 0 : i32
    return %c0_i32, %c0_i32_0 : i32, i32
  }
  func.func @transform_2(%arg0: i32) -> (i32, i32) {
    %c0_i32 = arith.constant 0 : i32
    %c0_i32_0 = arith.constant 0 : i32
    %c0_i32_1 = arith.constant 0 : i32
    return %c0_i32, %c0_i32_0 : i32, i32
  }
  func.func @transform_3(%arg0: i32) -> (i32, i32) {
    %c0_i32 = arith.constant 0 : i32
    %c0_i32_0 = arith.constant 0 : i32
    %c0_i32_1 = arith.constant 0 : i32
    return %c0_i32, %c0_i32_0 : i32, i32
  }
  func.func @transform_4(%arg0: i32) -> (i32, i32) {
    %c0_i32 = arith.constant 0 : i32
    %c0_i32_0 = arith.constant 0 : i32
    %c0_i32_1 = arith.constant 0 : i32
    return %c0_i32, %c0_i32_0 : i32, i32
  }
  func.func @transform_5(%arg0: i32) -> (i32, i32) {
    %c0_i32 = arith.constant 0 : i32
    %c0_i32_0 = arith.constant 0 : i32
    %c0_i32_1 = arith.constant 0 : i32
    return %c0_i32, %c0_i32_0 : i32, i32
  }
  func.func @transform_6(%arg0: i32) -> (i32, i32) {
    %c0_i32 = arith.constant 0 : i32
    %c0_i32_0 = arith.constant 0 : i32
    %c0_i32_1 = arith.constant 0 : i32
    return %c0_i32, %c0_i32_0 : i32, i32
  }
  func.func @transform_7(%arg0: i32) -> (i32, i32) {
    %c0_i32 = arith.constant 0 : i32
    %c0_i32_0 = arith.constant 0 : i32
    %c0_i32_1 = arith.constant 0 : i32
    return %c0_i32, %c0_i32_0 : i32, i32
  }
  func.func @transform_8(%arg0: i32) -> (i32, i32) {
    %c0_i32 = arith.constant 0 : i32
    %c0_i32_0 = arith.constant 0 : i32
    %c0_i32_1 = arith.constant 0 : i32
    return %c0_i32, %c0_i32_0 : i32, i32
  }
  func.func @transform_9(%arg0: i32) -> (i32, i32) {
    %c0_i32 = arith.constant 0 : i32
    %c0_i32_0 = arith.constant 0 : i32
    %c0_i32_1 = arith.constant 0 : i32
    return %c0_i32, %c0_i32_0 : i32, i32
  }
  func.func @transform_10(%arg0: i32) -> (i32, i32, i32) {
    %c0_i32 = arith.constant 0 : i32
    %c0_i32_0 = arith.constant 0 : i32
    %c0_i32_1 = arith.constant 0 : i32
    return %arg0, %c0_i32, %c0_i32_0 : i32, i32, i32
  }
}

</mosaic_0001>

<llo_original>
// kernel: basic_block_forward.1
$region0: #{basic_block_forward.1}
  #allocation0 [shape = 'u32[]', space=smem, size = 0x4, offset = 0x4, fixed_abs, tag = 'smem constant byte address 0x4 - core index']
  #allocation1 [shape = 'u32[144,128]{1,0:T(1,128)}', space=vmem, size = 0x12000, scoped, tag = 'internal scratch']
  #allocation2 [shape = 'f32[672,72]{1,0:T(8,128)}', space=vmem, size = 0x54000, scoped, tag = 'scratch operand']
  #allocation3 [shape = 'bf16[592,8]{1,0:T(16,128)(2,1)}', space=vmem, size = 0x25000, scoped, tag = 'scratch operand']
  #allocation4 [shape = 'f32[592,72]{1,0:T(8,128)}', space=vmem, size = 0x4a000, scoped, tag = 'scratch operand']
  %s0 = inlined_call_operand.vmem [shape: bf16[2,672,4], index: 0, kind: input, shape index: {}]
  %s1 = inlined_call_operand.vmem [shape: bf16[4,72], index: 1, kind: input, shape index: {}]
  %s2 = inlined_call_operand.vmem [shape: bf16[8,72], index: 2, kind: input, shape index: {}]
  %s3 = inlined_call_operand.vmem [shape: bf16[4,8], index: 3, kind: input, shape index: {}]
  %s4 = inlined_call_operand.vmem [shape: f32[1,8], index: 4, kind: input, shape index: {}]
  %s5 = inlined_call_operand.vmem [shape: f32[1,8], index: 5, kind: input, shape index: {}]
  %s6 = inlined_call_operand.vmem [shape: f32[1,8], index: 6, kind: input, shape index: {}]
  %s7 = inlined_call_operand.vmem [shape: f32[1,8], index: 7, kind: input, shape index: {}]
  %s8 = inlined_call_operand.vmem [shape: f32[1,8], index: 8, kind: input, shape index: {}]
  %s9 = inlined_call_operand.vmem [shape: f32[1,8], index: 9, kind: input, shape index: {}]
  %s10 = inlined_call_operand.vmem [shape: f32[2,512,8], index: 10, kind: output, shape index: {}]
  %s11 = sld [smem:[#allocation0]]
  $region73: #{basic_block_forward.1} parent=0
    _
  %s13 = ssub.s32 1, %s11
  %s14 = scalar_select 0, %s13, %s11
  loop: start=0, step=1, limit=4
  $region2: #{basic_block_forward.1} parent=0 // loop_pre_header
    _
  $region3: #{basic_block_forward.1} parent=0 // loop_header
    %s16 = sphi 0, %s20
    %p17 = scmp.ge.s32.totalorder %s16, 4
    %s26 = sphi 0, %s28
    %s29 = sphi 0, %s26
    %s30 = sphi 0, %s29
    %s46 = sphi 0, %s30
    %s50 = sphi 0, %s50
    %s52 = sphi 0, %s50
    %s53 = sphi 0, %s52
    %s67 = sphi 0, %s53
    %s71 = sphi 0, %s71
    %s73 = sphi 0, %s71
    %s74 = sphi 0, %s73
    %s88 = sphi 0, %s74
    %s92 = sphi 0, %s92
    %s94 = sphi 0, %s92
    %s95 = sphi 0, %s94
    %s109 = sphi 0, %s95
    %s113 = sphi 0, %s113
    %s115 = sphi 0, %s113
    %s116 = sphi 0, %s115
    %s130 = sphi 0, %s116
    %s134 = sphi 0, %s134
    %s136 = sphi 0, %s134
    %s137 = sphi 0, %s136
    %s151 = sphi 0, %s137
    %s155 = sphi 0, %s155
    %s157 = sphi 0, %s155
    %s158 = sphi 0, %s157
    %s172 = sphi 0, %s158
    %s176 = sphi 0, %s176
    %s178 = sphi 0, %s176
    %s179 = sphi 0, %s178
    %s193 = sphi 0, %s179
    %s197 = sphi 0, %s197
    %s199 = sphi 0, %s197
    %s200 = sphi 0, %s199
    %s214 = sphi 0, %s200
    %s218 = sphi 0, %s218
    %s220 = sphi 0, %s218
    %s221 = sphi 0, %s220
    %s235 = sphi 0, %s221
    %s241 = sphi 0, %s243
    %s244 = sphi 0, %s241
    %s245 = sphi 0, %s244
    %s261 = sphi 0, %s245
  $region4: #{basic_block_forward.1} parent=0 // loop_header_branch
    %19 = sbr.rel (%p17) target = $region8
  $region5: #{basic_block_forward.1} parent=0 // loop_body
    %s21 = ssub.s32 %s16, 1
    %s22 = ssub.s32 %s16, 2
    %s23 = sadd.s32 %s16, 1
    %s24 = ssub.s32 %s16, %s23
    %p25 = scmp.eq.s32.totalorder %s24, 0
    %s27 = sadd.s32 %s26, 1
    %s28 = scalar_select %p25, %s26, %s27
    %p31 = pneg %p25
    %p32 = scmp.eq.s32.totalorder %s16, 1
    %p33 = por %p31, %p32
    %p34 = scmp.ne.s32.totalorder %s26, %s29
    %p35 = scmp.eq.s32.totalorder %s16, 0
    %p36 = por %p34, %p35
    %p37 = scmp.ne.s32.totalorder %s26, %s29
    %p38 = scmp.eq.s32.totalorder %s21, 1
    %p39 = por %p37, %p38
    %p40 = scmp.ne.s32.totalorder %s29, %s30
    %p41 = scmp.eq.s32.totalorder %s21, 0
    %p42 = por %p40, %p41
    %p43 = scmp.ne.s32.totalorder %s29, %s30
    %p44 = scmp.eq.s32.totalorder %s22, 1
    %p45 = por %p43, %p44
    %p47 = scmp.ne.s32.totalorder %s30, %s46
    %p48 = scmp.eq.s32.totalorder %s22, 0
    %p49 = por %p47, %p48
    %s51 = sadd.s32 %s50, 1
    %p54 = scmp.eq.s32.totalorder %s16, 1
    %p55 = scmp.ne.s32.totalorder %s50, %s52
    %p56 = scmp.eq.s32.totalorder %s16, 0
    %p57 = por %p55, %p56
    %p58 = scmp.ne.s32.totalorder %s50, %s52
    %p59 = scmp.eq.s32.totalorder %s21, 1
    %p60 = por %p58, %p59
    %p61 = scmp.ne.s32.totalorder %s52, %s53
    %p62 = scmp.eq.s32.totalorder %s21, 0
    %p63 = por %p61, %p62
    %p64 = scmp.ne.s32.totalorder %s52, %s53
    %p65 = scmp.eq.s32.totalorder %s22, 1
    %p66 = por %p64, %p65
    %p68 = scmp.ne.s32.totalorder %s53, %s67
    %p69 = scmp.eq.s32.totalorder %s22, 0
    %p70 = por %p68, %p69
    %s72 = sadd.s32 %s71, 1
    %p75 = scmp.eq.s32.totalorder %s16, 1
    %p76 = scmp.ne.s32.totalorder %s71, %s73
    %p77 = scmp.eq.s32.totalorder %s16, 0
    %p78 = por %p76, %p77
    %p79 = scmp.ne.s32.totalorder %s71, %s73
    %p80 = scmp.eq.s32.totalorder %s21, 1
    %p81 = por %p79, %p80
    %p82 = scmp.ne.s32.totalorder %s73, %s74
    %p83 = scmp.eq.s32.totalorder %s21, 0
    %p84 = por %p82, %p83
    %p85 = scmp.ne.s32.totalorder %s73, %s74
    %p86 = scmp.eq.s32.totalorder %s22, 1
    %p87 = por %p85, %p86
    %p89 = scmp.ne.s32.totalorder %s74, %s88
    %p90 = scmp.eq.s32.totalorder %s22, 0
    %p91 = por %p89, %p90
    %s93 = sadd.s32 %s92, 1
    %p96 = scmp.eq.s32.totalorder %s16, 1
    %p97 = scmp.ne.s32.totalorder %s92, %s94
    %p98 = scmp.eq.s32.totalorder %s16, 0
    %p99 = por %p97, %p98
    %p100 = scmp.ne.s32.totalorder %s92, %s94
    %p101 = scmp.eq.s32.totalorder %s21, 1
    %p102 = por %p100, %p101
    %p103 = scmp.ne.s32.totalorder %s94, %s95
    %p104 = scmp.eq.s32.totalorder %s21, 0
    %p105 = por %p103, %p104
    %p106 = scmp.ne.s32.totalorder %s94, %s95
    %p107 = scmp.eq.s32.totalorder %s22, 1
    %p108 = por %p106, %p107
    %p110 = scmp.ne.s32.totalorder %s95, %s109
    %p111 = scmp.eq.s32.totalorder %s22, 0
    %p112 = por %p110, %p111
    %s114 = sadd.s32 %s113, 1
    %p117 = scmp.eq.s32.totalorder %s16, 1
    %p118 = scmp.ne.s32.totalorder %s113, %s115
    %p119 = scmp.eq.s32.totalorder %s16, 0
    %p120 = por %p118, %p119
    %p121 = scmp.ne.s32.totalorder %s113, %s115
    %p122 = scmp.eq.s32.totalorder %s21, 1
    %p123 = por %p121, %p122
    %p124 = scmp.ne.s32.totalorder %s115, %s116
    %p125 = scmp.eq.s32.totalorder %s21, 0
    %p126 = por %p124, %p125
    %p127 = scmp.ne.s32.totalorder %s115, %s116
    %p128 = scmp.eq.s32.totalorder %s22, 1
    %p129 = por %p127, %p128
    %p131 = scmp.ne.s32.totalorder %s116, %s130
    %p132 = scmp.eq.s32.totalorder %s22, 0
    %p133 = por %p131, %p132
    %s135 = sadd.s32 %s134, 1
    %p138 = scmp.eq.s32.totalorder %s16, 1
    %p139 = scmp.ne.s32.totalorder %s134, %s136
    %p140 = scmp.eq.s32.totalorder %s16, 0
    %p141 = por %p139, %p140
    %p142 = scmp.ne.s32.totalorder %s134, %s136
    %p143 = scmp.eq.s32.totalorder %s21, 1
    %p144 = por %p142, %p143
    %p145 = scmp.ne.s32.totalorder %s136, %s137
    %p146 = scmp.eq.s32.totalorder %s21, 0
    %p147 = por %p145, %p146
    %p148 = scmp.ne.s32.totalorder %s136, %s137
    %p149 = scmp.eq.s32.totalorder %s22, 1
    %p150 = por %p148, %p149
    %p152 = scmp.ne.s32.totalorder %s137, %s151
    %p153 = scmp.eq.s32.totalorder %s22, 0
    %p154 = por %p152, %p153
    %s156 = sadd.s32 %s155, 1
    %p159 = scmp.eq.s32.totalorder %s16, 1
    %p160 = scmp.ne.s32.totalorder %s155, %s157
    %p161 = scmp.eq.s32.totalorder %s16, 0
    %p162 = por %p160, %p161
    %p163 = scmp.ne.s32.totalorder %s155, %s157
    %p164 = scmp.eq.s32.totalorder %s21, 1
    %p165 = por %p163, %p164
    %p166 = scmp.ne.s32.totalorder %s157, %s158
    %p167 = scmp.eq.s32.totalorder %s21, 0
    %p168 = por %p166, %p167
    %p169 = scmp.ne.s32.totalorder %s157, %s158
    %p170 = scmp.eq.s32.totalorder %s22, 1
    %p171 = por %p169, %p170
    %p173 = scmp.ne.s32.totalorder %s158, %s172
    %p174 = scmp.eq.s32.totalorder %s22, 0
    %p175 = por %p173, %p174
    %s177 = sadd.s32 %s176, 1
    %p180 = scmp.eq.s32.totalorder %s16, 1
    %p181 = scmp.ne.s32.totalorder %s176, %s178
    %p182 = scmp.eq.s32.totalorder %s16, 0
    %p183 = por %p181, %p182
    %p184 = scmp.ne.s32.totalorder %s176, %s178
    %p185 = scmp.eq.s32.totalorder %s21, 1
    %p186 = por %p184, %p185
    %p187 = scmp.ne.s32.totalorder %s178, %s179
    %p188 = scmp.eq.s32.totalorder %s21, 0
    %p189 = por %p187, %p188
    %p190 = scmp.ne.s32.totalorder %s178, %s179
    %p191 = scmp.eq.s32.totalorder %s22, 1
    %p192 = por %p190, %p191
    %p194 = scmp.ne.s32.totalorder %s179, %s193
    %p195 = scmp.eq.s32.totalorder %s22, 0
    %p196 = por %p194, %p195
    %s198 = sadd.s32 %s197, 1
    %p201 = scmp.eq.s32.totalorder %s16, 1
    %p202 = scmp.ne.s32.totalorder %s197, %s199
    %p203 = scmp.eq.s32.totalorder %s16, 0
    %p204 = por %p202, %p203
    %p205 = scmp.ne.s32.totalorder %s197, %s199
    %p206 = scmp.eq.s32.totalorder %s21, 1
    %p207 = por %p205, %p206
    %p208 = scmp.ne.s32.totalorder %s199, %s200
    %p209 = scmp.eq.s32.totalorder %s21, 0
    %p210 = por %p208, %p209
    %p211 = scmp.ne.s32.totalorder %s199, %s200
    %p212 = scmp.eq.s32.totalorder %s22, 1
    %p213 = por %p211, %p212
    %p215 = scmp.ne.s32.totalorder %s200, %s214
    %p216 = scmp.eq.s32.totalorder %s22, 0
    %p217 = por %p215, %p216
    %s219 = sadd.s32 %s218, 1
    %p222 = scmp.eq.s32.totalorder %s16, 1
    %p223 = scmp.ne.s32.totalorder %s218, %s220
    %p224 = scmp.eq.s32.totalorder %s16, 0
    %p225 = por %p223, %p224
    %p226 = scmp.ne.s32.totalorder %s218, %s220
    %p227 = scmp.eq.s32.totalorder %s21, 1
    %p228 = por %p226, %p227
    %p229 = scmp.ne.s32.totalorder %s220, %s221
    %p230 = scmp.eq.s32.totalorder %s21, 0
    %p231 = por %p229, %p230
    %p232 = scmp.ne.s32.totalorder %s220, %s221
    %p233 = scmp.eq.s32.totalorder %s22, 1
    %p234 = por %p232, %p233
    %p236 = scmp.ne.s32.totalorder %s221, %s235
    %p237 = scmp.eq.s32.totalorder %s22, 0
    %p238 = por %p236, %p237
    %s239 = ssub.s32 %s16, %s23
    %p240 = scmp.eq.s32.totalorder %s239, 0
    %s242 = sadd.s32 %s241, 1
    %s243 = scalar_select %p240, %s241, %s242
    %p246 = pneg %p240
    %p247 = scmp.eq.s32.totalorder %s16, 1
    %p248 = por %p246, %p247
    %p249 = scmp.ne.s32.totalorder %s241, %s244
    %p250 = scmp.eq.s32.totalorder %s16, 0
    %p251 = por %p249, %p250
    %p252 = scmp.ne.s32.totalorder %s241, %s244
    %p253 = scmp.eq.s32.totalorder %s21, 1
    %p254 = por %p252, %p253
    %p255 = scmp.ne.s32.totalorder %s244, %s245
    %p256 = scmp.eq.s32.totalorder %s21, 0
    %p257 = por %p255, %p256
    %p258 = scmp.ne.s32.totalorder %s244, %s245
    %p259 = scmp.eq.s32.totalorder %s22, 1
    %p260 = por %p258, %p259
    %p262 = scmp.ne.s32.totalorder %s245, %s261
    %p263 = scmp.eq.s32.totalorder %s22, 0
    %p264 = por %p262, %p263
    %p265 = scmp.le.s32.totalorder 1, %s16
    %p266 = scmp.lt.s32.totalorder %s16, 3
    %p267 = pnand %p265, %p266
    %p268 = pneg %p267
    // Predicated region
    $region9: #{basic_block_forward.1} parent=5 // pred_check
      _
    $region10: #{basic_block_forward.1} parent=5 // pred_check_branch
      %270 = sbr.rel (%p267) target = $region12
    $region11: #{basic_block_forward.1} parent=5 // pred_region
      %s271 = ssub.s32 %s16, 1
      // Predicated region
      $region13: #{basic_block_forward.1} parent=11 // pred_check
        %p272 = pneg %p63
      $region14: #{basic_block_forward.1} parent=11 // pred_check_branch
        %274 = sbr.rel (%p272) target = $region16
      $region15: #{basic_block_forward.1} parent=11 // pred_region
        _
      $region16: #{basic_block_forward.1} parent=11 // pred_fallthru
        _
      // Predicated region
      $region17: #{basic_block_forward.1} parent=11 // pred_check
        %p275 = pneg %p84
      $region18: #{basic_block_forward.1} parent=11 // pred_check_branch
        %277 = sbr.rel (%p275) target = $region20
      $region19: #{basic_block_forward.1} parent=11 // pred_region
        _
      $region20: #{basic_block_forward.1} parent=11 // pred_fallthru
        _
      // Predicated region
      $region21: #{basic_block_forward.1} parent=11 // pred_check
        %p278 = pneg %p105
      $region22: #{basic_block_forward.1} parent=11 // pred_check_branch
        %280 = sbr.rel (%p278) target = $region24
      $region23: #{basic_block_forward.1} parent=11 // pred_region
        _
      $region24: #{basic_block_forward.1} parent=11 // pred_fallthru
        _
      // Predicated region
      $region25: #{basic_block_forward.1} parent=11 // pred_check
        %p281 = pneg %p126
      $region26: #{basic_block_forward.1} parent=11 // pred_check_branch
        %283 = sbr.rel (%p281) target = $region28
      $region27: #{basic_block_forward.1} parent=11 // pred_region
        _
      $region28: #{basic_block_forward.1} parent=11 // pred_fallthru
        _
      // Predicated region
      $region29: #{basic_block_forward.1} parent=11 // pred_check
        %p284 = pneg %p147
      $region30: #{basic_block_forward.1} parent=11 // pred_check_branch
        %286 = sbr.rel (%p284) target = $region32
      $region31: #{basic_block_forward.1} parent=11 // pred_region
        _
      $region32: #{basic_block_forward.1} parent=11 // pred_fallthru
        _
      // Predicated region
      $region33: #{basic_block_forward.1} parent=11 // pred_check
        %p287 = pneg %p168
      $region34: #{basic_block_forward.1} parent=11 // pred_check_branch
        %289 = sbr.rel (%p287) target = $region36
      $region35: #{basic_block_forward.1} parent=11 // pred_region
        _
      $region36: #{basic_block_forward.1} parent=11 // pred_fallthru
        _
      // Predicated region
      $region37: #{basic_block_forward.1} parent=11 // pred_check
        %p290 = pneg %p189
      $region38: #{basic_block_forward.1} parent=11 // pred_check_branch
        %292 = sbr.rel (%p290) target = $region40
      $region39: #{basic_block_forward.1} parent=11 // pred_region
        _
      $region40: #{basic_block_forward.1} parent=11 // pred_fallthru
        _
      // Predicated region
      $region41: #{basic_block_forward.1} parent=11 // pred_check
        %p293 = pneg %p210
      $region42: #{basic_block_forward.1} parent=11 // pred_check_branch
        %295 = sbr.rel (%p293) target = $region44
      $region43: #{basic_block_forward.1} parent=11 // pred_region
        _
      $region44: #{basic_block_forward.1} parent=11 // pred_fallthru
        _
      // Predicated region
      $region45: #{basic_block_forward.1} parent=11 // pred_check
        %p296 = pneg %p231
      $region46: #{basic_block_forward.1} parent=11 // pred_check_branch
        %298 = sbr.rel (%p296) target = $region48
      $region47: #{basic_block_forward.1} parent=11 // pred_region
        _
      $region48: #{basic_block_forward.1} parent=11 // pred_fallthru
        _
    $region12: #{basic_block_forward.1} parent=5 // pred_fallthru
      _
    %p299 = scmp.lt.s32.totalorder %s16, 2
    // Predicated region
    $region49: #{basic_block_forward.1} parent=5 // pred_check
      %p300 = pneg %p299
    $region50: #{basic_block_forward.1} parent=5 // pred_check_branch
      %302 = sbr.rel (%p300) target = $region52
    $region51: #{basic_block_forward.1} parent=5 // pred_region
      // Predicated region
      $region53: #{basic_block_forward.1} parent=51 // pred_check
        %p303 = pneg %p36
      $region54: #{basic_block_forward.1} parent=51 // pred_check_branch
        %305 = sbr.rel (%p303) target = $region56
      $region55: #{basic_block_forward.1} parent=51 // pred_region
        %p306 = scmp.lt.s32.totalorder %s16, 1
        %s307 = scalar_select %p306, %s16, 1
        %s308 = smul.addr %s307, 84
        %s309 = smul.addr %s308, 4
        %s310 = scalar_lea.vmem %s0, %s309
      $region56: #{basic_block_forward.1} parent=51 // pred_fallthru
        _
    $region52: #{basic_block_forward.1} parent=5 // pred_fallthru
      _
    %p311 = scmp.le.s32.totalorder 1, %s16
    %p312 = scmp.lt.s32.totalorder %s16, 3
    %p313 = pnand %p311, %p312
    %p314 = pneg %p313
    // Predicated region
    $region57: #{basic_block_forward.1} parent=5 // pred_check
      _
    $region58: #{basic_block_forward.1} parent=5 // pred_check_branch
      %316 = sbr.rel (%p313) target = $region60
    $region59: #{basic_block_forward.1} parent=5 // pred_region
      %s317 = ssub.s32 %s16, 1
      %p318 = scmp.lt.s32.totalorder %s21, 1
      %s319 = scalar_select %p318, %s21, 1
      %s320 = smul.addr %s319, 84
      %s321 = smul.addr %s320, 4
      %s322 = scalar_lea.vmem %s0, %s321
      %p323 = pneg %p42
      %p324 = pneg %p39
      %p325 = pneg %p63
      %p326 = pneg %p60
      %p327 = pneg %p84
      %p328 = pneg %p81
      %p329 = pneg %p105
      %p330 = pneg %p102
      %p331 = pneg %p126
      %p332 = pneg %p123
      %p333 = pneg %p147
      %p334 = pneg %p144
      %p335 = pneg %p168
      %p336 = pneg %p165
      %p337 = pneg %p189
      %p338 = pneg %p186
      %p339 = pneg %p210
      %p340 = pneg %p207
      %p341 = pneg %p231
      %p342 = pneg %p228
      %p343 = pneg %p257
      %p344 = pneg %p254
      %p345 = scmp.lt.s32.totalorder %s21, 1
      %s346 = scalar_select %p345, %s21, 1
      %s347 = smul.addr %s346, 64
      %s348 = smul.addr %s347, 8
      %s349 = scalar_lea.vmem %s10, %s348
      %p350 = scmp.lt.s32.totalorder %s21, 1
      %s351 = scalar_select %p350, %s21, 1
      %s352 = smul.addr %s351, 84
      %s353 = smul.addr %s352, 4
      %s354 = scalar_lea.vmem %s0, %s353
      %p355 = scmp.lt.s32.totalorder %s21, 1
      %s356 = scalar_select %p355, %s21, 1
      %s357 = smul.addr %s356, 64
      %s358 = smul.addr %s357, 8
      %s359 = scalar_lea.vmem %s10, %s358
      %v361 = vld [vmem:[%s354] sm:$0xf]
      %v362 = vld [vmem:[%s354 + $0x4] sm:$0xf]
      %v363 = vld [vmem:[%s354 + $0x8] sm:$0xf]
      %v364 = vld [vmem:[%s354 + $0xc] sm:$0xf]
      %v365 = vld [vmem:[%s354 + $0x10] sm:$0xf]
      %v366 = vld [vmem:[%s354 + $0x14] sm:$0xf]
      %v367 = vld [vmem:[%s354 + $0x18] sm:$0xf]
      %v368 = vld [vmem:[%s354 + $0x1c] sm:$0xf]
      %v369 = vld [vmem:[%s354 + $0x20] sm:$0xf]
      %v370 = vld [vmem:[%s354 + $0x24] sm:$0xf]
      %v371 = vld [vmem:[%s354 + $0x28] sm:$0xf]
      %v372 = vld [vmem:[%s354 + $0x2c] sm:$0xf]
      %v373 = vld [vmem:[%s354 + $0x30] sm:$0xf]
      %v374 = vld [vmem:[%s354 + $0x34] sm:$0xf]
      %v375 = vld [vmem:[%s354 + $0x38] sm:$0xf]
      %v376 = vld [vmem:[%s354 + $0x3c] sm:$0xf]
      %v377 = vld [vmem:[%s354 + $0x40] sm:$0xf]
      %v378 = vld [vmem:[%s354 + $0x44] sm:$0xf]
      %v379 = vld [vmem:[%s354 + $0x48] sm:$0xf]
      %v380 = vld [vmem:[%s354 + $0x4c] sm:$0xf]
      %v381 = vld [vmem:[%s354 + $0x50] sm:$0xf]
      %v382 = vld [vmem:[%s354 + $0x54] sm:$0xf]
      %v383 = vld [vmem:[%s354 + $0x58] sm:$0xf]
      %v384 = vld [vmem:[%s354 + $0x5c] sm:$0xf]
      %v385 = vld [vmem:[%s354 + $0x60] sm:$0xf]
      %v386 = vld [vmem:[%s354 + $0x64] sm:$0xf]
      %v387 = vld [vmem:[%s354 + $0x68] sm:$0xf]
      %v388 = vld [vmem:[%s354 + $0x6c] sm:$0xf]
      %v389 = vld [vmem:[%s354 + $0x70] sm:$0xf]
      %v390 = vld [vmem:[%s354 + $0x74] sm:$0xf]
      %v391 = vld [vmem:[%s354 + $0x78] sm:$0xf]
      %v392 = vld [vmem:[%s354 + $0x7c] sm:$0xf]
      %v393 = vld [vmem:[%s354 + $0x80] sm:$0xf]
      %v394 = vld [vmem:[%s354 + $0x84] sm:$0xf]
      %v395 = vld [vmem:[%s354 + $0x88] sm:$0xf]
      %v396 = vld [vmem:[%s354 + $0x8c] sm:$0xf]
      %v397 = vld [vmem:[%s354 + $0x90] sm:$0xf]
      %v398 = vld [vmem:[%s354 + $0x94] sm:$0xf]
      %v399 = vld [vmem:[%s354 + $0x98] sm:$0xf]
      %v400 = vld [vmem:[%s354 + $0x9c] sm:$0xf]
      %v401 = vld [vmem:[%s354 + $0xa0] sm:$0xf]
      %v402 = vld [vmem:[%s354 + $0xa4] sm:$0xf]
      %v403 = vld [vmem:[%s354 + $0xa8] sm:$0xf]
      %v404 = vld [vmem:[%s354 + $0xac] sm:$0xf]
      %v405 = vld [vmem:[%s354 + $0xb0] sm:$0xf]
      %v406 = vld [vmem:[%s354 + $0xb4] sm:$0xf]
      %v407 = vld [vmem:[%s354 + $0xb8] sm:$0xf]
      %v408 = vld [vmem:[%s354 + $0xbc] sm:$0xf]
      %v409 = vld [vmem:[%s354 + $0xc0] sm:$0xf]
      %v410 = vld [vmem:[%s354 + $0xc4] sm:$0xf]
      %v411 = vld [vmem:[%s354 + $0xc8] sm:$0xf]
      %v412 = vld [vmem:[%s354 + $0xcc] sm:$0xf]
      %v413 = vld [vmem:[%s354 + $0xd0] sm:$0xf]
      %v414 = vld [vmem:[%s354 + $0xd4] sm:$0xf]
      %v415 = vld [vmem:[%s354 + $0xd8] sm:$0xf]
      %v416 = vld [vmem:[%s354 + $0xdc] sm:$0xf]
      %v417 = vld [vmem:[%s354 + $0xe0] sm:$0xf]
      %v418 = vld [vmem:[%s354 + $0xe4] sm:$0xf]
      %v419 = vld [vmem:[%s354 + $0xe8] sm:$0xf]
      %v420 = vld [vmem:[%s354 + $0xec] sm:$0xf]
      %v421 = vld [vmem:[%s354 + $0xf0] sm:$0xf]
      %v422 = vld [vmem:[%s354 + $0xf4] sm:$0xf]
      %v423 = vld [vmem:[%s354 + $0xf8] sm:$0xf]
      %v424 = vld [vmem:[%s354 + $0xfc] sm:$0xf]
      %v425 = vld [vmem:[%s354 + $0x100] sm:$0xf]
      %v426 = vld [vmem:[%s354 + $0x104] sm:$0xf]
      %v427 = vld [vmem:[%s354 + $0x108] sm:$0xf]
      %v428 = vld [vmem:[%s354 + $0x10c] sm:$0xf]
      %v429 = vld [vmem:[%s354 + $0x110] sm:$0xf]
      %v430 = vld [vmem:[%s354 + $0x114] sm:$0xf]
      %v431 = vld [vmem:[%s354 + $0x118] sm:$0xf]
      %v432 = vld [vmem:[%s354 + $0x11c] sm:$0xf]
      %v433 = vld [vmem:[%s354 + $0x120] sm:$0xf]
      %v434 = vld [vmem:[%s354 + $0x124] sm:$0xf]
      %v435 = vld [vmem:[%s354 + $0x128] sm:$0xf]
      %v436 = vld [vmem:[%s354 + $0x12c] sm:$0xf]
      %v437 = vld [vmem:[%s354 + $0x130] sm:$0xf]
      %v438 = vld [vmem:[%s354 + $0x134] sm:$0xf]
      %v439 = vld [vmem:[%s354 + $0x138] sm:$0xf]
      %v440 = vld [vmem:[%s354 + $0x13c] sm:$0xf]
      %v441 = vld [vmem:[%s354 + $0x140] sm:$0xf]
      %v442 = vld [vmem:[%s354 + $0x144] sm:$0xf]
      %v443 = vld [vmem:[%s354 + $0x148] sm:$0xf]
      %v444 = vld [vmem:[%s354 + $0x14c] sm:$0xf]
      %v445 = vld [vmem:[%s1] sm:$0x3]
      %v530 = vunpack.c.l.b16 %v361
      %v531 = vunpack.c.l.b16 %v362
      %v532 = vunpack.c.l.b16 %v363
      %v533 = vunpack.c.l.b16 %v364
      %v534 = vunpack.c.l.b16 %v365
      %v535 = vunpack.c.l.b16 %v366
      %v536 = vunpack.c.l.b16 %v367
      %v537 = vunpack.c.l.b16 %v368
      %v538 = vunpack.c.l.b16 %v369
      %v539 = vunpack.c.l.b16 %v370
      %v540 = vunpack.c.l.b16 %v371
      %v541 = vunpack.c.l.b16 %v372
      %v542 = vunpack.c.l.b16 %v373
      %v543 = vunpack.c.l.b16 %v374
      %v544 = vunpack.c.l.b16 %v375
      %v545 = vunpack.c.l.b16 %v376
      %v546 = vunpack.c.l.b16 %v377
      %v547 = vunpack.c.l.b16 %v378
      %v548 = vunpack.c.l.b16 %v379
      %v549 = vunpack.c.l.b16 %v380
      %v550 = vunpack.c.l.b16 %v381
      %v551 = vunpack.c.l.b16 %v382
      %v552 = vunpack.c.l.b16 %v383
      %v553 = vunpack.c.l.b16 %v384
      %v554 = vunpack.c.l.b16 %v385
      %v555 = vunpack.c.l.b16 %v386
      %v556 = vunpack.c.l.b16 %v387
      %v557 = vunpack.c.l.b16 %v388
      %v558 = vunpack.c.l.b16 %v389
      %v559 = vunpack.c.l.b16 %v390
      %v560 = vunpack.c.l.b16 %v391
      %v561 = vunpack.c.l.b16 %v392
      %v562 = vunpack.c.l.b16 %v393
      %v563 = vunpack.c.l.b16 %v394
      %v564 = vunpack.c.l.b16 %v395
      %v565 = vunpack.c.l.b16 %v396
      %v566 = vunpack.c.l.b16 %v397
      %v567 = vunpack.c.l.b16 %v398
      %v568 = vunpack.c.l.b16 %v399
      %v569 = vunpack.c.l.b16 %v400
      %v570 = vunpack.c.l.b16 %v401
      %v571 = vunpack.c.l.b16 %v402
      %v572 = vunpack.c.l.b16 %v403
      %v573 = vunpack.c.l.b16 %v404
      %v574 = vunpack.c.l.b16 %v405
      %v575 = vunpack.c.l.b16 %v406
      %v576 = vunpack.c.l.b16 %v407
      %v577 = vunpack.c.l.b16 %v408
      %v578 = vunpack.c.l.b16 %v409
      %v579 = vunpack.c.l.b16 %v410
      %v580 = vunpack.c.l.b16 %v411
      %v581 = vunpack.c.l.b16 %v412
      %v582 = vunpack.c.l.b16 %v413
      %v583 = vunpack.c.l.b16 %v414
      %v584 = vunpack.c.l.b16 %v415
      %v585 = vunpack.c.l.b16 %v416
      %v586 = vunpack.c.l.b16 %v417
      %v587 = vunpack.c.l.b16 %v418
      %v588 = vunpack.c.l.b16 %v419
      %v589 = vunpack.c.l.b16 %v420
      %v590 = vunpack.c.l.b16 %v421
      %v591 = vunpack.c.l.b16 %v422
      %v592 = vunpack.c.l.b16 %v423
      %v593 = vunpack.c.l.b16 %v424
      %v594 = vunpack.c.l.b16 %v425
      %v595 = vunpack.c.l.b16 %v426
      %v596 = vunpack.c.l.b16 %v427
      %v597 = vunpack.c.l.b16 %v428
      %v598 = vunpack.c.l.b16 %v429
      %v599 = vunpack.c.l.b16 %v430
      %v600 = vunpack.c.l.b16 %v431
      %v601 = vunpack.c.l.b16 %v432
      %v602 = vunpack.c.l.b16 %v433
      %v603 = vunpack.c.l.b16 %v434
      %v604 = vunpack.c.l.b16 %v435
      %v605 = vunpack.c.l.b16 %v436
      %v606 = vunpack.c.l.b16 %v437
      %v607 = vunpack.c.l.b16 %v438
      %v608 = vunpack.c.l.b16 %v439
      %v609 = vunpack.c.l.b16 %v440
      %v610 = vunpack.c.l.b16 %v441
      %v611 = vunpack.c.l.b16 %v442
      %v612 = vunpack.c.l.b16 %v443
      %v613 = vunpack.c.l.b16 %v444
      %v614 = vpack.c.b16 %v531, %v530
      %v615 = vpack.c.b16 %v533, %v532
      %v616 = vpack.c.b16 %v535, %v534
      %v617 = vpack.c.b16 %v537, %v536
      %v618 = vpack.c.b16 %v539, %v538
      %v619 = vpack.c.b16 %v541, %v540
      %v620 = vpack.c.b16 %v543, %v542
      %v621 = vpack.c.b16 %v545, %v544
      %v622 = vpack.c.b16 %v547, %v546
      %v623 = vpack.c.b16 %v549, %v548
      %v624 = vpack.c.b16 %v551, %v550
      %v625 = vpack.c.b16 %v553, %v552
      %v626 = vpack.c.b16 %v555, %v554
      %v627 = vpack.c.b16 %v557, %v556
      %v628 = vpack.c.b16 %v559, %v558
      %v629 = vpack.c.b16 %v561, %v560
      %v630 = vpack.c.b16 %v563, %v562
      %v631 = vpack.c.b16 %v565, %v564
      %v632 = vpack.c.b16 %v567, %v566
      %v633 = vpack.c.b16 %v569, %v568
      %v634 = vpack.c.b16 %v571, %v570
      %v635 = vpack.c.b16 %v573, %v572
      %v636 = vpack.c.b16 %v575, %v574
      %v637 = vpack.c.b16 %v577, %v576
      %v638 = vpack.c.b16 %v579, %v578
      %v639 = vpack.c.b16 %v581, %v580
      %v640 = vpack.c.b16 %v583, %v582
      %v641 = vpack.c.b16 %v585, %v584
      %v642 = vpack.c.b16 %v587, %v586
      %v643 = vpack.c.b16 %v589, %v588
      %v644 = vpack.c.b16 %v591, %v590
      %v645 = vpack.c.b16 %v593, %v592
      %v646 = vpack.c.b16 %v595, %v594
      %v647 = vpack.c.b16 %v597, %v596
      %v648 = vpack.c.b16 %v599, %v598
      %v649 = vpack.c.b16 %v601, %v600
      %v650 = vpack.c.b16 %v603, %v602
      %v651 = vpack.c.b16 %v605, %v604
      %v652 = vpack.c.b16 %v607, %v606
      %v653 = vpack.c.b16 %v609, %v608
      %v654 = vpack.c.b16 %v611, %v610
      %v655 = vpack.c.b16 %v613, %v612
      %vm656 = vcmask 31744
      %v658 = vsel %vm656, %v614, 0
      %v661 = vsel %vm656, %v615, 0
      %v664 = vsel %vm656, %v616, 0
      %v667 = vsel %vm656, %v617, 0
      %v670 = vsel %vm656, %v618, 0
      %v673 = vsel %vm656, %v619, 0
      %v676 = vsel %vm656, %v620, 0
      %v679 = vsel %vm656, %v621, 0
      %v682 = vsel %vm656, %v622, 0
      %v685 = vsel %vm656, %v623, 0
      %v688 = vsel %vm656, %v624, 0
      %v691 = vsel %vm656, %v625, 0
      %v694 = vsel %vm656, %v626, 0
      %v697 = vsel %vm656, %v627, 0
      %v700 = vsel %vm656, %v628, 0
      %v703 = vsel %vm656, %v629, 0
      %v706 = vsel %vm656, %v630, 0
      %v709 = vsel %vm656, %v631, 0
      %v712 = vsel %vm656, %v632, 0
      %v715 = vsel %vm656, %v633, 0
      %v718 = vsel %vm656, %v634, 0
      %v721 = vsel %vm656, %v635, 0
      %v724 = vsel %vm656, %v636, 0
      %v727 = vsel %vm656, %v637, 0
      %v730 = vsel %vm656, %v638, 0
      %v733 = vsel %vm656, %v639, 0
      %v736 = vsel %vm656, %v640, 0
      %v739 = vsel %vm656, %v641, 0
      %v742 = vsel %vm656, %v642, 0
      %v745 = vsel %vm656, %v643, 0
      %v748 = vsel %vm656, %v644, 0
      %v751 = vsel %vm656, %v645, 0
      %v754 = vsel %vm656, %v646, 0
      %v757 = vsel %vm656, %v647, 0
      %v760 = vsel %vm656, %v648, 0
      %v763 = vsel %vm656, %v649, 0
      %v766 = vsel %vm656, %v650, 0
      %v769 = vsel %vm656, %v651, 0
      %v772 = vsel %vm656, %v652, 0
      %v775 = vsel %vm656, %v653, 0
      %v778 = vsel %vm656, %v654, 0
      %v781 = vsel %vm656, %v655, 0
      %vm783 = vcmask 1041408
      %v785 = vsel %vm783, %v445, 0
      %787 = vmatprep.subr.bf16.mxu0 0
      %788 = vmatpush1.bf16.msra.mxu0 %v785
      %789 = vmatprep.subr.bf16.mxu0 0
      %790 = vmatpush1.bf16.msra.mxu0 0
      %791 = vmatprep.subr.bf16.mxu0 0
      %792 = vmatpush1.bf16.msra.mxu0 0
      %793 = vmatprep.subr.bf16.mxu0 0
      %794 = vmatpush1.bf16.msra.mxu0 0
      %795 = vmatprep.subr.bf16.mxu0 0
      %796 = vmatpush1.bf16.msra.mxu0 0
      %797 = vmatprep.subr.bf16.mxu0 0
      %798 = vmatpush1.bf16.msra.mxu0 0
      %799 = vmatprep.subr.bf16.mxu0 0
      %800 = vmatpush1.bf16.msra.mxu0 0
      %801 = vmatprep.subr.bf16.mxu0 0
      %802 = vmatpush1.bf16.msra.mxu0 0
      %803 = vmatprep.subr.bf16.mxu0 0
      %804 = vmatpush1.bf16.msra.mxu0 0
      %805 = vmatprep.subr.bf16.mxu0 0
      %806 = vmatpush1.bf16.msra.mxu0 0
      %807 = vmatprep.subr.bf16.mxu0 0
      %808 = vmatpush1.bf16.msra.mxu0 0
      %809 = vmatprep.subr.bf16.mxu0 0
      %810 = vmatpush1.bf16.msra.mxu0 0
      %811 = vmatprep.subr.bf16.mxu0 0
      %812 = vmatpush1.bf16.msra.mxu0 0
      %813 = vmatprep.subr.bf16.mxu0 0
      %814 = vmatpush1.bf16.msra.mxu0 0
      %815 = vmatprep.subr.bf16.mxu0 0
      %816 = vmatpush1.bf16.msra.mxu0 0
      %817 = vmatprep.subr.bf16.mxu0 0
      %818 = vmatpush1.bf16.msra.mxu0 0
      %819 = vmatprep.mubr.bf16.mxu0 0
      %820 = vmatmul.mubr.bf16.gmra.mrb[0].mxu0 %v658
      %v821 = vpop.f32.mrb[0].mxu0
      %v822 = vadd.f32 0.0, %v821
      %v823 = vpop.f32.mrb[0].mxu0
      %v824 = vpop.f32.mrb[0].mxu0
      %v825 = vadd.f32 0.0, %v824
      %v826 = vpop.f32.mrb[0].mxu0
      %827 = vmatprep.mubr.bf16.mxu0 0
      %828 = vmatmul.mubr.bf16.gmra.mrb[0].mxu0 %v661
      %v829 = vpop.f32.mrb[0].mxu0
      %v830 = vadd.f32 0.0, %v829
      %v831 = vpop.f32.mrb[0].mxu0
      %v832 = vpop.f32.mrb[0].mxu0
      %v833 = vadd.f32 0.0, %v832
      %v834 = vpop.f32.mrb[0].mxu0
      %835 = vmatprep.mubr.bf16.mxu0 0
      %836 = vmatmul.mubr.bf16.gmra.mrb[0].mxu0 %v664
      %v837 = vpop.f32.mrb[0].mxu0
      %v838 = vadd.f32 0.0, %v837
      %v839 = vpop.f32.mrb[0].mxu0
      %v840 = vpop.f32.mrb[0].mxu0
      %v841 = vadd.f32 0.0, %v840
      %v842 = vpop.f32.mrb[0].mxu0
      %843 = vmatprep.mubr.bf16.mxu0 0
      %844 = vmatmul.mubr.bf16.gmra.mrb[0].mxu0 %v667
      %v845 = vpop.f32.mrb[0].mxu0
      %v846 = vadd.f32 0.0, %v845
      %v847 = vpop.f32.mrb[0].mxu0
      %v848 = vpop.f32.mrb[0].mxu0
      %v849 = vadd.f32 0.0, %v848
      %v850 = vpop.f32.mrb[0].mxu0
      %851 = vmatprep.mubr.bf16.mxu0 0
      %852 = vmatmul.mubr.bf16.gmra.mrb[0].mxu0 %v670
      %v853 = vpop.f32.mrb[0].mxu0
      %v854 = vadd.f32 0.0, %v853
      %v855 = vpop.f32.mrb[0].mxu0
      %v856 = vpop.f32.mrb[0].mxu0
      %v857 = vadd.f32 0.0, %v856
      %v858 = vpop.f32.mrb[0].mxu0
      %859 = vmatprep.mubr.bf16.mxu0 0
      %860 = vmatmul.mubr.bf16.gmra.mrb[0].mxu0 %v673
      %v861 = vpop.f32.mrb[0].mxu0
      %v862 = vadd.f32 0.0, %v861
      %v863 = vpop.f32.mrb[0].mxu0
      %v864 = vpop.f32.mrb[0].mxu0
      %v865 = vadd.f32 0.0, %v864
      %v866 = vpop.f32.mrb[0].mxu0
      %867 = vmatprep.mubr.bf16.mxu0 0
      %868 = vmatmul.mubr.bf16.gmra.mrb[0].mxu0 %v676
      %v869 = vpop.f32.mrb[0].mxu0
      %v870 = vadd.f32 0.0, %v869
      %v871 = vpop.f32.mrb[0].mxu0
      %v872 = vpop.f32.mrb[0].mxu0
      %v873 = vadd.f32 0.0, %v872
      %v874 = vpop.f32.mrb[0].mxu0
      %875 = vmatprep.mubr.bf16.mxu0 0
      %876 = vmatmul.mubr.bf16.gmra.mrb[0].mxu0 %v679
      %v877 = vpop.f32.mrb[0].mxu0
      %v878 = vadd.f32 0.0, %v877
      %v879 = vpop.f32.mrb[0].mxu0
      %v880 = vpop.f32.mrb[0].mxu0
      %v881 = vadd.f32 0.0, %v880
      %v882 = vpop.f32.mrb[0].mxu0
      %883 = vmatprep.mubr.bf16.mxu0 0
      %884 = vmatmul.mubr.bf16.gmra.mrb[0].mxu0 %v682
      %v885 = vpop.f32.mrb[0].mxu0
      %v886 = vadd.f32 0.0, %v885
      %v887 = vpop.f32.mrb[0].mxu0
      %v888 = vpop.f32.mrb[0].mxu0
      %v889 = vadd.f32 0.0, %v888
      %v890 = vpop.f32.mrb[0].mxu0
      %891 = vmatprep.mubr.bf16.mxu0 0
      %892 = vmatmul.mubr.bf16.gmra.mrb[0].mxu0 %v685
      %v893 = vpop.f32.mrb[0].mxu0
      %v894 = vadd.f32 0.0, %v893
      %v895 = vpop.f32.mrb[0].mxu0
      %v896 = vpop.f32.mrb[0].mxu0
      %v897 = vadd.f32 0.0, %v896
      %v898 = vpop.f32.mrb[0].mxu0
      %899 = vmatprep.mubr.bf16.mxu0 0
      %900 = vmatmul.mubr.bf16.gmra.mrb[0].mxu0 %v688
      %v901 = vpop.f32.mrb[0].mxu0
      %v902 = vadd.f32 0.0, %v901
      %v903 = vpop.f32.mrb[0].mxu0
      %v904 = vpop.f32.mrb[0].mxu0
      %v905 = vadd.f32 0.0, %v904
      %v906 = vpop.f32.mrb[0].mxu0
      %907 = vmatprep.mubr.bf16.mxu0 0
      %908 = vmatmul.mubr.bf16.gmra.mrb[0].mxu0 %v691
      %v909 = vpop.f32.mrb[0].mxu0
      %v910 = vadd.f32 0.0, %v909
      %v911 = vpop.f32.mrb[0].mxu0
      %v912 = vpop.f32.mrb[0].mxu0
      %v913 = vadd.f32 0.0, %v912
      %v914 = vpop.f32.mrb[0].mxu0
      %915 = vmatprep.mubr.bf16.mxu0 0
      %916 = vmatmul.mubr.bf16.gmra.mrb[0].mxu0 %v694
      %v917 = vpop.f32.mrb[0].mxu0
      %v918 = vadd.f32 0.0, %v917
      %v919 = vpop.f32.mrb[0].mxu0
      %v920 = vpop.f32.mrb[0].mxu0
      %v921 = vadd.f32 0.0, %v920
      %v922 = vpop.f32.mrb[0].mxu0
      %923 = vmatprep.mubr.bf16.mxu0 0
      %924 = vmatmul.mubr.bf16.gmra.mrb[0].mxu0 %v697
      %v925 = vpop.f32.mrb[0].mxu0
      %v926 = vadd.f32 0.0, %v925
      %v927 = vpop.f32.mrb[0].mxu0
      %v928 = vpop.f32.mrb[0].mxu0
      %v929 = vadd.f32 0.0, %v928
      %v930 = vpop.f32.mrb[0].mxu0
      %931 = vmatprep.mubr.bf16.mxu0 0
      %932 = vmatmul.mubr.bf16.gmra.mrb[0].mxu0 %v700
      %v933 = vpop.f32.mrb[0].mxu0
      %v934 = vadd.f32 0.0, %v933
      %v935 = vpop.f32.mrb[0].mxu0
      %v936 = vpop.f32.mrb[0].mxu0
      %v937 = vadd.f32 0.0, %v936
      %v938 = vpop.f32.mrb[0].mxu0
      %939 = vmatprep.mubr.bf16.mxu0 0
      %940 = vmatmul.mubr.bf16.gmra.mrb[0].mxu0 %v703
      %v941 = vpop.f32.mrb[0].mxu0
      %v942 = vadd.f32 0.0, %v941
      %v943 = vpop.f32.mrb[0].mxu0
      %v944 = vpop.f32.mrb[0].mxu0
      %v945 = vadd.f32 0.0, %v944
      %v946 = vpop.f32.mrb[0].mxu0
      %947 = vmatprep.mubr.bf16.mxu0 0
      %948 = vmatmul.mubr.bf16.gmra.mrb[0].mxu0 %v706
      %v949 = vpop.f32.mrb[0].mxu0
      %v950 = vadd.f32 0.0, %v949
      %v951 = vpop.f32.mrb[0].mxu0
      %v952 = vpop.f32.mrb[0].mxu0
      %v953 = vadd.f32 0.0, %v952
      %v954 = vpop.f32.mrb[0].mxu0
      %955 = vmatprep.mubr.bf16.mxu0 0
      %956 = vmatmul.mubr.bf16.gmra.mrb[0].mxu0 %v709
      %v957 = vpop.f32.mrb[0].mxu0
      %v958 = vadd.f32 0.0, %v957
      %v959 = vpop.f32.mrb[0].mxu0
      %v960 = vpop.f32.mrb[0].mxu0
      %v961 = vadd.f32 0.0, %v960
      %v962 = vpop.f32.mrb[0].mxu0
      %963 = vmatprep.mubr.bf16.mxu0 0
      %964 = vmatmul.mubr.bf16.gmra.mrb[0].mxu0 %v712
      %v965 = vpop.f32.mrb[0].mxu0
      %v966 = vadd.f32 0.0, %v965
      %v967 = vpop.f32.mrb[0].mxu0
      %v968 = vpop.f32.mrb[0].mxu0
      %v969 = vadd.f32 0.0, %v968
      %v970 = vpop.f32.mrb[0].mxu0
      %971 = vmatprep.mubr.bf16.mxu0 0
      %972 = vmatmul.mubr.bf16.gmra.mrb[0].mxu0 %v715
      %v973 = vpop.f32.mrb[0].mxu0
      %v974 = vadd.f32 0.0, %v973
      %v975 = vpop.f32.mrb[0].mxu0
      %v976 = vpop.f32.mrb[0].mxu0
      %v977 = vadd.f32 0.0, %v976
      %v978 = vpop.f32.mrb[0].mxu0
      %979 = vmatprep.mubr.bf16.mxu0 0
      %980 = vmatmul.mubr.bf16.gmra.mrb[0].mxu0 %v718
      %v981 = vpop.f32.mrb[0].mxu0
      %v982 = vadd.f32 0.0, %v981
      %v983 = vpop.f32.mrb[0].mxu0
      %v984 = vpop.f32.mrb[0].mxu0
      %v985 = vadd.f32 0.0, %v984
      %v986 = vpop.f32.mrb[0].mxu0
      %987 = vmatprep.mubr.bf16.mxu0 0
      %988 = vmatmul.mubr.bf16.gmra.mrb[0].mxu0 %v721
      %v989 = vpop.f32.mrb[0].mxu0
      %v990 = vadd.f32 0.0, %v989
      %v991 = vpop.f32.mrb[0].mxu0
      %v992 = vpop.f32.mrb[0].mxu0
      %v993 = vadd.f32 0.0, %v992
      %v994 = vpop.f32.mrb[0].mxu0
      %995 = vmatprep.mubr.bf16.mxu0 0
      %996 = vmatmul.mubr.bf16.gmra.mrb[0].mxu0 %v724
      %v997 = vpop.f32.mrb[0].mxu0
      %v998 = vadd.f32 0.0, %v997
      %v999 = vpop.f32.mrb[0].mxu0
      %v1000 = vpop.f32.mrb[0].mxu0
      %v1001 = vadd.f32 0.0, %v1000
      %v1002 = vpop.f32.mrb[0].mxu0
      %1003 = vmatprep.mubr.bf16.mxu0 0
      %1004 = vmatmul.mubr.bf16.gmra.mrb[0].mxu0 %v727
      %v1005 = vpop.f32.mrb[0].mxu0
      %v1006 = vadd.f32 0.0, %v1005
      %v1007 = vpop.f32.mrb[0].mxu0
      %v1008 = vpop.f32.mrb[0].mxu0
      %v1009 = vadd.f32 0.0, %v1008
      %v1010 = vpop.f32.mrb[0].mxu0
      %1011 = vmatprep.mubr.bf16.mxu0 0
      %1012 = vmatmul.mubr.bf16.gmra.mrb[0].mxu0 %v730
      %v1013 = vpop.f32.mrb[0].mxu0
      %v1014 = vadd.f32 0.0, %v1013
      %v1015 = vpop.f32.mrb[0].mxu0
      %v1016 = vpop.f32.mrb[0].mxu0
      %v1017 = vadd.f32 0.0, %v1016
      %v1018 = vpop.f32.mrb[0].mxu0
      %1019 = vmatprep.mubr.bf16.mxu0 0
      %1020 = vmatmul.mubr.bf16.gmra.mrb[0].mxu0 %v733
      %v1021 = vpop.f32.mrb[0].mxu0
      %v1022 = vadd.f32 0.0, %v1021
      %v1023 = vpop.f32.mrb[0].mxu0
      %v1024 = vpop.f32.mrb[0].mxu0
      %v1025 = vadd.f32 0.0, %v1024
      %v1026 = vpop.f32.mrb[0].mxu0
      %1027 = vmatprep.mubr.bf16.mxu0 0
      %1028 = vmatmul.mubr.bf16.gmra.mrb[0].mxu0 %v736
      %v1029 = vpop.f32.mrb[0].mxu0
      %v1030 = vadd.f32 0.0, %v1029
      %v1031 = vpop.f32.mrb[0].mxu0
      %v1032 = vpop.f32.mrb[0].mxu0
      %v1033 = vadd.f32 0.0, %v1032
      %v1034 = vpop.f32.mrb[0].mxu0
      %1035 = vmatprep.mubr.bf16.mxu0 0
      %1036 = vmatmul.mubr.bf16.gmra.mrb[0].mxu0 %v739
      %v1037 = vpop.f32.mrb[0].mxu0
      %v1038 = vadd.f32 0.0, %v1037
      %v1039 = vpop.f32.mrb[0].mxu0
      %v1040 = vpop.f32.mrb[0].mxu0
      %v1041 = vadd.f32 0.0, %v1040
      %v1042 = vpop.f32.mrb[0].mxu0
      %1043 = vmatprep.mubr.bf16.mxu0 0
      %1044 = vmatmul.mubr.bf16.gmra.mrb[0].mxu0 %v742
      %v1045 = vpop.f32.mrb[0].mxu0
      %v1046 = vadd.f32 0.0, %v1045
      %v1047 = vpop.f32.mrb[0].mxu0
      %v1048 = vpop.f32.mrb[0].mxu0
      %v1049 = vadd.f32 0.0, %v1048
      %v1050 = vpop.f32.mrb[0].mxu0
      %1051 = vmatprep.mubr.bf16.mxu0 0
      %1052 = vmatmul.mubr.bf16.gmra.mrb[0].mxu0 %v745
      %v1053 = vpop.f32.mrb[0].mxu0
      %v1054 = vadd.f32 0.0, %v1053
      %v1055 = vpop.f32.mrb[0].mxu0
      %v1056 = vpop.f32.mrb[0].mxu0
      %v1057 = vadd.f32 0.0, %v1056
      %v1058 = vpop.f32.mrb[0].mxu0
      %1059 = vmatprep.mubr.bf16.mxu0 0
      %1060 = vmatmul.mubr.bf16.gmra.mrb[0].mxu0 %v748
      %v1061 = vpop.f32.mrb[0].mxu0
      %v1062 = vadd.f32 0.0, %v1061
      %v1063 = vpop.f32.mrb[0].mxu0
      %v1064 = vpop.f32.mrb[0].mxu0
      %v1065 = vadd.f32 0.0, %v1064
      %v1066 = vpop.f32.mrb[0].mxu0
      %1067 = vmatprep.mubr.bf16.mxu0 0
      %1068 = vmatmul.mubr.bf16.gmra.mrb[0].mxu0 %v751
      %v1069 = vpop.f32.mrb[0].mxu0
      %v1070 = vadd.f32 0.0, %v1069
      %v1071 = vpop.f32.mrb[0].mxu0
      %v1072 = vpop.f32.mrb[0].mxu0
      %v1073 = vadd.f32 0.0, %v1072
      %v1074 = vpop.f32.mrb[0].mxu0
      %1075 = vmatprep.mubr.bf16.mxu0 0
      %1076 = vmatmul.mubr.bf16.gmra.mrb[0].mxu0 %v754
      %v1077 = vpop.f32.mrb[0].mxu0
      %v1078 = vadd.f32 0.0, %v1077
      %v1079 = vpop.f32.mrb[0].mxu0
      %v1080 = vpop.f32.mrb[0].mxu0
      %v1081 = vadd.f32 0.0, %v1080
      %v1082 = vpop.f32.mrb[0].mxu0
      %1083 = vmatprep.mubr.bf16.mxu0 0
      %1084 = vmatmul.mubr.bf16.gmra.mrb[0].mxu0 %v757
      %v1085 = vpop.f32.mrb[0].mxu0
      %v1086 = vadd.f32 0.0, %v1085
      %v1087 = vpop.f32.mrb[0].mxu0
      %v1088 = vpop.f32.mrb[0].mxu0
      %v1089 = vadd.f32 0.0, %v1088
      %v1090 = vpop.f32.mrb[0].mxu0
      %1091 = vmatprep.mubr.bf16.mxu0 0
      %1092 = vmatmul.mubr.bf16.gmra.mrb[0].mxu0 %v760
      %v1093 = vpop.f32.mrb[0].mxu0
      %v1094 = vadd.f32 0.0, %v1093
      %v1095 = vpop.f32.mrb[0].mxu0
      %v1096 = vpop.f32.mrb[0].mxu0
      %v1097 = vadd.f32 0.0, %v1096
      %v1098 = vpop.f32.mrb[0].mxu0
      %1099 = vmatprep.mubr.bf16.mxu0 0
      %1100 = vmatmul.mubr.bf16.gmra.mrb[0].mxu0 %v763
      %v1101 = vpop.f32.mrb[0].mxu0
      %v1102 = vadd.f32 0.0, %v1101
      %v1103 = vpop.f32.mrb[0].mxu0
      %v1104 = vpop.f32.mrb[0].mxu0
      %v1105 = vadd.f32 0.0, %v1104
      %v1106 = vpop.f32.mrb[0].mxu0
      %1107 = vmatprep.mubr.bf16.mxu0 0
      %1108 = vmatmul.mubr.bf16.gmra.mrb[0].mxu0 %v766
      %v1109 = vpop.f32.mrb[0].mxu0
      %v1110 = vadd.f32 0.0, %v1109
      %v1111 = vpop.f32.mrb[0].mxu0
      %v1112 = vpop.f32.mrb[0].mxu0
      %v1113 = vadd.f32 0.0, %v1112
      %v1114 = vpop.f32.mrb[0].mxu0
      %1115 = vmatprep.mubr.bf16.mxu0 0
      %1116 = vmatmul.mubr.bf16.gmra.mrb[0].mxu0 %v769
      %v1117 = vpop.f32.mrb[0].mxu0
      %v1118 = vadd.f32 0.0, %v1117
      %v1119 = vpop.f32.mrb[0].mxu0
      %v1120 = vpop.f32.mrb[0].mxu0
      %v1121 = vadd.f32 0.0, %v1120
      %v1122 = vpop.f32.mrb[0].mxu0
      %1123 = vmatprep.mubr.bf16.mxu0 0
      %1124 = vmatmul.mubr.bf16.gmra.mrb[0].mxu0 %v772
      %v1125 = vpop.f32.mrb[0].mxu0
      %v1126 = vadd.f32 0.0, %v1125
      %v1127 = vpop.f32.mrb[0].mxu0
      %v1128 = vpop.f32.mrb[0].mxu0
      %v1129 = vadd.f32 0.0, %v1128
      %v1130 = vpop.f32.mrb[0].mxu0
      %1131 = vmatprep.mubr.bf16.mxu0 0
      %1132 = vmatmul.mubr.bf16.gmra.mrb[0].mxu0 %v775
      %v1133 = vpop.f32.mrb[0].mxu0
      %v1134 = vadd.f32 0.0, %v1133
      %v1135 = vpop.f32.mrb[0].mxu0
      %v1136 = vpop.f32.mrb[0].mxu0
      %v1137 = vadd.f32 0.0, %v1136
      %v1138 = vpop.f32.mrb[0].mxu0
      %1139 = vmatprep.mubr.bf16.mxu0 0
      %1140 = vmatmul.mubr.bf16.gmra.mrb[0].mxu0 %v778
      %v1141 = vpop.f32.mrb[0].mxu0
      %v1142 = vadd.f32 0.0, %v1141
      %v1143 = vpop.f32.mrb[0].mxu0
      %v1144 = vpop.f32.mrb[0].mxu0
      %v1145 = vadd.f32 0.0, %v1144
      %v1146 = vpop.f32.mrb[0].mxu0
      %1147 = vmatprep.mubr.bf16.mxu0 0
      %1148 = vmatmul.mubr.bf16.gmra.mrb[0].mxu0 %v781
      %v1149 = vpop.f32.mrb[0].mxu0
      %v1150 = vadd.f32 0.0, %v1149
      %v1151 = vpop.f32.mrb[0].mxu0
      %v1152 = vpop.f32.mrb[0].mxu0
      %v1153 = vadd.f32 0.0, %v1152
      %v1154 = vpop.f32.mrb[0].mxu0
      %1155 = vdwg.mxu0
      %vm1156 = vcmask 588800
      %1157 = vst.msk [vmem:[#allocation2] sm:$0xff] %vm1156, %v822
      %1158 = vst.msk [vmem:[#allocation2 + $0x8] sm:$0xff] %vm1156, %v825
      %1159 = vst.msk [vmem:[#allocation2 + $0x10] sm:$0xff] %vm1156, %v830
      %1160 = vst.msk [vmem:[#allocation2 + $0x18] sm:$0xff] %vm1156, %v833
      %1161 = vst.msk [vmem:[#allocation2 + $0x20] sm:$0xff] %vm1156, %v838
      %1162 = vst.msk [vmem:[#allocation2 + $0x28] sm:$0xff] %vm1156, %v841
      %1163 = vst.msk [vmem:[#allocation2 + $0x30] sm:$0xff] %vm1156, %v846
      %1164 = vst.msk [vmem:[#allocation2 + $0x38] sm:$0xff] %vm1156, %v849
      %1165 = vst.msk [vmem:[#allocation2 + $0x40] sm:$0xff] %vm1156, %v854
      %1166 = vst.msk [vmem:[#allocation2 + $0x48] sm:$0xff] %vm1156, %v857
      %1167 = vst.msk [vmem:[#allocation2 + $0x50] sm:$0xff] %vm1156, %v862
      %1168 = vst.msk [vmem:[#allocation2 + $0x58] sm:$0xff] %vm1156, %v865
      %1169 = vst.msk [vmem:[#allocation2 + $0x60] sm:$0xff] %vm1156, %v870
      %1170 = vst.msk [vmem:[#allocation2 + $0x68] sm:$0xff] %vm1156, %v873
      %1171 = vst.msk [vmem:[#allocation2 + $0x70] sm:$0xff] %vm1156, %v878
      %1172 = vst.msk [vmem:[#allocation2 + $0x78] sm:$0xff] %vm1156, %v881
      %1173 = vst.msk [vmem:[#allocation2 + $0x80] sm:$0xff] %vm1156, %v886
      %1174 = vst.msk [vmem:[#allocation2 + $0x88] sm:$0xff] %vm1156, %v889
      %1175 = vst.msk [vmem:[#allocation2 + $0x90] sm:$0xff] %vm1156, %v894
      %1176 = vst.msk [vmem:[#allocation2 + $0x98] sm:$0xff] %vm1156, %v897
      %1177 = vst.msk [vmem:[#allocation2 + $0xa0] sm:$0xff] %vm1156, %v902
      %1178 = vst.msk [vmem:[#allocation2 + $0xa8] sm:$0xff] %vm1156, %v905
      %1179 = vst.msk [vmem:[#allocation2 + $0xb0] sm:$0xff] %vm1156, %v910
      %1180 = vst.msk [vmem:[#allocation2 + $0xb8] sm:$0xff] %vm1156, %v913
      %1181 = vst.msk [vmem:[#allocation2 + $0xc0] sm:$0xff] %vm1156, %v918
      %1182 = vst.msk [vmem:[#allocation2 + $0xc8] sm:$0xff] %vm1156, %v921
      %1183 = vst.msk [vmem:[#allocation2 + $0xd0] sm:$0xff] %vm1156, %v926
      %1184 = vst.msk [vmem:[#allocation2 + $0xd8] sm:$0xff] %vm1156, %v929
      %1185 = vst.msk [vmem:[#allocation2 + $0xe0] sm:$0xff] %vm1156, %v934
      %1186 = vst.msk [vmem:[#allocation2 + $0xe8] sm:$0xff] %vm1156, %v937
      %1187 = vst.msk [vmem:[#allocation2 + $0xf0] sm:$0xff] %vm1156, %v942
      %1188 = vst.msk [vmem:[#allocation2 + $0xf8] sm:$0xff] %vm1156, %v945
      %1189 = vst.msk [vmem:[#allocation2 + $0x100] sm:$0xff] %vm1156, %v950
      %1190 = vst.msk [vmem:[#allocation2 + $0x108] sm:$0xff] %vm1156, %v953
      %1191 = vst.msk [vmem:[#allocation2 + $0x110] sm:$0xff] %vm1156, %v958
      %1192 = vst.msk [vmem:[#allocation2 + $0x118] sm:$0xff] %vm1156, %v961
      %1193 = vst.msk [vmem:[#allocation2 + $0x120] sm:$0xff] %vm1156, %v966
      %1194 = vst.msk [vmem:[#allocation2 + $0x128] sm:$0xff] %vm1156, %v969
      %1195 = vst.msk [vmem:[#allocation2 + $0x130] sm:$0xff] %vm1156, %v974
      %1196 = vst.msk [vmem:[#allocation2 + $0x138] sm:$0xff] %vm1156, %v977
      %1197 = vst.msk [vmem:[#allocation2 + $0x140] sm:$0xff] %vm1156, %v982
      %1198 = vst.msk [vmem:[#allocation2 + $0x148] sm:$0xff] %vm1156, %v985
      %1199 = vst.msk [vmem:[#allocation2 + $0x150] sm:$0xff] %vm1156, %v990
      %1200 = vst.msk [vmem:[#allocation2 + $0x158] sm:$0xff] %vm1156, %v993
      %1201 = vst.msk [vmem:[#allocation2 + $0x160] sm:$0xff] %vm1156, %v998
      %1202 = vst.msk [vmem:[#allocation2 + $0x168] sm:$0xff] %vm1156, %v1001
      %1203 = vst.msk [vmem:[#allocation2 + $0x170] sm:$0xff] %vm1156, %v1006
      %1204 = vst.msk [vmem:[#allocation2 + $0x178] sm:$0xff] %vm1156, %v1009
      %1205 = vst.msk [vmem:[#allocation2 + $0x180] sm:$0xff] %vm1156, %v1014
      %1206 = vst.msk [vmem:[#allocation2 + $0x188] sm:$0xff] %vm1156, %v1017
      %1207 = vst.msk [vmem:[#allocation2 + $0x190] sm:$0xff] %vm1156, %v1022
      %1208 = vst.msk [vmem:[#allocation2 + $0x198] sm:$0xff] %vm1156, %v1025
      %1209 = vst.msk [vmem:[#allocation2 + $0x1a0] sm:$0xff] %vm1156, %v1030
      %1210 = vst.msk [vmem:[#allocation2 + $0x1a8] sm:$0xff] %vm1156, %v1033
      %1211 = vst.msk [vmem:[#allocation2 + $0x1b0] sm:$0xff] %vm1156, %v1038
      %1212 = vst.msk [vmem:[#allocation2 + $0x1b8] sm:$0xff] %vm1156, %v1041
      %1213 = vst.msk [vmem:[#allocation2 + $0x1c0] sm:$0xff] %vm1156, %v1046
      %1214 = vst.msk [vmem:[#allocation2 + $0x1c8] sm:$0xff] %vm1156, %v1049
      %1215 = vst.msk [vmem:[#allocation2 + $0x1d0] sm:$0xff] %vm1156, %v1054
      %1216 = vst.msk [vmem:[#allocation2 + $0x1d8] sm:$0xff] %vm1156, %v1057
      %1217 = vst.msk [vmem:[#allocation2 + $0x1e0] sm:$0xff] %vm1156, %v1062
      %1218 = vst.msk [vmem:[#allocation2 + $0x1e8] sm:$0xff] %vm1156, %v1065
      %1219 = vst.msk [vmem:[#allocation2 + $0x1f0] sm:$0xff] %vm1156, %v1070
      %1220 = vst.msk [vmem:[#allocation2 + $0x1f8] sm:$0xff] %vm1156, %v1073
      %1221 = vst.msk [vmem:[#allocation2 + $0x200] sm:$0xff] %vm1156, %v1078
      %1222 = vst.msk [vmem:[#allocation2 + $0x208] sm:$0xff] %vm1156, %v1081
      %1223 = vst.msk [vmem:[#allocation2 + $0x210] sm:$0xff] %vm1156, %v1086
      %1224 = vst.msk [vmem:[#allocation2 + $0x218] sm:$0xff] %vm1156, %v1089
      %1225 = vst.msk [vmem:[#allocation2 + $0x220] sm:$0xff] %vm1156, %v1094
      %1226 = vst.msk [vmem:[#allocation2 + $0x228] sm:$0xff] %vm1156, %v1097
      %1227 = vst.msk [vmem:[#allocation2 + $0x230] sm:$0xff] %vm1156, %v1102
      %1228 = vst.msk [vmem:[#allocation2 + $0x238] sm:$0xff] %vm1156, %v1105
      %1229 = vst.msk [vmem:[#allocation2 + $0x240] sm:$0xff] %vm1156, %v1110
      %1230 = vst.msk [vmem:[#allocation2 + $0x248] sm:$0xff] %vm1156, %v1113
      %1231 = vst.msk [vmem:[#allocation2 + $0x250] sm:$0xff] %vm1156, %v1118
      %1232 = vst.msk [vmem:[#allocation2 + $0x258] sm:$0xff] %vm1156, %v1121
      %1233 = vst.msk [vmem:[#allocation2 + $0x260] sm:$0xff] %vm1156, %v1126
      %1234 = vst.msk [vmem:[#allocation2 + $0x268] sm:$0xff] %vm1156, %v1129
      %1235 = vst.msk [vmem:[#allocation2 + $0x270] sm:$0xff] %vm1156, %v1134
      %1236 = vst.msk [vmem:[#allocation2 + $0x278] sm:$0xff] %vm1156, %v1137
      %1237 = vst.msk [vmem:[#allocation2 + $0x280] sm:$0xff] %vm1156, %v1142
      %1238 = vst.msk [vmem:[#allocation2 + $0x288] sm:$0xff] %vm1156, %v1145
      %1239 = vst.msk [vmem:[#allocation2 + $0x290] sm:$0xff] %vm1156, %v1150
      %1240 = vst.msk [vmem:[#allocation2 + $0x298] sm:$0xff] %vm1156, %v1153
      %v1241 = vld [vmem:[#allocation2 + $0x7] sm:$0xff]
      %v1242 = vld [vmem:[#allocation2 + $0xf] sm:$0xff]
      %v1243 = vld [vmem:[#allocation2 + $0x17] sm:$0xff]
      %v1244 = vld [vmem:[#allocation2 + $0x1f] sm:$0xff]
      %v1245 = vld [vmem:[#allocation2 + $0x27] sm:$0xff]
      %v1246 = vld [vmem:[#allocation2 + $0x2f] sm:$0xff]
      %v1247 = vld [vmem:[#allocation2 + $0x37] sm:$0xff]
      %v1248 = vld [vmem:[#allocation2 + $0x3f] sm:$0xff]
      %v1249 = vld [vmem:[#allocation2 + $0x47] sm:$0xff]
      %v1250 = vld [vmem:[#allocation2 + $0x4f] sm:$0xff]
      %v1251 = vld [vmem:[#allocation2 + $0x57] sm:$0xff]
      %v1252 = vld [vmem:[#allocation2 + $0x5f] sm:$0xff]
      %v1253 = vld [vmem:[#allocation2 + $0x67] sm:$0xff]
      %v1254 = vld [vmem:[#allocation2 + $0x6f] sm:$0xff]
      %v1255 = vld [vmem:[#allocation2 + $0x77] sm:$0xff]
      %v1256 = vld [vmem:[#allocation2 + $0x7f] sm:$0xff]
      %v1257 = vld [vmem:[#allocation2 + $0x87] sm:$0xff]
      %v1258 = vld [vmem:[#allocation2 + $0x8f] sm:$0xff]
      %v1259 = vld [vmem:[#allocation2 + $0x97] sm:$0xff]
      %v1260 = vld [vmem:[#allocation2 + $0x9f] sm:$0xff]
      %v1261 = vld [vmem:[#allocation2 + $0xa7] sm:$0xff]
      %v1262 = vld [vmem:[#allocation2 + $0xaf] sm:$0xff]
      %v1263 = vld [vmem:[#allocation2 + $0xb7] sm:$0xff]
      %v1264 = vld [vmem:[#allocation2 + $0xbf] sm:$0xff]
      %v1265 = vld [vmem:[#allocation2 + $0xc7] sm:$0xff]
      %v1266 = vld [vmem:[#allocation2 + $0xcf] sm:$0xff]
      %v1267 = vld [vmem:[#allocation2 + $0xd7] sm:$0xff]
      %v1268 = vld [vmem:[#allocation2 + $0xdf] sm:$0xff]
      %v1269 = vld [vmem:[#allocation2 + $0xe7] sm:$0xff]
      %v1270 = vld [vmem:[#allocation2 + $0xef] sm:$0xff]
      %v1271 = vld [vmem:[#allocation2 + $0xf7] sm:$0xff]
      %v1272 = vld [vmem:[#allocation2 + $0xff] sm:$0xff]
      %v1273 = vld [vmem:[#allocation2 + $0x107] sm:$0xff]
      %v1274 = vld [vmem:[#allocation2 + $0x10f] sm:$0xff]
      %v1275 = vld [vmem:[#allocation2 + $0x117] sm:$0xff]
      %v1276 = vld [vmem:[#allocation2 + $0x11f] sm:$0xff]
      %v1277 = vld [vmem:[#allocation2 + $0x127] sm:$0xff]
      %v1278 = vld [vmem:[#allocation2 + $0x12f] sm:$0xff]
      %v1279 = vld [vmem:[#allocation2 + $0x137] sm:$0xff]
      %v1280 = vld [vmem:[#allocation2 + $0x13f] sm:$0xff]
      %v1281 = vld [vmem:[#allocation2 + $0x147] sm:$0xff]
      %v1282 = vld [vmem:[#allocation2 + $0x14f] sm:$0xff]
      %v1283 = vld [vmem:[#allocation2 + $0x157] sm:$0xff]
      %v1284 = vld [vmem:[#allocation2 + $0x15f] sm:$0xff]
      %v1285 = vld [vmem:[#allocation2 + $0x167] sm:$0xff]
      %v1286 = vld [vmem:[#allocation2 + $0x16f] sm:$0xff]
      %v1287 = vld [vmem:[#allocation2 + $0x177] sm:$0xff]
      %v1288 = vld [vmem:[#allocation2 + $0x17f] sm:$0xff]
      %v1289 = vld [vmem:[#allocation2 + $0x187] sm:$0xff]
      %v1290 = vld [vmem:[#allocation2 + $0x18f] sm:$0xff]
      %v1291 = vld [vmem:[#allocation2 + $0x197] sm:$0xff]
      %v1292 = vld [vmem:[#allocation2 + $0x19f] sm:$0xff]
      %v1293 = vld [vmem:[#allocation2 + $0x1a7] sm:$0xff]
      %v1294 = vld [vmem:[#allocation2 + $0x1af] sm:$0xff]
      %v1295 = vld [vmem:[#allocation2 + $0x1b7] sm:$0xff]
      %v1296 = vld [vmem:[#allocation2 + $0x1bf] sm:$0xff]
      %v1297 = vld [vmem:[#allocation2 + $0x1c7] sm:$0xff]
      %v1298 = vld [vmem:[#allocation2 + $0x1cf] sm:$0xff]
      %v1299 = vld [vmem:[#allocation2 + $0x1d7] sm:$0xff]
      %v1300 = vld [vmem:[#allocation2 + $0x1df] sm:$0xff]
      %v1301 = vld [vmem:[#allocation2 + $0x1e7] sm:$0xff]
      %v1302 = vld [vmem:[#allocation2 + $0x1ef] sm:$0xff]
      %v1303 = vld [vmem:[#allocation2 + $0x1f7] sm:$0xff]
      %v1304 = vld [vmem:[#allocation2 + $0x1ff] sm:$0xff]
      %v1305 = vld [vmem:[#allocation2 + $0x207] sm:$0xff]
      %v1306 = vld [vmem:[#allocation2 + $0x20f] sm:$0xff]
      %v1307 = vld [vmem:[#allocation2 + $0x217] sm:$0xff]
      %v1308 = vld [vmem:[#allocation2 + $0x21f] sm:$0xff]
      %v1309 = vld [vmem:[#allocation2 + $0x227] sm:$0xff]
      %v1310 = vld [vmem:[#allocation2 + $0x22f] sm:$0xff]
      %v1311 = vld [vmem:[#allocation2 + $0x237] sm:$0xff]
      %v1312 = vld [vmem:[#allocation2 + $0x23f] sm:$0xff]
      %v1313 = vld [vmem:[#allocation2 + $0x247] sm:$0xff]
      %v1314 = vld [vmem:[#allocation2 + $0x24f] sm:$0xff]
      %v1315 = vld [vmem:[#allocation2 + $0x8] sm:$0xff]
      %v1316 = vld [vmem:[#allocation2 + $0x10] sm:$0xff]
      %v1317 = vld [vmem:[#allocation2 + $0x18] sm:$0xff]
      %v1318 = vld [vmem:[#allocation2 + $0x20] sm:$0xff]
      %v1319 = vld [vmem:[#allocation2 + $0x28] sm:$0xff]
      %v1320 = vld [vmem:[#allocation2 + $0x30] sm:$0xff]
      %v1321 = vld [vmem:[#allocation2 + $0x38] sm:$0xff]
      %v1322 = vld [vmem:[#allocation2 + $0x40] sm:$0xff]
      %v1323 = vld [vmem:[#allocation2 + $0x48] sm:$0xff]
      %v1324 = vld [vmem:[#allocation2 + $0x50] sm:$0xff]
      %v1325 = vld [vmem:[#allocation2 + $0x58] sm:$0xff]
      %v1326 = vld [vmem:[#allocation2 + $0x60] sm:$0xff]
      %v1327 = vld [vmem:[#allocation2 + $0x68] sm:$0xff]
      %v1328 = vld [vmem:[#allocation2 + $0x70] sm:$0xff]
      %v1329 = vld [vmem:[#allocation2 + $0x78] sm:$0xff]
      %v1330 = vld [vmem:[#allocation2 + $0x80] sm:$0xff]
      %v1331 = vld [vmem:[#allocation2 + $0x88] sm:$0xff]
      %v1332 = vld [vmem:[#allocation2 + $0x90] sm:$0xff]
      %v1333 = vld [vmem:[#allocation2 + $0x98] sm:$0xff]
      %v1334 = vld [vmem:[#allocation2 + $0xa0] sm:$0xff]
      %v1335 = vld [vmem:[#allocation2 + $0xa8] sm:$0xff]
      %v1336 = vld [vmem:[#allocation2 + $0xb0] sm:$0xff]
      %v1337 = vld [vmem:[#allocation2 + $0xb8] sm:$0xff]
      %v1338 = vld [vmem:[#allocation2 + $0xc0] sm:$0xff]
      %v1339 = vld [vmem:[#allocation2 + $0xc8] sm:$0xff]
      %v1340 = vld [vmem:[#allocation2 + $0xd0] sm:$0xff]
      %v1341 = vld [vmem:[#allocation2 + $0xd8] sm:$0xff]
      %v1342 = vld [vmem:[#allocation2 + $0xe0] sm:$0xff]
      %v1343 = vld [vmem:[#allocation2 + $0xe8] sm:$0xff]
      %v1344 = vld [vmem:[#allocation2 + $0xf0] sm:$0xff]
      %v1345 = vld [vmem:[#allocation2 + $0xf8] sm:$0xff]
      %v1346 = vld [vmem:[#allocation2 + $0x100] sm:$0xff]
      %v1347 = vld [vmem:[#allocation2 + $0x108] sm:$0xff]
      %v1348 = vld [vmem:[#allocation2 + $0x110] sm:$0xff]
      %v1349 = vld [vmem:[#allocation2 + $0x118] sm:$0xff]
      %v1350 = vld [vmem:[#allocation2 + $0x120] sm:$0xff]
      %v1351 = vld [vmem:[#allocation2 + $0x128] sm:$0xff]
      %v1352 = vld [vmem:[#allocation2 + $0x130] sm:$0xff]
      %v1353 = vld [vmem:[#allocation2 + $0x138] sm:$0xff]
      %v1354 = vld [vmem:[#allocation2 + $0x140] sm:$0xff]
      %v1355 = vld [vmem:[#allocation2 + $0x148] sm:$0xff]
      %v1356 = vld [vmem:[#allocation2 + $0x150] sm:$0xff]
      %v1357 = vld [vmem:[#allocation2 + $0x158] sm:$0xff]
      %v1358 = vld [vmem:[#allocation2 + $0x160] sm:$0xff]
      %v1359 = vld [vmem:[#allocation2 + $0x168] sm:$0xff]
      %v1360 = vld [vmem:[#allocation2 + $0x170] sm:$0xff]
      %v1361 = vld [vmem:[#allocation2 + $0x178] sm:$0xff]
      %v1362 = vld [vmem:[#allocation2 + $0x180] sm:$0xff]
      %v1363 = vld [vmem:[#allocation2 + $0x188] sm:$0xff]
      %v1364 = vld [vmem:[#allocation2 + $0x190] sm:$0xff]
      %v1365 = vld [vmem:[#allocation2 + $0x198] sm:$0xff]
      %v1366 = vld [vmem:[#allocation2 + $0x1a0] sm:$0xff]
      %v1367 = vld [vmem:[#allocation2 + $0x1a8] sm:$0xff]
      %v1368 = vld [vmem:[#allocation2 + $0x1b0] sm:$0xff]
      %v1369 = vld [vmem:[#allocation2 + $0x1b8] sm:$0xff]
      %v1370 = vld [vmem:[#allocation2 + $0x1c0] sm:$0xff]
      %v1371 = vld [vmem:[#allocation2 + $0x1c8] sm:$0xff]
      %v1372 = vld [vmem:[#allocation2 + $0x1d0] sm:$0xff]
      %v1373 = vld [vmem:[#allocation2 + $0x1d8] sm:$0xff]
      %v1374 = vld [vmem:[#allocation2 + $0x1e0] sm:$0xff]
      %v1375 = vld [vmem:[#allocation2 + $0x1e8] sm:$0xff]
      %v1376 = vld [vmem:[#allocation2 + $0x1f0] sm:$0xff]
      %v1377 = vld [vmem:[#allocation2 + $0x1f8] sm:$0xff]
      %v1378 = vld [vmem:[#allocation2 + $0x200] sm:$0xff]
      %v1379 = vld [vmem:[#allocation2 + $0x208] sm:$0xff]
      %v1380 = vld [vmem:[#allocation2 + $0x210] sm:$0xff]
      %v1381 = vld [vmem:[#allocation2 + $0x218] sm:$0xff]
      %v1382 = vld [vmem:[#allocation2 + $0x220] sm:$0xff]
      %v1383 = vld [vmem:[#allocation2 + $0x228] sm:$0xff]
      %v1384 = vld [vmem:[#allocation2 + $0x230] sm:$0xff]
      %v1385 = vld [vmem:[#allocation2 + $0x238] sm:$0xff]
      %v1386 = vld [vmem:[#allocation2 + $0x240] sm:$0xff]
      %v1387 = vld [vmem:[#allocation2 + $0x248] sm:$0xff]
      %v1388 = vld [vmem:[#allocation2 + $0x250] sm:$0xff]
      %1463 = vrot.lane.b32.xlu0 %v1315, 120
      %v1464 = vpop.permute.xlu0 %1463
      %1465 = vrot.lane.b32.xlu0 %v1316, 120
      %v1466 = vpop.permute.xlu0 %1465
      %1467 = vrot.lane.b32.xlu0 %v1317, 120
      %v1468 = vpop.permute.xlu0 %1467
      %1469 = vrot.lane.b32.xlu0 %v1318, 120
      %v1470 = vpop.permute.xlu0 %1469
      %1471 = vrot.lane.b32.xlu0 %v1319, 120
      %v1472 = vpop.permute.xlu0 %1471
      %1473 = vrot.lane.b32.xlu0 %v1320, 120
      %v1474 = vpop.permute.xlu0 %1473
      %1475 = vrot.lane.b32.xlu0 %v1321, 120
      %v1476 = vpop.permute.xlu0 %1475
      %1477 = vrot.lane.b32.xlu0 %v1322, 120
      %v1478 = vpop.permute.xlu0 %1477
      %1479 = vrot.lane.b32.xlu0 %v1323, 120
      %v1480 = vpop.permute.xlu0 %1479
      %1481 = vrot.lane.b32.xlu0 %v1324, 120
      %v1482 = vpop.permute.xlu0 %1481
      %1483 = vrot.lane.b32.xlu0 %v1325, 120
      %v1484 = vpop.permute.xlu0 %1483
      %1485 = vrot.lane.b32.xlu0 %v1326, 120
      %v1486 = vpop.permute.xlu0 %1485
      %1487 = vrot.lane.b32.xlu0 %v1327, 120
      %v1488 = vpop.permute.xlu0 %1487
      %1489 = vrot.lane.b32.xlu0 %v1328, 120
      %v1490 = vpop.permute.xlu0 %1489
      %1491 = vrot.lane.b32.xlu0 %v1329, 120
      %v1492 = vpop.permute.xlu0 %1491
      %1493 = vrot.lane.b32.xlu0 %v1330, 120
      %v1494 = vpop.permute.xlu0 %1493
      %1495 = vrot.lane.b32.xlu0 %v1331, 120
      %v1496 = vpop.permute.xlu0 %1495
      %1497 = vrot.lane.b32.xlu0 %v1332, 120
      %v1498 = vpop.permute.xlu0 %1497
      %1499 = vrot.lane.b32.xlu0 %v1333, 120
      %v1500 = vpop.permute.xlu0 %1499
      %1501 = vrot.lane.b32.xlu0 %v1334, 120
      %v1502 = vpop.permute.xlu0 %1501
      %1503 = vrot.lane.b32.xlu0 %v1335, 120
      %v1504 = vpop.permute.xlu0 %1503
      %1505 = vrot.lane.b32.xlu0 %v1336, 120
      %v1506 = vpop.permute.xlu0 %1505
      %1507 = vrot.lane.b32.xlu0 %v1337, 120
      %v1508 = vpop.permute.xlu0 %1507
      %1509 = vrot.lane.b32.xlu0 %v1338, 120
      %v1510 = vpop.permute.xlu0 %1509
      %1511 = vrot.lane.b32.xlu0 %v1339, 120
      %v1512 = vpop.permute.xlu0 %1511
      %1513 = vrot.lane.b32.xlu0 %v1340, 120
      %v1514 = vpop.permute.xlu0 %1513
      %1515 = vrot.lane.b32.xlu0 %v1341, 120
      %v1516 = vpop.permute.xlu0 %1515
      %1517 = vrot.lane.b32.xlu0 %v1342, 120
      %v1518 = vpop.permute.xlu0 %1517
      %1519 = vrot.lane.b32.xlu0 %v1343, 120
      %v1520 = vpop.permute.xlu0 %1519
      %1521 = vrot.lane.b32.xlu0 %v1344, 120
      %v1522 = vpop.permute.xlu0 %1521
      %1523 = vrot.lane.b32.xlu0 %v1345, 120
      %v1524 = vpop.permute.xlu0 %1523
      %1525 = vrot.lane.b32.xlu0 %v1346, 120
      %v1526 = vpop.permute.xlu0 %1525
      %1527 = vrot.lane.b32.xlu0 %v1347, 120
      %v1528 = vpop.permute.xlu0 %1527
      %1529 = vrot.lane.b32.xlu0 %v1348, 120
      %v1530 = vpop.permute.xlu0 %1529
      %1531 = vrot.lane.b32.xlu0 %v1349, 120
      %v1532 = vpop.permute.xlu0 %1531
      %1533 = vrot.lane.b32.xlu0 %v1350, 120
      %v1534 = vpop.permute.xlu0 %1533
      %1535 = vrot.lane.b32.xlu0 %v1351, 120
      %v1536 = vpop.permute.xlu0 %1535
      %1537 = vrot.lane.b32.xlu0 %v1352, 120
      %v1538 = vpop.permute.xlu0 %1537
      %1539 = vrot.lane.b32.xlu0 %v1353, 120
      %v1540 = vpop.permute.xlu0 %1539
      %1541 = vrot.lane.b32.xlu0 %v1354, 120
      %v1542 = vpop.permute.xlu0 %1541
      %1543 = vrot.lane.b32.xlu0 %v1355, 120
      %v1544 = vpop.permute.xlu0 %1543
      %1545 = vrot.lane.b32.xlu0 %v1356, 120
      %v1546 = vpop.permute.xlu0 %1545
      %1547 = vrot.lane.b32.xlu0 %v1357, 120
      %v1548 = vpop.permute.xlu0 %1547
      %1549 = vrot.lane.b32.xlu0 %v1358, 120
      %v1550 = vpop.permute.xlu0 %1549
      %1551 = vrot.lane.b32.xlu0 %v1359, 120
      %v1552 = vpop.permute.xlu0 %1551
      %1553 = vrot.lane.b32.xlu0 %v1360, 120
      %v1554 = vpop.permute.xlu0 %1553
      %1555 = vrot.lane.b32.xlu0 %v1361, 120
      %v1556 = vpop.permute.xlu0 %1555
      %1557 = vrot.lane.b32.xlu0 %v1362, 120
      %v1558 = vpop.permute.xlu0 %1557
      %1559 = vrot.lane.b32.xlu0 %v1363, 120
      %v1560 = vpop.permute.xlu0 %1559
      %1561 = vrot.lane.b32.xlu0 %v1364, 120
      %v1562 = vpop.permute.xlu0 %1561
      %1563 = vrot.lane.b32.xlu0 %v1365, 120
      %v1564 = vpop.permute.xlu0 %1563
      %1565 = vrot.lane.b32.xlu0 %v1366, 120
      %v1566 = vpop.permute.xlu0 %1565
      %1567 = vrot.lane.b32.xlu0 %v1367, 120
      %v1568 = vpop.permute.xlu0 %1567
      %1569 = vrot.lane.b32.xlu0 %v1368, 120
      %v1570 = vpop.permute.xlu0 %1569
      %1571 = vrot.lane.b32.xlu0 %v1369, 120
      %v1572 = vpop.permute.xlu0 %1571
      %1573 = vrot.lane.b32.xlu0 %v1370, 120
      %v1574 = vpop.permute.xlu0 %1573
      %1575 = vrot.lane.b32.xlu0 %v1371, 120
      %v1576 = vpop.permute.xlu0 %1575
      %1577 = vrot.lane.b32.xlu0 %v1372, 120
      %v1578 = vpop.permute.xlu0 %1577
      %1579 = vrot.lane.b32.xlu0 %v1373, 120
      %v1580 = vpop.permute.xlu0 %1579
      %1581 = vrot.lane.b32.xlu0 %v1374, 120
      %v1582 = vpop.permute.xlu0 %1581
      %1583 = vrot.lane.b32.xlu0 %v1375, 120
      %v1584 = vpop.permute.xlu0 %1583
      %1585 = vrot.lane.b32.xlu0 %v1376, 120
      %v1586 = vpop.permute.xlu0 %1585
      %1587 = vrot.lane.b32.xlu0 %v1377, 120
      %v1588 = vpop.permute.xlu0 %1587
      %1589 = vrot.lane.b32.xlu0 %v1378, 120
      %v1590 = vpop.permute.xlu0 %1589
      %1591 = vrot.lane.b32.xlu0 %v1379, 120
      %v1592 = vpop.permute.xlu0 %1591
      %1593 = vrot.lane.b32.xlu0 %v1380, 120
      %v1594 = vpop.permute.xlu0 %1593
      %1595 = vrot.lane.b32.xlu0 %v1381, 120
      %v1596 = vpop.permute.xlu0 %1595
      %1597 = vrot.lane.b32.xlu0 %v1382, 120
      %v1598 = vpop.permute.xlu0 %1597
      %1599 = vrot.lane.b32.xlu0 %v1383, 120
      %v1600 = vpop.permute.xlu0 %1599
      %1601 = vrot.lane.b32.xlu0 %v1384, 120
      %v1602 = vpop.permute.xlu0 %1601
      %1603 = vrot.lane.b32.xlu0 %v1385, 120
      %v1604 = vpop.permute.xlu0 %1603
      %1605 = vrot.lane.b32.xlu0 %v1386, 120
      %v1606 = vpop.permute.xlu0 %1605
      %1607 = vrot.lane.b32.xlu0 %v1387, 120
      %v1608 = vpop.permute.xlu0 %1607
      %1609 = vrot.lane.b32.xlu0 %v1388, 120
      %v1610 = vpop.permute.xlu0 %1609
      %v1685 = vadd.f32 %v1241, %v1464
      %v1686 = vadd.f32 %v1242, %v1466
      %v1687 = vadd.f32 %v1243, %v1468
      %v1688 = vadd.f32 %v1244, %v1470
      %v1689 = vadd.f32 %v1245, %v1472
      %v1690 = vadd.f32 %v1246, %v1474
      %v1691 = vadd.f32 %v1247, %v1476
      %v1692 = vadd.f32 %v1248, %v1478
      %v1693 = vadd.f32 %v1249, %v1480
      %v1694 = vadd.f32 %v1250, %v1482
      %v1695 = vadd.f32 %v1251, %v1484
      %v1696 = vadd.f32 %v1252, %v1486
      %v1697 = vadd.f32 %v1253, %v1488
      %v1698 = vadd.f32 %v1254, %v1490
      %v1699 = vadd.f32 %v1255, %v1492
      %v1700 = vadd.f32 %v1256, %v1494
      %v1701 = vadd.f32 %v1257, %v1496
      %v1702 = vadd.f32 %v1258, %v1498
      %v1703 = vadd.f32 %v1259, %v1500
      %v1704 = vadd.f32 %v1260, %v1502
      %v1705 = vadd.f32 %v1261, %v1504
      %v1706 = vadd.f32 %v1262, %v1506
      %v1707 = vadd.f32 %v1263, %v1508
      %v1708 = vadd.f32 %v1264, %v1510
      %v1709 = vadd.f32 %v1265, %v1512
      %v1710 = vadd.f32 %v1266, %v1514
      %v1711 = vadd.f32 %v1267, %v1516
      %v1712 = vadd.f32 %v1268, %v1518
      %v1713 = vadd.f32 %v1269, %v1520
      %v1714 = vadd.f32 %v1270, %v1522
      %v1715 = vadd.f32 %v1271, %v1524
      %v1716 = vadd.f32 %v1272, %v1526
      %v1717 = vadd.f32 %v1273, %v1528
      %v1718 = vadd.f32 %v1274, %v1530
      %v1719 = vadd.f32 %v1275, %v1532
      %v1720 = vadd.f32 %v1276, %v1534
      %v1721 = vadd.f32 %v1277, %v1536
      %v1722 = vadd.f32 %v1278, %v1538
      %v1723 = vadd.f32 %v1279, %v1540
      %v1724 = vadd.f32 %v1280, %v1542
      %v1725 = vadd.f32 %v1281, %v1544
      %v1726 = vadd.f32 %v1282, %v1546
      %v1727 = vadd.f32 %v1283, %v1548
      %v1728 = vadd.f32 %v1284, %v1550
      %v1729 = vadd.f32 %v1285, %v1552
      %v1730 = vadd.f32 %v1286, %v1554
      %v1731 = vadd.f32 %v1287, %v1556
      %v1732 = vadd.f32 %v1288, %v1558
      %v1733 = vadd.f32 %v1289, %v1560
      %v1734 = vadd.f32 %v1290, %v1562
      %v1735 = vadd.f32 %v1291, %v1564
      %v1736 = vadd.f32 %v1292, %v1566
      %v1737 = vadd.f32 %v1293, %v1568
      %v1738 = vadd.f32 %v1294, %v1570
      %v1739 = vadd.f32 %v1295, %v1572
      %v1740 = vadd.f32 %v1296, %v1574
      %v1741 = vadd.f32 %v1297, %v1576
      %v1742 = vadd.f32 %v1298, %v1578
      %v1743 = vadd.f32 %v1299, %v1580
      %v1744 = vadd.f32 %v1300, %v1582
      %v1745 = vadd.f32 %v1301, %v1584
      %v1746 = vadd.f32 %v1302, %v1586
      %v1747 = vadd.f32 %v1303, %v1588
      %v1748 = vadd.f32 %v1304, %v1590
      %v1749 = vadd.f32 %v1305, %v1592
      %v1750 = vadd.f32 %v1306, %v1594
      %v1751 = vadd.f32 %v1307, %v1596
      %v1752 = vadd.f32 %v1308, %v1598
      %v1753 = vadd.f32 %v1309, %v1600
      %v1754 = vadd.f32 %v1310, %v1602
      %v1755 = vadd.f32 %v1311, %v1604
      %v1756 = vadd.f32 %v1312, %v1606
      %v1757 = vadd.f32 %v1313, %v1608
      %v1758 = vadd.f32 %v1314, %v1610
      %v1759 = vld [vmem:[#allocation2 + $0x9] sm:$0xff]
      %v1760 = vld [vmem:[#allocation2 + $0x11] sm:$0xff]
      %v1761 = vld [vmem:[#allocation2 + $0x19] sm:$0xff]
      %v1762 = vld [vmem:[#allocation2 + $0x21] sm:$0xff]
      %v1763 = vld [vmem:[#allocation2 + $0x29] sm:$0xff]
      %v1764 = vld [vmem:[#allocation2 + $0x31] sm:$0xff]
      %v1765 = vld [vmem:[#allocation2 + $0x39] sm:$0xff]
      %v1766 = vld [vmem:[#allocation2 + $0x41] sm:$0xff]
      %v1767 = vld [vmem:[#allocation2 + $0x49] sm:$0xff]
      %v1768 = vld [vmem:[#allocation2 + $0x51] sm:$0xff]
      %v1769 = vld [vmem:[#allocation2 + $0x59] sm:$0xff]
      %v1770 = vld [vmem:[#allocation2 + $0x61] sm:$0xff]
      %v1771 = vld [vmem:[#allocation2 + $0x69] sm:$0xff]
      %v1772 = vld [vmem:[#allocation2 + $0x71] sm:$0xff]
      %v1773 = vld [vmem:[#allocation2 + $0x79] sm:$0xff]
      %v1774 = vld [vmem:[#allocation2 + $0x81] sm:$0xff]
      %v1775 = vld [vmem:[#allocation2 + $0x89] sm:$0xff]
      %v1776 = vld [vmem:[#allocation2 + $0x91] sm:$0xff]
      %v1777 = vld [vmem:[#allocation2 + $0x99] sm:$0xff]
      %v1778 = vld [vmem:[#allocation2 + $0xa1] sm:$0xff]
      %v1779 = vld [vmem:[#allocation2 + $0xa9] sm:$0xff]
      %v1780 = vld [vmem:[#allocation2 + $0xb1] sm:$0xff]
      %v1781 = vld [vmem:[#allocation2 + $0xb9] sm:$0xff]
      %v1782 = vld [vmem:[#allocation2 + $0xc1] sm:$0xff]
      %v1783 = vld [vmem:[#allocation2 + $0xc9] sm:$0xff]
      %v1784 = vld [vmem:[#allocation2 + $0xd1] sm:$0xff]
      %v1785 = vld [vmem:[#allocation2 + $0xd9] sm:$0xff]
      %v1786 = vld [vmem:[#allocation2 + $0xe1] sm:$0xff]
      %v1787 = vld [vmem:[#allocation2 + $0xe9] sm:$0xff]
      %v1788 = vld [vmem:[#allocation2 + $0xf1] sm:$0xff]
      %v1789 = vld [vmem:[#allocation2 + $0xf9] sm:$0xff]
      %v1790 = vld [vmem:[#allocation2 + $0x101] sm:$0xff]
      %v1791 = vld [vmem:[#allocation2 + $0x109] sm:$0xff]
      %v1792 = vld [vmem:[#allocation2 + $0x111] sm:$0xff]
      %v1793 = vld [vmem:[#allocation2 + $0x119] sm:$0xff]
      %v1794 = vld [vmem:[#allocation2 + $0x121] sm:$0xff]
      %v1795 = vld [vmem:[#allocation2 + $0x129] sm:$0xff]
      %v1796 = vld [vmem:[#allocation2 + $0x131] sm:$0xff]
      %v1797 = vld [vmem:[#allocation2 + $0x139] sm:$0xff]
      %v1798 = vld [vmem:[#allocation2 + $0x141] sm:$0xff]
      %v1799 = vld [vmem:[#allocation2 + $0x149] sm:$0xff]
      %v1800 = vld [vmem:[#allocation2 + $0x151] sm:$0xff]
      %v1801 = vld [vmem:[#allocation2 + $0x159] sm:$0xff]
      %v1802 = vld [vmem:[#allocation2 + $0x161] sm:$0xff]
      %v1803 = vld [vmem:[#allocation2 + $0x169] sm:$0xff]
      %v1804 = vld [vmem:[#allocation2 + $0x171] sm:$0xff]
      %v1805 = vld [vmem:[#allocation2 + $0x179] sm:$0xff]
      %v1806 = vld [vmem:[#allocation2 + $0x181] sm:$0xff]
      %v1807 = vld [vmem:[#allocation2 + $0x189] sm:$0xff]
      %v1808 = vld [vmem:[#allocation2 + $0x191] sm:$0xff]
      %v1809 = vld [vmem:[#allocation2 + $0x199] sm:$0xff]
      %v1810 = vld [vmem:[#allocation2 + $0x1a1] sm:$0xff]
      %v1811 = vld [vmem:[#allocation2 + $0x1a9] sm:$0xff]
      %v1812 = vld [vmem:[#allocation2 + $0x1b1] sm:$0xff]
      %v1813 = vld [vmem:[#allocation2 + $0x1b9] sm:$0xff]
      %v1814 = vld [vmem:[#allocation2 + $0x1c1] sm:$0xff]
      %v1815 = vld [vmem:[#allocation2 + $0x1c9] sm:$0xff]
      %v1816 = vld [vmem:[#allocation2 + $0x1d1] sm:$0xff]
      %v1817 = vld [vmem:[#allocation2 + $0x1d9] sm:$0xff]
      %v1818 = vld [vmem:[#allocation2 + $0x1e1] sm:$0xff]
      %v1819 = vld [vmem:[#allocation2 + $0x1e9] sm:$0xff]
      %v1820 = vld [vmem:[#allocation2 + $0x1f1] sm:$0xff]
      %v1821 = vld [vmem:[#allocation2 + $0x1f9] sm:$0xff]
      %v1822 = vld [vmem:[#allocation2 + $0x201] sm:$0xff]
      %v1823 = vld [vmem:[#allocation2 + $0x209] sm:$0xff]
      %v1824 = vld [vmem:[#allocation2 + $0x211] sm:$0xff]
      %v1825 = vld [vmem:[#allocation2 + $0x219] sm:$0xff]
      %v1826 = vld [vmem:[#allocation2 + $0x221] sm:$0xff]
      %v1827 = vld [vmem:[#allocation2 + $0x229] sm:$0xff]
      %v1828 = vld [vmem:[#allocation2 + $0x231] sm:$0xff]
      %v1829 = vld [vmem:[#allocation2 + $0x239] sm:$0xff]
      %v1830 = vld [vmem:[#allocation2 + $0x241] sm:$0xff]
      %v1831 = vld [vmem:[#allocation2 + $0x249] sm:$0xff]
      %v1832 = vld [vmem:[#allocation2 + $0x251] sm:$0xff]
      %1907 = vrot.lane.b32.xlu0 %v1759, 112
      %v1908 = vpop.permute.xlu0 %1907
      %1909 = vrot.lane.b32.xlu0 %v1760, 112
      %v1910 = vpop.permute.xlu0 %1909
      %1911 = vrot.lane.b32.xlu0 %v1761, 112
      %v1912 = vpop.permute.xlu0 %1911
      %1913 = vrot.lane.b32.xlu0 %v1762, 112
      %v1914 = vpop.permute.xlu0 %1913
      %1915 = vrot.lane.b32.xlu0 %v1763, 112
      %v1916 = vpop.permute.xlu0 %1915
      %1917 = vrot.lane.b32.xlu0 %v1764, 112
      %v1918 = vpop.permute.xlu0 %1917
      %1919 = vrot.lane.b32.xlu0 %v1765, 112
      %v1920 = vpop.permute.xlu0 %1919
      %1921 = vrot.lane.b32.xlu0 %v1766, 112
      %v1922 = vpop.permute.xlu0 %1921
      %1923 = vrot.lane.b32.xlu0 %v1767, 112
      %v1924 = vpop.permute.xlu0 %1923
      %1925 = vrot.lane.b32.xlu0 %v1768, 112
      %v1926 = vpop.permute.xlu0 %1925
      %1927 = vrot.lane.b32.xlu0 %v1769, 112
      %v1928 = vpop.permute.xlu0 %1927
      %1929 = vrot.lane.b32.xlu0 %v1770, 112
      %v1930 = vpop.permute.xlu0 %1929
      %1931 = vrot.lane.b32.xlu0 %v1771, 112
      %v1932 = vpop.permute.xlu0 %1931
      %1933 = vrot.lane.b32.xlu0 %v1772, 112
      %v1934 = vpop.permute.xlu0 %1933
      %1935 = vrot.lane.b32.xlu0 %v1773, 112
      %v1936 = vpop.permute.xlu0 %1935
      %1937 = vrot.lane.b32.xlu0 %v1774, 112
      %v1938 = vpop.permute.xlu0 %1937
      %1939 = vrot.lane.b32.xlu0 %v1775, 112
      %v1940 = vpop.permute.xlu0 %1939
      %1941 = vrot.lane.b32.xlu0 %v1776, 112
      %v1942 = vpop.permute.xlu0 %1941
      %1943 = vrot.lane.b32.xlu0 %v1777, 112
      %v1944 = vpop.permute.xlu0 %1943
      %1945 = vrot.lane.b32.xlu0 %v1778, 112
      %v1946 = vpop.permute.xlu0 %1945
      %1947 = vrot.lane.b32.xlu0 %v1779, 112
      %v1948 = vpop.permute.xlu0 %1947
      %1949 = vrot.lane.b32.xlu0 %v1780, 112
      %v1950 = vpop.permute.xlu0 %1949
      %1951 = vrot.lane.b32.xlu0 %v1781, 112
      %v1952 = vpop.permute.xlu0 %1951
      %1953 = vrot.lane.b32.xlu0 %v1782, 112
      %v1954 = vpop.permute.xlu0 %1953
      %1955 = vrot.lane.b32.xlu0 %v1783, 112
      %v1956 = vpop.permute.xlu0 %1955
      %1957 = vrot.lane.b32.xlu0 %v1784, 112
      %v1958 = vpop.permute.xlu0 %1957
      %1959 = vrot.lane.b32.xlu0 %v1785, 112
      %v1960 = vpop.permute.xlu0 %1959
      %1961 = vrot.lane.b32.xlu0 %v1786, 112
      %v1962 = vpop.permute.xlu0 %1961
      %1963 = vrot.lane.b32.xlu0 %v1787, 112
      %v1964 = vpop.permute.xlu0 %1963
      %1965 = vrot.lane.b32.xlu0 %v1788, 112
      %v1966 = vpop.permute.xlu0 %1965
      %1967 = vrot.lane.b32.xlu0 %v1789, 112
      %v1968 = vpop.permute.xlu0 %1967
      %1969 = vrot.lane.b32.xlu0 %v1790, 112
      %v1970 = vpop.permute.xlu0 %1969
      %1971 = vrot.lane.b32.xlu0 %v1791, 112
      %v1972 = vpop.permute.xlu0 %1971
      %1973 = vrot.lane.b32.xlu0 %v1792, 112
      %v1974 = vpop.permute.xlu0 %1973
      %1975 = vrot.lane.b32.xlu0 %v1793, 112
      %v1976 = vpop.permute.xlu0 %1975
      %1977 = vrot.lane.b32.xlu0 %v1794, 112
      %v1978 = vpop.permute.xlu0 %1977
      %1979 = vrot.lane.b32.xlu0 %v1795, 112
      %v1980 = vpop.permute.xlu0 %1979
      %1981 = vrot.lane.b32.xlu0 %v1796, 112
      %v1982 = vpop.permute.xlu0 %1981
      %1983 = vrot.lane.b32.xlu0 %v1797, 112
      %v1984 = vpop.permute.xlu0 %1983
      %1985 = vrot.lane.b32.xlu0 %v1798, 112
      %v1986 = vpop.permute.xlu0 %1985
      %1987 = vrot.lane.b32.xlu0 %v1799, 112
      %v1988 = vpop.permute.xlu0 %1987
      %1989 = vrot.lane.b32.xlu0 %v1800, 112
      %v1990 = vpop.permute.xlu0 %1989
      %1991 = vrot.lane.b32.xlu0 %v1801, 112
      %v1992 = vpop.permute.xlu0 %1991
      %1993 = vrot.lane.b32.xlu0 %v1802, 112
      %v1994 = vpop.permute.xlu0 %1993
      %1995 = vrot.lane.b32.xlu0 %v1803, 112
      %v1996 = vpop.permute.xlu0 %1995
      %1997 = vrot.lane.b32.xlu0 %v1804, 112
      %v1998 = vpop.permute.xlu0 %1997
      %1999 = vrot.lane.b32.xlu0 %v1805, 112
      %v2000 = vpop.permute.xlu0 %1999
      %2001 = vrot.lane.b32.xlu0 %v1806, 112
      %v2002 = vpop.permute.xlu0 %2001
      %2003 = vrot.lane.b32.xlu0 %v1807, 112
      %v2004 = vpop.permute.xlu0 %2003
      %2005 = vrot.lane.b32.xlu0 %v1808, 112
      %v2006 = vpop.permute.xlu0 %2005
      %2007 = vrot.lane.b32.xlu0 %v1809, 112
      %v2008 = vpop.permute.xlu0 %2007
      %2009 = vrot.lane.b32.xlu0 %v1810, 112
      %v2010 = vpop.permute.xlu0 %2009
      %2011 = vrot.lane.b32.xlu0 %v1811, 112
      %v2012 = vpop.permute.xlu0 %2011
      %2013 = vrot.lane.b32.xlu0 %v1812, 112
      %v2014 = vpop.permute.xlu0 %2013
      %2015 = vrot.lane.b32.xlu0 %v1813, 112
      %v2016 = vpop.permute.xlu0 %2015
      %2017 = vrot.lane.b32.xlu0 %v1814, 112
      %v2018 = vpop.permute.xlu0 %2017
      %2019 = vrot.lane.b32.xlu0 %v1815, 112
      %v2020 = vpop.permute.xlu0 %2019
      %2021 = vrot.lane.b32.xlu0 %v1816, 112
      %v2022 = vpop.permute.xlu0 %2021
      %2023 = vrot.lane.b32.xlu0 %v1817, 112
      %v2024 = vpop.permute.xlu0 %2023
      %2025 = vrot.lane.b32.xlu0 %v1818, 112
      %v2026 = vpop.permute.xlu0 %2025
      %2027 = vrot.lane.b32.xlu0 %v1819, 112
      %v2028 = vpop.permute.xlu0 %2027
      %2029 = vrot.lane.b32.xlu0 %v1820, 112
      %v2030 = vpop.permute.xlu0 %2029
      %2031 = vrot.lane.b32.xlu0 %v1821, 112
      %v2032 = vpop.permute.xlu0 %2031
      %2033 = vrot.lane.b32.xlu0 %v1822, 112
      %v2034 = vpop.permute.xlu0 %2033
      %2035 = vrot.lane.b32.xlu0 %v1823, 112
      %v2036 = vpop.permute.xlu0 %2035
      %2037 = vrot.lane.b32.xlu0 %v1824, 112
      %v2038 = vpop.permute.xlu0 %2037
      %2039 = vrot.lane.b32.xlu0 %v1825, 112
      %v2040 = vpop.permute.xlu0 %2039
      %2041 = vrot.lane.b32.xlu0 %v1826, 112
      %v2042 = vpop.permute.xlu0 %2041
      %2043 = vrot.lane.b32.xlu0 %v1827, 112
      %v2044 = vpop.permute.xlu0 %2043
      %2045 = vrot.lane.b32.xlu0 %v1828, 112
      %v2046 = vpop.permute.xlu0 %2045
      %2047 = vrot.lane.b32.xlu0 %v1829, 112
      %v2048 = vpop.permute.xlu0 %2047
      %2049 = vrot.lane.b32.xlu0 %v1830, 112
      %v2050 = vpop.permute.xlu0 %2049
      %2051 = vrot.lane.b32.xlu0 %v1831, 112
      %v2052 = vpop.permute.xlu0 %2051
      %2053 = vrot.lane.b32.xlu0 %v1832, 112
      %v2054 = vpop.permute.xlu0 %2053
      %v2129 = vadd.f32 %v1685, %v1908
      %v2130 = vadd.f32 %v1686, %v1910
      %v2131 = vadd.f32 %v1687, %v1912
      %v2132 = vadd.f32 %v1688, %v1914
      %v2133 = vadd.f32 %v1689, %v1916
      %v2134 = vadd.f32 %v1690, %v1918
      %v2135 = vadd.f32 %v1691, %v1920
      %v2136 = vadd.f32 %v1692, %v1922
      %v2137 = vadd.f32 %v1693, %v1924
      %v2138 = vadd.f32 %v1694, %v1926
      %v2139 = vadd.f32 %v1695, %v1928
      %v2140 = vadd.f32 %v1696, %v1930
      %v2141 = vadd.f32 %v1697, %v1932
      %v2142 = vadd.f32 %v1698, %v1934
      %v2143 = vadd.f32 %v1699, %v1936
      %v2144 = vadd.f32 %v1700, %v1938
      %v2145 = vadd.f32 %v1701, %v1940
      %v2146 = vadd.f32 %v1702, %v1942
      %v2147 = vadd.f32 %v1703, %v1944
      %v2148 = vadd.f32 %v1704, %v1946
      %v2149 = vadd.f32 %v1705, %v1948
      %v2150 = vadd.f32 %v1706, %v1950
      %v2151 = vadd.f32 %v1707, %v1952
      %v2152 = vadd.f32 %v1708, %v1954
      %v2153 = vadd.f32 %v1709, %v1956
      %v2154 = vadd.f32 %v1710, %v1958
      %v2155 = vadd.f32 %v1711, %v1960
      %v2156 = vadd.f32 %v1712, %v1962
      %v2157 = vadd.f32 %v1713, %v1964
      %v2158 = vadd.f32 %v1714, %v1966
      %v2159 = vadd.f32 %v1715, %v1968
      %v2160 = vadd.f32 %v1716, %v1970
      %v2161 = vadd.f32 %v1717, %v1972
      %v2162 = vadd.f32 %v1718, %v1974
      %v2163 = vadd.f32 %v1719, %v1976
      %v2164 = vadd.f32 %v1720, %v1978
      %v2165 = vadd.f32 %v1721, %v1980
      %v2166 = vadd.f32 %v1722, %v1982
      %v2167 = vadd.f32 %v1723, %v1984
      %v2168 = vadd.f32 %v1724, %v1986
      %v2169 = vadd.f32 %v1725, %v1988
      %v2170 = vadd.f32 %v1726, %v1990
      %v2171 = vadd.f32 %v1727, %v1992
      %v2172 = vadd.f32 %v1728, %v1994
      %v2173 = vadd.f32 %v1729, %v1996
      %v2174 = vadd.f32 %v1730, %v1998
      %v2175 = vadd.f32 %v1731, %v2000
      %v2176 = vadd.f32 %v1732, %v2002
      %v2177 = vadd.f32 %v1733, %v2004
      %v2178 = vadd.f32 %v1734, %v2006
      %v2179 = vadd.f32 %v1735, %v2008
      %v2180 = vadd.f32 %v1736, %v2010
      %v2181 = vadd.f32 %v1737, %v2012
      %v2182 = vadd.f32 %v1738, %v2014
      %v2183 = vadd.f32 %v1739, %v2016
      %v2184 = vadd.f32 %v1740, %v2018
      %v2185 = vadd.f32 %v1741, %v2020
      %v2186 = vadd.f32 %v1742, %v2022
      %v2187 = vadd.f32 %v1743, %v2024
      %v2188 = vadd.f32 %v1744, %v2026
      %v2189 = vadd.f32 %v1745, %v2028
      %v2190 = vadd.f32 %v1746, %v2030
      %v2191 = vadd.f32 %v1747, %v2032
      %v2192 = vadd.f32 %v1748, %v2034
      %v2193 = vadd.f32 %v1749, %v2036
      %v2194 = vadd.f32 %v1750, %v2038
      %v2195 = vadd.f32 %v1751, %v2040
      %v2196 = vadd.f32 %v1752, %v2042
      %v2197 = vadd.f32 %v1753, %v2044
      %v2198 = vadd.f32 %v1754, %v2046
      %v2199 = vadd.f32 %v1755, %v2048
      %v2200 = vadd.f32 %v1756, %v2050
      %v2201 = vadd.f32 %v1757, %v2052
      %v2202 = vadd.f32 %v1758, %v2054
      %v2203 = vld [vmem:[#allocation2 + $0x257] sm:$0xff]
      %v2204 = vld [vmem:[#allocation2 + $0x25f] sm:$0xff]
      %v2205 = vld [vmem:[#allocation2 + $0x267] sm:$0xff]
      %v2206 = vld [vmem:[#allocation2 + $0x26f] sm:$0xff]
      %2281 = vrot.lane.b32.xlu0 %v1245, 104
      %v2282 = vpop.permute.xlu0 %2281
      %2283 = vrot.lane.b32.xlu0 %v1246, 104
      %v2284 = vpop.permute.xlu0 %2283
      %2285 = vrot.lane.b32.xlu0 %v1247, 104
      %v2286 = vpop.permute.xlu0 %2285
      %2287 = vrot.lane.b32.xlu0 %v1248, 104
      %v2288 = vpop.permute.xlu0 %2287
      %2289 = vrot.lane.b32.xlu0 %v1249, 104
      %v2290 = vpop.permute.xlu0 %2289
      %2291 = vrot.lane.b32.xlu0 %v1250, 104
      %v2292 = vpop.permute.xlu0 %2291
      %2293 = vrot.lane.b32.xlu0 %v1251, 104
      %v2294 = vpop.permute.xlu0 %2293
      %2295 = vrot.lane.b32.xlu0 %v1252, 104
      %v2296 = vpop.permute.xlu0 %2295
      %2297 = vrot.lane.b32.xlu0 %v1253, 104
      %v2298 = vpop.permute.xlu0 %2297
      %2299 = vrot.lane.b32.xlu0 %v1254, 104
      %v2300 = vpop.permute.xlu0 %2299
      %2301 = vrot.lane.b32.xlu0 %v1255, 104
      %v2302 = vpop.permute.xlu0 %2301
      %2303 = vrot.lane.b32.xlu0 %v1256, 104
      %v2304 = vpop.permute.xlu0 %2303
      %2305 = vrot.lane.b32.xlu0 %v1257, 104
      %v2306 = vpop.permute.xlu0 %2305
      %2307 = vrot.lane.b32.xlu0 %v1258, 104
      %v2308 = vpop.permute.xlu0 %2307
      %2309 = vrot.lane.b32.xlu0 %v1259, 104
      %v2310 = vpop.permute.xlu0 %2309
      %2311 = vrot.lane.b32.xlu0 %v1260, 104
      %v2312 = vpop.permute.xlu0 %2311
      %2313 = vrot.lane.b32.xlu0 %v1261, 104
      %v2314 = vpop.permute.xlu0 %2313
      %2315 = vrot.lane.b32.xlu0 %v1262, 104
      %v2316 = vpop.permute.xlu0 %2315
      %2317 = vrot.lane.b32.xlu0 %v1263, 104
      %v2318 = vpop.permute.xlu0 %2317
      %2319 = vrot.lane.b32.xlu0 %v1264, 104
      %v2320 = vpop.permute.xlu0 %2319
      %2321 = vrot.lane.b32.xlu0 %v1265, 104
      %v2322 = vpop.permute.xlu0 %2321
      %2323 = vrot.lane.b32.xlu0 %v1266, 104
      %v2324 = vpop.permute.xlu0 %2323
      %2325 = vrot.lane.b32.xlu0 %v1267, 104
      %v2326 = vpop.permute.xlu0 %2325
      %2327 = vrot.lane.b32.xlu0 %v1268, 104
      %v2328 = vpop.permute.xlu0 %2327
      %2329 = vrot.lane.b32.xlu0 %v1269, 104
      %v2330 = vpop.permute.xlu0 %2329
      %2331 = vrot.lane.b32.xlu0 %v1270, 104
      %v2332 = vpop.permute.xlu0 %2331
      %2333 = vrot.lane.b32.xlu0 %v1271, 104
      %v2334 = vpop.permute.xlu0 %2333
      %2335 = vrot.lane.b32.xlu0 %v1272, 104
      %v2336 = vpop.permute.xlu0 %2335
      %2337 = vrot.lane.b32.xlu0 %v1273, 104
      %v2338 = vpop.permute.xlu0 %2337
      %2339 = vrot.lane.b32.xlu0 %v1274, 104
      %v2340 = vpop.permute.xlu0 %2339
      %2341 = vrot.lane.b32.xlu0 %v1275, 104
      %v2342 = vpop.permute.xlu0 %2341
      %2343 = vrot.lane.b32.xlu0 %v1276, 104
      %v2344 = vpop.permute.xlu0 %2343
      %2345 = vrot.lane.b32.xlu0 %v1277, 104
      %v2346 = vpop.permute.xlu0 %2345
      %2347 = vrot.lane.b32.xlu0 %v1278, 104
      %v2348 = vpop.permute.xlu0 %2347
      %2349 = vrot.lane.b32.xlu0 %v1279, 104
      %v2350 = vpop.permute.xlu0 %2349
      %2351 = vrot.lane.b32.xlu0 %v1280, 104
      %v2352 = vpop.permute.xlu0 %2351
      %2353 = vrot.lane.b32.xlu0 %v1281, 104
      %v2354 = vpop.permute.xlu0 %2353
      %2355 = vrot.lane.b32.xlu0 %v1282, 104
      %v2356 = vpop.permute.xlu0 %2355
      %2357 = vrot.lane.b32.xlu0 %v1283, 104
      %v2358 = vpop.permute.xlu0 %2357
      %2359 = vrot.lane.b32.xlu0 %v1284, 104
      %v2360 = vpop.permute.xlu0 %2359
      %2361 = vrot.lane.b32.xlu0 %v1285, 104
      %v2362 = vpop.permute.xlu0 %2361
      %2363 = vrot.lane.b32.xlu0 %v1286, 104
      %v2364 = vpop.permute.xlu0 %2363
      %2365 = vrot.lane.b32.xlu0 %v1287, 104
      %v2366 = vpop.permute.xlu0 %2365
      %2367 = vrot.lane.b32.xlu0 %v1288, 104
      %v2368 = vpop.permute.xlu0 %2367
      %2369 = vrot.lane.b32.xlu0 %v1289, 104
      %v2370 = vpop.permute.xlu0 %2369
      %2371 = vrot.lane.b32.xlu0 %v1290, 104
      %v2372 = vpop.permute.xlu0 %2371
      %2373 = vrot.lane.b32.xlu0 %v1291, 104
      %v2374 = vpop.permute.xlu0 %2373
      %2375 = vrot.lane.b32.xlu0 %v1292, 104
      %v2376 = vpop.permute.xlu0 %2375
      %2377 = vrot.lane.b32.xlu0 %v1293, 104
      %v2378 = vpop.permute.xlu0 %2377
      %2379 = vrot.lane.b32.xlu0 %v1294, 104
      %v2380 = vpop.permute.xlu0 %2379
      %2381 = vrot.lane.b32.xlu0 %v1295, 104
      %v2382 = vpop.permute.xlu0 %2381
      %2383 = vrot.lane.b32.xlu0 %v1296, 104
      %v2384 = vpop.permute.xlu0 %2383
      %2385 = vrot.lane.b32.xlu0 %v1297, 104
      %v2386 = vpop.permute.xlu0 %2385
      %2387 = vrot.lane.b32.xlu0 %v1298, 104
      %v2388 = vpop.permute.xlu0 %2387
      %2389 = vrot.lane.b32.xlu0 %v1299, 104
      %v2390 = vpop.permute.xlu0 %2389
      %2391 = vrot.lane.b32.xlu0 %v1300, 104
      %v2392 = vpop.permute.xlu0 %2391
      %2393 = vrot.lane.b32.xlu0 %v1301, 104
      %v2394 = vpop.permute.xlu0 %2393
      %2395 = vrot.lane.b32.xlu0 %v1302, 104
      %v2396 = vpop.permute.xlu0 %2395
      %2397 = vrot.lane.b32.xlu0 %v1303, 104
      %v2398 = vpop.permute.xlu0 %2397
      %2399 = vrot.lane.b32.xlu0 %v1304, 104
      %v2400 = vpop.permute.xlu0 %2399
      %2401 = vrot.lane.b32.xlu0 %v1305, 104
      %v2402 = vpop.permute.xlu0 %2401
      %2403 = vrot.lane.b32.xlu0 %v1306, 104
      %v2404 = vpop.permute.xlu0 %2403
      %2405 = vrot.lane.b32.xlu0 %v1307, 104
      %v2406 = vpop.permute.xlu0 %2405
      %2407 = vrot.lane.b32.xlu0 %v1308, 104
      %v2408 = vpop.permute.xlu0 %2407
      %2409 = vrot.lane.b32.xlu0 %v1309, 104
      %v2410 = vpop.permute.xlu0 %2409
      %2411 = vrot.lane.b32.xlu0 %v1310, 104
      %v2412 = vpop.permute.xlu0 %2411
      %2413 = vrot.lane.b32.xlu0 %v1311, 104
      %v2414 = vpop.permute.xlu0 %2413
      %2415 = vrot.lane.b32.xlu0 %v1312, 104
      %v2416 = vpop.permute.xlu0 %2415
      %2417 = vrot.lane.b32.xlu0 %v1313, 104
      %v2418 = vpop.permute.xlu0 %2417
      %2419 = vrot.lane.b32.xlu0 %v1314, 104
      %v2420 = vpop.permute.xlu0 %2419
      %2421 = vrot.lane.b32.xlu0 %v2203, 104
      %v2422 = vpop.permute.xlu0 %2421
      %2423 = vrot.lane.b32.xlu0 %v2204, 104
      %v2424 = vpop.permute.xlu0 %2423
      %2425 = vrot.lane.b32.xlu0 %v2205, 104
      %v2426 = vpop.permute.xlu0 %2425
      %2427 = vrot.lane.b32.xlu0 %v2206, 104
      %v2428 = vpop.permute.xlu0 %2427
      %v2503 = vadd.f32 %v2129, %v2282
      %v2504 = vadd.f32 %v2130, %v2284
      %v2505 = vadd.f32 %v2131, %v2286
      %v2506 = vadd.f32 %v2132, %v2288
      %v2507 = vadd.f32 %v2133, %v2290
      %v2508 = vadd.f32 %v2134, %v2292
      %v2509 = vadd.f32 %v2135, %v2294
      %v2510 = vadd.f32 %v2136, %v2296
      %v2511 = vadd.f32 %v2137, %v2298
      %v2512 = vadd.f32 %v2138, %v2300
      %v2513 = vadd.f32 %v2139, %v2302
      %v2514 = vadd.f32 %v2140, %v2304
      %v2515 = vadd.f32 %v2141, %v2306
      %v2516 = vadd.f32 %v2142, %v2308
      %v2517 = vadd.f32 %v2143, %v2310
      %v2518 = vadd.f32 %v2144, %v2312
      %v2519 = vadd.f32 %v2145, %v2314
      %v2520 = vadd.f32 %v2146, %v2316
      %v2521 = vadd.f32 %v2147, %v2318
      %v2522 = vadd.f32 %v2148, %v2320
      %v2523 = vadd.f32 %v2149, %v2322
      %v2524 = vadd.f32 %v2150, %v2324
      %v2525 = vadd.f32 %v2151, %v2326
      %v2526 = vadd.f32 %v2152, %v2328
      %v2527 = vadd.f32 %v2153, %v2330
      %v2528 = vadd.f32 %v2154, %v2332
      %v2529 = vadd.f32 %v2155, %v2334
      %v2530 = vadd.f32 %v2156, %v2336
      %v2531 = vadd.f32 %v2157, %v2338
      %v2532 = vadd.f32 %v2158, %v2340
      %v2533 = vadd.f32 %v2159, %v2342
      %v2534 = vadd.f32 %v2160, %v2344
      %v2535 = vadd.f32 %v2161, %v2346
      %v2536 = vadd.f32 %v2162, %v2348
      %v2537 = vadd.f32 %v2163, %v2350
      %v2538 = vadd.f32 %v2164, %v2352
      %v2539 = vadd.f32 %v2165, %v2354
      %v2540 = vadd.f32 %v2166, %v2356
      %v2541 = vadd.f32 %v2167, %v2358
      %v2542 = vadd.f32 %v2168, %v2360
      %v2543 = vadd.f32 %v2169, %v2362
      %v2544 = vadd.f32 %v2170, %v2364
      %v2545 = vadd.f32 %v2171, %v2366
      %v2546 = vadd.f32 %v2172, %v2368
      %v2547 = vadd.f32 %v2173, %v2370
      %v2548 = vadd.f32 %v2174, %v2372
      %v2549 = vadd.f32 %v2175, %v2374
      %v2550 = vadd.f32 %v2176, %v2376
      %v2551 = vadd.f32 %v2177, %v2378
      %v2552 = vadd.f32 %v2178, %v2380
      %v2553 = vadd.f32 %v2179, %v2382
      %v2554 = vadd.f32 %v2180, %v2384
      %v2555 = vadd.f32 %v2181, %v2386
      %v2556 = vadd.f32 %v2182, %v2388
      %v2557 = vadd.f32 %v2183, %v2390
      %v2558 = vadd.f32 %v2184, %v2392
      %v2559 = vadd.f32 %v2185, %v2394
      %v2560 = vadd.f32 %v2186, %v2396
      %v2561 = vadd.f32 %v2187, %v2398
      %v2562 = vadd.f32 %v2188, %v2400
      %v2563 = vadd.f32 %v2189, %v2402
      %v2564 = vadd.f32 %v2190, %v2404
      %v2565 = vadd.f32 %v2191, %v2406
      %v2566 = vadd.f32 %v2192, %v2408
      %v2567 = vadd.f32 %v2193, %v2410
      %v2568 = vadd.f32 %v2194, %v2412
      %v2569 = vadd.f32 %v2195, %v2414
      %v2570 = vadd.f32 %v2196, %v2416
      %v2571 = vadd.f32 %v2197, %v2418
      %v2572 = vadd.f32 %v2198, %v2420
      %v2573 = vadd.f32 %v2199, %v2422
      %v2574 = vadd.f32 %v2200, %v2424
      %v2575 = vadd.f32 %v2201, %v2426
      %v2576 = vadd.f32 %v2202, %v2428
      %v2577 = vld [vmem:[#allocation2 + $0x258] sm:$0xff]
      %v2578 = vld [vmem:[#allocation2 + $0x260] sm:$0xff]
      %v2579 = vld [vmem:[#allocation2 + $0x268] sm:$0xff]
      %v2580 = vld [vmem:[#allocation2 + $0x270] sm:$0xff]
      %2585 = vrot.lane.b32.xlu0 %v1319, 96
      %v2586 = vpop.permute.xlu0 %2585
      %2587 = vrot.lane.b32.xlu0 %v1320, 96
      %v2588 = vpop.permute.xlu0 %2587
      %2589 = vrot.lane.b32.xlu0 %v1321, 96
      %v2590 = vpop.permute.xlu0 %2589
      %2591 = vrot.lane.b32.xlu0 %v1322, 96
      %v2592 = vpop.permute.xlu0 %2591
      %2593 = vrot.lane.b32.xlu0 %v1323, 96
      %v2594 = vpop.permute.xlu0 %2593
      %2595 = vrot.lane.b32.xlu0 %v1324, 96
      %v2596 = vpop.permute.xlu0 %2595
      %2597 = vrot.lane.b32.xlu0 %v1325, 96
      %v2598 = vpop.permute.xlu0 %2597
      %2599 = vrot.lane.b32.xlu0 %v1326, 96
      %v2600 = vpop.permute.xlu0 %2599
      %2601 = vrot.lane.b32.xlu0 %v1327, 96
      %v2602 = vpop.permute.xlu0 %2601
      %2603 = vrot.lane.b32.xlu0 %v1328, 96
      %v2604 = vpop.permute.xlu0 %2603
      %2605 = vrot.lane.b32.xlu0 %v1329, 96
      %v2606 = vpop.permute.xlu0 %2605
      %2607 = vrot.lane.b32.xlu0 %v1330, 96
      %v2608 = vpop.permute.xlu0 %2607
      %2609 = vrot.lane.b32.xlu0 %v1331, 96
      %v2610 = vpop.permute.xlu0 %2609
      %2611 = vrot.lane.b32.xlu0 %v1332, 96
      %v2612 = vpop.permute.xlu0 %2611
      %2613 = vrot.lane.b32.xlu0 %v1333, 96
      %v2614 = vpop.permute.xlu0 %2613
      %2615 = vrot.lane.b32.xlu0 %v1334, 96
      %v2616 = vpop.permute.xlu0 %2615
      %2617 = vrot.lane.b32.xlu0 %v1335, 96
      %v2618 = vpop.permute.xlu0 %2617
      %2619 = vrot.lane.b32.xlu0 %v1336, 96
      %v2620 = vpop.permute.xlu0 %2619
      %2621 = vrot.lane.b32.xlu0 %v1337, 96
      %v2622 = vpop.permute.xlu0 %2621
      %2623 = vrot.lane.b32.xlu0 %v1338, 96
      %v2624 = vpop.permute.xlu0 %2623
      %2625 = vrot.lane.b32.xlu0 %v1339, 96
      %v2626 = vpop.permute.xlu0 %2625
      %2627 = vrot.lane.b32.xlu0 %v1340, 96
      %v2628 = vpop.permute.xlu0 %2627
      %2629 = vrot.lane.b32.xlu0 %v1341, 96
      %v2630 = vpop.permute.xlu0 %2629
      %2631 = vrot.lane.b32.xlu0 %v1342, 96
      %v2632 = vpop.permute.xlu0 %2631
      %2633 = vrot.lane.b32.xlu0 %v1343, 96
      %v2634 = vpop.permute.xlu0 %2633
      %2635 = vrot.lane.b32.xlu0 %v1344, 96
      %v2636 = vpop.permute.xlu0 %2635
      %2637 = vrot.lane.b32.xlu0 %v1345, 96
      %v2638 = vpop.permute.xlu0 %2637
      %2639 = vrot.lane.b32.xlu0 %v1346, 96
      %v2640 = vpop.permute.xlu0 %2639
      %2641 = vrot.lane.b32.xlu0 %v1347, 96
      %v2642 = vpop.permute.xlu0 %2641
      %2643 = vrot.lane.b32.xlu0 %v1348, 96
      %v2644 = vpop.permute.xlu0 %2643
      %2645 = vrot.lane.b32.xlu0 %v1349, 96
      %v2646 = vpop.permute.xlu0 %2645
      %2647 = vrot.lane.b32.xlu0 %v1350, 96
      %v2648 = vpop.permute.xlu0 %2647
      %2649 = vrot.lane.b32.xlu0 %v1351, 96
      %v2650 = vpop.permute.xlu0 %2649
      %2651 = vrot.lane.b32.xlu0 %v1352, 96
      %v2652 = vpop.permute.xlu0 %2651
      %2653 = vrot.lane.b32.xlu0 %v1353, 96
      %v2654 = vpop.permute.xlu0 %2653
      %2655 = vrot.lane.b32.xlu0 %v1354, 96
      %v2656 = vpop.permute.xlu0 %2655
      %2657 = vrot.lane.b32.xlu0 %v1355, 96
      %v2658 = vpop.permute.xlu0 %2657
      %2659 = vrot.lane.b32.xlu0 %v1356, 96
      %v2660 = vpop.permute.xlu0 %2659
      %2661 = vrot.lane.b32.xlu0 %v1357, 96
      %v2662 = vpop.permute.xlu0 %2661
      %2663 = vrot.lane.b32.xlu0 %v1358, 96
      %v2664 = vpop.permute.xlu0 %2663
      %2665 = vrot.lane.b32.xlu0 %v1359, 96
      %v2666 = vpop.permute.xlu0 %2665
      %2667 = vrot.lane.b32.xlu0 %v1360, 96
      %v2668 = vpop.permute.xlu0 %2667
      %2669 = vrot.lane.b32.xlu0 %v1361, 96
      %v2670 = vpop.permute.xlu0 %2669
      %2671 = vrot.lane.b32.xlu0 %v1362, 96
      %v2672 = vpop.permute.xlu0 %2671
      %2673 = vrot.lane.b32.xlu0 %v1363, 96
      %v2674 = vpop.permute.xlu0 %2673
      %2675 = vrot.lane.b32.xlu0 %v1364, 96
      %v2676 = vpop.permute.xlu0 %2675
      %2677 = vrot.lane.b32.xlu0 %v1365, 96
      %v2678 = vpop.permute.xlu0 %2677
      %2679 = vrot.lane.b32.xlu0 %v1366, 96
      %v2680 = vpop.permute.xlu0 %2679
      %2681 = vrot.lane.b32.xlu0 %v1367, 96
      %v2682 = vpop.permute.xlu0 %2681
      %2683 = vrot.lane.b32.xlu0 %v1368, 96
      %v2684 = vpop.permute.xlu0 %2683
      %2685 = vrot.lane.b32.xlu0 %v1369, 96
      %v2686 = vpop.permute.xlu0 %2685
      %2687 = vrot.lane.b32.xlu0 %v1370, 96
      %v2688 = vpop.permute.xlu0 %2687
      %2689 = vrot.lane.b32.xlu0 %v1371, 96
      %v2690 = vpop.permute.xlu0 %2689
      %2691 = vrot.lane.b32.xlu0 %v1372, 96
      %v2692 = vpop.permute.xlu0 %2691
      %2693 = vrot.lane.b32.xlu0 %v1373, 96
      %v2694 = vpop.permute.xlu0 %2693
      %2695 = vrot.lane.b32.xlu0 %v1374, 96
      %v2696 = vpop.permute.xlu0 %2695
      %2697 = vrot.lane.b32.xlu0 %v1375, 96
      %v2698 = vpop.permute.xlu0 %2697
      %2699 = vrot.lane.b32.xlu0 %v1376, 96
      %v2700 = vpop.permute.xlu0 %2699
      %2701 = vrot.lane.b32.xlu0 %v1377, 96
      %v2702 = vpop.permute.xlu0 %2701
      %2703 = vrot.lane.b32.xlu0 %v1378, 96
      %v2704 = vpop.permute.xlu0 %2703
      %2705 = vrot.lane.b32.xlu0 %v1379, 96
      %v2706 = vpop.permute.xlu0 %2705
      %2707 = vrot.lane.b32.xlu0 %v1380, 96
      %v2708 = vpop.permute.xlu0 %2707
      %2709 = vrot.lane.b32.xlu0 %v1381, 96
      %v2710 = vpop.permute.xlu0 %2709
      %2711 = vrot.lane.b32.xlu0 %v1382, 96
      %v2712 = vpop.permute.xlu0 %2711
      %2713 = vrot.lane.b32.xlu0 %v1383, 96
      %v2714 = vpop.permute.xlu0 %2713
      %2715 = vrot.lane.b32.xlu0 %v1384, 96
      %v2716 = vpop.permute.xlu0 %2715
      %2717 = vrot.lane.b32.xlu0 %v1385, 96
      %v2718 = vpop.permute.xlu0 %2717
      %2719 = vrot.lane.b32.xlu0 %v1386, 96
      %v2720 = vpop.permute.xlu0 %2719
      %2721 = vrot.lane.b32.xlu0 %v1387, 96
      %v2722 = vpop.permute.xlu0 %2721
      %2723 = vrot.lane.b32.xlu0 %v1388, 96
      %v2724 = vpop.permute.xlu0 %2723
      %2725 = vrot.lane.b32.xlu0 %v2577, 96
      %v2726 = vpop.permute.xlu0 %2725
      %2727 = vrot.lane.b32.xlu0 %v2578, 96
      %v2728 = vpop.permute.xlu0 %2727
      %2729 = vrot.lane.b32.xlu0 %v2579, 96
      %v2730 = vpop.permute.xlu0 %2729
      %2731 = vrot.lane.b32.xlu0 %v2580, 96
      %v2732 = vpop.permute.xlu0 %2731
      %v2807 = vadd.f32 %v2503, %v2586
      %v2808 = vadd.f32 %v2504, %v2588
      %v2809 = vadd.f32 %v2505, %v2590
      %v2810 = vadd.f32 %v2506, %v2592
      %v2811 = vadd.f32 %v2507, %v2594
      %v2812 = vadd.f32 %v2508, %v2596
      %v2813 = vadd.f32 %v2509, %v2598
      %v2814 = vadd.f32 %v2510, %v2600
      %v2815 = vadd.f32 %v2511, %v2602
      %v2816 = vadd.f32 %v2512, %v2604
      %v2817 = vadd.f32 %v2513, %v2606
      %v2818 = vadd.f32 %v2514, %v2608
      %v2819 = vadd.f32 %v2515, %v2610
      %v2820 = vadd.f32 %v2516, %v2612
      %v2821 = vadd.f32 %v2517, %v2614
      %v2822 = vadd.f32 %v2518, %v2616
      %v2823 = vadd.f32 %v2519, %v2618
      %v2824 = vadd.f32 %v2520, %v2620
      %v2825 = vadd.f32 %v2521, %v2622
      %v2826 = vadd.f32 %v2522, %v2624
      %v2827 = vadd.f32 %v2523, %v2626
      %v2828 = vadd.f32 %v2524, %v2628
      %v2829 = vadd.f32 %v2525, %v2630
      %v2830 = vadd.f32 %v2526, %v2632
      %v2831 = vadd.f32 %v2527, %v2634
      %v2832 = vadd.f32 %v2528, %v2636
      %v2833 = vadd.f32 %v2529, %v2638
      %v2834 = vadd.f32 %v2530, %v2640
      %v2835 = vadd.f32 %v2531, %v2642
      %v2836 = vadd.f32 %v2532, %v2644
      %v2837 = vadd.f32 %v2533, %v2646
      %v2838 = vadd.f32 %v2534, %v2648
      %v2839 = vadd.f32 %v2535, %v2650
      %v2840 = vadd.f32 %v2536, %v2652
      %v2841 = vadd.f32 %v2537, %v2654
      %v2842 = vadd.f32 %v2538, %v2656
      %v2843 = vadd.f32 %v2539, %v2658
      %v2844 = vadd.f32 %v2540, %v2660
      %v2845 = vadd.f32 %v2541, %v2662
      %v2846 = vadd.f32 %v2542, %v2664
      %v2847 = vadd.f32 %v2543, %v2666
      %v2848 = vadd.f32 %v2544, %v2668
      %v2849 = vadd.f32 %v2545, %v2670
      %v2850 = vadd.f32 %v2546, %v2672
      %v2851 = vadd.f32 %v2547, %v2674
      %v2852 = vadd.f32 %v2548, %v2676
      %v2853 = vadd.f32 %v2549, %v2678
      %v2854 = vadd.f32 %v2550, %v2680
      %v2855 = vadd.f32 %v2551, %v2682
      %v2856 = vadd.f32 %v2552, %v2684
      %v2857 = vadd.f32 %v2553, %v2686
      %v2858 = vadd.f32 %v2554, %v2688
      %v2859 = vadd.f32 %v2555, %v2690
      %v2860 = vadd.f32 %v2556, %v2692
      %v2861 = vadd.f32 %v2557, %v2694
      %v2862 = vadd.f32 %v2558, %v2696
      %v2863 = vadd.f32 %v2559, %v2698
      %v2864 = vadd.f32 %v2560, %v2700
      %v2865 = vadd.f32 %v2561, %v2702
      %v2866 = vadd.f32 %v2562, %v2704
      %v2867 = vadd.f32 %v2563, %v2706
      %v2868 = vadd.f32 %v2564, %v2708
      %v2869 = vadd.f32 %v2565, %v2710
      %v2870 = vadd.f32 %v2566, %v2712
      %v2871 = vadd.f32 %v2567, %v2714
      %v2872 = vadd.f32 %v2568, %v2716
      %v2873 = vadd.f32 %v2569, %v2718
      %v2874 = vadd.f32 %v2570, %v2720
      %v2875 = vadd.f32 %v2571, %v2722
      %v2876 = vadd.f32 %v2572, %v2724
      %v2877 = vadd.f32 %v2573, %v2726
      %v2878 = vadd.f32 %v2574, %v2728
      %v2879 = vadd.f32 %v2575, %v2730
      %v2880 = vadd.f32 %v2576, %v2732
      %v2881 = vld [vmem:[#allocation2 + $0x259] sm:$0xff]
      %v2882 = vld [vmem:[#allocation2 + $0x261] sm:$0xff]
      %v2883 = vld [vmem:[#allocation2 + $0x269] sm:$0xff]
      %v2884 = vld [vmem:[#allocation2 + $0x271] sm:$0xff]
      %2889 = vrot.lane.b32.xlu0 %v1763, 88
      %v2890 = vpop.permute.xlu0 %2889
      %2891 = vrot.lane.b32.xlu0 %v1764, 88
      %v2892 = vpop.permute.xlu0 %2891
      %2893 = vrot.lane.b32.xlu0 %v1765, 88
      %v2894 = vpop.permute.xlu0 %2893
      %2895 = vrot.lane.b32.xlu0 %v1766, 88
      %v2896 = vpop.permute.xlu0 %2895
      %2897 = vrot.lane.b32.xlu0 %v1767, 88
      %v2898 = vpop.permute.xlu0 %2897
      %2899 = vrot.lane.b32.xlu0 %v1768, 88
      %v2900 = vpop.permute.xlu0 %2899
      %2901 = vrot.lane.b32.xlu0 %v1769, 88
      %v2902 = vpop.permute.xlu0 %2901
      %2903 = vrot.lane.b32.xlu0 %v1770, 88
      %v2904 = vpop.permute.xlu0 %2903
      %2905 = vrot.lane.b32.xlu0 %v1771, 88
      %v2906 = vpop.permute.xlu0 %2905
      %2907 = vrot.lane.b32.xlu0 %v1772, 88
      %v2908 = vpop.permute.xlu0 %2907
      %2909 = vrot.lane.b32.xlu0 %v1773, 88
      %v2910 = vpop.permute.xlu0 %2909
      %2911 = vrot.lane.b32.xlu0 %v1774, 88
      %v2912 = vpop.permute.xlu0 %2911
      %2913 = vrot.lane.b32.xlu0 %v1775, 88
      %v2914 = vpop.permute.xlu0 %2913
      %2915 = vrot.lane.b32.xlu0 %v1776, 88
      %v2916 = vpop.permute.xlu0 %2915
      %2917 = vrot.lane.b32.xlu0 %v1777, 88
      %v2918 = vpop.permute.xlu0 %2917
      %2919 = vrot.lane.b32.xlu0 %v1778, 88
      %v2920 = vpop.permute.xlu0 %2919
      %2921 = vrot.lane.b32.xlu0 %v1779, 88
      %v2922 = vpop.permute.xlu0 %2921
      %2923 = vrot.lane.b32.xlu0 %v1780, 88
      %v2924 = vpop.permute.xlu0 %2923
      %2925 = vrot.lane.b32.xlu0 %v1781, 88
      %v2926 = vpop.permute.xlu0 %2925
      %2927 = vrot.lane.b32.xlu0 %v1782, 88
      %v2928 = vpop.permute.xlu0 %2927
      %2929 = vrot.lane.b32.xlu0 %v1783, 88
      %v2930 = vpop.permute.xlu0 %2929
      %2931 = vrot.lane.b32.xlu0 %v1784, 88
      %v2932 = vpop.permute.xlu0 %2931
      %2933 = vrot.lane.b32.xlu0 %v1785, 88
      %v2934 = vpop.permute.xlu0 %2933
      %2935 = vrot.lane.b32.xlu0 %v1786, 88
      %v2936 = vpop.permute.xlu0 %2935
      %2937 = vrot.lane.b32.xlu0 %v1787, 88
      %v2938 = vpop.permute.xlu0 %2937
      %2939 = vrot.lane.b32.xlu0 %v1788, 88
      %v2940 = vpop.permute.xlu0 %2939
      %2941 = vrot.lane.b32.xlu0 %v1789, 88
      %v2942 = vpop.permute.xlu0 %2941
      %2943 = vrot.lane.b32.xlu0 %v1790, 88
      %v2944 = vpop.permute.xlu0 %2943
      %2945 = vrot.lane.b32.xlu0 %v1791, 88
      %v2946 = vpop.permute.xlu0 %2945
      %2947 = vrot.lane.b32.xlu0 %v1792, 88
      %v2948 = vpop.permute.xlu0 %2947
      %2949 = vrot.lane.b32.xlu0 %v1793, 88
      %v2950 = vpop.permute.xlu0 %2949
      %2951 = vrot.lane.b32.xlu0 %v1794, 88
      %v2952 = vpop.permute.xlu0 %2951
      %2953 = vrot.lane.b32.xlu0 %v1795, 88
      %v2954 = vpop.permute.xlu0 %2953
      %2955 = vrot.lane.b32.xlu0 %v1796, 88
      %v2956 = vpop.permute.xlu0 %2955
      %2957 = vrot.lane.b32.xlu0 %v1797, 88
      %v2958 = vpop.permute.xlu0 %2957
      %2959 = vrot.lane.b32.xlu0 %v1798, 88
      %v2960 = vpop.permute.xlu0 %2959
      %2961 = vrot.lane.b32.xlu0 %v1799, 88
      %v2962 = vpop.permute.xlu0 %2961
      %2963 = vrot.lane.b32.xlu0 %v1800, 88
      %v2964 = vpop.permute.xlu0 %2963
      %2965 = vrot.lane.b32.xlu0 %v1801, 88
      %v2966 = vpop.permute.xlu0 %2965
      %2967 = vrot.lane.b32.xlu0 %v1802, 88
      %v2968 = vpop.permute.xlu0 %2967
      %2969 = vrot.lane.b32.xlu0 %v1803, 88
      %v2970 = vpop.permute.xlu0 %2969
      %2971 = vrot.lane.b32.xlu0 %v1804, 88
      %v2972 = vpop.permute.xlu0 %2971
      %2973 = vrot.lane.b32.xlu0 %v1805, 88
      %v2974 = vpop.permute.xlu0 %2973
      %2975 = vrot.lane.b32.xlu0 %v1806, 88
      %v2976 = vpop.permute.xlu0 %2975
      %2977 = vrot.lane.b32.xlu0 %v1807, 88
      %v2978 = vpop.permute.xlu0 %2977
      %2979 = vrot.lane.b32.xlu0 %v1808, 88
      %v2980 = vpop.permute.xlu0 %2979
      %2981 = vrot.lane.b32.xlu0 %v1809, 88
      %v2982 = vpop.permute.xlu0 %2981
      %2983 = vrot.lane.b32.xlu0 %v1810, 88
      %v2984 = vpop.permute.xlu0 %2983
      %2985 = vrot.lane.b32.xlu0 %v1811, 88
      %v2986 = vpop.permute.xlu0 %2985
      %2987 = vrot.lane.b32.xlu0 %v1812, 88
      %v2988 = vpop.permute.xlu0 %2987
      %2989 = vrot.lane.b32.xlu0 %v1813, 88
      %v2990 = vpop.permute.xlu0 %2989
      %2991 = vrot.lane.b32.xlu0 %v1814, 88
      %v2992 = vpop.permute.xlu0 %2991
      %2993 = vrot.lane.b32.xlu0 %v1815, 88
      %v2994 = vpop.permute.xlu0 %2993
      %2995 = vrot.lane.b32.xlu0 %v1816, 88
      %v2996 = vpop.permute.xlu0 %2995
      %2997 = vrot.lane.b32.xlu0 %v1817, 88
      %v2998 = vpop.permute.xlu0 %2997
      %2999 = vrot.lane.b32.xlu0 %v1818, 88
      %v3000 = vpop.permute.xlu0 %2999
      %3001 = vrot.lane.b32.xlu0 %v1819, 88
      %v3002 = vpop.permute.xlu0 %3001
      %3003 = vrot.lane.b32.xlu0 %v1820, 88
      %v3004 = vpop.permute.xlu0 %3003
      %3005 = vrot.lane.b32.xlu0 %v1821, 88
      %v3006 = vpop.permute.xlu0 %3005
      %3007 = vrot.lane.b32.xlu0 %v1822, 88
      %v3008 = vpop.permute.xlu0 %3007
      %3009 = vrot.lane.b32.xlu0 %v1823, 88
      %v3010 = vpop.permute.xlu0 %3009
      %3011 = vrot.lane.b32.xlu0 %v1824, 88
      %v3012 = vpop.permute.xlu0 %3011
      %3013 = vrot.lane.b32.xlu0 %v1825, 88
      %v3014 = vpop.permute.xlu0 %3013
      %3015 = vrot.lane.b32.xlu0 %v1826, 88
      %v3016 = vpop.permute.xlu0 %3015
      %3017 = vrot.lane.b32.xlu0 %v1827, 88
      %v3018 = vpop.permute.xlu0 %3017
      %3019 = vrot.lane.b32.xlu0 %v1828, 88
      %v3020 = vpop.permute.xlu0 %3019
      %3021 = vrot.lane.b32.xlu0 %v1829, 88
      %v3022 = vpop.permute.xlu0 %3021
      %3023 = vrot.lane.b32.xlu0 %v1830, 88
      %v3024 = vpop.permute.xlu0 %3023
      %3025 = vrot.lane.b32.xlu0 %v1831, 88
      %v3026 = vpop.permute.xlu0 %3025
      %3027 = vrot.lane.b32.xlu0 %v1832, 88
      %v3028 = vpop.permute.xlu0 %3027
      %3029 = vrot.lane.b32.xlu0 %v2881, 88
      %v3030 = vpop.permute.xlu0 %3029
      %3031 = vrot.lane.b32.xlu0 %v2882, 88
      %v3032 = vpop.permute.xlu0 %3031
      %3033 = vrot.lane.b32.xlu0 %v2883, 88
      %v3034 = vpop.permute.xlu0 %3033
      %3035 = vrot.lane.b32.xlu0 %v2884, 88
      %v3036 = vpop.permute.xlu0 %3035
      %v3111 = vadd.f32 %v2807, %v2890
      %v3112 = vadd.f32 %v2808, %v2892
      %v3113 = vadd.f32 %v2809, %v2894
      %v3114 = vadd.f32 %v2810, %v2896
      %v3115 = vadd.f32 %v2811, %v2898
      %v3116 = vadd.f32 %v2812, %v2900
      %v3117 = vadd.f32 %v2813, %v2902
      %v3118 = vadd.f32 %v2814, %v2904
      %v3119 = vadd.f32 %v2815, %v2906
      %v3120 = vadd.f32 %v2816, %v2908
      %v3121 = vadd.f32 %v2817, %v2910
      %v3122 = vadd.f32 %v2818, %v2912
      %v3123 = vadd.f32 %v2819, %v2914
      %v3124 = vadd.f32 %v2820, %v2916
      %v3125 = vadd.f32 %v2821, %v2918
      %v3126 = vadd.f32 %v2822, %v2920
      %v3127 = vadd.f32 %v2823, %v2922
      %v3128 = vadd.f32 %v2824, %v2924
      %v3129 = vadd.f32 %v2825, %v2926
      %v3130 = vadd.f32 %v2826, %v2928
      %v3131 = vadd.f32 %v2827, %v2930
      %v3132 = vadd.f32 %v2828, %v2932
      %v3133 = vadd.f32 %v2829, %v2934
      %v3134 = vadd.f32 %v2830, %v2936
      %v3135 = vadd.f32 %v2831, %v2938
      %v3136 = vadd.f32 %v2832, %v2940
      %v3137 = vadd.f32 %v2833, %v2942
      %v3138 = vadd.f32 %v2834, %v2944
      %v3139 = vadd.f32 %v2835, %v2946
      %v3140 = vadd.f32 %v2836, %v2948
      %v3141 = vadd.f32 %v2837, %v2950
      %v3142 = vadd.f32 %v2838, %v2952
      %v3143 = vadd.f32 %v2839, %v2954
      %v3144 = vadd.f32 %v2840, %v2956
      %v3145 = vadd.f32 %v2841, %v2958
      %v3146 = vadd.f32 %v2842, %v2960
      %v3147 = vadd.f32 %v2843, %v2962
      %v3148 = vadd.f32 %v2844, %v2964
      %v3149 = vadd.f32 %v2845, %v2966
      %v3150 = vadd.f32 %v2846, %v2968
      %v3151 = vadd.f32 %v2847, %v2970
      %v3152 = vadd.f32 %v2848, %v2972
      %v3153 = vadd.f32 %v2849, %v2974
      %v3154 = vadd.f32 %v2850, %v2976
      %v3155 = vadd.f32 %v2851, %v2978
      %v3156 = vadd.f32 %v2852, %v2980
      %v3157 = vadd.f32 %v2853, %v2982
      %v3158 = vadd.f32 %v2854, %v2984
      %v3159 = vadd.f32 %v2855, %v2986
      %v3160 = vadd.f32 %v2856, %v2988
      %v3161 = vadd.f32 %v2857, %v2990
      %v3162 = vadd.f32 %v2858, %v2992
      %v3163 = vadd.f32 %v2859, %v2994
      %v3164 = vadd.f32 %v2860, %v2996
      %v3165 = vadd.f32 %v2861, %v2998
      %v3166 = vadd.f32 %v2862, %v3000
      %v3167 = vadd.f32 %v2863, %v3002
      %v3168 = vadd.f32 %v2864, %v3004
      %v3169 = vadd.f32 %v2865, %v3006
      %v3170 = vadd.f32 %v2866, %v3008
      %v3171 = vadd.f32 %v2867, %v3010
      %v3172 = vadd.f32 %v2868, %v3012
      %v3173 = vadd.f32 %v2869, %v3014
      %v3174 = vadd.f32 %v2870, %v3016
      %v3175 = vadd.f32 %v2871, %v3018
      %v3176 = vadd.f32 %v2872, %v3020
      %v3177 = vadd.f32 %v2873, %v3022
      %v3178 = vadd.f32 %v2874, %v3024
      %v3179 = vadd.f32 %v2875, %v3026
      %v3180 = vadd.f32 %v2876, %v3028
      %v3181 = vadd.f32 %v2877, %v3030
      %v3182 = vadd.f32 %v2878, %v3032
      %v3183 = vadd.f32 %v2879, %v3034
      %v3184 = vadd.f32 %v2880, %v3036
      %v3185 = vld [vmem:[#allocation2 + $0x277] sm:$0xff]
      %v3186 = vld [vmem:[#allocation2 + $0x27f] sm:$0xff]
      %v3187 = vld [vmem:[#allocation2 + $0x287] sm:$0xff]
      %v3188 = vld [vmem:[#allocation2 + $0x28f] sm:$0xff]
      %3193 = vrot.lane.b32.xlu0 %v1249, 80
      %v3194 = vpop.permute.xlu0 %3193
      %3195 = vrot.lane.b32.xlu0 %v1250, 80
      %v3196 = vpop.permute.xlu0 %3195
      %3197 = vrot.lane.b32.xlu0 %v1251, 80
      %v3198 = vpop.permute.xlu0 %3197
      %3199 = vrot.lane.b32.xlu0 %v1252, 80
      %v3200 = vpop.permute.xlu0 %3199
      %3201 = vrot.lane.b32.xlu0 %v1253, 80
      %v3202 = vpop.permute.xlu0 %3201
      %3203 = vrot.lane.b32.xlu0 %v1254, 80
      %v3204 = vpop.permute.xlu0 %3203
      %3205 = vrot.lane.b32.xlu0 %v1255, 80
      %v3206 = vpop.permute.xlu0 %3205
      %3207 = vrot.lane.b32.xlu0 %v1256, 80
      %v3208 = vpop.permute.xlu0 %3207
      %3209 = vrot.lane.b32.xlu0 %v1257, 80
      %v3210 = vpop.permute.xlu0 %3209
      %3211 = vrot.lane.b32.xlu0 %v1258, 80
      %v3212 = vpop.permute.xlu0 %3211
      %3213 = vrot.lane.b32.xlu0 %v1259, 80
      %v3214 = vpop.permute.xlu0 %3213
      %3215 = vrot.lane.b32.xlu0 %v1260, 80
      %v3216 = vpop.permute.xlu0 %3215
      %3217 = vrot.lane.b32.xlu0 %v1261, 80
      %v3218 = vpop.permute.xlu0 %3217
      %3219 = vrot.lane.b32.xlu0 %v1262, 80
      %v3220 = vpop.permute.xlu0 %3219
      %3221 = vrot.lane.b32.xlu0 %v1263, 80
      %v3222 = vpop.permute.xlu0 %3221
      %3223 = vrot.lane.b32.xlu0 %v1264, 80
      %v3224 = vpop.permute.xlu0 %3223
      %3225 = vrot.lane.b32.xlu0 %v1265, 80
      %v3226 = vpop.permute.xlu0 %3225
      %3227 = vrot.lane.b32.xlu0 %v1266, 80
      %v3228 = vpop.permute.xlu0 %3227
      %3229 = vrot.lane.b32.xlu0 %v1267, 80
      %v3230 = vpop.permute.xlu0 %3229
      %3231 = vrot.lane.b32.xlu0 %v1268, 80
      %v3232 = vpop.permute.xlu0 %3231
      %3233 = vrot.lane.b32.xlu0 %v1269, 80
      %v3234 = vpop.permute.xlu0 %3233
      %3235 = vrot.lane.b32.xlu0 %v1270, 80
      %v3236 = vpop.permute.xlu0 %3235
      %3237 = vrot.lane.b32.xlu0 %v1271, 80
      %v3238 = vpop.permute.xlu0 %3237
      %3239 = vrot.lane.b32.xlu0 %v1272, 80
      %v3240 = vpop.permute.xlu0 %3239
      %3241 = vrot.lane.b32.xlu0 %v1273, 80
      %v3242 = vpop.permute.xlu0 %3241
      %3243 = vrot.lane.b32.xlu0 %v1274, 80
      %v3244 = vpop.permute.xlu0 %3243
      %3245 = vrot.lane.b32.xlu0 %v1275, 80
      %v3246 = vpop.permute.xlu0 %3245
      %3247 = vrot.lane.b32.xlu0 %v1276, 80
      %v3248 = vpop.permute.xlu0 %3247
      %3249 = vrot.lane.b32.xlu0 %v1277, 80
      %v3250 = vpop.permute.xlu0 %3249
      %3251 = vrot.lane.b32.xlu0 %v1278, 80
      %v3252 = vpop.permute.xlu0 %3251
      %3253 = vrot.lane.b32.xlu0 %v1279, 80
      %v3254 = vpop.permute.xlu0 %3253
      %3255 = vrot.lane.b32.xlu0 %v1280, 80
      %v3256 = vpop.permute.xlu0 %3255
      %3257 = vrot.lane.b32.xlu0 %v1281, 80
      %v3258 = vpop.permute.xlu0 %3257
      %3259 = vrot.lane.b32.xlu0 %v1282, 80
      %v3260 = vpop.permute.xlu0 %3259
      %3261 = vrot.lane.b32.xlu0 %v1283, 80
      %v3262 = vpop.permute.xlu0 %3261
      %3263 = vrot.lane.b32.xlu0 %v1284, 80
      %v3264 = vpop.permute.xlu0 %3263
      %3265 = vrot.lane.b32.xlu0 %v1285, 80
      %v3266 = vpop.permute.xlu0 %3265
      %3267 = vrot.lane.b32.xlu0 %v1286, 80
      %v3268 = vpop.permute.xlu0 %3267
      %3269 = vrot.lane.b32.xlu0 %v1287, 80
      %v3270 = vpop.permute.xlu0 %3269
      %3271 = vrot.lane.b32.xlu0 %v1288, 80
      %v3272 = vpop.permute.xlu0 %3271
      %3273 = vrot.lane.b32.xlu0 %v1289, 80
      %v3274 = vpop.permute.xlu0 %3273
      %3275 = vrot.lane.b32.xlu0 %v1290, 80
      %v3276 = vpop.permute.xlu0 %3275
      %3277 = vrot.lane.b32.xlu0 %v1291, 80
      %v3278 = vpop.permute.xlu0 %3277
      %3279 = vrot.lane.b32.xlu0 %v1292, 80
      %v3280 = vpop.permute.xlu0 %3279
      %3281 = vrot.lane.b32.xlu0 %v1293, 80
      %v3282 = vpop.permute.xlu0 %3281
      %3283 = vrot.lane.b32.xlu0 %v1294, 80
      %v3284 = vpop.permute.xlu0 %3283
      %3285 = vrot.lane.b32.xlu0 %v1295, 80
      %v3286 = vpop.permute.xlu0 %3285
      %3287 = vrot.lane.b32.xlu0 %v1296, 80
      %v3288 = vpop.permute.xlu0 %3287
      %3289 = vrot.lane.b32.xlu0 %v1297, 80
      %v3290 = vpop.permute.xlu0 %3289
      %3291 = vrot.lane.b32.xlu0 %v1298, 80
      %v3292 = vpop.permute.xlu0 %3291
      %3293 = vrot.lane.b32.xlu0 %v1299, 80
      %v3294 = vpop.permute.xlu0 %3293
      %3295 = vrot.lane.b32.xlu0 %v1300, 80
      %v3296 = vpop.permute.xlu0 %3295
      %3297 = vrot.lane.b32.xlu0 %v1301, 80
      %v3298 = vpop.permute.xlu0 %3297
      %3299 = vrot.lane.b32.xlu0 %v1302, 80
      %v3300 = vpop.permute.xlu0 %3299
      %3301 = vrot.lane.b32.xlu0 %v1303, 80
      %v3302 = vpop.permute.xlu0 %3301
      %3303 = vrot.lane.b32.xlu0 %v1304, 80
      %v3304 = vpop.permute.xlu0 %3303
      %3305 = vrot.lane.b32.xlu0 %v1305, 80
      %v3306 = vpop.permute.xlu0 %3305
      %3307 = vrot.lane.b32.xlu0 %v1306, 80
      %v3308 = vpop.permute.xlu0 %3307
      %3309 = vrot.lane.b32.xlu0 %v1307, 80
      %v3310 = vpop.permute.xlu0 %3309
      %3311 = vrot.lane.b32.xlu0 %v1308, 80
      %v3312 = vpop.permute.xlu0 %3311
      %3313 = vrot.lane.b32.xlu0 %v1309, 80
      %v3314 = vpop.permute.xlu0 %3313
      %3315 = vrot.lane.b32.xlu0 %v1310, 80
      %v3316 = vpop.permute.xlu0 %3315
      %3317 = vrot.lane.b32.xlu0 %v1311, 80
      %v3318 = vpop.permute.xlu0 %3317
      %3319 = vrot.lane.b32.xlu0 %v1312, 80
      %v3320 = vpop.permute.xlu0 %3319
      %3321 = vrot.lane.b32.xlu0 %v1313, 80
      %v3322 = vpop.permute.xlu0 %3321
      %3323 = vrot.lane.b32.xlu0 %v1314, 80
      %v3324 = vpop.permute.xlu0 %3323
      %3325 = vrot.lane.b32.xlu0 %v2203, 80
      %v3326 = vpop.permute.xlu0 %3325
      %3327 = vrot.lane.b32.xlu0 %v2204, 80
      %v3328 = vpop.permute.xlu0 %3327
      %3329 = vrot.lane.b32.xlu0 %v2205, 80
      %v3330 = vpop.permute.xlu0 %3329
      %3331 = vrot.lane.b32.xlu0 %v2206, 80
      %v3332 = vpop.permute.xlu0 %3331
      %3333 = vrot.lane.b32.xlu0 %v3185, 80
      %v3334 = vpop.permute.xlu0 %3333
      %3335 = vrot.lane.b32.xlu0 %v3186, 80
      %v3336 = vpop.permute.xlu0 %3335
      %3337 = vrot.lane.b32.xlu0 %v3187, 80
      %v3338 = vpop.permute.xlu0 %3337
      %3339 = vrot.lane.b32.xlu0 %v3188, 80
      %v3340 = vpop.permute.xlu0 %3339
      %v3415 = vadd.f32 %v3111, %v3194
      %v3416 = vadd.f32 %v3112, %v3196
      %v3417 = vadd.f32 %v3113, %v3198
      %v3418 = vadd.f32 %v3114, %v3200
      %v3419 = vadd.f32 %v3115, %v3202
      %v3420 = vadd.f32 %v3116, %v3204
      %v3421 = vadd.f32 %v3117, %v3206
      %v3422 = vadd.f32 %v3118, %v3208
      %v3423 = vadd.f32 %v3119, %v3210
      %v3424 = vadd.f32 %v3120, %v3212
      %v3425 = vadd.f32 %v3121, %v3214
      %v3426 = vadd.f32 %v3122, %v3216
      %v3427 = vadd.f32 %v3123, %v3218
      %v3428 = vadd.f32 %v3124, %v3220
      %v3429 = vadd.f32 %v3125, %v3222
      %v3430 = vadd.f32 %v3126, %v3224
      %v3431 = vadd.f32 %v3127, %v3226
      %v3432 = vadd.f32 %v3128, %v3228
      %v3433 = vadd.f32 %v3129, %v3230
      %v3434 = vadd.f32 %v3130, %v3232
      %v3435 = vadd.f32 %v3131, %v3234
      %v3436 = vadd.f32 %v3132, %v3236
      %v3437 = vadd.f32 %v3133, %v3238
      %v3438 = vadd.f32 %v3134, %v3240
      %v3439 = vadd.f32 %v3135, %v3242
      %v3440 = vadd.f32 %v3136, %v3244
      %v3441 = vadd.f32 %v3137, %v3246
      %v3442 = vadd.f32 %v3138, %v3248
      %v3443 = vadd.f32 %v3139, %v3250
      %v3444 = vadd.f32 %v3140, %v3252
      %v3445 = vadd.f32 %v3141, %v3254
      %v3446 = vadd.f32 %v3142, %v3256
      %v3447 = vadd.f32 %v3143, %v3258
      %v3448 = vadd.f32 %v3144, %v3260
      %v3449 = vadd.f32 %v3145, %v3262
      %v3450 = vadd.f32 %v3146, %v3264
      %v3451 = vadd.f32 %v3147, %v3266
      %v3452 = vadd.f32 %v3148, %v3268
      %v3453 = vadd.f32 %v3149, %v3270
      %v3454 = vadd.f32 %v3150, %v3272
      %v3455 = vadd.f32 %v3151, %v3274
      %v3456 = vadd.f32 %v3152, %v3276
      %v3457 = vadd.f32 %v3153, %v3278
      %v3458 = vadd.f32 %v3154, %v3280
      %v3459 = vadd.f32 %v3155, %v3282
      %v3460 = vadd.f32 %v3156, %v3284
      %v3461 = vadd.f32 %v3157, %v3286
      %v3462 = vadd.f32 %v3158, %v3288
      %v3463 = vadd.f32 %v3159, %v3290
      %v3464 = vadd.f32 %v3160, %v3292
      %v3465 = vadd.f32 %v3161, %v3294
      %v3466 = vadd.f32 %v3162, %v3296
      %v3467 = vadd.f32 %v3163, %v3298
      %v3468 = vadd.f32 %v3164, %v3300
      %v3469 = vadd.f32 %v3165, %v3302
      %v3470 = vadd.f32 %v3166, %v3304
      %v3471 = vadd.f32 %v3167, %v3306
      %v3472 = vadd.f32 %v3168, %v3308
      %v3473 = vadd.f32 %v3169, %v3310
      %v3474 = vadd.f32 %v3170, %v3312
      %v3475 = vadd.f32 %v3171, %v3314
      %v3476 = vadd.f32 %v3172, %v3316
      %v3477 = vadd.f32 %v3173, %v3318
      %v3478 = vadd.f32 %v3174, %v3320
      %v3479 = vadd.f32 %v3175, %v3322
      %v3480 = vadd.f32 %v3176, %v3324
      %v3481 = vadd.f32 %v3177, %v3326
      %v3482 = vadd.f32 %v3178, %v3328
      %v3483 = vadd.f32 %v3179, %v3330
      %v3484 = vadd.f32 %v3180, %v3332
      %v3485 = vadd.f32 %v3181, %v3334
      %v3486 = vadd.f32 %v3182, %v3336
      %v3487 = vadd.f32 %v3183, %v3338
      %v3488 = vadd.f32 %v3184, %v3340
      %v3489 = vld [vmem:[#allocation2 + $0x278] sm:$0xff]
      %v3490 = vld [vmem:[#allocation2 + $0x280] sm:$0xff]
      %v3491 = vld [vmem:[#allocation2 + $0x288] sm:$0xff]
      %v3492 = vld [vmem:[#allocation2 + $0x290] sm:$0xff]
      %3497 = vrot.lane.b32.xlu0 %v1323, 72
      %v3498 = vpop.permute.xlu0 %3497
      %3499 = vrot.lane.b32.xlu0 %v1324, 72
      %v3500 = vpop.permute.xlu0 %3499
      %3501 = vrot.lane.b32.xlu0 %v1325, 72
      %v3502 = vpop.permute.xlu0 %3501
      %3503 = vrot.lane.b32.xlu0 %v1326, 72
      %v3504 = vpop.permute.xlu0 %3503
      %3505 = vrot.lane.b32.xlu0 %v1327, 72
      %v3506 = vpop.permute.xlu0 %3505
      %3507 = vrot.lane.b32.xlu0 %v1328, 72
      %v3508 = vpop.permute.xlu0 %3507
      %3509 = vrot.lane.b32.xlu0 %v1329, 72
      %v3510 = vpop.permute.xlu0 %3509
      %3511 = vrot.lane.b32.xlu0 %v1330, 72
      %v3512 = vpop.permute.xlu0 %3511
      %3513 = vrot.lane.b32.xlu0 %v1331, 72
      %v3514 = vpop.permute.xlu0 %3513
      %3515 = vrot.lane.b32.xlu0 %v1332, 72
      %v3516 = vpop.permute.xlu0 %3515
      %3517 = vrot.lane.b32.xlu0 %v1333, 72
      %v3518 = vpop.permute.xlu0 %3517
      %3519 = vrot.lane.b32.xlu0 %v1334, 72
      %v3520 = vpop.permute.xlu0 %3519
      %3521 = vrot.lane.b32.xlu0 %v1335, 72
      %v3522 = vpop.permute.xlu0 %3521
      %3523 = vrot.lane.b32.xlu0 %v1336, 72
      %v3524 = vpop.permute.xlu0 %3523
      %3525 = vrot.lane.b32.xlu0 %v1337, 72
      %v3526 = vpop.permute.xlu0 %3525
      %3527 = vrot.lane.b32.xlu0 %v1338, 72
      %v3528 = vpop.permute.xlu0 %3527
      %3529 = vrot.lane.b32.xlu0 %v1339, 72
      %v3530 = vpop.permute.xlu0 %3529
      %3531 = vrot.lane.b32.xlu0 %v1340, 72
      %v3532 = vpop.permute.xlu0 %3531
      %3533 = vrot.lane.b32.xlu0 %v1341, 72
      %v3534 = vpop.permute.xlu0 %3533
      %3535 = vrot.lane.b32.xlu0 %v1342, 72
      %v3536 = vpop.permute.xlu0 %3535
      %3537 = vrot.lane.b32.xlu0 %v1343, 72
      %v3538 = vpop.permute.xlu0 %3537
      %3539 = vrot.lane.b32.xlu0 %v1344, 72
      %v3540 = vpop.permute.xlu0 %3539
      %3541 = vrot.lane.b32.xlu0 %v1345, 72
      %v3542 = vpop.permute.xlu0 %3541
      %3543 = vrot.lane.b32.xlu0 %v1346, 72
      %v3544 = vpop.permute.xlu0 %3543
      %3545 = vrot.lane.b32.xlu0 %v1347, 72
      %v3546 = vpop.permute.xlu0 %3545
      %3547 = vrot.lane.b32.xlu0 %v1348, 72
      %v3548 = vpop.permute.xlu0 %3547
      %3549 = vrot.lane.b32.xlu0 %v1349, 72
      %v3550 = vpop.permute.xlu0 %3549
      %3551 = vrot.lane.b32.xlu0 %v1350, 72
      %v3552 = vpop.permute.xlu0 %3551
      %3553 = vrot.lane.b32.xlu0 %v1351, 72
      %v3554 = vpop.permute.xlu0 %3553
      %3555 = vrot.lane.b32.xlu0 %v1352, 72
      %v3556 = vpop.permute.xlu0 %3555
      %3557 = vrot.lane.b32.xlu0 %v1353, 72
      %v3558 = vpop.permute.xlu0 %3557
      %3559 = vrot.lane.b32.xlu0 %v1354, 72
      %v3560 = vpop.permute.xlu0 %3559
      %3561 = vrot.lane.b32.xlu0 %v1355, 72
      %v3562 = vpop.permute.xlu0 %3561
      %3563 = vrot.lane.b32.xlu0 %v1356, 72
      %v3564 = vpop.permute.xlu0 %3563
      %3565 = vrot.lane.b32.xlu0 %v1357, 72
      %v3566 = vpop.permute.xlu0 %3565
      %3567 = vrot.lane.b32.xlu0 %v1358, 72
      %v3568 = vpop.permute.xlu0 %3567
      %3569 = vrot.lane.b32.xlu0 %v1359, 72
      %v3570 = vpop.permute.xlu0 %3569
      %3571 = vrot.lane.b32.xlu0 %v1360, 72
      %v3572 = vpop.permute.xlu0 %3571
      %3573 = vrot.lane.b32.xlu0 %v1361, 72
      %v3574 = vpop.permute.xlu0 %3573
      %3575 = vrot.lane.b32.xlu0 %v1362, 72
      %v3576 = vpop.permute.xlu0 %3575
      %3577 = vrot.lane.b32.xlu0 %v1363, 72
      %v3578 = vpop.permute.xlu0 %3577
      %3579 = vrot.lane.b32.xlu0 %v1364, 72
      %v3580 = vpop.permute.xlu0 %3579
      %3581 = vrot.lane.b32.xlu0 %v1365, 72
      %v3582 = vpop.permute.xlu0 %3581
      %3583 = vrot.lane.b32.xlu0 %v1366, 72
      %v3584 = vpop.permute.xlu0 %3583
      %3585 = vrot.lane.b32.xlu0 %v1367, 72
      %v3586 = vpop.permute.xlu0 %3585
      %3587 = vrot.lane.b32.xlu0 %v1368, 72
      %v3588 = vpop.permute.xlu0 %3587
      %3589 = vrot.lane.b32.xlu0 %v1369, 72
      %v3590 = vpop.permute.xlu0 %3589
      %3591 = vrot.lane.b32.xlu0 %v1370, 72
      %v3592 = vpop.permute.xlu0 %3591
      %3593 = vrot.lane.b32.xlu0 %v1371, 72
      %v3594 = vpop.permute.xlu0 %3593
      %3595 = vrot.lane.b32.xlu0 %v1372, 72
      %v3596 = vpop.permute.xlu0 %3595
      %3597 = vrot.lane.b32.xlu0 %v1373, 72
      %v3598 = vpop.permute.xlu0 %3597
      %3599 = vrot.lane.b32.xlu0 %v1374, 72
      %v3600 = vpop.permute.xlu0 %3599
      %3601 = vrot.lane.b32.xlu0 %v1375, 72
      %v3602 = vpop.permute.xlu0 %3601
      %3603 = vrot.lane.b32.xlu0 %v1376, 72
      %v3604 = vpop.permute.xlu0 %3603
      %3605 = vrot.lane.b32.xlu0 %v1377, 72
      %v3606 = vpop.permute.xlu0 %3605
      %3607 = vrot.lane.b32.xlu0 %v1378, 72
      %v3608 = vpop.permute.xlu0 %3607
      %3609 = vrot.lane.b32.xlu0 %v1379, 72
      %v3610 = vpop.permute.xlu0 %3609
      %3611 = vrot.lane.b32.xlu0 %v1380, 72
      %v3612 = vpop.permute.xlu0 %3611
      %3613 = vrot.lane.b32.xlu0 %v1381, 72
      %v3614 = vpop.permute.xlu0 %3613
      %3615 = vrot.lane.b32.xlu0 %v1382, 72
      %v3616 = vpop.permute.xlu0 %3615
      %3617 = vrot.lane.b32.xlu0 %v1383, 72
      %v3618 = vpop.permute.xlu0 %3617
      %3619 = vrot.lane.b32.xlu0 %v1384, 72
      %v3620 = vpop.permute.xlu0 %3619
      %3621 = vrot.lane.b32.xlu0 %v1385, 72
      %v3622 = vpop.permute.xlu0 %3621
      %3623 = vrot.lane.b32.xlu0 %v1386, 72
      %v3624 = vpop.permute.xlu0 %3623
      %3625 = vrot.lane.b32.xlu0 %v1387, 72
      %v3626 = vpop.permute.xlu0 %3625
      %3627 = vrot.lane.b32.xlu0 %v1388, 72
      %v3628 = vpop.permute.xlu0 %3627
      %3629 = vrot.lane.b32.xlu0 %v2577, 72
      %v3630 = vpop.permute.xlu0 %3629
      %3631 = vrot.lane.b32.xlu0 %v2578, 72
      %v3632 = vpop.permute.xlu0 %3631
      %3633 = vrot.lane.b32.xlu0 %v2579, 72
      %v3634 = vpop.permute.xlu0 %3633
      %3635 = vrot.lane.b32.xlu0 %v2580, 72
      %v3636 = vpop.permute.xlu0 %3635
      %3637 = vrot.lane.b32.xlu0 %v3489, 72
      %v3638 = vpop.permute.xlu0 %3637
      %3639 = vrot.lane.b32.xlu0 %v3490, 72
      %v3640 = vpop.permute.xlu0 %3639
      %3641 = vrot.lane.b32.xlu0 %v3491, 72
      %v3642 = vpop.permute.xlu0 %3641
      %3643 = vrot.lane.b32.xlu0 %v3492, 72
      %v3644 = vpop.permute.xlu0 %3643
      %v3719 = vadd.f32 %v3415, %v3498
      %v3720 = vadd.f32 %v3416, %v3500
      %v3721 = vadd.f32 %v3417, %v3502
      %v3722 = vadd.f32 %v3418, %v3504
      %v3723 = vadd.f32 %v3419, %v3506
      %v3724 = vadd.f32 %v3420, %v3508
      %v3725 = vadd.f32 %v3421, %v3510
      %v3726 = vadd.f32 %v3422, %v3512
      %v3727 = vadd.f32 %v3423, %v3514
      %v3728 = vadd.f32 %v3424, %v3516
      %v3729 = vadd.f32 %v3425, %v3518
      %v3730 = vadd.f32 %v3426, %v3520
      %v3731 = vadd.f32 %v3427, %v3522
      %v3732 = vadd.f32 %v3428, %v3524
      %v3733 = vadd.f32 %v3429, %v3526
      %v3734 = vadd.f32 %v3430, %v3528
      %v3735 = vadd.f32 %v3431, %v3530
      %v3736 = vadd.f32 %v3432, %v3532
      %v3737 = vadd.f32 %v3433, %v3534
      %v3738 = vadd.f32 %v3434, %v3536
      %v3739 = vadd.f32 %v3435, %v3538
      %v3740 = vadd.f32 %v3436, %v3540
      %v3741 = vadd.f32 %v3437, %v3542
      %v3742 = vadd.f32 %v3438, %v3544
      %v3743 = vadd.f32 %v3439, %v3546
      %v3744 = vadd.f32 %v3440, %v3548
      %v3745 = vadd.f32 %v3441, %v3550
      %v3746 = vadd.f32 %v3442, %v3552
      %v3747 = vadd.f32 %v3443, %v3554
      %v3748 = vadd.f32 %v3444, %v3556
      %v3749 = vadd.f32 %v3445, %v3558
      %v3750 = vadd.f32 %v3446, %v3560
      %v3751 = vadd.f32 %v3447, %v3562
      %v3752 = vadd.f32 %v3448, %v3564
      %v3753 = vadd.f32 %v3449, %v3566
      %v3754 = vadd.f32 %v3450, %v3568
      %v3755 = vadd.f32 %v3451, %v3570
      %v3756 = vadd.f32 %v3452, %v3572
      %v3757 = vadd.f32 %v3453, %v3574
      %v3758 = vadd.f32 %v3454, %v3576
      %v3759 = vadd.f32 %v3455, %v3578
      %v3760 = vadd.f32 %v3456, %v3580
      %v3761 = vadd.f32 %v3457, %v3582
      %v3762 = vadd.f32 %v3458, %v3584
      %v3763 = vadd.f32 %v3459, %v3586
      %v3764 = vadd.f32 %v3460, %v3588
      %v3765 = vadd.f32 %v3461, %v3590
      %v3766 = vadd.f32 %v3462, %v3592
      %v3767 = vadd.f32 %v3463, %v3594
      %v3768 = vadd.f32 %v3464, %v3596
      %v3769 = vadd.f32 %v3465, %v3598
      %v3770 = vadd.f32 %v3466, %v3600
      %v3771 = vadd.f32 %v3467, %v3602
      %v3772 = vadd.f32 %v3468, %v3604
      %v3773 = vadd.f32 %v3469, %v3606
      %v3774 = vadd.f32 %v3470, %v3608
      %v3775 = vadd.f32 %v3471, %v3610
      %v3776 = vadd.f32 %v3472, %v3612
      %v3777 = vadd.f32 %v3473, %v3614
      %v3778 = vadd.f32 %v3474, %v3616
      %v3779 = vadd.f32 %v3475, %v3618
      %v3780 = vadd.f32 %v3476, %v3620
      %v3781 = vadd.f32 %v3477, %v3622
      %v3782 = vadd.f32 %v3478, %v3624
      %v3783 = vadd.f32 %v3479, %v3626
      %v3784 = vadd.f32 %v3480, %v3628
      %v3785 = vadd.f32 %v3481, %v3630
      %v3786 = vadd.f32 %v3482, %v3632
      %v3787 = vadd.f32 %v3483, %v3634
      %v3788 = vadd.f32 %v3484, %v3636
      %v3789 = vadd.f32 %v3485, %v3638
      %v3790 = vadd.f32 %v3486, %v3640
      %v3791 = vadd.f32 %v3487, %v3642
      %v3792 = vadd.f32 %v3488, %v3644
      %v3793 = vld [vmem:[#allocation2 + $0x279] sm:$0xff]
      %v3794 = vld [vmem:[#allocation2 + $0x281] sm:$0xff]
      %v3795 = vld [vmem:[#allocation2 + $0x289] sm:$0xff]
      %v3796 = vld [vmem:[#allocation2 + $0x291] sm:$0xff]
      %3801 = vrot.lane.b32.xlu0 %v1767, 64
      %v3802 = vpop.permute.xlu0 %3801
      %3803 = vrot.lane.b32.xlu0 %v1768, 64
      %v3804 = vpop.permute.xlu0 %3803
      %3805 = vrot.lane.b32.xlu0 %v1769, 64
      %v3806 = vpop.permute.xlu0 %3805
      %3807 = vrot.lane.b32.xlu0 %v1770, 64
      %v3808 = vpop.permute.xlu0 %3807
      %3809 = vrot.lane.b32.xlu0 %v1771, 64
      %v3810 = vpop.permute.xlu0 %3809
      %3811 = vrot.lane.b32.xlu0 %v1772, 64
      %v3812 = vpop.permute.xlu0 %3811
      %3813 = vrot.lane.b32.xlu0 %v1773, 64
      %v3814 = vpop.permute.xlu0 %3813
      %3815 = vrot.lane.b32.xlu0 %v1774, 64
      %v3816 = vpop.permute.xlu0 %3815
      %3817 = vrot.lane.b32.xlu0 %v1775, 64
      %v3818 = vpop.permute.xlu0 %3817
      %3819 = vrot.lane.b32.xlu0 %v1776, 64
      %v3820 = vpop.permute.xlu0 %3819
      %3821 = vrot.lane.b32.xlu0 %v1777, 64
      %v3822 = vpop.permute.xlu0 %3821
      %3823 = vrot.lane.b32.xlu0 %v1778, 64
      %v3824 = vpop.permute.xlu0 %3823
      %3825 = vrot.lane.b32.xlu0 %v1779, 64
      %v3826 = vpop.permute.xlu0 %3825
      %3827 = vrot.lane.b32.xlu0 %v1780, 64
      %v3828 = vpop.permute.xlu0 %3827
      %3829 = vrot.lane.b32.xlu0 %v1781, 64
      %v3830 = vpop.permute.xlu0 %3829
      %3831 = vrot.lane.b32.xlu0 %v1782, 64
      %v3832 = vpop.permute.xlu0 %3831
      %3833 = vrot.lane.b32.xlu0 %v1783, 64
      %v3834 = vpop.permute.xlu0 %3833
      %3835 = vrot.lane.b32.xlu0 %v1784, 64
      %v3836 = vpop.permute.xlu0 %3835
      %3837 = vrot.lane.b32.xlu0 %v1785, 64
      %v3838 = vpop.permute.xlu0 %3837
      %3839 = vrot.lane.b32.xlu0 %v1786, 64
      %v3840 = vpop.permute.xlu0 %3839
      %3841 = vrot.lane.b32.xlu0 %v1787, 64
      %v3842 = vpop.permute.xlu0 %3841
      %3843 = vrot.lane.b32.xlu0 %v1788, 64
      %v3844 = vpop.permute.xlu0 %3843
      %3845 = vrot.lane.b32.xlu0 %v1789, 64
      %v3846 = vpop.permute.xlu0 %3845
      %3847 = vrot.lane.b32.xlu0 %v1790, 64
      %v3848 = vpop.permute.xlu0 %3847
      %3849 = vrot.lane.b32.xlu0 %v1791, 64
      %v3850 = vpop.permute.xlu0 %3849
      %3851 = vrot.lane.b32.xlu0 %v1792, 64
      %v3852 = vpop.permute.xlu0 %3851
      %3853 = vrot.lane.b32.xlu0 %v1793, 64
      %v3854 = vpop.permute.xlu0 %3853
      %3855 = vrot.lane.b32.xlu0 %v1794, 64
      %v3856 = vpop.permute.xlu0 %3855
      %3857 = vrot.lane.b32.xlu0 %v1795, 64
      %v3858 = vpop.permute.xlu0 %3857
      %3859 = vrot.lane.b32.xlu0 %v1796, 64
      %v3860 = vpop.permute.xlu0 %3859
      %3861 = vrot.lane.b32.xlu0 %v1797, 64
      %v3862 = vpop.permute.xlu0 %3861
      %3863 = vrot.lane.b32.xlu0 %v1798, 64
      %v3864 = vpop.permute.xlu0 %3863
      %3865 = vrot.lane.b32.xlu0 %v1799, 64
      %v3866 = vpop.permute.xlu0 %3865
      %3867 = vrot.lane.b32.xlu0 %v1800, 64
      %v3868 = vpop.permute.xlu0 %3867
      %3869 = vrot.lane.b32.xlu0 %v1801, 64
      %v3870 = vpop.permute.xlu0 %3869
      %3871 = vrot.lane.b32.xlu0 %v1802, 64
      %v3872 = vpop.permute.xlu0 %3871
      %3873 = vrot.lane.b32.xlu0 %v1803, 64
      %v3874 = vpop.permute.xlu0 %3873
      %3875 = vrot.lane.b32.xlu0 %v1804, 64
      %v3876 = vpop.permute.xlu0 %3875
      %3877 = vrot.lane.b32.xlu0 %v1805, 64
      %v3878 = vpop.permute.xlu0 %3877
      %3879 = vrot.lane.b32.xlu0 %v1806, 64
      %v3880 = vpop.permute.xlu0 %3879
      %3881 = vrot.lane.b32.xlu0 %v1807, 64
      %v3882 = vpop.permute.xlu0 %3881
      %3883 = vrot.lane.b32.xlu0 %v1808, 64
      %v3884 = vpop.permute.xlu0 %3883
      %3885 = vrot.lane.b32.xlu0 %v1809, 64
      %v3886 = vpop.permute.xlu0 %3885
      %3887 = vrot.lane.b32.xlu0 %v1810, 64
      %v3888 = vpop.permute.xlu0 %3887
      %3889 = vrot.lane.b32.xlu0 %v1811, 64
      %v3890 = vpop.permute.xlu0 %3889
      %3891 = vrot.lane.b32.xlu0 %v1812, 64
      %v3892 = vpop.permute.xlu0 %3891
      %3893 = vrot.lane.b32.xlu0 %v1813, 64
      %v3894 = vpop.permute.xlu0 %3893
      %3895 = vrot.lane.b32.xlu0 %v1814, 64
      %v3896 = vpop.permute.xlu0 %3895
      %3897 = vrot.lane.b32.xlu0 %v1815, 64
      %v3898 = vpop.permute.xlu0 %3897
      %3899 = vrot.lane.b32.xlu0 %v1816, 64
      %v3900 = vpop.permute.xlu0 %3899
      %3901 = vrot.lane.b32.xlu0 %v1817, 64
      %v3902 = vpop.permute.xlu0 %3901
      %3903 = vrot.lane.b32.xlu0 %v1818, 64
      %v3904 = vpop.permute.xlu0 %3903
      %3905 = vrot.lane.b32.xlu0 %v1819, 64
      %v3906 = vpop.permute.xlu0 %3905
      %3907 = vrot.lane.b32.xlu0 %v1820, 64
      %v3908 = vpop.permute.xlu0 %3907
      %3909 = vrot.lane.b32.xlu0 %v1821, 64
      %v3910 = vpop.permute.xlu0 %3909
      %3911 = vrot.lane.b32.xlu0 %v1822, 64
      %v3912 = vpop.permute.xlu0 %3911
      %3913 = vrot.lane.b32.xlu0 %v1823, 64
      %v3914 = vpop.permute.xlu0 %3913
      %3915 = vrot.lane.b32.xlu0 %v1824, 64
      %v3916 = vpop.permute.xlu0 %3915
      %3917 = vrot.lane.b32.xlu0 %v1825, 64
      %v3918 = vpop.permute.xlu0 %3917
      %3919 = vrot.lane.b32.xlu0 %v1826, 64
      %v3920 = vpop.permute.xlu0 %3919
      %3921 = vrot.lane.b32.xlu0 %v1827, 64
      %v3922 = vpop.permute.xlu0 %3921
      %3923 = vrot.lane.b32.xlu0 %v1828, 64
      %v3924 = vpop.permute.xlu0 %3923
      %3925 = vrot.lane.b32.xlu0 %v1829, 64
      %v3926 = vpop.permute.xlu0 %3925
      %3927 = vrot.lane.b32.xlu0 %v1830, 64
      %v3928 = vpop.permute.xlu0 %3927
      %3929 = vrot.lane.b32.xlu0 %v1831, 64
      %v3930 = vpop.permute.xlu0 %3929
      %3931 = vrot.lane.b32.xlu0 %v1832, 64
      %v3932 = vpop.permute.xlu0 %3931
      %3933 = vrot.lane.b32.xlu0 %v2881, 64
      %v3934 = vpop.permute.xlu0 %3933
      %3935 = vrot.lane.b32.xlu0 %v2882, 64
      %v3936 = vpop.permute.xlu0 %3935
      %3937 = vrot.lane.b32.xlu0 %v2883, 64
      %v3938 = vpop.permute.xlu0 %3937
      %3939 = vrot.lane.b32.xlu0 %v2884, 64
      %v3940 = vpop.permute.xlu0 %3939
      %3941 = vrot.lane.b32.xlu0 %v3793, 64
      %v3942 = vpop.permute.xlu0 %3941
      %3943 = vrot.lane.b32.xlu0 %v3794, 64
      %v3944 = vpop.permute.xlu0 %3943
      %3945 = vrot.lane.b32.xlu0 %v3795, 64
      %v3946 = vpop.permute.xlu0 %3945
      %3947 = vrot.lane.b32.xlu0 %v3796, 64
      %v3948 = vpop.permute.xlu0 %3947
      %v4023 = vadd.f32 %v3719, %v3802
      %v4024 = vadd.f32 %v3720, %v3804
      %v4025 = vadd.f32 %v3721, %v3806
      %v4026 = vadd.f32 %v3722, %v3808
      %v4027 = vadd.f32 %v3723, %v3810
      %v4028 = vadd.f32 %v3724, %v3812
      %v4029 = vadd.f32 %v3725, %v3814
      %v4030 = vadd.f32 %v3726, %v3816
      %v4031 = vadd.f32 %v3727, %v3818
      %v4032 = vadd.f32 %v3728, %v3820
      %v4033 = vadd.f32 %v3729, %v3822
      %v4034 = vadd.f32 %v3730, %v3824
      %v4035 = vadd.f32 %v3731, %v3826
      %v4036 = vadd.f32 %v3732, %v3828
      %v4037 = vadd.f32 %v3733, %v3830
      %v4038 = vadd.f32 %v3734, %v3832
      %v4039 = vadd.f32 %v3735, %v3834
      %v4040 = vadd.f32 %v3736, %v3836
      %v4041 = vadd.f32 %v3737, %v3838
      %v4042 = vadd.f32 %v3738, %v3840
      %v4043 = vadd.f32 %v3739, %v3842
      %v4044 = vadd.f32 %v3740, %v3844
      %v4045 = vadd.f32 %v3741, %v3846
      %v4046 = vadd.f32 %v3742, %v3848
      %v4047 = vadd.f32 %v3743, %v3850
      %v4048 = vadd.f32 %v3744, %v3852
      %v4049 = vadd.f32 %v3745, %v3854
      %v4050 = vadd.f32 %v3746, %v3856
      %v4051 = vadd.f32 %v3747, %v3858
      %v4052 = vadd.f32 %v3748, %v3860
      %v4053 = vadd.f32 %v3749, %v3862
      %v4054 = vadd.f32 %v3750, %v3864
      %v4055 = vadd.f32 %v3751, %v3866
      %v4056 = vadd.f32 %v3752, %v3868
      %v4057 = vadd.f32 %v3753, %v3870
      %v4058 = vadd.f32 %v3754, %v3872
      %v4059 = vadd.f32 %v3755, %v3874
      %v4060 = vadd.f32 %v3756, %v3876
      %v4061 = vadd.f32 %v3757, %v3878
      %v4062 = vadd.f32 %v3758, %v3880
      %v4063 = vadd.f32 %v3759, %v3882
      %v4064 = vadd.f32 %v3760, %v3884
      %v4065 = vadd.f32 %v3761, %v3886
      %v4066 = vadd.f32 %v3762, %v3888
      %v4067 = vadd.f32 %v3763, %v3890
      %v4068 = vadd.f32 %v3764, %v3892
      %v4069 = vadd.f32 %v3765, %v3894
      %v4070 = vadd.f32 %v3766, %v3896
      %v4071 = vadd.f32 %v3767, %v3898
      %v4072 = vadd.f32 %v3768, %v3900
      %v4073 = vadd.f32 %v3769, %v3902
      %v4074 = vadd.f32 %v3770, %v3904
      %v4075 = vadd.f32 %v3771, %v3906
      %v4076 = vadd.f32 %v3772, %v3908
      %v4077 = vadd.f32 %v3773, %v3910
      %v4078 = vadd.f32 %v3774, %v3912
      %v4079 = vadd.f32 %v3775, %v3914
      %v4080 = vadd.f32 %v3776, %v3916
      %v4081 = vadd.f32 %v3777, %v3918
      %v4082 = vadd.f32 %v3778, %v3920
      %v4083 = vadd.f32 %v3779, %v3922
      %v4084 = vadd.f32 %v3780, %v3924
      %v4085 = vadd.f32 %v3781, %v3926
      %v4086 = vadd.f32 %v3782, %v3928
      %v4087 = vadd.f32 %v3783, %v3930
      %v4088 = vadd.f32 %v3784, %v3932
      %v4089 = vadd.f32 %v3785, %v3934
      %v4090 = vadd.f32 %v3786, %v3936
      %v4091 = vadd.f32 %v3787, %v3938
      %v4092 = vadd.f32 %v3788, %v3940
      %v4093 = vadd.f32 %v3789, %v3942
      %v4094 = vadd.f32 %v3790, %v3944
      %v4095 = vadd.f32 %v3791, %v3946
      %v4096 = vadd.f32 %v3792, %v3948
      %v4097 = vld [vmem:[%s4] sm:$0x1]
      %v4099 = vlaneseq
      %v4100 = vshrl.u32 %v4099, 7
      %v4101 = vsub.s32 0, %v4100
      %v4102 = vrot.slane %v4097, %v4101
      %v4104 = vmul.f32 %v4023, %v4102
      %v4105 = vmul.f32 %v4024, %v4102
      %v4106 = vmul.f32 %v4025, %v4102
      %v4107 = vmul.f32 %v4026, %v4102
      %v4108 = vmul.f32 %v4027, %v4102
      %v4109 = vmul.f32 %v4028, %v4102
      %v4110 = vmul.f32 %v4029, %v4102
      %v4111 = vmul.f32 %v4030, %v4102
      %v4112 = vmul.f32 %v4031, %v4102
      %v4113 = vmul.f32 %v4032, %v4102
      %v4114 = vmul.f32 %v4033, %v4102
      %v4115 = vmul.f32 %v4034, %v4102
      %v4116 = vmul.f32 %v4035, %v4102
      %v4117 = vmul.f32 %v4036, %v4102
      %v4118 = vmul.f32 %v4037, %v4102
      %v4119 = vmul.f32 %v4038, %v4102
      %v4120 = vmul.f32 %v4039, %v4102
      %v4121 = vmul.f32 %v4040, %v4102
      %v4122 = vmul.f32 %v4041, %v4102
      %v4123 = vmul.f32 %v4042, %v4102
      %v4124 = vmul.f32 %v4043, %v4102
      %v4125 = vmul.f32 %v4044, %v4102
      %v4126 = vmul.f32 %v4045, %v4102
      %v4127 = vmul.f32 %v4046, %v4102
      %v4128 = vmul.f32 %v4047, %v4102
      %v4129 = vmul.f32 %v4048, %v4102
      %v4130 = vmul.f32 %v4049, %v4102
      %v4131 = vmul.f32 %v4050, %v4102
      %v4132 = vmul.f32 %v4051, %v4102
      %v4133 = vmul.f32 %v4052, %v4102
      %v4134 = vmul.f32 %v4053, %v4102
      %v4135 = vmul.f32 %v4054, %v4102
      %v4136 = vmul.f32 %v4055, %v4102
      %v4137 = vmul.f32 %v4056, %v4102
      %v4138 = vmul.f32 %v4057, %v4102
      %v4139 = vmul.f32 %v4058, %v4102
      %v4140 = vmul.f32 %v4059, %v4102
      %v4141 = vmul.f32 %v4060, %v4102
      %v4142 = vmul.f32 %v4061, %v4102
      %v4143 = vmul.f32 %v4062, %v4102
      %v4144 = vmul.f32 %v4063, %v4102
      %v4145 = vmul.f32 %v4064, %v4102
      %v4146 = vmul.f32 %v4065, %v4102
      %v4147 = vmul.f32 %v4066, %v4102
      %v4148 = vmul.f32 %v4067, %v4102
      %v4149 = vmul.f32 %v4068, %v4102
      %v4150 = vmul.f32 %v4069, %v4102
      %v4151 = vmul.f32 %v4070, %v4102
      %v4152 = vmul.f32 %v4071, %v4102
      %v4153 = vmul.f32 %v4072, %v4102
      %v4154 = vmul.f32 %v4073, %v4102
      %v4155 = vmul.f32 %v4074, %v4102
      %v4156 = vmul.f32 %v4075, %v4102
      %v4157 = vmul.f32 %v4076, %v4102
      %v4158 = vmul.f32 %v4077, %v4102
      %v4159 = vmul.f32 %v4078, %v4102
      %v4160 = vmul.f32 %v4079, %v4102
      %v4161 = vmul.f32 %v4080, %v4102
      %v4162 = vmul.f32 %v4081, %v4102
      %v4163 = vmul.f32 %v4082, %v4102
      %v4164 = vmul.f32 %v4083, %v4102
      %v4165 = vmul.f32 %v4084, %v4102
      %v4166 = vmul.f32 %v4085, %v4102
      %v4167 = vmul.f32 %v4086, %v4102
      %v4168 = vmul.f32 %v4087, %v4102
      %v4169 = vmul.f32 %v4088, %v4102
      %v4170 = vmul.f32 %v4089, %v4102
      %v4171 = vmul.f32 %v4090, %v4102
      %v4172 = vmul.f32 %v4091, %v4102
      %v4173 = vmul.f32 %v4092, %v4102
      %v4174 = vmul.f32 %v4093, %v4102
      %v4175 = vmul.f32 %v4094, %v4102
      %v4176 = vmul.f32 %v4095, %v4102
      %v4177 = vmul.f32 %v4096, %v4102
      %v4178 = vld [vmem:[%s5] sm:$0x1]
      %v4180 = vlaneseq
      %v4181 = vshrl.u32 %v4180, 7
      %v4182 = vsub.s32 0, %v4181
      %v4183 = vrot.slane %v4178, %v4182
      %v4185 = vadd.f32 %v4104, %v4183
      %v4186 = vadd.f32 %v4105, %v4183
      %v4187 = vadd.f32 %v4106, %v4183
      %v4188 = vadd.f32 %v4107, %v4183
      %v4189 = vadd.f32 %v4108, %v4183
      %v4190 = vadd.f32 %v4109, %v4183
      %v4191 = vadd.f32 %v4110, %v4183
      %v4192 = vadd.f32 %v4111, %v4183
      %v4193 = vadd.f32 %v4112, %v4183
      %v4194 = vadd.f32 %v4113, %v4183
      %v4195 = vadd.f32 %v4114, %v4183
      %v4196 = vadd.f32 %v4115, %v4183
      %v4197 = vadd.f32 %v4116, %v4183
      %v4198 = vadd.f32 %v4117, %v4183
      %v4199 = vadd.f32 %v4118, %v4183
      %v4200 = vadd.f32 %v4119, %v4183
      %v4201 = vadd.f32 %v4120, %v4183
      %v4202 = vadd.f32 %v4121, %v4183
      %v4203 = vadd.f32 %v4122, %v4183
      %v4204 = vadd.f32 %v4123, %v4183
      %v4205 = vadd.f32 %v4124, %v4183
      %v4206 = vadd.f32 %v4125, %v4183
      %v4207 = vadd.f32 %v4126, %v4183
      %v4208 = vadd.f32 %v4127, %v4183
      %v4209 = vadd.f32 %v4128, %v4183
      %v4210 = vadd.f32 %v4129, %v4183
      %v4211 = vadd.f32 %v4130, %v4183
      %v4212 = vadd.f32 %v4131, %v4183
      %v4213 = vadd.f32 %v4132, %v4183
      %v4214 = vadd.f32 %v4133, %v4183
      %v4215 = vadd.f32 %v4134, %v4183
      %v4216 = vadd.f32 %v4135, %v4183
      %v4217 = vadd.f32 %v4136, %v4183
      %v4218 = vadd.f32 %v4137, %v4183
      %v4219 = vadd.f32 %v4138, %v4183
      %v4220 = vadd.f32 %v4139, %v4183
      %v4221 = vadd.f32 %v4140, %v4183
      %v4222 = vadd.f32 %v4141, %v4183
      %v4223 = vadd.f32 %v4142, %v4183
      %v4224 = vadd.f32 %v4143, %v4183
      %v4225 = vadd.f32 %v4144, %v4183
      %v4226 = vadd.f32 %v4145, %v4183
      %v4227 = vadd.f32 %v4146, %v4183
      %v4228 = vadd.f32 %v4147, %v4183
      %v4229 = vadd.f32 %v4148, %v4183
      %v4230 = vadd.f32 %v4149, %v4183
      %v4231 = vadd.f32 %v4150, %v4183
      %v4232 = vadd.f32 %v4151, %v4183
      %v4233 = vadd.f32 %v4152, %v4183
      %v4234 = vadd.f32 %v4153, %v4183
      %v4235 = vadd.f32 %v4154, %v4183
      %v4236 = vadd.f32 %v4155, %v4183
      %v4237 = vadd.f32 %v4156, %v4183
      %v4238 = vadd.f32 %v4157, %v4183
      %v4239 = vadd.f32 %v4158, %v4183
      %v4240 = vadd.f32 %v4159, %v4183
      %v4241 = vadd.f32 %v4160, %v4183
      %v4242 = vadd.f32 %v4161, %v4183
      %v4243 = vadd.f32 %v4162, %v4183
      %v4244 = vadd.f32 %v4163, %v4183
      %v4245 = vadd.f32 %v4164, %v4183
      %v4246 = vadd.f32 %v4165, %v4183
      %v4247 = vadd.f32 %v4166, %v4183
      %v4248 = vadd.f32 %v4167, %v4183
      %v4249 = vadd.f32 %v4168, %v4183
      %v4250 = vadd.f32 %v4169, %v4183
      %v4251 = vadd.f32 %v4170, %v4183
      %v4252 = vadd.f32 %v4171, %v4183
      %v4253 = vadd.f32 %v4172, %v4183
      %v4254 = vadd.f32 %v4173, %v4183
      %v4255 = vadd.f32 %v4174, %v4183
      %v4256 = vadd.f32 %v4175, %v4183
      %v4257 = vadd.f32 %v4176, %v4183
      %v4258 = vadd.f32 %v4177, %v4183
      %v4259 = vmax.f32 %v4185, 0.0
      %v4260 = vmax.f32 %v4186, 0.0
      %v4261 = vmax.f32 %v4187, 0.0
      %v4262 = vmax.f32 %v4188, 0.0
      %v4263 = vmax.f32 %v4189, 0.0
      %v4264 = vmax.f32 %v4190, 0.0
      %v4265 = vmax.f32 %v4191, 0.0
      %v4266 = vmax.f32 %v4192, 0.0
      %v4267 = vmax.f32 %v4193, 0.0
      %v4268 = vmax.f32 %v4194, 0.0
      %v4269 = vmax.f32 %v4195, 0.0
      %v4270 = vmax.f32 %v4196, 0.0
      %v4271 = vmax.f32 %v4197, 0.0
      %v4272 = vmax.f32 %v4198, 0.0
      %v4273 = vmax.f32 %v4199, 0.0
      %v4274 = vmax.f32 %v4200, 0.0
      %v4275 = vmax.f32 %v4201, 0.0
      %v4276 = vmax.f32 %v4202, 0.0
      %v4277 = vmax.f32 %v4203, 0.0
      %v4278 = vmax.f32 %v4204, 0.0
      %v4279 = vmax.f32 %v4205, 0.0
      %v4280 = vmax.f32 %v4206, 0.0
      %v4281 = vmax.f32 %v4207, 0.0
      %v4282 = vmax.f32 %v4208, 0.0
      %v4283 = vmax.f32 %v4209, 0.0
      %v4284 = vmax.f32 %v4210, 0.0
      %v4285 = vmax.f32 %v4211, 0.0
      %v4286 = vmax.f32 %v4212, 0.0
      %v4287 = vmax.f32 %v4213, 0.0
      %v4288 = vmax.f32 %v4214, 0.0
      %v4289 = vmax.f32 %v4215, 0.0
      %v4290 = vmax.f32 %v4216, 0.0
      %v4291 = vmax.f32 %v4217, 0.0
      %v4292 = vmax.f32 %v4218, 0.0
      %v4293 = vmax.f32 %v4219, 0.0
      %v4294 = vmax.f32 %v4220, 0.0
      %v4295 = vmax.f32 %v4221, 0.0
      %v4296 = vmax.f32 %v4222, 0.0
      %v4297 = vmax.f32 %v4223, 0.0
      %v4298 = vmax.f32 %v4224, 0.0
      %v4299 = vmax.f32 %v4225, 0.0
      %v4300 = vmax.f32 %v4226, 0.0
      %v4301 = vmax.f32 %v4227, 0.0
      %v4302 = vmax.f32 %v4228, 0.0
      %v4303 = vmax.f32 %v4229, 0.0
      %v4304 = vmax.f32 %v4230, 0.0
      %v4305 = vmax.f32 %v4231, 0.0
      %v4306 = vmax.f32 %v4232, 0.0
      %v4307 = vmax.f32 %v4233, 0.0
      %v4308 = vmax.f32 %v4234, 0.0
      %v4309 = vmax.f32 %v4235, 0.0
      %v4310 = vmax.f32 %v4236, 0.0
      %v4311 = vmax.f32 %v4237, 0.0
      %v4312 = vmax.f32 %v4238, 0.0
      %v4313 = vmax.f32 %v4239, 0.0
      %v4314 = vmax.f32 %v4240, 0.0
      %v4315 = vmax.f32 %v4241, 0.0
      %v4316 = vmax.f32 %v4242, 0.0
      %v4317 = vmax.f32 %v4243, 0.0
      %v4318 = vmax.f32 %v4244, 0.0
      %v4319 = vmax.f32 %v4245, 0.0
      %v4320 = vmax.f32 %v4246, 0.0
      %v4321 = vmax.f32 %v4247, 0.0
      %v4322 = vmax.f32 %v4248, 0.0
      %v4323 = vmax.f32 %v4249, 0.0
      %v4324 = vmax.f32 %v4250, 0.0
      %v4325 = vmax.f32 %v4251, 0.0
      %v4326 = vmax.f32 %v4252, 0.0
      %v4327 = vmax.f32 %v4253, 0.0
      %v4328 = vmax.f32 %v4254, 0.0
      %v4329 = vmax.f32 %v4255, 0.0
      %v4330 = vmax.f32 %v4256, 0.0
      %v4331 = vmax.f32 %v4257, 0.0
      %v4332 = vmax.f32 %v4258, 0.0
      %v4333 = vlaneseq
      %v4334 = vshrl.u32 %v4333, 7
      %v4335 = vadd.s32 %v4334, 8
      %v4336 = vadd.s32 %v4334, 16
      %v4337 = vadd.s32 %v4334, 24
      %v4338 = vadd.s32 %v4334, 32
      %v4339 = vadd.s32 %v4334, 40
      %v4340 = vadd.s32 %v4334, 48
      %v4341 = vadd.s32 %v4334, 56
      %v4342 = vadd.s32 %v4334, 64
      %v4343 = vadd.s32 %v4334, 72
      %v4344 = vadd.s32 %v4334, 80
      %v4345 = vadd.s32 %v4334, 88
      %v4346 = vadd.s32 %v4334, 96
      %v4347 = vadd.s32 %v4334, 104
      %v4348 = vadd.s32 %v4334, 112
      %v4349 = vadd.s32 %v4334, 120
      %v4350 = vadd.s32 %v4334, 128
      %v4351 = vadd.s32 %v4334, 136
      %v4352 = vadd.s32 %v4334, 144
      %v4353 = vadd.s32 %v4334, 152
      %v4354 = vadd.s32 %v4334, 160
      %v4355 = vadd.s32 %v4334, 168
      %v4356 = vadd.s32 %v4334, 176
      %v4357 = vadd.s32 %v4334, 184
      %v4358 = vadd.s32 %v4334, 192
      %v4359 = vadd.s32 %v4334, 200
      %v4360 = vadd.s32 %v4334, 208
      %v4361 = vadd.s32 %v4334, 216
      %v4362 = vadd.s32 %v4334, 224
      %v4363 = vadd.s32 %v4334, 232
      %v4364 = vadd.s32 %v4334, 240
      %v4365 = vadd.s32 %v4334, 248
      %v4366 = vadd.s32 %v4334, 256
      %v4367 = vadd.s32 %v4334, 264
      %v4368 = vadd.s32 %v4334, 272
      %v4369 = vadd.s32 %v4334, 280
      %v4370 = vadd.s32 %v4334, 288
      %v4371 = vadd.s32 %v4334, 296
      %v4372 = vadd.s32 %v4334, 304
      %v4373 = vadd.s32 %v4334, 312
      %v4374 = vadd.s32 %v4334, 320
      %v4375 = vadd.s32 %v4334, 328
      %v4376 = vadd.s32 %v4334, 336
      %v4377 = vadd.s32 %v4334, 344
      %v4378 = vadd.s32 %v4334, 352
      %v4379 = vadd.s32 %v4334, 360
      %v4380 = vadd.s32 %v4334, 368
      %v4381 = vadd.s32 %v4334, 376
      %v4382 = vadd.s32 %v4334, 384
      %v4383 = vadd.s32 %v4334, 392
      %v4384 = vadd.s32 %v4334, 400
      %v4385 = vadd.s32 %v4334, 408
      %v4386 = vadd.s32 %v4334, 416
      %v4387 = vadd.s32 %v4334, 424
      %v4388 = vadd.s32 %v4334, 432
      %v4389 = vadd.s32 %v4334, 440
      %v4390 = vadd.s32 %v4334, 448
      %v4391 = vadd.s32 %v4334, 456
      %v4392 = vadd.s32 %v4334, 464
      %v4393 = vadd.s32 %v4334, 472
      %v4394 = vadd.s32 %v4334, 480
      %v4395 = vadd.s32 %v4334, 488
      %v4396 = vadd.s32 %v4334, 496
      %v4397 = vadd.s32 %v4334, 504
      %v4398 = vadd.s32 %v4334, 512
      %v4399 = vadd.s32 %v4334, 520
      %v4400 = vadd.s32 %v4334, 528
      %v4401 = vadd.s32 %v4334, 536
      %v4402 = vadd.s32 %v4334, 544
      %v4403 = vadd.s32 %v4334, 552
      %v4404 = vadd.s32 %v4334, 560
      %v4405 = vadd.s32 %v4334, 568
      %v4406 = vadd.s32 %v4334, 576
      %v4407 = vadd.s32 %v4334, 584
      %v4408 = vadd.s32 %v4335, 24
      %v4409 = vadd.s32 %v4336, 24
      %v4410 = vadd.s32 %v4337, 24
      %v4411 = vadd.s32 %v4338, 24
      %v4412 = vadd.s32 %v4339, 24
      %v4413 = vadd.s32 %v4340, 24
      %v4414 = vadd.s32 %v4341, 24
      %v4415 = vadd.s32 %v4342, 24
      %v4416 = vadd.s32 %v4343, 24
      %v4417 = vadd.s32 %v4344, 24
      %v4418 = vadd.s32 %v4345, 24
      %v4419 = vadd.s32 %v4346, 24
      %v4420 = vadd.s32 %v4347, 24
      %v4421 = vadd.s32 %v4348, 24
      %v4422 = vadd.s32 %v4349, 24
      %v4423 = vadd.s32 %v4350, 24
      %v4424 = vadd.s32 %v4351, 24
      %v4425 = vadd.s32 %v4352, 24
      %v4426 = vadd.s32 %v4353, 24
      %v4427 = vadd.s32 %v4354, 24
      %v4428 = vadd.s32 %v4355, 24
      %v4429 = vadd.s32 %v4356, 24
      %v4430 = vadd.s32 %v4357, 24
      %v4431 = vadd.s32 %v4358, 24
      %v4432 = vadd.s32 %v4359, 24
      %v4433 = vadd.s32 %v4360, 24
      %v4434 = vadd.s32 %v4361, 24
      %v4435 = vadd.s32 %v4362, 24
      %v4436 = vadd.s32 %v4363, 24
      %v4437 = vadd.s32 %v4364, 24
      %v4438 = vadd.s32 %v4365, 24
      %v4439 = vadd.s32 %v4366, 24
      %v4440 = vadd.s32 %v4367, 24
      %v4441 = vadd.s32 %v4368, 24
      %v4442 = vadd.s32 %v4369, 24
      %v4443 = vadd.s32 %v4370, 24
      %v4444 = vadd.s32 %v4371, 24
      %v4445 = vadd.s32 %v4372, 24
      %v4446 = vadd.s32 %v4373, 24
      %v4447 = vadd.s32 %v4374, 24
      %v4448 = vadd.s32 %v4375, 24
      %v4449 = vadd.s32 %v4376, 24
      %v4450 = vadd.s32 %v4377, 24
      %v4451 = vadd.s32 %v4378, 24
      %v4452 = vadd.s32 %v4379, 24
      %v4453 = vadd.s32 %v4380, 24
      %v4454 = vadd.s32 %v4381, 24
      %v4455 = vadd.s32 %v4382, 24
      %v4456 = vadd.s32 %v4383, 24
      %v4457 = vadd.s32 %v4384, 24
      %v4458 = vadd.s32 %v4385, 24
      %v4459 = vadd.s32 %v4386, 24
      %v4460 = vadd.s32 %v4387, 24
      %v4461 = vadd.s32 %v4388, 24
      %v4462 = vadd.s32 %v4389, 24
      %v4463 = vadd.s32 %v4390, 24
      %v4464 = vadd.s32 %v4391, 24
      %v4465 = vadd.s32 %v4392, 24
      %v4466 = vadd.s32 %v4393, 24
      %v4467 = vadd.s32 %v4394, 24
      %v4468 = vadd.s32 %v4395, 24
      %v4469 = vadd.s32 %v4396, 24
      %v4470 = vadd.s32 %v4397, 24
      %v4471 = vadd.s32 %v4398, 24
      %v4472 = vadd.s32 %v4399, 24
      %v4473 = vadd.s32 %v4400, 24
      %v4474 = vadd.s32 %v4401, 24
      %v4475 = vadd.s32 %v4402, 24
      %v4476 = vadd.s32 %v4403, 24
      %v4477 = vadd.s32 %v4404, 24
      %v4478 = vadd.s32 %v4405, 24
      %v4479 = vadd.s32 %v4406, 24
      %v4480 = vadd.s32 %v4407, 24
      %v4481 = vshra.s32 %v4337, 5
      %v4482 = vshra.s32 %v4408, 5
      %v4483 = vshra.s32 %v4409, 5
      %v4484 = vshra.s32 %v4410, 5
      %v4485 = vshra.s32 %v4411, 5
      %v4486 = vshra.s32 %v4412, 5
      %v4487 = vshra.s32 %v4413, 5
      %v4488 = vshra.s32 %v4414, 5
      %v4489 = vshra.s32 %v4415, 5
      %v4490 = vshra.s32 %v4416, 5
      %v4491 = vshra.s32 %v4417, 5
      %v4492 = vshra.s32 %v4418, 5
      %v4493 = vshra.s32 %v4419, 5
      %v4494 = vshra.s32 %v4420, 5
      %v4495 = vshra.s32 %v4421, 5
      %v4496 = vshra.s32 %v4422, 5
      %v4497 = vshra.s32 %v4423, 5
      %v4498 = vshra.s32 %v4424, 5
      %v4499 = vshra.s32 %v4425, 5
      %v4500 = vshra.s32 %v4426, 5
      %v4501 = vshra.s32 %v4427, 5
      %v4502 = vshra.s32 %v4428, 5
      %v4503 = vshra.s32 %v4429, 5
      %v4504 = vshra.s32 %v4430, 5
      %v4505 = vshra.s32 %v4431, 5
      %v4506 = vshra.s32 %v4432, 5
      %v4507 = vshra.s32 %v4433, 5
      %v4508 = vshra.s32 %v4434, 5
      %v4509 = vshra.s32 %v4435, 5
      %v4510 = vshra.s32 %v4436, 5
      %v4511 = vshra.s32 %v4437, 5
      %v4512 = vshra.s32 %v4438, 5
      %v4513 = vshra.s32 %v4439, 5
      %v4514 = vshra.s32 %v4440, 5
      %v4515 = vshra.s32 %v4441, 5
      %v4516 = vshra.s32 %v4442, 5
      %v4517 = vshra.s32 %v4443, 5
      %v4518 = vshra.s32 %v4444, 5
      %v4519 = vshra.s32 %v4445, 5
      %v4520 = vshra.s32 %v4446, 5
      %v4521 = vshra.s32 %v4447, 5
      %v4522 = vshra.s32 %v4448, 5
      %v4523 = vshra.s32 %v4449, 5
      %v4524 = vshra.s32 %v4450, 5
      %v4525 = vshra.s32 %v4451, 5
      %v4526 = vshra.s32 %v4452, 5
      %v4527 = vshra.s32 %v4453, 5
      %v4528 = vshra.s32 %v4454, 5
      %v4529 = vshra.s32 %v4455, 5
      %v4530 = vshra.s32 %v4456, 5
      %v4531 = vshra.s32 %v4457, 5
      %v4532 = vshra.s32 %v4458, 5
      %v4533 = vshra.s32 %v4459, 5
      %v4534 = vshra.s32 %v4460, 5
      %v4535 = vshra.s32 %v4461, 5
      %v4536 = vshra.s32 %v4462, 5
      %v4537 = vshra.s32 %v4463, 5
      %v4538 = vshra.s32 %v4464, 5
      %v4539 = vshra.s32 %v4465, 5
      %v4540 = vshra.s32 %v4466, 5
      %v4541 = vshra.s32 %v4467, 5
      %v4542 = vshra.s32 %v4468, 5
      %v4543 = vshra.s32 %v4469, 5
      %v4544 = vshra.s32 %v4470, 5
      %v4545 = vshra.s32 %v4471, 5
      %v4546 = vshra.s32 %v4472, 5
      %v4547 = vshra.s32 %v4473, 5
      %v4548 = vshra.s32 %v4474, 5
      %v4549 = vshra.s32 %v4475, 5
      %v4550 = vshra.s32 %v4476, 5
      %v4551 = vshra.s32 %v4477, 5
      %v4552 = vshra.s32 %v4478, 5
      %v4553 = vshra.s32 %v4479, 5
      %v4554 = vshra.s32 %v4480, 5
      %v4555 = vand.u32 %v4337, 31
      %v4556 = vand.u32 %v4408, 31
      %v4557 = vand.u32 %v4409, 31
      %v4558 = vand.u32 %v4410, 31
      %v4559 = vand.u32 %v4411, 31
      %v4560 = vand.u32 %v4412, 31
      %v4561 = vand.u32 %v4413, 31
      %v4562 = vand.u32 %v4414, 31
      %v4563 = vand.u32 %v4415, 31
      %v4564 = vand.u32 %v4416, 31
      %v4565 = vand.u32 %v4417, 31
      %v4566 = vand.u32 %v4418, 31
      %v4567 = vand.u32 %v4419, 31
      %v4568 = vand.u32 %v4420, 31
      %v4569 = vand.u32 %v4421, 31
      %v4570 = vand.u32 %v4422, 31
      %v4571 = vand.u32 %v4423, 31
      %v4572 = vand.u32 %v4424, 31
      %v4573 = vand.u32 %v4425, 31
      %v4574 = vand.u32 %v4426, 31
      %v4575 = vand.u32 %v4427, 31
      %v4576 = vand.u32 %v4428, 31
      %v4577 = vand.u32 %v4429, 31
      %v4578 = vand.u32 %v4430, 31
      %v4579 = vand.u32 %v4431, 31
      %v4580 = vand.u32 %v4432, 31
      %v4581 = vand.u32 %v4433, 31
      %v4582 = vand.u32 %v4434, 31
      %v4583 = vand.u32 %v4435, 31
      %v4584 = vand.u32 %v4436, 31
      %v4585 = vand.u32 %v4437, 31
      %v4586 = vand.u32 %v4438, 31
      %v4587 = vand.u32 %v4439, 31
      %v4588 = vand.u32 %v4440, 31
      %v4589 = vand.u32 %v4441, 31
      %v4590 = vand.u32 %v4442, 31
      %v4591 = vand.u32 %v4443, 31
      %v4592 = vand.u32 %v4444, 31
      %v4593 = vand.u32 %v4445, 31
      %v4594 = vand.u32 %v4446, 31
      %v4595 = vand.u32 %v4447, 31
      %v4596 = vand.u32 %v4448, 31
      %v4597 = vand.u32 %v4449, 31
      %v4598 = vand.u32 %v4450, 31
      %v4599 = vand.u32 %v4451, 31
      %v4600 = vand.u32 %v4452, 31
      %v4601 = vand.u32 %v4453, 31
      %v4602 = vand.u32 %v4454, 31
      %v4603 = vand.u32 %v4455, 31
      %v4604 = vand.u32 %v4456, 31
      %v4605 = vand.u32 %v4457, 31
      %v4606 = vand.u32 %v4458, 31
      %v4607 = vand.u32 %v4459, 31
      %v4608 = vand.u32 %v4460, 31
      %v4609 = vand.u32 %v4461, 31
      %v4610 = vand.u32 %v4462, 31
      %v4611 = vand.u32 %v4463, 31
      %v4612 = vand.u32 %v4464, 31
      %v4613 = vand.u32 %v4465, 31
      %v4614 = vand.u32 %v4466, 31
      %v4615 = vand.u32 %v4467, 31
      %v4616 = vand.u32 %v4468, 31
      %v4617 = vand.u32 %v4469, 31
      %v4618 = vand.u32 %v4470, 31
      %v4619 = vand.u32 %v4471, 31
      %v4620 = vand.u32 %v4472, 31
      %v4621 = vand.u32 %v4473, 31
      %v4622 = vand.u32 %v4474, 31
      %v4623 = vand.u32 %v4475, 31
      %v4624 = vand.u32 %v4476, 31
      %v4625 = vand.u32 %v4477, 31
      %v4626 = vand.u32 %v4478, 31
      %v4627 = vand.u32 %v4479, 31
      %v4628 = vand.u32 %v4480, 31
      %vm4629 = vcmp.ge.s32.totalorder %v4481, 2
      %vm4630 = vcmp.ge.s32.totalorder %v4482, 2
      %vm4631 = vcmp.ge.s32.totalorder %v4483, 2
      %vm4632 = vcmp.ge.s32.totalorder %v4484, 2
      %vm4633 = vcmp.ge.s32.totalorder %v4485, 2
      %vm4634 = vcmp.ge.s32.totalorder %v4486, 2
      %vm4635 = vcmp.ge.s32.totalorder %v4487, 2
      %vm4636 = vcmp.ge.s32.totalorder %v4488, 2
      %vm4637 = vcmp.ge.s32.totalorder %v4489, 2
      %vm4638 = vcmp.ge.s32.totalorder %v4490, 2
      %vm4639 = vcmp.ge.s32.totalorder %v4491, 2
      %vm4640 = vcmp.ge.s32.totalorder %v4492, 2
      %vm4641 = vcmp.ge.s32.totalorder %v4493, 2
      %vm4642 = vcmp.ge.s32.totalorder %v4494, 2
      %vm4643 = vcmp.ge.s32.totalorder %v4495, 2
      %vm4644 = vcmp.ge.s32.totalorder %v4496, 2
      %vm4645 = vcmp.ge.s32.totalorder %v4497, 2
      %vm4646 = vcmp.ge.s32.totalorder %v4498, 2
      %vm4647 = vcmp.ge.s32.totalorder %v4499, 2
      %vm4648 = vcmp.ge.s32.totalorder %v4500, 2
      %vm4649 = vcmp.ge.s32.totalorder %v4501, 2
      %vm4650 = vcmp.ge.s32.totalorder %v4502, 2
      %vm4651 = vcmp.ge.s32.totalorder %v4503, 2
      %vm4652 = vcmp.ge.s32.totalorder %v4504, 2
      %vm4653 = vcmp.ge.s32.totalorder %v4505, 2
      %vm4654 = vcmp.ge.s32.totalorder %v4506, 2
      %vm4655 = vcmp.ge.s32.totalorder %v4507, 2
      %vm4656 = vcmp.ge.s32.totalorder %v4508, 2
      %vm4657 = vcmp.ge.s32.totalorder %v4509, 2
      %vm4658 = vcmp.ge.s32.totalorder %v4510, 2
      %vm4659 = vcmp.ge.s32.totalorder %v4511, 2
      %vm4660 = vcmp.ge.s32.totalorder %v4512, 2
      %vm4661 = vcmp.ge.s32.totalorder %v4513, 2
      %vm4662 = vcmp.ge.s32.totalorder %v4514, 2
      %vm4663 = vcmp.ge.s32.totalorder %v4515, 2
      %vm4664 = vcmp.ge.s32.totalorder %v4516, 2
      %vm4665 = vcmp.ge.s32.totalorder %v4517, 2
      %vm4666 = vcmp.ge.s32.totalorder %v4518, 2
      %vm4667 = vcmp.ge.s32.totalorder %v4519, 2
      %vm4668 = vcmp.ge.s32.totalorder %v4520, 2
      %vm4669 = vcmp.ge.s32.totalorder %v4521, 2
      %vm4670 = vcmp.ge.s32.totalorder %v4522, 2
      %vm4671 = vcmp.ge.s32.totalorder %v4523, 2
      %vm4672 = vcmp.ge.s32.totalorder %v4524, 2
      %vm4673 = vcmp.ge.s32.totalorder %v4525, 2
      %vm4674 = vcmp.ge.s32.totalorder %v4526, 2
      %vm4675 = vcmp.ge.s32.totalorder %v4527, 2
      %vm4676 = vcmp.ge.s32.totalorder %v4528, 2
      %vm4677 = vcmp.ge.s32.totalorder %v4529, 2
      %vm4678 = vcmp.ge.s32.totalorder %v4530, 2
      %vm4679 = vcmp.ge.s32.totalorder %v4531, 2
      %vm4680 = vcmp.ge.s32.totalorder %v4532, 2
      %vm4681 = vcmp.ge.s32.totalorder %v4533, 2
      %vm4682 = vcmp.ge.s32.totalorder %v4534, 2
      %vm4683 = vcmp.ge.s32.totalorder %v4535, 2
      %vm4684 = vcmp.ge.s32.totalorder %v4536, 2
      %vm4685 = vcmp.ge.s32.totalorder %v4537, 2
      %vm4686 = vcmp.ge.s32.totalorder %v4538, 2
      %vm4687 = vcmp.ge.s32.totalorder %v4539, 2
      %vm4688 = vcmp.ge.s32.totalorder %v4540, 2
      %vm4689 = vcmp.ge.s32.totalorder %v4541, 2
      %vm4690 = vcmp.ge.s32.totalorder %v4542, 2
      %vm4691 = vcmp.ge.s32.totalorder %v4543, 2
      %vm4692 = vcmp.ge.s32.totalorder %v4544, 2
      %vm4693 = vcmp.ge.s32.totalorder %v4545, 2
      %vm4694 = vcmp.ge.s32.totalorder %v4546, 2
      %vm4695 = vcmp.ge.s32.totalorder %v4547, 2
      %vm4696 = vcmp.ge.s32.totalorder %v4548, 2
      %vm4697 = vcmp.ge.s32.totalorder %v4549, 2
      %vm4698 = vcmp.ge.s32.totalorder %v4550, 2
      %vm4699 = vcmp.ge.s32.totalorder %v4551, 2
      %vm4700 = vcmp.ge.s32.totalorder %v4552, 2
      %vm4701 = vcmp.ge.s32.totalorder %v4553, 2
      %vm4702 = vcmp.ge.s32.totalorder %v4554, 2
      %vm4703 = vcmp.lt.s32.totalorder %v4481, 18
      %vm4704 = vcmp.lt.s32.totalorder %v4482, 18
      %vm4705 = vcmp.lt.s32.totalorder %v4483, 18
      %vm4706 = vcmp.lt.s32.totalorder %v4484, 18
      %vm4707 = vcmp.lt.s32.totalorder %v4485, 18
      %vm4708 = vcmp.lt.s32.totalorder %v4486, 18
      %vm4709 = vcmp.lt.s32.totalorder %v4487, 18
      %vm4710 = vcmp.lt.s32.totalorder %v4488, 18
      %vm4711 = vcmp.lt.s32.totalorder %v4489, 18
      %vm4712 = vcmp.lt.s32.totalorder %v4490, 18
      %vm4713 = vcmp.lt.s32.totalorder %v4491, 18
      %vm4714 = vcmp.lt.s32.totalorder %v4492, 18
      %vm4715 = vcmp.lt.s32.totalorder %v4493, 18
      %vm4716 = vcmp.lt.s32.totalorder %v4494, 18
      %vm4717 = vcmp.lt.s32.totalorder %v4495, 18
      %vm4718 = vcmp.lt.s32.totalorder %v4496, 18
      %vm4719 = vcmp.lt.s32.totalorder %v4497, 18
      %vm4720 = vcmp.lt.s32.totalorder %v4498, 18
      %vm4721 = vcmp.lt.s32.totalorder %v4499, 18
      %vm4722 = vcmp.lt.s32.totalorder %v4500, 18
      %vm4723 = vcmp.lt.s32.totalorder %v4501, 18
      %vm4724 = vcmp.lt.s32.totalorder %v4502, 18
      %vm4725 = vcmp.lt.s32.totalorder %v4503, 18
      %vm4726 = vcmp.lt.s32.totalorder %v4504, 18
      %vm4727 = vcmp.lt.s32.totalorder %v4505, 18
      %vm4728 = vcmp.lt.s32.totalorder %v4506, 18
      %vm4729 = vcmp.lt.s32.totalorder %v4507, 18
      %vm4730 = vcmp.lt.s32.totalorder %v4508, 18
      %vm4731 = vcmp.lt.s32.totalorder %v4509, 18
      %vm4732 = vcmp.lt.s32.totalorder %v4510, 18
      %vm4733 = vcmp.lt.s32.totalorder %v4511, 18
      %vm4734 = vcmp.lt.s32.totalorder %v4512, 18
      %vm4735 = vcmp.lt.s32.totalorder %v4513, 18
      %vm4736 = vcmp.lt.s32.totalorder %v4514, 18
      %vm4737 = vcmp.lt.s32.totalorder %v4515, 18
      %vm4738 = vcmp.lt.s32.totalorder %v4516, 18
      %vm4739 = vcmp.lt.s32.totalorder %v4517, 18
      %vm4740 = vcmp.lt.s32.totalorder %v4518, 18
      %vm4741 = vcmp.lt.s32.totalorder %v4519, 18
      %vm4742 = vcmp.lt.s32.totalorder %v4520, 18
      %vm4743 = vcmp.lt.s32.totalorder %v4521, 18
      %vm4744 = vcmp.lt.s32.totalorder %v4522, 18
      %vm4745 = vcmp.lt.s32.totalorder %v4523, 18
      %vm4746 = vcmp.lt.s32.totalorder %v4524, 18
      %vm4747 = vcmp.lt.s32.totalorder %v4525, 18
      %vm4748 = vcmp.lt.s32.totalorder %v4526, 18
      %vm4749 = vcmp.lt.s32.totalorder %v4527, 18
      %vm4750 = vcmp.lt.s32.totalorder %v4528, 18
      %vm4751 = vcmp.lt.s32.totalorder %v4529, 18
      %vm4752 = vcmp.lt.s32.totalorder %v4530, 18
      %vm4753 = vcmp.lt.s32.totalorder %v4531, 18
      %vm4754 = vcmp.lt.s32.totalorder %v4532, 18
      %vm4755 = vcmp.lt.s32.totalorder %v4533, 18
      %vm4756 = vcmp.lt.s32.totalorder %v4534, 18
      %vm4757 = vcmp.lt.s32.totalorder %v4535, 18
      %vm4758 = vcmp.lt.s32.totalorder %v4536, 18
      %vm4759 = vcmp.lt.s32.totalorder %v4537, 18
      %vm4760 = vcmp.lt.s32.totalorder %v4538, 18
      %vm4761 = vcmp.lt.s32.totalorder %v4539, 18
      %vm4762 = vcmp.lt.s32.totalorder %v4540, 18
      %vm4763 = vcmp.lt.s32.totalorder %v4541, 18
      %vm4764 = vcmp.lt.s32.totalorder %v4542, 18
      %vm4765 = vcmp.lt.s32.totalorder %v4543, 18
      %vm4766 = vcmp.lt.s32.totalorder %v4544, 18
      %vm4767 = vcmp.lt.s32.totalorder %v4545, 18
      %vm4768 = vcmp.lt.s32.totalorder %v4546, 18
      %vm4769 = vcmp.lt.s32.totalorder %v4547, 18
      %vm4770 = vcmp.lt.s32.totalorder %v4548, 18
      %vm4771 = vcmp.lt.s32.totalorder %v4549, 18
      %vm4772 = vcmp.lt.s32.totalorder %v4550, 18
      %vm4773 = vcmp.lt.s32.totalorder %v4551, 18
      %vm4774 = vcmp.lt.s32.totalorder %v4552, 18
      %vm4775 = vcmp.lt.s32.totalorder %v4553, 18
      %vm4776 = vcmp.lt.s32.totalorder %v4554, 18
      %vm4777 = vmand %vm4629, %vm4703
      %vm4778 = vmand %vm4630, %vm4704
      %vm4779 = vmand %vm4631, %vm4705
      %vm4780 = vmand %vm4632, %vm4706
      %vm4781 = vmand %vm4633, %vm4707
      %vm4782 = vmand %vm4634, %vm4708
      %vm4783 = vmand %vm4635, %vm4709
      %vm4784 = vmand %vm4636, %vm4710
      %vm4785 = vmand %vm4637, %vm4711
      %vm4786 = vmand %vm4638, %vm4712
      %vm4787 = vmand %vm4639, %vm4713
      %vm4788 = vmand %vm4640, %vm4714
      %vm4789 = vmand %vm4641, %vm4715
      %vm4790 = vmand %vm4642, %vm4716
      %vm4791 = vmand %vm4643, %vm4717
      %vm4792 = vmand %vm4644, %vm4718
      %vm4793 = vmand %vm4645, %vm4719
      %vm4794 = vmand %vm4646, %vm4720
      %vm4795 = vmand %vm4647, %vm4721
      %vm4796 = vmand %vm4648, %vm4722
      %vm4797 = vmand %vm4649, %vm4723
      %vm4798 = vmand %vm4650, %vm4724
      %vm4799 = vmand %vm4651, %vm4725
      %vm4800 = vmand %vm4652, %vm4726
      %vm4801 = vmand %vm4653, %vm4727
      %vm4802 = vmand %vm4654, %vm4728
      %vm4803 = vmand %vm4655, %vm4729
      %vm4804 = vmand %vm4656, %vm4730
      %vm4805 = vmand %vm4657, %vm4731
      %vm4806 = vmand %vm4658, %vm4732
      %vm4807 = vmand %vm4659, %vm4733
      %vm4808 = vmand %vm4660, %vm4734
      %vm4809 = vmand %vm4661, %vm4735
      %vm4810 = vmand %vm4662, %vm4736
      %vm4811 = vmand %vm4663, %vm4737
      %vm4812 = vmand %vm4664, %vm4738
      %vm4813 = vmand %vm4665, %vm4739
      %vm4814 = vmand %vm4666, %vm4740
      %vm4815 = vmand %vm4667, %vm4741
      %vm4816 = vmand %vm4668, %vm4742
      %vm4817 = vmand %vm4669, %vm4743
      %vm4818 = vmand %vm4670, %vm4744
      %vm4819 = vmand %vm4671, %vm4745
      %vm4820 = vmand %vm4672, %vm4746
      %vm4821 = vmand %vm4673, %vm4747
      %vm4822 = vmand %vm4674, %vm4748
      %vm4823 = vmand %vm4675, %vm4749
      %vm4824 = vmand %vm4676, %vm4750
      %vm4825 = vmand %vm4677, %vm4751
      %vm4826 = vmand %vm4678, %vm4752
      %vm4827 = vmand %vm4679, %vm4753
      %vm4828 = vmand %vm4680, %vm4754
      %vm4829 = vmand %vm4681, %vm4755
      %vm4830 = vmand %vm4682, %vm4756
      %vm4831 = vmand %vm4683, %vm4757
      %vm4832 = vmand %vm4684, %vm4758
      %vm4833 = vmand %vm4685, %vm4759
      %vm4834 = vmand %vm4686, %vm4760
      %vm4835 = vmand %vm4687, %vm4761
      %vm4836 = vmand %vm4688, %vm4762
      %vm4837 = vmand %vm4689, %vm4763
      %vm4838 = vmand %vm4690, %vm4764
      %vm4839 = vmand %vm4691, %vm4765
      %vm4840 = vmand %vm4692, %vm4766
      %vm4841 = vmand %vm4693, %vm4767
      %vm4842 = vmand %vm4694, %vm4768
      %vm4843 = vmand %vm4695, %vm4769
      %vm4844 = vmand %vm4696, %vm4770
      %vm4845 = vmand %vm4697, %vm4771
      %vm4846 = vmand %vm4698, %vm4772
      %vm4847 = vmand %vm4699, %vm4773
      %vm4848 = vmand %vm4700, %vm4774
      %vm4849 = vmand %vm4701, %vm4775
      %vm4850 = vmand %vm4702, %vm4776
      %vm4851 = vcmp.ge.s32.totalorder %v4555, 2
      %vm4852 = vcmp.ge.s32.totalorder %v4556, 2
      %vm4853 = vcmp.ge.s32.totalorder %v4557, 2
      %vm4854 = vcmp.ge.s32.totalorder %v4558, 2
      %vm4855 = vcmp.ge.s32.totalorder %v4559, 2
      %vm4856 = vcmp.ge.s32.totalorder %v4560, 2
      %vm4857 = vcmp.ge.s32.totalorder %v4561, 2
      %vm4858 = vcmp.ge.s32.totalorder %v4562, 2
      %vm4859 = vcmp.ge.s32.totalorder %v4563, 2
      %vm4860 = vcmp.ge.s32.totalorder %v4564, 2
      %vm4861 = vcmp.ge.s32.totalorder %v4565, 2
      %vm4862 = vcmp.ge.s32.totalorder %v4566, 2
      %vm4863 = vcmp.ge.s32.totalorder %v4567, 2
      %vm4864 = vcmp.ge.s32.totalorder %v4568, 2
      %vm4865 = vcmp.ge.s32.totalorder %v4569, 2
      %vm4866 = vcmp.ge.s32.totalorder %v4570, 2
      %vm4867 = vcmp.ge.s32.totalorder %v4571, 2
      %vm4868 = vcmp.ge.s32.totalorder %v4572, 2
      %vm4869 = vcmp.ge.s32.totalorder %v4573, 2
      %vm4870 = vcmp.ge.s32.totalorder %v4574, 2
      %vm4871 = vcmp.ge.s32.totalorder %v4575, 2
      %vm4872 = vcmp.ge.s32.totalorder %v4576, 2
      %vm4873 = vcmp.ge.s32.totalorder %v4577, 2
      %vm4874 = vcmp.ge.s32.totalorder %v4578, 2
      %vm4875 = vcmp.ge.s32.totalorder %v4579, 2
      %vm4876 = vcmp.ge.s32.totalorder %v4580, 2
      %vm4877 = vcmp.ge.s32.totalorder %v4581, 2
      %vm4878 = vcmp.ge.s32.totalorder %v4582, 2
      %vm4879 = vcmp.ge.s32.totalorder %v4583, 2
      %vm4880 = vcmp.ge.s32.totalorder %v4584, 2
      %vm4881 = vcmp.ge.s32.totalorder %v4585, 2
      %vm4882 = vcmp.ge.s32.totalorder %v4586, 2
      %vm4883 = vcmp.ge.s32.totalorder %v4587, 2
      %vm4884 = vcmp.ge.s32.totalorder %v4588, 2
      %vm4885 = vcmp.ge.s32.totalorder %v4589, 2
      %vm4886 = vcmp.ge.s32.totalorder %v4590, 2
      %vm4887 = vcmp.ge.s32.totalorder %v4591, 2
      %vm4888 = vcmp.ge.s32.totalorder %v4592, 2
      %vm4889 = vcmp.ge.s32.totalorder %v4593, 2
      %vm4890 = vcmp.ge.s32.totalorder %v4594, 2
      %vm4891 = vcmp.ge.s32.totalorder %v4595, 2
      %vm4892 = vcmp.ge.s32.totalorder %v4596, 2
      %vm4893 = vcmp.ge.s32.totalorder %v4597, 2
      %vm4894 = vcmp.ge.s32.totalorder %v4598, 2
      %vm4895 = vcmp.ge.s32.totalorder %v4599, 2
      %vm4896 = vcmp.ge.s32.totalorder %v4600, 2
      %vm4897 = vcmp.ge.s32.totalorder %v4601, 2
      %vm4898 = vcmp.ge.s32.totalorder %v4602, 2
      %vm4899 = vcmp.ge.s32.totalorder %v4603, 2
      %vm4900 = vcmp.ge.s32.totalorder %v4604, 2
      %vm4901 = vcmp.ge.s32.totalorder %v4605, 2
      %vm4902 = vcmp.ge.s32.totalorder %v4606, 2
      %vm4903 = vcmp.ge.s32.totalorder %v4607, 2
      %vm4904 = vcmp.ge.s32.totalorder %v4608, 2
      %vm4905 = vcmp.ge.s32.totalorder %v4609, 2
      %vm4906 = vcmp.ge.s32.totalorder %v4610, 2
      %vm4907 = vcmp.ge.s32.totalorder %v4611, 2
      %vm4908 = vcmp.ge.s32.totalorder %v4612, 2
      %vm4909 = vcmp.ge.s32.totalorder %v4613, 2
      %vm4910 = vcmp.ge.s32.totalorder %v4614, 2
      %vm4911 = vcmp.ge.s32.totalorder %v4615, 2
      %vm4912 = vcmp.ge.s32.totalorder %v4616, 2
      %vm4913 = vcmp.ge.s32.totalorder %v4617, 2
      %vm4914 = vcmp.ge.s32.totalorder %v4618, 2
      %vm4915 = vcmp.ge.s32.totalorder %v4619, 2
      %vm4916 = vcmp.ge.s32.totalorder %v4620, 2
      %vm4917 = vcmp.ge.s32.totalorder %v4621, 2
      %vm4918 = vcmp.ge.s32.totalorder %v4622, 2
      %vm4919 = vcmp.ge.s32.totalorder %v4623, 2
      %vm4920 = vcmp.ge.s32.totalorder %v4624, 2
      %vm4921 = vcmp.ge.s32.totalorder %v4625, 2
      %vm4922 = vcmp.ge.s32.totalorder %v4626, 2
      %vm4923 = vcmp.ge.s32.totalorder %v4627, 2
      %vm4924 = vcmp.ge.s32.totalorder %v4628, 2
      %vm4925 = vmand %vm4777, %vm4851
      %vm4926 = vmand %vm4778, %vm4852
      %vm4927 = vmand %vm4779, %vm4853
      %vm4928 = vmand %vm4780, %vm4854
      %vm4929 = vmand %vm4781, %vm4855
      %vm4930 = vmand %vm4782, %vm4856
      %vm4931 = vmand %vm4783, %vm4857
      %vm4932 = vmand %vm4784, %vm4858
      %vm4933 = vmand %vm4785, %vm4859
      %vm4934 = vmand %vm4786, %vm4860
      %vm4935 = vmand %vm4787, %vm4861
      %vm4936 = vmand %vm4788, %vm4862
      %vm4937 = vmand %vm4789, %vm4863
      %vm4938 = vmand %vm4790, %vm4864
      %vm4939 = vmand %vm4791, %vm4865
      %vm4940 = vmand %vm4792, %vm4866
      %vm4941 = vmand %vm4793, %vm4867
      %vm4942 = vmand %vm4794, %vm4868
      %vm4943 = vmand %vm4795, %vm4869
      %vm4944 = vmand %vm4796, %vm4870
      %vm4945 = vmand %vm4797, %vm4871
      %vm4946 = vmand %vm4798, %vm4872
      %vm4947 = vmand %vm4799, %vm4873
      %vm4948 = vmand %vm4800, %vm4874
      %vm4949 = vmand %vm4801, %vm4875
      %vm4950 = vmand %vm4802, %vm4876
      %vm4951 = vmand %vm4803, %vm4877
      %vm4952 = vmand %vm4804, %vm4878
      %vm4953 = vmand %vm4805, %vm4879
      %vm4954 = vmand %vm4806, %vm4880
      %vm4955 = vmand %vm4807, %vm4881
      %vm4956 = vmand %vm4808, %vm4882
      %vm4957 = vmand %vm4809, %vm4883
      %vm4958 = vmand %vm4810, %vm4884
      %vm4959 = vmand %vm4811, %vm4885
      %vm4960 = vmand %vm4812, %vm4886
      %vm4961 = vmand %vm4813, %vm4887
      %vm4962 = vmand %vm4814, %vm4888
      %vm4963 = vmand %vm4815, %vm4889
      %vm4964 = vmand %vm4816, %vm4890
      %vm4965 = vmand %vm4817, %vm4891
      %vm4966 = vmand %vm4818, %vm4892
      %vm4967 = vmand %vm4819, %vm4893
      %vm4968 = vmand %vm4820, %vm4894
      %vm4969 = vmand %vm4821, %vm4895
      %vm4970 = vmand %vm4822, %vm4896
      %vm4971 = vmand %vm4823, %vm4897
      %vm4972 = vmand %vm4824, %vm4898
      %vm4973 = vmand %vm4825, %vm4899
      %vm4974 = vmand %vm4826, %vm4900
      %vm4975 = vmand %vm4827, %vm4901
      %vm4976 = vmand %vm4828, %vm4902
      %vm4977 = vmand %vm4829, %vm4903
      %vm4978 = vmand %vm4830, %vm4904
      %vm4979 = vmand %vm4831, %vm4905
      %vm4980 = vmand %vm4832, %vm4906
      %vm4981 = vmand %vm4833, %vm4907
      %vm4982 = vmand %vm4834, %vm4908
      %vm4983 = vmand %vm4835, %vm4909
      %vm4984 = vmand %vm4836, %vm4910
      %vm4985 = vmand %vm4837, %vm4911
      %vm4986 = vmand %vm4838, %vm4912
      %vm4987 = vmand %vm4839, %vm4913
      %vm4988 = vmand %vm4840, %vm4914
      %vm4989 = vmand %vm4841, %vm4915
      %vm4990 = vmand %vm4842, %vm4916
      %vm4991 = vmand %vm4843, %vm4917
      %vm4992 = vmand %vm4844, %vm4918
      %vm4993 = vmand %vm4845, %vm4919
      %vm4994 = vmand %vm4846, %vm4920
      %vm4995 = vmand %vm4847, %vm4921
      %vm4996 = vmand %vm4848, %vm4922
      %vm4997 = vmand %vm4849, %vm4923
      %vm4998 = vmand %vm4850, %vm4924
      %vm4999 = vcmp.lt.s32.totalorder %v4555, 18
      %vm5000 = vcmp.lt.s32.totalorder %v4556, 18
      %vm5001 = vcmp.lt.s32.totalorder %v4557, 18
      %vm5002 = vcmp.lt.s32.totalorder %v4558, 18
      %vm5003 = vcmp.lt.s32.totalorder %v4559, 18
      %vm5004 = vcmp.lt.s32.totalorder %v4560, 18
      %vm5005 = vcmp.lt.s32.totalorder %v4561, 18
      %vm5006 = vcmp.lt.s32.totalorder %v4562, 18
      %vm5007 = vcmp.lt.s32.totalorder %v4563, 18
      %vm5008 = vcmp.lt.s32.totalorder %v4564, 18
      %vm5009 = vcmp.lt.s32.totalorder %v4565, 18
      %vm5010 = vcmp.lt.s32.totalorder %v4566, 18
      %vm5011 = vcmp.lt.s32.totalorder %v4567, 18
      %vm5012 = vcmp.lt.s32.totalorder %v4568, 18
      %vm5013 = vcmp.lt.s32.totalorder %v4569, 18
      %vm5014 = vcmp.lt.s32.totalorder %v4570, 18
      %vm5015 = vcmp.lt.s32.totalorder %v4571, 18
      %vm5016 = vcmp.lt.s32.totalorder %v4572, 18
      %vm5017 = vcmp.lt.s32.totalorder %v4573, 18
      %vm5018 = vcmp.lt.s32.totalorder %v4574, 18
      %vm5019 = vcmp.lt.s32.totalorder %v4575, 18
      %vm5020 = vcmp.lt.s32.totalorder %v4576, 18
      %vm5021 = vcmp.lt.s32.totalorder %v4577, 18
      %vm5022 = vcmp.lt.s32.totalorder %v4578, 18
      %vm5023 = vcmp.lt.s32.totalorder %v4579, 18
      %vm5024 = vcmp.lt.s32.totalorder %v4580, 18
      %vm5025 = vcmp.lt.s32.totalorder %v4581, 18
      %vm5026 = vcmp.lt.s32.totalorder %v4582, 18
      %vm5027 = vcmp.lt.s32.totalorder %v4583, 18
      %vm5028 = vcmp.lt.s32.totalorder %v4584, 18
      %vm5029 = vcmp.lt.s32.totalorder %v4585, 18
      %vm5030 = vcmp.lt.s32.totalorder %v4586, 18
      %vm5031 = vcmp.lt.s32.totalorder %v4587, 18
      %vm5032 = vcmp.lt.s32.totalorder %v4588, 18
      %vm5033 = vcmp.lt.s32.totalorder %v4589, 18
      %vm5034 = vcmp.lt.s32.totalorder %v4590, 18
      %vm5035 = vcmp.lt.s32.totalorder %v4591, 18
      %vm5036 = vcmp.lt.s32.totalorder %v4592, 18
      %vm5037 = vcmp.lt.s32.totalorder %v4593, 18
      %vm5038 = vcmp.lt.s32.totalorder %v4594, 18
      %vm5039 = vcmp.lt.s32.totalorder %v4595, 18
      %vm5040 = vcmp.lt.s32.totalorder %v4596, 18
      %vm5041 = vcmp.lt.s32.totalorder %v4597, 18
      %vm5042 = vcmp.lt.s32.totalorder %v4598, 18
      %vm5043 = vcmp.lt.s32.totalorder %v4599, 18
      %vm5044 = vcmp.lt.s32.totalorder %v4600, 18
      %vm5045 = vcmp.lt.s32.totalorder %v4601, 18
      %vm5046 = vcmp.lt.s32.totalorder %v4602, 18
      %vm5047 = vcmp.lt.s32.totalorder %v4603, 18
      %vm5048 = vcmp.lt.s32.totalorder %v4604, 18
      %vm5049 = vcmp.lt.s32.totalorder %v4605, 18
      %vm5050 = vcmp.lt.s32.totalorder %v4606, 18
      %vm5051 = vcmp.lt.s32.totalorder %v4607, 18
      %vm5052 = vcmp.lt.s32.totalorder %v4608, 18
      %vm5053 = vcmp.lt.s32.totalorder %v4609, 18
      %vm5054 = vcmp.lt.s32.totalorder %v4610, 18
      %vm5055 = vcmp.lt.s32.totalorder %v4611, 18
      %vm5056 = vcmp.lt.s32.totalorder %v4612, 18
      %vm5057 = vcmp.lt.s32.totalorder %v4613, 18
      %vm5058 = vcmp.lt.s32.totalorder %v4614, 18
      %vm5059 = vcmp.lt.s32.totalorder %v4615, 18
      %vm5060 = vcmp.lt.s32.totalorder %v4616, 18
      %vm5061 = vcmp.lt.s32.totalorder %v4617, 18
      %vm5062 = vcmp.lt.s32.totalorder %v4618, 18
      %vm5063 = vcmp.lt.s32.totalorder %v4619, 18
      %vm5064 = vcmp.lt.s32.totalorder %v4620, 18
      %vm5065 = vcmp.lt.s32.totalorder %v4621, 18
      %vm5066 = vcmp.lt.s32.totalorder %v4622, 18
      %vm5067 = vcmp.lt.s32.totalorder %v4623, 18
      %vm5068 = vcmp.lt.s32.totalorder %v4624, 18
      %vm5069 = vcmp.lt.s32.totalorder %v4625, 18
      %vm5070 = vcmp.lt.s32.totalorder %v4626, 18
      %vm5071 = vcmp.lt.s32.totalorder %v4627, 18
      %vm5072 = vcmp.lt.s32.totalorder %v4628, 18
      %vm5073 = vmand %vm4925, %vm4999
      %vm5074 = vmand %vm4926, %vm5000
      %vm5075 = vmand %vm4927, %vm5001
      %vm5076 = vmand %vm4928, %vm5002
      %vm5077 = vmand %vm4929, %vm5003
      %vm5078 = vmand %vm4930, %vm5004
      %vm5079 = vmand %vm4931, %vm5005
      %vm5080 = vmand %vm4932, %vm5006
      %vm5081 = vmand %vm4933, %vm5007
      %vm5082 = vmand %vm4934, %vm5008
      %vm5083 = vmand %vm4935, %vm5009
      %vm5084 = vmand %vm4936, %vm5010
      %vm5085 = vmand %vm4937, %vm5011
      %vm5086 = vmand %vm4938, %vm5012
      %vm5087 = vmand %vm4939, %vm5013
      %vm5088 = vmand %vm4940, %vm5014
      %vm5089 = vmand %vm4941, %vm5015
      %vm5090 = vmand %vm4942, %vm5016
      %vm5091 = vmand %vm4943, %vm5017
      %vm5092 = vmand %vm4944, %vm5018
      %vm5093 = vmand %vm4945, %vm5019
      %vm5094 = vmand %vm4946, %vm5020
      %vm5095 = vmand %vm4947, %vm5021
      %vm5096 = vmand %vm4948, %vm5022
      %vm5097 = vmand %vm4949, %vm5023
      %vm5098 = vmand %vm4950, %vm5024
      %vm5099 = vmand %vm4951, %vm5025
      %vm5100 = vmand %vm4952, %vm5026
      %vm5101 = vmand %vm4953, %vm5027
      %vm5102 = vmand %vm4954, %vm5028
      %vm5103 = vmand %vm4955, %vm5029
      %vm5104 = vmand %vm4956, %vm5030
      %vm5105 = vmand %vm4957, %vm5031
      %vm5106 = vmand %vm4958, %vm5032
      %vm5107 = vmand %vm4959, %vm5033
      %vm5108 = vmand %vm4960, %vm5034
      %vm5109 = vmand %vm4961, %vm5035
      %vm5110 = vmand %vm4962, %vm5036
      %vm5111 = vmand %vm4963, %vm5037
      %vm5112 = vmand %vm4964, %vm5038
      %vm5113 = vmand %vm4965, %vm5039
      %vm5114 = vmand %vm4966, %vm5040
      %vm5115 = vmand %vm4967, %vm5041
      %vm5116 = vmand %vm4968, %vm5042
      %vm5117 = vmand %vm4969, %vm5043
      %vm5118 = vmand %vm4970, %vm5044
      %vm5119 = vmand %vm4971, %vm5045
      %vm5120 = vmand %vm4972, %vm5046
      %vm5121 = vmand %vm4973, %vm5047
      %vm5122 = vmand %vm4974, %vm5048
      %vm5123 = vmand %vm4975, %vm5049
      %vm5124 = vmand %vm4976, %vm5050
      %vm5125 = vmand %vm4977, %vm5051
      %vm5126 = vmand %vm4978, %vm5052
      %vm5127 = vmand %vm4979, %vm5053
      %vm5128 = vmand %vm4980, %vm5054
      %vm5129 = vmand %vm4981, %vm5055
      %vm5130 = vmand %vm4982, %vm5056
      %vm5131 = vmand %vm4983, %vm5057
      %vm5132 = vmand %vm4984, %vm5058
      %vm5133 = vmand %vm4985, %vm5059
      %vm5134 = vmand %vm4986, %vm5060
      %vm5135 = vmand %vm4987, %vm5061
      %vm5136 = vmand %vm4988, %vm5062
      %vm5137 = vmand %vm4989, %vm5063
      %vm5138 = vmand %vm4990, %vm5064
      %vm5139 = vmand %vm4991, %vm5065
      %vm5140 = vmand %vm4992, %vm5066
      %vm5141 = vmand %vm4993, %vm5067
      %vm5142 = vmand %vm4994, %vm5068
      %vm5143 = vmand %vm4995, %vm5069
      %vm5144 = vmand %vm4996, %vm5070
      %vm5145 = vmand %vm4997, %vm5071
      %vm5146 = vmand %vm4998, %vm5072
      %v5147 = vsel %vm5073, 1, 0
      %v5148 = vsel %vm5074, 1, 0
      %v5149 = vsel %vm5075, 1, 0
      %v5150 = vsel %vm5076, 1, 0
      %v5151 = vsel %vm5077, 1, 0
      %v5152 = vsel %vm5078, 1, 0
      %v5153 = vsel %vm5079, 1, 0
      %v5154 = vsel %vm5080, 1, 0
      %v5155 = vsel %vm5081, 1, 0
      %v5156 = vsel %vm5082, 1, 0
      %v5157 = vsel %vm5083, 1, 0
      %v5158 = vsel %vm5084, 1, 0
      %v5159 = vsel %vm5085, 1, 0
      %v5160 = vsel %vm5086, 1, 0
      %v5161 = vsel %vm5087, 1, 0
      %v5162 = vsel %vm5088, 1, 0
      %v5163 = vsel %vm5089, 1, 0
      %v5164 = vsel %vm5090, 1, 0
      %v5165 = vsel %vm5091, 1, 0
      %v5166 = vsel %vm5092, 1, 0
      %v5167 = vsel %vm5093, 1, 0
      %v5168 = vsel %vm5094, 1, 0
      %v5169 = vsel %vm5095, 1, 0
      %v5170 = vsel %vm5096, 1, 0
      %v5171 = vsel %vm5097, 1, 0
      %v5172 = vsel %vm5098, 1, 0
      %v5173 = vsel %vm5099, 1, 0
      %v5174 = vsel %vm5100, 1, 0
      %v5175 = vsel %vm5101, 1, 0
      %v5176 = vsel %vm5102, 1, 0
      %v5177 = vsel %vm5103, 1, 0
      %v5178 = vsel %vm5104, 1, 0
      %v5179 = vsel %vm5105, 1, 0
      %v5180 = vsel %vm5106, 1, 0
      %v5181 = vsel %vm5107, 1, 0
      %v5182 = vsel %vm5108, 1, 0
      %v5183 = vsel %vm5109, 1, 0
      %v5184 = vsel %vm5110, 1, 0
      %v5185 = vsel %vm5111, 1, 0
      %v5186 = vsel %vm5112, 1, 0
      %v5187 = vsel %vm5113, 1, 0
      %v5188 = vsel %vm5114, 1, 0
      %v5189 = vsel %vm5115, 1, 0
      %v5190 = vsel %vm5116, 1, 0
      %v5191 = vsel %vm5117, 1, 0
      %v5192 = vsel %vm5118, 1, 0
      %v5193 = vsel %vm5119, 1, 0
      %v5194 = vsel %vm5120, 1, 0
      %v5195 = vsel %vm5121, 1, 0
      %v5196 = vsel %vm5122, 1, 0
      %v5197 = vsel %vm5123, 1, 0
      %v5198 = vsel %vm5124, 1, 0
      %v5199 = vsel %vm5125, 1, 0
      %v5200 = vsel %vm5126, 1, 0
      %v5201 = vsel %vm5127, 1, 0
      %v5202 = vsel %vm5128, 1, 0
      %v5203 = vsel %vm5129, 1, 0
      %v5204 = vsel %vm5130, 1, 0
      %v5205 = vsel %vm5131, 1, 0
      %v5206 = vsel %vm5132, 1, 0
      %v5207 = vsel %vm5133, 1, 0
      %v5208 = vsel %vm5134, 1, 0
      %v5209 = vsel %vm5135, 1, 0
      %v5210 = vsel %vm5136, 1, 0
      %v5211 = vsel %vm5137, 1, 0
      %v5212 = vsel %vm5138, 1, 0
      %v5213 = vsel %vm5139, 1, 0
      %v5214 = vsel %vm5140, 1, 0
      %v5215 = vsel %vm5141, 1, 0
      %v5216 = vsel %vm5142, 1, 0
      %v5217 = vsel %vm5143, 1, 0
      %v5218 = vsel %vm5144, 1, 0
      %v5219 = vsel %vm5145, 1, 0
      %v5220 = vsel %vm5146, 1, 0
      %vm5221 = vcmp.eq.s32.totalorder %v5147, 1
      %vm5222 = vcmp.eq.s32.totalorder %v5148, 1
      %vm5223 = vcmp.eq.s32.totalorder %v5149, 1
      %vm5224 = vcmp.eq.s32.totalorder %v5150, 1
      %vm5225 = vcmp.eq.s32.totalorder %v5151, 1
      %vm5226 = vcmp.eq.s32.totalorder %v5152, 1
      %vm5227 = vcmp.eq.s32.totalorder %v5153, 1
      %vm5228 = vcmp.eq.s32.totalorder %v5154, 1
      %vm5229 = vcmp.eq.s32.totalorder %v5155, 1
      %vm5230 = vcmp.eq.s32.totalorder %v5156, 1
      %vm5231 = vcmp.eq.s32.totalorder %v5157, 1
      %vm5232 = vcmp.eq.s32.totalorder %v5158, 1
      %vm5233 = vcmp.eq.s32.totalorder %v5159, 1
      %vm5234 = vcmp.eq.s32.totalorder %v5160, 1
      %vm5235 = vcmp.eq.s32.totalorder %v5161, 1
      %vm5236 = vcmp.eq.s32.totalorder %v5162, 1
      %vm5237 = vcmp.eq.s32.totalorder %v5163, 1
      %vm5238 = vcmp.eq.s32.totalorder %v5164, 1
      %vm5239 = vcmp.eq.s32.totalorder %v5165, 1
      %vm5240 = vcmp.eq.s32.totalorder %v5166, 1
      %vm5241 = vcmp.eq.s32.totalorder %v5167, 1
      %vm5242 = vcmp.eq.s32.totalorder %v5168, 1
      %vm5243 = vcmp.eq.s32.totalorder %v5169, 1
      %vm5244 = vcmp.eq.s32.totalorder %v5170, 1
      %vm5245 = vcmp.eq.s32.totalorder %v5171, 1
      %vm5246 = vcmp.eq.s32.totalorder %v5172, 1
      %vm5247 = vcmp.eq.s32.totalorder %v5173, 1
      %vm5248 = vcmp.eq.s32.totalorder %v5174, 1
      %vm5249 = vcmp.eq.s32.totalorder %v5175, 1
      %vm5250 = vcmp.eq.s32.totalorder %v5176, 1
      %vm5251 = vcmp.eq.s32.totalorder %v5177, 1
      %vm5252 = vcmp.eq.s32.totalorder %v5178, 1
      %vm5253 = vcmp.eq.s32.totalorder %v5179, 1
      %vm5254 = vcmp.eq.s32.totalorder %v5180, 1
      %vm5255 = vcmp.eq.s32.totalorder %v5181, 1
      %vm5256 = vcmp.eq.s32.totalorder %v5182, 1
      %vm5257 = vcmp.eq.s32.totalorder %v5183, 1
      %vm5258 = vcmp.eq.s32.totalorder %v5184, 1
      %vm5259 = vcmp.eq.s32.totalorder %v5185, 1
      %vm5260 = vcmp.eq.s32.totalorder %v5186, 1
      %vm5261 = vcmp.eq.s32.totalorder %v5187, 1
      %vm5262 = vcmp.eq.s32.totalorder %v5188, 1
      %vm5263 = vcmp.eq.s32.totalorder %v5189, 1
      %vm5264 = vcmp.eq.s32.totalorder %v5190, 1
      %vm5265 = vcmp.eq.s32.totalorder %v5191, 1
      %vm5266 = vcmp.eq.s32.totalorder %v5192, 1
      %vm5267 = vcmp.eq.s32.totalorder %v5193, 1
      %vm5268 = vcmp.eq.s32.totalorder %v5194, 1
      %vm5269 = vcmp.eq.s32.totalorder %v5195, 1
      %vm5270 = vcmp.eq.s32.totalorder %v5196, 1
      %vm5271 = vcmp.eq.s32.totalorder %v5197, 1
      %vm5272 = vcmp.eq.s32.totalorder %v5198, 1
      %vm5273 = vcmp.eq.s32.totalorder %v5199, 1
      %vm5274 = vcmp.eq.s32.totalorder %v5200, 1
      %vm5275 = vcmp.eq.s32.totalorder %v5201, 1
      %vm5276 = vcmp.eq.s32.totalorder %v5202, 1
      %vm5277 = vcmp.eq.s32.totalorder %v5203, 1
      %vm5278 = vcmp.eq.s32.totalorder %v5204, 1
      %vm5279 = vcmp.eq.s32.totalorder %v5205, 1
      %vm5280 = vcmp.eq.s32.totalorder %v5206, 1
      %vm5281 = vcmp.eq.s32.totalorder %v5207, 1
      %vm5282 = vcmp.eq.s32.totalorder %v5208, 1
      %vm5283 = vcmp.eq.s32.totalorder %v5209, 1
      %vm5284 = vcmp.eq.s32.totalorder %v5210, 1
      %vm5285 = vcmp.eq.s32.totalorder %v5211, 1
      %vm5286 = vcmp.eq.s32.totalorder %v5212, 1
      %vm5287 = vcmp.eq.s32.totalorder %v5213, 1
      %vm5288 = vcmp.eq.s32.totalorder %v5214, 1
      %vm5289 = vcmp.eq.s32.totalorder %v5215, 1
      %vm5290 = vcmp.eq.s32.totalorder %v5216, 1
      %vm5291 = vcmp.eq.s32.totalorder %v5217, 1
      %vm5292 = vcmp.eq.s32.totalorder %v5218, 1
      %vm5293 = vcmp.eq.s32.totalorder %v5219, 1
      %vm5294 = vcmp.eq.s32.totalorder %v5220, 1
      %v5295 = vsel %vm5221, %v4259, 0.0
      %v5296 = vsel %vm5222, %v4260, 0.0
      %v5297 = vsel %vm5223, %v4261, 0.0
      %v5298 = vsel %vm5224, %v4262, 0.0
      %v5299 = vsel %vm5225, %v4263, 0.0
      %v5300 = vsel %vm5226, %v4264, 0.0
      %v5301 = vsel %vm5227, %v4265, 0.0
      %v5302 = vsel %vm5228, %v4266, 0.0
      %v5303 = vsel %vm5229, %v4267, 0.0
      %v5304 = vsel %vm5230, %v4268, 0.0
      %v5305 = vsel %vm5231, %v4269, 0.0
      %v5306 = vsel %vm5232, %v4270, 0.0
      %v5307 = vsel %vm5233, %v4271, 0.0
      %v5308 = vsel %vm5234, %v4272, 0.0
      %v5309 = vsel %vm5235, %v4273, 0.0
      %v5310 = vsel %vm5236, %v4274, 0.0
      %v5311 = vsel %vm5237, %v4275, 0.0
      %v5312 = vsel %vm5238, %v4276, 0.0
      %v5313 = vsel %vm5239, %v4277, 0.0
      %v5314 = vsel %vm5240, %v4278, 0.0
      %v5315 = vsel %vm5241, %v4279, 0.0
      %v5316 = vsel %vm5242, %v4280, 0.0
      %v5317 = vsel %vm5243, %v4281, 0.0
      %v5318 = vsel %vm5244, %v4282, 0.0
      %v5319 = vsel %vm5245, %v4283, 0.0
      %v5320 = vsel %vm5246, %v4284, 0.0
      %v5321 = vsel %vm5247, %v4285, 0.0
      %v5322 = vsel %vm5248, %v4286, 0.0
      %v5323 = vsel %vm5249, %v4287, 0.0
      %v5324 = vsel %vm5250, %v4288, 0.0
      %v5325 = vsel %vm5251, %v4289, 0.0
      %v5326 = vsel %vm5252, %v4290, 0.0
      %v5327 = vsel %vm5253, %v4291, 0.0
      %v5328 = vsel %vm5254, %v4292, 0.0
      %v5329 = vsel %vm5255, %v4293, 0.0
      %v5330 = vsel %vm5256, %v4294, 0.0
      %v5331 = vsel %vm5257, %v4295, 0.0
      %v5332 = vsel %vm5258, %v4296, 0.0
      %v5333 = vsel %vm5259, %v4297, 0.0
      %v5334 = vsel %vm5260, %v4298, 0.0
      %v5335 = vsel %vm5261, %v4299, 0.0
      %v5336 = vsel %vm5262, %v4300, 0.0
      %v5337 = vsel %vm5263, %v4301, 0.0
      %v5338 = vsel %vm5264, %v4302, 0.0
      %v5339 = vsel %vm5265, %v4303, 0.0
      %v5340 = vsel %vm5266, %v4304, 0.0
      %v5341 = vsel %vm5267, %v4305, 0.0
      %v5342 = vsel %vm5268, %v4306, 0.0
      %v5343 = vsel %vm5269, %v4307, 0.0
      %v5344 = vsel %vm5270, %v4308, 0.0
      %v5345 = vsel %vm5271, %v4309, 0.0
      %v5346 = vsel %vm5272, %v4310, 0.0
      %v5347 = vsel %vm5273, %v4311, 0.0
      %v5348 = vsel %vm5274, %v4312, 0.0
      %v5349 = vsel %vm5275, %v4313, 0.0
      %v5350 = vsel %vm5276, %v4314, 0.0
      %v5351 = vsel %vm5277, %v4315, 0.0
      %v5352 = vsel %vm5278, %v4316, 0.0
      %v5353 = vsel %vm5279, %v4317, 0.0
      %v5354 = vsel %vm5280, %v4318, 0.0
      %v5355 = vsel %vm5281, %v4319, 0.0
      %v5356 = vsel %vm5282, %v4320, 0.0
      %v5357 = vsel %vm5283, %v4321, 0.0
      %v5358 = vsel %vm5284, %v4322, 0.0
      %v5359 = vsel %vm5285, %v4323, 0.0
      %v5360 = vsel %vm5286, %v4324, 0.0
      %v5361 = vsel %vm5287, %v4325, 0.0
      %v5362 = vsel %vm5288, %v4326, 0.0
      %v5363 = vsel %vm5289, %v4327, 0.0
      %v5364 = vsel %vm5290, %v4328, 0.0
      %v5365 = vsel %vm5291, %v4329, 0.0
      %v5366 = vsel %vm5292, %v4330, 0.0
      %v5367 = vsel %vm5293, %v4331, 0.0
      %v5368 = vsel %vm5294, %v4332, 0.0
      %v5369 = vpack.c.bf16 %v5296, %v5295
      %v5370 = vpack.c.bf16 %v5298, %v5297
      %v5371 = vpack.c.bf16 %v5300, %v5299
      %v5372 = vpack.c.bf16 %v5302, %v5301
      %v5373 = vpack.c.bf16 %v5304, %v5303
      %v5374 = vpack.c.bf16 %v5306, %v5305
      %v5375 = vpack.c.bf16 %v5308, %v5307
      %v5376 = vpack.c.bf16 %v5310, %v5309
      %v5377 = vpack.c.bf16 %v5312, %v5311
      %v5378 = vpack.c.bf16 %v5314, %v5313
      %v5379 = vpack.c.bf16 %v5316, %v5315
      %v5380 = vpack.c.bf16 %v5318, %v5317
      %v5381 = vpack.c.bf16 %v5320, %v5319
      %v5382 = vpack.c.bf16 %v5322, %v5321
      %v5383 = vpack.c.bf16 %v5324, %v5323
      %v5384 = vpack.c.bf16 %v5326, %v5325
      %v5385 = vpack.c.bf16 %v5328, %v5327
      %v5386 = vpack.c.bf16 %v5330, %v5329
      %v5387 = vpack.c.bf16 %v5332, %v5331
      %v5388 = vpack.c.bf16 %v5334, %v5333
      %v5389 = vpack.c.bf16 %v5336, %v5335
      %v5390 = vpack.c.bf16 %v5338, %v5337
      %v5391 = vpack.c.bf16 %v5340, %v5339
      %v5392 = vpack.c.bf16 %v5342, %v5341
      %v5393 = vpack.c.bf16 %v5344, %v5343
      %v5394 = vpack.c.bf16 %v5346, %v5345
      %v5395 = vpack.c.bf16 %v5348, %v5347
      %v5396 = vpack.c.bf16 %v5350, %v5349
      %v5397 = vpack.c.bf16 %v5352, %v5351
      %v5398 = vpack.c.bf16 %v5354, %v5353
      %v5399 = vpack.c.bf16 %v5356, %v5355
      %v5400 = vpack.c.bf16 %v5358, %v5357
      %v5401 = vpack.c.bf16 %v5360, %v5359
      %v5402 = vpack.c.bf16 %v5362, %v5361
      %v5403 = vpack.c.bf16 %v5364, %v5363
      %v5404 = vpack.c.bf16 %v5366, %v5365
      %v5405 = vpack.c.bf16 %v5368, %v5367
      %vm5406 = vcmask 64512
      %5407 = vst.msk [vmem:[#allocation3] sm:$0xff] %vm5406, %v5369
      %5408 = vst.msk [vmem:[#allocation3 + $0x8] sm:$0xff] %vm5406, %v5370
      %5409 = vst.msk [vmem:[#allocation3 + $0x10] sm:$0xff] %vm5406, %v5371
      %5410 = vst.msk [vmem:[#allocation3 + $0x18] sm:$0xff] %vm5406, %v5372
      %5411 = vst.msk [vmem:[#allocation3 + $0x20] sm:$0xff] %vm5406, %v5373
      %5412 = vst.msk [vmem:[#allocation3 + $0x28] sm:$0xff] %vm5406, %v5374
      %5413 = vst.msk [vmem:[#allocation3 + $0x30] sm:$0xff] %vm5406, %v5375
      %5414 = vst.msk [vmem:[#allocation3 + $0x38] sm:$0xff] %vm5406, %v5376
      %5415 = vst.msk [vmem:[#allocation3 + $0x40] sm:$0xff] %vm5406, %v5377
      %5416 = vst.msk [vmem:[#allocation3 + $0x48] sm:$0xff] %vm5406, %v5378
      %5417 = vst.msk [vmem:[#allocation3 + $0x50] sm:$0xff] %vm5406, %v5379
      %5418 = vst.msk [vmem:[#allocation3 + $0x58] sm:$0xff] %vm5406, %v5380
      %5419 = vst.msk [vmem:[#allocation3 + $0x60] sm:$0xff] %vm5406, %v5381
      %5420 = vst.msk [vmem:[#allocation3 + $0x68] sm:$0xff] %vm5406, %v5382
      %5421 = vst.msk [vmem:[#allocation3 + $0x70] sm:$0xff] %vm5406, %v5383
      %5422 = vst.msk [vmem:[#allocation3 + $0x78] sm:$0xff] %vm5406, %v5384
      %5423 = vst.msk [vmem:[#allocation3 + $0x80] sm:$0xff] %vm5406, %v5385
      %5424 = vst.msk [vmem:[#allocation3 + $0x88] sm:$0xff] %vm5406, %v5386
      %5425 = vst.msk [vmem:[#allocation3 + $0x90] sm:$0xff] %vm5406, %v5387
      %5426 = vst.msk [vmem:[#allocation3 + $0x98] sm:$0xff] %vm5406, %v5388
      %5427 = vst.msk [vmem:[#allocation3 + $0xa0] sm:$0xff] %vm5406, %v5389
      %5428 = vst.msk [vmem:[#allocation3 + $0xa8] sm:$0xff] %vm5406, %v5390
      %5429 = vst.msk [vmem:[#allocation3 + $0xb0] sm:$0xff] %vm5406, %v5391
      %5430 = vst.msk [vmem:[#allocation3 + $0xb8] sm:$0xff] %vm5406, %v5392
      %5431 = vst.msk [vmem:[#allocation3 + $0xc0] sm:$0xff] %vm5406, %v5393
      %5432 = vst.msk [vmem:[#allocation3 + $0xc8] sm:$0xff] %vm5406, %v5394
      %5433 = vst.msk [vmem:[#allocation3 + $0xd0] sm:$0xff] %vm5406, %v5395
      %5434 = vst.msk [vmem:[#allocation3 + $0xd8] sm:$0xff] %vm5406, %v5396
      %5435 = vst.msk [vmem:[#allocation3 + $0xe0] sm:$0xff] %vm5406, %v5397
      %5436 = vst.msk [vmem:[#allocation3 + $0xe8] sm:$0xff] %vm5406, %v5398
      %5437 = vst.msk [vmem:[#allocation3 + $0xf0] sm:$0xff] %vm5406, %v5399
      %5438 = vst.msk [vmem:[#allocation3 + $0xf8] sm:$0xff] %vm5406, %v5400
      %5439 = vst.msk [vmem:[#allocation3 + $0x100] sm:$0xff] %vm5406, %v5401
      %5440 = vst.msk [vmem:[#allocation3 + $0x108] sm:$0xff] %vm5406, %v5402
      %5441 = vst.msk [vmem:[#allocation3 + $0x110] sm:$0xff] %vm5406, %v5403
      %5442 = vst.msk [vmem:[#allocation3 + $0x118] sm:$0xff] %vm5406, %v5404
      %5443 = vst.msk [vmem:[#allocation3 + $0x120] sm:$0xff] %vm5406, %v5405
      %v5444 = vld [vmem:[#allocation3] sm:$0xff]
      %v5445 = vld [vmem:[#allocation3 + $0x8] sm:$0xff]
      %v5446 = vld [vmem:[#allocation3 + $0x10] sm:$0xff]
      %v5447 = vld [vmem:[#allocation3 + $0x18] sm:$0xff]
      %v5448 = vld [vmem:[#allocation3 + $0x20] sm:$0xff]
      %v5449 = vld [vmem:[#allocation3 + $0x28] sm:$0xff]
      %v5450 = vld [vmem:[#allocation3 + $0x30] sm:$0xff]
      %v5451 = vld [vmem:[#allocation3 + $0x38] sm:$0xff]
      %v5452 = vld [vmem:[#allocation3 + $0x40] sm:$0xff]
      %v5453 = vld [vmem:[#allocation3 + $0x48] sm:$0xff]
      %v5454 = vld [vmem:[#allocation3 + $0x50] sm:$0xff]
      %v5455 = vld [vmem:[#allocation3 + $0x58] sm:$0xff]
      %v5456 = vld [vmem:[#allocation3 + $0x60] sm:$0xff]
      %v5457 = vld [vmem:[#allocation3 + $0x68] sm:$0xff]
      %v5458 = vld [vmem:[#allocation3 + $0x70] sm:$0xff]
      %v5459 = vld [vmem:[#allocation3 + $0x78] sm:$0xff]
      %v5460 = vld [vmem:[#allocation3 + $0x80] sm:$0xff]
      %v5461 = vld [vmem:[#allocation3 + $0x88] sm:$0xff]
      %v5462 = vld [vmem:[#allocation3 + $0x90] sm:$0xff]
      %v5463 = vld [vmem:[#allocation3 + $0x98] sm:$0xff]
      %v5464 = vld [vmem:[#allocation3 + $0xa0] sm:$0xff]
      %v5465 = vld [vmem:[#allocation3 + $0xa8] sm:$0xff]
      %v5466 = vld [vmem:[#allocation3 + $0xb0] sm:$0xff]
      %v5467 = vld [vmem:[#allocation3 + $0xb8] sm:$0xff]
      %v5468 = vld [vmem:[#allocation3 + $0xc0] sm:$0xff]
      %v5469 = vld [vmem:[#allocation3 + $0xc8] sm:$0xff]
      %v5470 = vld [vmem:[#allocation3 + $0xd0] sm:$0xff]
      %v5471 = vld [vmem:[#allocation3 + $0xd8] sm:$0xff]
      %v5472 = vld [vmem:[#allocation3 + $0xe0] sm:$0xff]
      %v5473 = vld [vmem:[#allocation3 + $0xe8] sm:$0xff]
      %v5474 = vld [vmem:[#allocation3 + $0xf0] sm:$0xff]
      %v5475 = vld [vmem:[#allocation3 + $0xf8] sm:$0xff]
      %v5476 = vld [vmem:[#allocation3 + $0x100] sm:$0xff]
      %v5477 = vld [vmem:[#allocation3 + $0x108] sm:$0xff]
      %v5478 = vld [vmem:[#allocation3 + $0x110] sm:$0xff]
      %v5479 = vld [vmem:[#allocation3 + $0x118] sm:$0xff]
      %v5480 = vld [vmem:[#allocation3 + $0x120] sm:$0xff]
      %v5481 = vld [vmem:[%s2] sm:$0xf]
      %v5483 = vsel %vm5406, %v5444, 0
      %v5486 = vsel %vm5406, %v5445, 0
      %v5489 = vsel %vm5406, %v5446, 0
      %v5492 = vsel %vm5406, %v5447, 0
      %v5495 = vsel %vm5406, %v5448, 0
      %v5498 = vsel %vm5406, %v5449, 0
      %v5501 = vsel %vm5406, %v5450, 0
      %v5504 = vsel %vm5406, %v5451, 0
      %v5507 = vsel %vm5406, %v5452, 0
      %v5510 = vsel %vm5406, %v5453, 0
      %v5513 = vsel %vm5406, %v5454, 0
      %v5516 = vsel %vm5406, %v5455, 0
      %v5519 = vsel %vm5406, %v5456, 0
      %v5522 = vsel %vm5406, %v5457, 0
      %v5525 = vsel %vm5406, %v5458, 0
      %v5528 = vsel %vm5406, %v5459, 0
      %v5531 = vsel %vm5406, %v5460, 0
      %v5534 = vsel %vm5406, %v5461, 0
      %v5537 = vsel %vm5406, %v5462, 0
      %v5540 = vsel %vm5406, %v5463, 0
      %v5543 = vsel %vm5406, %v5464, 0
      %v5546 = vsel %vm5406, %v5465, 0
      %v5549 = vsel %vm5406, %v5466, 0
      %v5552 = vsel %vm5406, %v5467, 0
      %v5555 = vsel %vm5406, %v5468, 0
      %v5558 = vsel %vm5406, %v5469, 0
      %v5561 = vsel %vm5406, %v5470, 0
      %v5564 = vsel %vm5406, %v5471, 0
      %v5567 = vsel %vm5406, %v5472, 0
      %v5570 = vsel %vm5406, %v5473, 0
      %v5573 = vsel %vm5406, %v5474, 0
      %v5576 = vsel %vm5406, %v5475, 0
      %v5579 = vsel %vm5406, %v5476, 0
      %v5582 = vsel %vm5406, %v5477, 0
      %v5585 = vsel %vm5406, %v5478, 0
      %v5588 = vsel %vm5406, %v5479, 0
      %v5591 = vsel %vm5406, %v5480, 0
      %vm5593 = vcmask 1043456
      %v5595 = vsel %vm5593, %v5481, 0
      %5597 = vmatprep.subr.bf16.mxu0 0
      %5598 = vmatpush1.bf16.msra.mxu0 %v5595
      %5599 = vmatprep.subr.bf16.mxu0 0
      %5600 = vmatpush1.bf16.msra.mxu0 0
      %5601 = vmatprep.subr.bf16.mxu0 0
      %5602 = vmatpush1.bf16.msra.mxu0 0
      %5603 = vmatprep.subr.bf16.mxu0 0
      %5604 = vmatpush1.bf16.msra.mxu0 0
      %5605 = vmatprep.subr.bf16.mxu0 0
      %5606 = vmatpush1.bf16.msra.mxu0 0
      %5607 = vmatprep.subr.bf16.mxu0 0
      %5608 = vmatpush1.bf16.msra.mxu0 0
      %5609 = vmatprep.subr.bf16.mxu0 0
      %5610 = vmatpush1.bf16.msra.mxu0 0
      %5611 = vmatprep.subr.bf16.mxu0 0
      %5612 = vmatpush1.bf16.msra.mxu0 0
      %5613 = vmatprep.subr.bf16.mxu0 0
      %5614 = vmatpush1.bf16.msra.mxu0 0
      %5615 = vmatprep.subr.bf16.mxu0 0
      %5616 = vmatpush1.bf16.msra.mxu0 0
      %5617 = vmatprep.subr.bf16.mxu0 0
      %5618 = vmatpush1.bf16.msra.mxu0 0
      %5619 = vmatprep.subr.bf16.mxu0 0
      %5620 = vmatpush1.bf16.msra.mxu0 0
      %5621 = vmatprep.subr.bf16.mxu0 0
      %5622 = vmatpush1.bf16.msra.mxu0 0
      %5623 = vmatprep.subr.bf16.mxu0 0
      %5624 = vmatpush1.bf16.msra.mxu0 0
      %5625 = vmatprep.subr.bf16.mxu0 0
      %5626 = vmatpush1.bf16.msra.mxu0 0
      %5627 = vmatprep.subr.bf16.mxu0 0
      %5628 = vmatpush1.bf16.msra.mxu0 0
      %5629 = vmatprep.mubr.bf16.mxu0 0
      %5630 = vmatmul.mubr.bf16.gmra.mrb[0].mxu0 %v5483
      %v5631 = vpop.f32.mrb[0].mxu0
      %v5632 = vadd.f32 0.0, %v5631
      %v5633 = vpop.f32.mrb[0].mxu0
      %v5634 = vpop.f32.mrb[0].mxu0
      %v5635 = vadd.f32 0.0, %v5634
      %v5636 = vpop.f32.mrb[0].mxu0
      %5637 = vmatprep.mubr.bf16.mxu0 0
      %5638 = vmatmul.mubr.bf16.gmra.mrb[0].mxu0 %v5486
      %v5639 = vpop.f32.mrb[0].mxu0
      %v5640 = vadd.f32 0.0, %v5639
      %v5641 = vpop.f32.mrb[0].mxu0
      %v5642 = vpop.f32.mrb[0].mxu0
      %v5643 = vadd.f32 0.0, %v5642
      %v5644 = vpop.f32.mrb[0].mxu0
      %5645 = vmatprep.mubr.bf16.mxu0 0
      %5646 = vmatmul.mubr.bf16.gmra.mrb[0].mxu0 %v5489
      %v5647 = vpop.f32.mrb[0].mxu0
      %v5648 = vadd.f32 0.0, %v5647
      %v5649 = vpop.f32.mrb[0].mxu0
      %v5650 = vpop.f32.mrb[0].mxu0
      %v5651 = vadd.f32 0.0, %v5650
      %v5652 = vpop.f32.mrb[0].mxu0
      %5653 = vmatprep.mubr.bf16.mxu0 0
      %5654 = vmatmul.mubr.bf16.gmra.mrb[0].mxu0 %v5492
      %v5655 = vpop.f32.mrb[0].mxu0
      %v5656 = vadd.f32 0.0, %v5655
      %v5657 = vpop.f32.mrb[0].mxu0
      %v5658 = vpop.f32.mrb[0].mxu0
      %v5659 = vadd.f32 0.0, %v5658
      %v5660 = vpop.f32.mrb[0].mxu0
      %5661 = vmatprep.mubr.bf16.mxu0 0
      %5662 = vmatmul.mubr.bf16.gmra.mrb[0].mxu0 %v5495
      %v5663 = vpop.f32.mrb[0].mxu0
      %v5664 = vadd.f32 0.0, %v5663
      %v5665 = vpop.f32.mrb[0].mxu0
      %v5666 = vpop.f32.mrb[0].mxu0
      %v5667 = vadd.f32 0.0, %v5666
      %v5668 = vpop.f32.mrb[0].mxu0
      %5669 = vmatprep.mubr.bf16.mxu0 0
      %5670 = vmatmul.mubr.bf16.gmra.mrb[0].mxu0 %v5498
      %v5671 = vpop.f32.mrb[0].mxu0
      %v5672 = vadd.f32 0.0, %v5671
      %v5673 = vpop.f32.mrb[0].mxu0
      %v5674 = vpop.f32.mrb[0].mxu0
      %v5675 = vadd.f32 0.0, %v5674
      %v5676 = vpop.f32.mrb[0].mxu0
      %5677 = vmatprep.mubr.bf16.mxu0 0
      %5678 = vmatmul.mubr.bf16.gmra.mrb[0].mxu0 %v5501
      %v5679 = vpop.f32.mrb[0].mxu0
      %v5680 = vadd.f32 0.0, %v5679
      %v5681 = vpop.f32.mrb[0].mxu0
      %v5682 = vpop.f32.mrb[0].mxu0
      %v5683 = vadd.f32 0.0, %v5682
      %v5684 = vpop.f32.mrb[0].mxu0
      %5685 = vmatprep.mubr.bf16.mxu0 0
      %5686 = vmatmul.mubr.bf16.gmra.mrb[0].mxu0 %v5504
      %v5687 = vpop.f32.mrb[0].mxu0
      %v5688 = vadd.f32 0.0, %v5687
      %v5689 = vpop.f32.mrb[0].mxu0
      %v5690 = vpop.f32.mrb[0].mxu0
      %v5691 = vadd.f32 0.0, %v5690
      %v5692 = vpop.f32.mrb[0].mxu0
      %5693 = vmatprep.mubr.bf16.mxu0 0
      %5694 = vmatmul.mubr.bf16.gmra.mrb[0].mxu0 %v5507
      %v5695 = vpop.f32.mrb[0].mxu0
      %v5696 = vadd.f32 0.0, %v5695
      %v5697 = vpop.f32.mrb[0].mxu0
      %v5698 = vpop.f32.mrb[0].mxu0
      %v5699 = vadd.f32 0.0, %v5698
      %v5700 = vpop.f32.mrb[0].mxu0
      %5701 = vmatprep.mubr.bf16.mxu0 0
      %5702 = vmatmul.mubr.bf16.gmra.mrb[0].mxu0 %v5510
      %v5703 = vpop.f32.mrb[0].mxu0
      %v5704 = vadd.f32 0.0, %v5703
      %v5705 = vpop.f32.mrb[0].mxu0
      %v5706 = vpop.f32.mrb[0].mxu0
      %v5707 = vadd.f32 0.0, %v5706
      %v5708 = vpop.f32.mrb[0].mxu0
      %5709 = vmatprep.mubr.bf16.mxu0 0
      %5710 = vmatmul.mubr.bf16.gmra.mrb[0].mxu0 %v5513
      %v5711 = vpop.f32.mrb[0].mxu0
      %v5712 = vadd.f32 0.0, %v5711
      %v5713 = vpop.f32.mrb[0].mxu0
      %v5714 = vpop.f32.mrb[0].mxu0
      %v5715 = vadd.f32 0.0, %v5714
      %v5716 = vpop.f32.mrb[0].mxu0
      %5717 = vmatprep.mubr.bf16.mxu0 0
      %5718 = vmatmul.mubr.bf16.gmra.mrb[0].mxu0 %v5516
      %v5719 = vpop.f32.mrb[0].mxu0
      %v5720 = vadd.f32 0.0, %v5719
      %v5721 = vpop.f32.mrb[0].mxu0
      %v5722 = vpop.f32.mrb[0].mxu0
      %v5723 = vadd.f32 0.0, %v5722
      %v5724 = vpop.f32.mrb[0].mxu0
      %5725 = vmatprep.mubr.bf16.mxu0 0
      %5726 = vmatmul.mubr.bf16.gmra.mrb[0].mxu0 %v5519
      %v5727 = vpop.f32.mrb[0].mxu0
      %v5728 = vadd.f32 0.0, %v5727
      %v5729 = vpop.f32.mrb[0].mxu0
      %v5730 = vpop.f32.mrb[0].mxu0
      %v5731 = vadd.f32 0.0, %v5730
      %v5732 = vpop.f32.mrb[0].mxu0
      %5733 = vmatprep.mubr.bf16.mxu0 0
      %5734 = vmatmul.mubr.bf16.gmra.mrb[0].mxu0 %v5522
      %v5735 = vpop.f32.mrb[0].mxu0
      %v5736 = vadd.f32 0.0, %v5735
      %v5737 = vpop.f32.mrb[0].mxu0
      %v5738 = vpop.f32.mrb[0].mxu0
      %v5739 = vadd.f32 0.0, %v5738
      %v5740 = vpop.f32.mrb[0].mxu0
      %5741 = vmatprep.mubr.bf16.mxu0 0
      %5742 = vmatmul.mubr.bf16.gmra.mrb[0].mxu0 %v5525
      %v5743 = vpop.f32.mrb[0].mxu0
      %v5744 = vadd.f32 0.0, %v5743
      %v5745 = vpop.f32.mrb[0].mxu0
      %v5746 = vpop.f32.mrb[0].mxu0
      %v5747 = vadd.f32 0.0, %v5746
      %v5748 = vpop.f32.mrb[0].mxu0
      %5749 = vmatprep.mubr.bf16.mxu0 0
      %5750 = vmatmul.mubr.bf16.gmra.mrb[0].mxu0 %v5528
      %v5751 = vpop.f32.mrb[0].mxu0
      %v5752 = vadd.f32 0.0, %v5751
      %v5753 = vpop.f32.mrb[0].mxu0
      %v5754 = vpop.f32.mrb[0].mxu0
      %v5755 = vadd.f32 0.0, %v5754
      %v5756 = vpop.f32.mrb[0].mxu0
      %5757 = vmatprep.mubr.bf16.mxu0 0
      %5758 = vmatmul.mubr.bf16.gmra.mrb[0].mxu0 %v5531
      %v5759 = vpop.f32.mrb[0].mxu0
      %v5760 = vadd.f32 0.0, %v5759
      %v5761 = vpop.f32.mrb[0].mxu0
      %v5762 = vpop.f32.mrb[0].mxu0
      %v5763 = vadd.f32 0.0, %v5762
      %v5764 = vpop.f32.mrb[0].mxu0
      %5765 = vmatprep.mubr.bf16.mxu0 0
      %5766 = vmatmul.mubr.bf16.gmra.mrb[0].mxu0 %v5534
      %v5767 = vpop.f32.mrb[0].mxu0
      %v5768 = vadd.f32 0.0, %v5767
      %v5769 = vpop.f32.mrb[0].mxu0
      %v5770 = vpop.f32.mrb[0].mxu0
      %v5771 = vadd.f32 0.0, %v5770
      %v5772 = vpop.f32.mrb[0].mxu0
      %5773 = vmatprep.mubr.bf16.mxu0 0
      %5774 = vmatmul.mubr.bf16.gmra.mrb[0].mxu0 %v5537
      %v5775 = vpop.f32.mrb[0].mxu0
      %v5776 = vadd.f32 0.0, %v5775
      %v5777 = vpop.f32.mrb[0].mxu0
      %v5778 = vpop.f32.mrb[0].mxu0
      %v5779 = vadd.f32 0.0, %v5778
      %v5780 = vpop.f32.mrb[0].mxu0
      %5781 = vmatprep.mubr.bf16.mxu0 0
      %5782 = vmatmul.mubr.bf16.gmra.mrb[0].mxu0 %v5540
      %v5783 = vpop.f32.mrb[0].mxu0
      %v5784 = vadd.f32 0.0, %v5783
      %v5785 = vpop.f32.mrb[0].mxu0
      %v5786 = vpop.f32.mrb[0].mxu0
      %v5787 = vadd.f32 0.0, %v5786
      %v5788 = vpop.f32.mrb[0].mxu0
      %5789 = vmatprep.mubr.bf16.mxu0 0
      %5790 = vmatmul.mubr.bf16.gmra.mrb[0].mxu0 %v5543
      %v5791 = vpop.f32.mrb[0].mxu0
      %v5792 = vadd.f32 0.0, %v5791
      %v5793 = vpop.f32.mrb[0].mxu0
      %v5794 = vpop.f32.mrb[0].mxu0
      %v5795 = vadd.f32 0.0, %v5794
      %v5796 = vpop.f32.mrb[0].mxu0
      %5797 = vmatprep.mubr.bf16.mxu0 0
      %5798 = vmatmul.mubr.bf16.gmra.mrb[0].mxu0 %v5546
      %v5799 = vpop.f32.mrb[0].mxu0
      %v5800 = vadd.f32 0.0, %v5799
      %v5801 = vpop.f32.mrb[0].mxu0
      %v5802 = vpop.f32.mrb[0].mxu0
      %v5803 = vadd.f32 0.0, %v5802
      %v5804 = vpop.f32.mrb[0].mxu0
      %5805 = vmatprep.mubr.bf16.mxu0 0
      %5806 = vmatmul.mubr.bf16.gmra.mrb[0].mxu0 %v5549
      %v5807 = vpop.f32.mrb[0].mxu0
      %v5808 = vadd.f32 0.0, %v5807
      %v5809 = vpop.f32.mrb[0].mxu0
      %v5810 = vpop.f32.mrb[0].mxu0
      %v5811 = vadd.f32 0.0, %v5810
      %v5812 = vpop.f32.mrb[0].mxu0
      %5813 = vmatprep.mubr.bf16.mxu0 0
      %5814 = vmatmul.mubr.bf16.gmra.mrb[0].mxu0 %v5552
      %v5815 = vpop.f32.mrb[0].mxu0
      %v5816 = vadd.f32 0.0, %v5815
      %v5817 = vpop.f32.mrb[0].mxu0
      %v5818 = vpop.f32.mrb[0].mxu0
      %v5819 = vadd.f32 0.0, %v5818
      %v5820 = vpop.f32.mrb[0].mxu0
      %5821 = vmatprep.mubr.bf16.mxu0 0
      %5822 = vmatmul.mubr.bf16.gmra.mrb[0].mxu0 %v5555
      %v5823 = vpop.f32.mrb[0].mxu0
      %v5824 = vadd.f32 0.0, %v5823
      %v5825 = vpop.f32.mrb[0].mxu0
      %v5826 = vpop.f32.mrb[0].mxu0
      %v5827 = vadd.f32 0.0, %v5826
      %v5828 = vpop.f32.mrb[0].mxu0
      %5829 = vmatprep.mubr.bf16.mxu0 0
      %5830 = vmatmul.mubr.bf16.gmra.mrb[0].mxu0 %v5558
      %v5831 = vpop.f32.mrb[0].mxu0
      %v5832 = vadd.f32 0.0, %v5831
      %v5833 = vpop.f32.mrb[0].mxu0
      %v5834 = vpop.f32.mrb[0].mxu0
      %v5835 = vadd.f32 0.0, %v5834
      %v5836 = vpop.f32.mrb[0].mxu0
      %5837 = vmatprep.mubr.bf16.mxu0 0
      %5838 = vmatmul.mubr.bf16.gmra.mrb[0].mxu0 %v5561
      %v5839 = vpop.f32.mrb[0].mxu0
      %v5840 = vadd.f32 0.0, %v5839
      %v5841 = vpop.f32.mrb[0].mxu0
      %v5842 = vpop.f32.mrb[0].mxu0
      %v5843 = vadd.f32 0.0, %v5842
      %v5844 = vpop.f32.mrb[0].mxu0
      %5845 = vmatprep.mubr.bf16.mxu0 0
      %5846 = vmatmul.mubr.bf16.gmra.mrb[0].mxu0 %v5564
      %v5847 = vpop.f32.mrb[0].mxu0
      %v5848 = vadd.f32 0.0, %v5847
      %v5849 = vpop.f32.mrb[0].mxu0
      %v5850 = vpop.f32.mrb[0].mxu0
      %v5851 = vadd.f32 0.0, %v5850
      %v5852 = vpop.f32.mrb[0].mxu0
      %5853 = vmatprep.mubr.bf16.mxu0 0
      %5854 = vmatmul.mubr.bf16.gmra.mrb[0].mxu0 %v5567
      %v5855 = vpop.f32.mrb[0].mxu0
      %v5856 = vadd.f32 0.0, %v5855
      %v5857 = vpop.f32.mrb[0].mxu0
      %v5858 = vpop.f32.mrb[0].mxu0
      %v5859 = vadd.f32 0.0, %v5858
      %v5860 = vpop.f32.mrb[0].mxu0
      %5861 = vmatprep.mubr.bf16.mxu0 0
      %5862 = vmatmul.mubr.bf16.gmra.mrb[0].mxu0 %v5570
      %v5863 = vpop.f32.mrb[0].mxu0
      %v5864 = vadd.f32 0.0, %v5863
      %v5865 = vpop.f32.mrb[0].mxu0
      %v5866 = vpop.f32.mrb[0].mxu0
      %v5867 = vadd.f32 0.0, %v5866
      %v5868 = vpop.f32.mrb[0].mxu0
      %5869 = vmatprep.mubr.bf16.mxu0 0
      %5870 = vmatmul.mubr.bf16.gmra.mrb[0].mxu0 %v5573
      %v5871 = vpop.f32.mrb[0].mxu0
      %v5872 = vadd.f32 0.0, %v5871
      %v5873 = vpop.f32.mrb[0].mxu0
      %v5874 = vpop.f32.mrb[0].mxu0
      %v5875 = vadd.f32 0.0, %v5874
      %v5876 = vpop.f32.mrb[0].mxu0
      %5877 = vmatprep.mubr.bf16.mxu0 0
      %5878 = vmatmul.mubr.bf16.gmra.mrb[0].mxu0 %v5576
      %v5879 = vpop.f32.mrb[0].mxu0
      %v5880 = vadd.f32 0.0, %v5879
      %v5881 = vpop.f32.mrb[0].mxu0
      %v5882 = vpop.f32.mrb[0].mxu0
      %v5883 = vadd.f32 0.0, %v5882
      %v5884 = vpop.f32.mrb[0].mxu0
      %5885 = vmatprep.mubr.bf16.mxu0 0
      %5886 = vmatmul.mubr.bf16.gmra.mrb[0].mxu0 %v5579
      %v5887 = vpop.f32.mrb[0].mxu0
      %v5888 = vadd.f32 0.0, %v5887
      %v5889 = vpop.f32.mrb[0].mxu0
      %v5890 = vpop.f32.mrb[0].mxu0
      %v5891 = vadd.f32 0.0, %v5890
      %v5892 = vpop.f32.mrb[0].mxu0
      %5893 = vmatprep.mubr.bf16.mxu0 0
      %5894 = vmatmul.mubr.bf16.gmra.mrb[0].mxu0 %v5582
      %v5895 = vpop.f32.mrb[0].mxu0
      %v5896 = vadd.f32 0.0, %v5895
      %v5897 = vpop.f32.mrb[0].mxu0
      %v5898 = vpop.f32.mrb[0].mxu0
      %v5899 = vadd.f32 0.0, %v5898
      %v5900 = vpop.f32.mrb[0].mxu0
      %5901 = vmatprep.mubr.bf16.mxu0 0
      %5902 = vmatmul.mubr.bf16.gmra.mrb[0].mxu0 %v5585
      %v5903 = vpop.f32.mrb[0].mxu0
      %v5904 = vadd.f32 0.0, %v5903
      %v5905 = vpop.f32.mrb[0].mxu0
      %v5906 = vpop.f32.mrb[0].mxu0
      %v5907 = vadd.f32 0.0, %v5906
      %v5908 = vpop.f32.mrb[0].mxu0
      %5909 = vmatprep.mubr.bf16.mxu0 0
      %5910 = vmatmul.mubr.bf16.gmra.mrb[0].mxu0 %v5588
      %v5911 = vpop.f32.mrb[0].mxu0
      %v5912 = vadd.f32 0.0, %v5911
      %v5913 = vpop.f32.mrb[0].mxu0
      %v5914 = vpop.f32.mrb[0].mxu0
      %v5915 = vadd.f32 0.0, %v5914
      %v5916 = vpop.f32.mrb[0].mxu0
      %5917 = vmatprep.mubr.bf16.mxu0 0
      %5918 = vmatmul.mubr.bf16.gmra.mrb[0].mxu0 %v5591
      %v5919 = vpop.f32.mrb[0].mxu0
      %v5920 = vadd.f32 0.0, %v5919
      %v5921 = vpop.f32.mrb[0].mxu0
      %v5922 = vpop.f32.mrb[0].mxu0
      %v5923 = vadd.f32 0.0, %v5922
      %v5924 = vpop.f32.mrb[0].mxu0
      %5925 = vdwg.mxu0
      %5926 = vst.msk [vmem:[#allocation4] sm:$0xff] %vm1156, %v5632
      %5927 = vst.msk [vmem:[#allocation4 + $0x8] sm:$0xff] %vm1156, %v5635
      %5928 = vst.msk [vmem:[#allocation4 + $0x10] sm:$0xff] %vm1156, %v5640
      %5929 = vst.msk [vmem:[#allocation4 + $0x18] sm:$0xff] %vm1156, %v5643
      %5930 = vst.msk [vmem:[#allocation4 + $0x20] sm:$0xff] %vm1156, %v5648
      %5931 = vst.msk [vmem:[#allocation4 + $0x28] sm:$0xff] %vm1156, %v5651
      %5932 = vst.msk [vmem:[#allocation4 + $0x30] sm:$0xff] %vm1156, %v5656
      %5933 = vst.msk [vmem:[#allocation4 + $0x38] sm:$0xff] %vm1156, %v5659
      %5934 = vst.msk [vmem:[#allocation4 + $0x40] sm:$0xff] %vm1156, %v5664
      %5935 = vst.msk [vmem:[#allocation4 + $0x48] sm:$0xff] %vm1156, %v5667
      %5936 = vst.msk [vmem:[#allocation4 + $0x50] sm:$0xff] %vm1156, %v5672
      %5937 = vst.msk [vmem:[#allocation4 + $0x58] sm:$0xff] %vm1156, %v5675
      %5938 = vst.msk [vmem:[#allocation4 + $0x60] sm:$0xff] %vm1156, %v5680
      %5939 = vst.msk [vmem:[#allocation4 + $0x68] sm:$0xff] %vm1156, %v5683
      %5940 = vst.msk [vmem:[#allocation4 + $0x70] sm:$0xff] %vm1156, %v5688
      %5941 = vst.msk [vmem:[#allocation4 + $0x78] sm:$0xff] %vm1156, %v5691
      %5942 = vst.msk [vmem:[#allocation4 + $0x80] sm:$0xff] %vm1156, %v5696
      %5943 = vst.msk [vmem:[#allocation4 + $0x88] sm:$0xff] %vm1156, %v5699
      %5944 = vst.msk [vmem:[#allocation4 + $0x90] sm:$0xff] %vm1156, %v5704
      %5945 = vst.msk [vmem:[#allocation4 + $0x98] sm:$0xff] %vm1156, %v5707
      %5946 = vst.msk [vmem:[#allocation4 + $0xa0] sm:$0xff] %vm1156, %v5712
      %5947 = vst.msk [vmem:[#allocation4 + $0xa8] sm:$0xff] %vm1156, %v5715
      %5948 = vst.msk [vmem:[#allocation4 + $0xb0] sm:$0xff] %vm1156, %v5720
      %5949 = vst.msk [vmem:[#allocation4 + $0xb8] sm:$0xff] %vm1156, %v5723
      %5950 = vst.msk [vmem:[#allocation4 + $0xc0] sm:$0xff] %vm1156, %v5728
      %5951 = vst.msk [vmem:[#allocation4 + $0xc8] sm:$0xff] %vm1156, %v5731
      %5952 = vst.msk [vmem:[#allocation4 + $0xd0] sm:$0xff] %vm1156, %v5736
      %5953 = vst.msk [vmem:[#allocation4 + $0xd8] sm:$0xff] %vm1156, %v5739
      %5954 = vst.msk [vmem:[#allocation4 + $0xe0] sm:$0xff] %vm1156, %v5744
      %5955 = vst.msk [vmem:[#allocation4 + $0xe8] sm:$0xff] %vm1156, %v5747
      %5956 = vst.msk [vmem:[#allocation4 + $0xf0] sm:$0xff] %vm1156, %v5752
      %5957 = vst.msk [vmem:[#allocation4 + $0xf8] sm:$0xff] %vm1156, %v5755
      %5958 = vst.msk [vmem:[#allocation4 + $0x100] sm:$0xff] %vm1156, %v5760
      %5959 = vst.msk [vmem:[#allocation4 + $0x108] sm:$0xff] %vm1156, %v5763
      %5960 = vst.msk [vmem:[#allocation4 + $0x110] sm:$0xff] %vm1156, %v5768
      %5961 = vst.msk [vmem:[#allocation4 + $0x118] sm:$0xff] %vm1156, %v5771
      %5962 = vst.msk [vmem:[#allocation4 + $0x120] sm:$0xff] %vm1156, %v5776
      %5963 = vst.msk [vmem:[#allocation4 + $0x128] sm:$0xff] %vm1156, %v5779
      %5964 = vst.msk [vmem:[#allocation4 + $0x130] sm:$0xff] %vm1156, %v5784
      %5965 = vst.msk [vmem:[#allocation4 + $0x138] sm:$0xff] %vm1156, %v5787
      %5966 = vst.msk [vmem:[#allocation4 + $0x140] sm:$0xff] %vm1156, %v5792
      %5967 = vst.msk [vmem:[#allocation4 + $0x148] sm:$0xff] %vm1156, %v5795
      %5968 = vst.msk [vmem:[#allocation4 + $0x150] sm:$0xff] %vm1156, %v5800
      %5969 = vst.msk [vmem:[#allocation4 + $0x158] sm:$0xff] %vm1156, %v5803
      %5970 = vst.msk [vmem:[#allocation4 + $0x160] sm:$0xff] %vm1156, %v5808
      %5971 = vst.msk [vmem:[#allocation4 + $0x168] sm:$0xff] %vm1156, %v5811
      %5972 = vst.msk [vmem:[#allocation4 + $0x170] sm:$0xff] %vm1156, %v5816
      %5973 = vst.msk [vmem:[#allocation4 + $0x178] sm:$0xff] %vm1156, %v5819
      %5974 = vst.msk [vmem:[#allocation4 + $0x180] sm:$0xff] %vm1156, %v5824
      %5975 = vst.msk [vmem:[#allocation4 + $0x188] sm:$0xff] %vm1156, %v5827
      %5976 = vst.msk [vmem:[#allocation4 + $0x190] sm:$0xff] %vm1156, %v5832
      %5977 = vst.msk [vmem:[#allocation4 + $0x198] sm:$0xff] %vm1156, %v5835
      %5978 = vst.msk [vmem:[#allocation4 + $0x1a0] sm:$0xff] %vm1156, %v5840
      %5979 = vst.msk [vmem:[#allocation4 + $0x1a8] sm:$0xff] %vm1156, %v5843
      %5980 = vst.msk [vmem:[#allocation4 + $0x1b0] sm:$0xff] %vm1156, %v5848
      %5981 = vst.msk [vmem:[#allocation4 + $0x1b8] sm:$0xff] %vm1156, %v5851
      %5982 = vst.msk [vmem:[#allocation4 + $0x1c0] sm:$0xff] %vm1156, %v5856
      %5983 = vst.msk [vmem:[#allocation4 + $0x1c8] sm:$0xff] %vm1156, %v5859
      %5984 = vst.msk [vmem:[#allocation4 + $0x1d0] sm:$0xff] %vm1156, %v5864
      %5985 = vst.msk [vmem:[#allocation4 + $0x1d8] sm:$0xff] %vm1156, %v5867
      %5986 = vst.msk [vmem:[#allocation4 + $0x1e0] sm:$0xff] %vm1156, %v5872
      %5987 = vst.msk [vmem:[#allocation4 + $0x1e8] sm:$0xff] %vm1156, %v5875
      %5988 = vst.msk [vmem:[#allocation4 + $0x1f0] sm:$0xff] %vm1156, %v5880
      %5989 = vst.msk [vmem:[#allocation4 + $0x1f8] sm:$0xff] %vm1156, %v5883
      %5990 = vst.msk [vmem:[#allocation4 + $0x200] sm:$0xff] %vm1156, %v5888
      %5991 = vst.msk [vmem:[#allocation4 + $0x208] sm:$0xff] %vm1156, %v5891
      %5992 = vst.msk [vmem:[#allocation4 + $0x210] sm:$0xff] %vm1156, %v5896
      %5993 = vst.msk [vmem:[#allocation4 + $0x218] sm:$0xff] %vm1156, %v5899
      %5994 = vst.msk [vmem:[#allocation4 + $0x220] sm:$0xff] %vm1156, %v5904
      %5995 = vst.msk [vmem:[#allocation4 + $0x228] sm:$0xff] %vm1156, %v5907
      %5996 = vst.msk [vmem:[#allocation4 + $0x230] sm:$0xff] %vm1156, %v5912
      %5997 = vst.msk [vmem:[#allocation4 + $0x238] sm:$0xff] %vm1156, %v5915
      %5998 = vst.msk [vmem:[#allocation4 + $0x240] sm:$0xff] %vm1156, %v5920
      %5999 = vst.msk [vmem:[#allocation4 + $0x248] sm:$0xff] %vm1156, %v5923
      %v6000 = vld [vmem:[#allocation4 + $0x7] sm:$0xff]
      %v6001 = vld [vmem:[#allocation4 + $0xf] sm:$0xff]
      %v6002 = vld [vmem:[#allocation4 + $0x17] sm:$0xff]
      %v6003 = vld [vmem:[#allocation4 + $0x1f] sm:$0xff]
      %v6004 = vld [vmem:[#allocation4 + $0x27] sm:$0xff]
      %v6005 = vld [vmem:[#allocation4 + $0x2f] sm:$0xff]
      %v6006 = vld [vmem:[#allocation4 + $0x37] sm:$0xff]
      %v6007 = vld [vmem:[#allocation4 + $0x3f] sm:$0xff]
      %v6008 = vld [vmem:[#allocation4 + $0x47] sm:$0xff]
      %v6009 = vld [vmem:[#allocation4 + $0x4f] sm:$0xff]
      %v6010 = vld [vmem:[#allocation4 + $0x57] sm:$0xff]
      %v6011 = vld [vmem:[#allocation4 + $0x5f] sm:$0xff]
      %v6012 = vld [vmem:[#allocation4 + $0x67] sm:$0xff]
      %v6013 = vld [vmem:[#allocation4 + $0x6f] sm:$0xff]
      %v6014 = vld [vmem:[#allocation4 + $0x77] sm:$0xff]
      %v6015 = vld [vmem:[#allocation4 + $0x7f] sm:$0xff]
      %v6016 = vld [vmem:[#allocation4 + $0x87] sm:$0xff]
      %v6017 = vld [vmem:[#allocation4 + $0x8f] sm:$0xff]
      %v6018 = vld [vmem:[#allocation4 + $0x97] sm:$0xff]
      %v6019 = vld [vmem:[#allocation4 + $0x9f] sm:$0xff]
      %v6020 = vld [vmem:[#allocation4 + $0xa7] sm:$0xff]
      %v6021 = vld [vmem:[#allocation4 + $0xaf] sm:$0xff]
      %v6022 = vld [vmem:[#allocation4 + $0xb7] sm:$0xff]
      %v6023 = vld [vmem:[#allocation4 + $0xbf] sm:$0xff]
      %v6024 = vld [vmem:[#allocation4 + $0xc7] sm:$0xff]
      %v6025 = vld [vmem:[#allocation4 + $0xcf] sm:$0xff]
      %v6026 = vld [vmem:[#allocation4 + $0xd7] sm:$0xff]
      %v6027 = vld [vmem:[#allocation4 + $0xdf] sm:$0xff]
      %v6028 = vld [vmem:[#allocation4 + $0xe7] sm:$0xff]
      %v6029 = vld [vmem:[#allocation4 + $0xef] sm:$0xff]
      %v6030 = vld [vmem:[#allocation4 + $0xf7] sm:$0xff]
      %v6031 = vld [vmem:[#allocation4 + $0xff] sm:$0xff]
      %v6032 = vld [vmem:[#allocation4 + $0x107] sm:$0xff]
      %v6033 = vld [vmem:[#allocation4 + $0x10f] sm:$0xff]
      %v6034 = vld [vmem:[#allocation4 + $0x117] sm:$0xff]
      %v6035 = vld [vmem:[#allocation4 + $0x11f] sm:$0xff]
      %v6036 = vld [vmem:[#allocation4 + $0x127] sm:$0xff]
      %v6037 = vld [vmem:[#allocation4 + $0x12f] sm:$0xff]
      %v6038 = vld [vmem:[#allocation4 + $0x137] sm:$0xff]
      %v6039 = vld [vmem:[#allocation4 + $0x13f] sm:$0xff]
      %v6040 = vld [vmem:[#allocation4 + $0x147] sm:$0xff]
      %v6041 = vld [vmem:[#allocation4 + $0x14f] sm:$0xff]
      %v6042 = vld [vmem:[#allocation4 + $0x157] sm:$0xff]
      %v6043 = vld [vmem:[#allocation4 + $0x15f] sm:$0xff]
      %v6044 = vld [vmem:[#allocation4 + $0x167] sm:$0xff]
      %v6045 = vld [vmem:[#allocation4 + $0x16f] sm:$0xff]
      %v6046 = vld [vmem:[#allocation4 + $0x177] sm:$0xff]
      %v6047 = vld [vmem:[#allocation4 + $0x17f] sm:$0xff]
      %v6048 = vld [vmem:[#allocation4 + $0x187] sm:$0xff]
      %v6049 = vld [vmem:[#allocation4 + $0x18f] sm:$0xff]
      %v6050 = vld [vmem:[#allocation4 + $0x197] sm:$0xff]
      %v6051 = vld [vmem:[#allocation4 + $0x19f] sm:$0xff]
      %v6052 = vld [vmem:[#allocation4 + $0x1a7] sm:$0xff]
      %v6053 = vld [vmem:[#allocation4 + $0x1af] sm:$0xff]
      %v6054 = vld [vmem:[#allocation4 + $0x1b7] sm:$0xff]
      %v6055 = vld [vmem:[#allocation4 + $0x1bf] sm:$0xff]
      %v6056 = vld [vmem:[#allocation4 + $0x1c7] sm:$0xff]
      %v6057 = vld [vmem:[#allocation4 + $0x1cf] sm:$0xff]
      %v6058 = vld [vmem:[#allocation4 + $0x1d7] sm:$0xff]
      %v6059 = vld [vmem:[#allocation4 + $0x1df] sm:$0xff]
      %v6060 = vld [vmem:[#allocation4 + $0x1e7] sm:$0xff]
      %v6061 = vld [vmem:[#allocation4 + $0x1ef] sm:$0xff]
      %v6062 = vld [vmem:[#allocation4 + $0x1f7] sm:$0xff]
      %v6063 = vld [vmem:[#allocation4 + $0x1ff] sm:$0xff]
      %v6064 = vld [vmem:[#allocation4 + $0x8] sm:$0xff]
      %v6065 = vld [vmem:[#allocation4 + $0x10] sm:$0xff]
      %v6066 = vld [vmem:[#allocation4 + $0x18] sm:$0xff]
      %v6067 = vld [vmem:[#allocation4 + $0x20] sm:$0xff]
      %v6068 = vld [vmem:[#allocation4 + $0x28] sm:$0xff]
      %v6069 = vld [vmem:[#allocation4 + $0x30] sm:$0xff]
      %v6070 = vld [vmem:[#allocation4 + $0x38] sm:$0xff]
      %v6071 = vld [vmem:[#allocation4 + $0x40] sm:$0xff]
      %v6072 = vld [vmem:[#allocation4 + $0x48] sm:$0xff]
      %v6073 = vld [vmem:[#allocation4 + $0x50] sm:$0xff]
      %v6074 = vld [vmem:[#allocation4 + $0x58] sm:$0xff]
      %v6075 = vld [vmem:[#allocation4 + $0x60] sm:$0xff]
      %v6076 = vld [vmem:[#allocation4 + $0x68] sm:$0xff]
      %v6077 = vld [vmem:[#allocation4 + $0x70] sm:$0xff]
      %v6078 = vld [vmem:[#allocation4 + $0x78] sm:$0xff]
      %v6079 = vld [vmem:[#allocation4 + $0x80] sm:$0xff]
      %v6080 = vld [vmem:[#allocation4 + $0x88] sm:$0xff]
      %v6081 = vld [vmem:[#allocation4 + $0x90] sm:$0xff]
      %v6082 = vld [vmem:[#allocation4 + $0x98] sm:$0xff]
      %v6083 = vld [vmem:[#allocation4 + $0xa0] sm:$0xff]
      %v6084 = vld [vmem:[#allocation4 + $0xa8] sm:$0xff]
      %v6085 = vld [vmem:[#allocation4 + $0xb0] sm:$0xff]
      %v6086 = vld [vmem:[#allocation4 + $0xb8] sm:$0xff]
      %v6087 = vld [vmem:[#allocation4 + $0xc0] sm:$0xff]
      %v6088 = vld [vmem:[#allocation4 + $0xc8] sm:$0xff]
      %v6089 = vld [vmem:[#allocation4 + $0xd0] sm:$0xff]
      %v6090 = vld [vmem:[#allocation4 + $0xd8] sm:$0xff]
      %v6091 = vld [vmem:[#allocation4 + $0xe0] sm:$0xff]
      %v6092 = vld [vmem:[#allocation4 + $0xe8] sm:$0xff]
      %v6093 = vld [vmem:[#allocation4 + $0xf0] sm:$0xff]
      %v6094 = vld [vmem:[#allocation4 + $0xf8] sm:$0xff]
      %v6095 = vld [vmem:[#allocation4 + $0x100] sm:$0xff]
      %v6096 = vld [vmem:[#allocation4 + $0x108] sm:$0xff]
      %v6097 = vld [vmem:[#allocation4 + $0x110] sm:$0xff]
      %v6098 = vld [vmem:[#allocation4 + $0x118] sm:$0xff]
      %v6099 = vld [vmem:[#allocation4 + $0x120] sm:$0xff]
      %v6100 = vld [vmem:[#allocation4 + $0x128] sm:$0xff]
      %v6101 = vld [vmem:[#allocation4 + $0x130] sm:$0xff]
      %v6102 = vld [vmem:[#allocation4 + $0x138] sm:$0xff]
      %v6103 = vld [vmem:[#allocation4 + $0x140] sm:$0xff]
      %v6104 = vld [vmem:[#allocation4 + $0x148] sm:$0xff]
      %v6105 = vld [vmem:[#allocation4 + $0x150] sm:$0xff]
      %v6106 = vld [vmem:[#allocation4 + $0x158] sm:$0xff]
      %v6107 = vld [vmem:[#allocation4 + $0x160] sm:$0xff]
      %v6108 = vld [vmem:[#allocation4 + $0x168] sm:$0xff]
      %v6109 = vld [vmem:[#allocation4 + $0x170] sm:$0xff]
      %v6110 = vld [vmem:[#allocation4 + $0x178] sm:$0xff]
      %v6111 = vld [vmem:[#allocation4 + $0x180] sm:$0xff]
      %v6112 = vld [vmem:[#allocation4 + $0x188] sm:$0xff]
      %v6113 = vld [vmem:[#allocation4 + $0x190] sm:$0xff]
      %v6114 = vld [vmem:[#allocation4 + $0x198] sm:$0xff]
      %v6115 = vld [vmem:[#allocation4 + $0x1a0] sm:$0xff]
      %v6116 = vld [vmem:[#allocation4 + $0x1a8] sm:$0xff]
      %v6117 = vld [vmem:[#allocation4 + $0x1b0] sm:$0xff]
      %v6118 = vld [vmem:[#allocation4 + $0x1b8] sm:$0xff]
      %v6119 = vld [vmem:[#allocation4 + $0x1c0] sm:$0xff]
      %v6120 = vld [vmem:[#allocation4 + $0x1c8] sm:$0xff]
      %v6121 = vld [vmem:[#allocation4 + $0x1d0] sm:$0xff]
      %v6122 = vld [vmem:[#allocation4 + $0x1d8] sm:$0xff]
      %v6123 = vld [vmem:[#allocation4 + $0x1e0] sm:$0xff]
      %v6124 = vld [vmem:[#allocation4 + $0x1e8] sm:$0xff]
      %v6125 = vld [vmem:[#allocation4 + $0x1f0] sm:$0xff]
      %v6126 = vld [vmem:[#allocation4 + $0x1f8] sm:$0xff]
      %v6127 = vld [vmem:[#allocation4 + $0x200] sm:$0xff]
      %6192 = vrot.lane.b32.xlu0 %v6064, 120
      %v6193 = vpop.permute.xlu0 %6192
      %6194 = vrot.lane.b32.xlu0 %v6065, 120
      %v6195 = vpop.permute.xlu0 %6194
      %6196 = vrot.lane.b32.xlu0 %v6066, 120
      %v6197 = vpop.permute.xlu0 %6196
      %6198 = vrot.lane.b32.xlu0 %v6067, 120
      %v6199 = vpop.permute.xlu0 %6198
      %6200 = vrot.lane.b32.xlu0 %v6068, 120
      %v6201 = vpop.permute.xlu0 %6200
      %6202 = vrot.lane.b32.xlu0 %v6069, 120
      %v6203 = vpop.permute.xlu0 %6202
      %6204 = vrot.lane.b32.xlu0 %v6070, 120
      %v6205 = vpop.permute.xlu0 %6204
      %6206 = vrot.lane.b32.xlu0 %v6071, 120
      %v6207 = vpop.permute.xlu0 %6206
      %6208 = vrot.lane.b32.xlu0 %v6072, 120
      %v6209 = vpop.permute.xlu0 %6208
      %6210 = vrot.lane.b32.xlu0 %v6073, 120
      %v6211 = vpop.permute.xlu0 %6210
      %6212 = vrot.lane.b32.xlu0 %v6074, 120
      %v6213 = vpop.permute.xlu0 %6212
      %6214 = vrot.lane.b32.xlu0 %v6075, 120
      %v6215 = vpop.permute.xlu0 %6214
      %6216 = vrot.lane.b32.xlu0 %v6076, 120
      %v6217 = vpop.permute.xlu0 %6216
      %6218 = vrot.lane.b32.xlu0 %v6077, 120
      %v6219 = vpop.permute.xlu0 %6218
      %6220 = vrot.lane.b32.xlu0 %v6078, 120
      %v6221 = vpop.permute.xlu0 %6220
      %6222 = vrot.lane.b32.xlu0 %v6079, 120
      %v6223 = vpop.permute.xlu0 %6222
      %6224 = vrot.lane.b32.xlu0 %v6080, 120
      %v6225 = vpop.permute.xlu0 %6224
      %6226 = vrot.lane.b32.xlu0 %v6081, 120
      %v6227 = vpop.permute.xlu0 %6226
      %6228 = vrot.lane.b32.xlu0 %v6082, 120
      %v6229 = vpop.permute.xlu0 %6228
      %6230 = vrot.lane.b32.xlu0 %v6083, 120
      %v6231 = vpop.permute.xlu0 %6230
      %6232 = vrot.lane.b32.xlu0 %v6084, 120
      %v6233 = vpop.permute.xlu0 %6232
      %6234 = vrot.lane.b32.xlu0 %v6085, 120
      %v6235 = vpop.permute.xlu0 %6234
      %6236 = vrot.lane.b32.xlu0 %v6086, 120
      %v6237 = vpop.permute.xlu0 %6236
      %6238 = vrot.lane.b32.xlu0 %v6087, 120
      %v6239 = vpop.permute.xlu0 %6238
      %6240 = vrot.lane.b32.xlu0 %v6088, 120
      %v6241 = vpop.permute.xlu0 %6240
      %6242 = vrot.lane.b32.xlu0 %v6089, 120
      %v6243 = vpop.permute.xlu0 %6242
      %6244 = vrot.lane.b32.xlu0 %v6090, 120
      %v6245 = vpop.permute.xlu0 %6244
      %6246 = vrot.lane.b32.xlu0 %v6091, 120
      %v6247 = vpop.permute.xlu0 %6246
      %6248 = vrot.lane.b32.xlu0 %v6092, 120
      %v6249 = vpop.permute.xlu0 %6248
      %6250 = vrot.lane.b32.xlu0 %v6093, 120
      %v6251 = vpop.permute.xlu0 %6250
      %6252 = vrot.lane.b32.xlu0 %v6094, 120
      %v6253 = vpop.permute.xlu0 %6252
      %6254 = vrot.lane.b32.xlu0 %v6095, 120
      %v6255 = vpop.permute.xlu0 %6254
      %6256 = vrot.lane.b32.xlu0 %v6096, 120
      %v6257 = vpop.permute.xlu0 %6256
      %6258 = vrot.lane.b32.xlu0 %v6097, 120
      %v6259 = vpop.permute.xlu0 %6258
      %6260 = vrot.lane.b32.xlu0 %v6098, 120
      %v6261 = vpop.permute.xlu0 %6260
      %6262 = vrot.lane.b32.xlu0 %v6099, 120
      %v6263 = vpop.permute.xlu0 %6262
      %6264 = vrot.lane.b32.xlu0 %v6100, 120
      %v6265 = vpop.permute.xlu0 %6264
      %6266 = vrot.lane.b32.xlu0 %v6101, 120
      %v6267 = vpop.permute.xlu0 %6266
      %6268 = vrot.lane.b32.xlu0 %v6102, 120
      %v6269 = vpop.permute.xlu0 %6268
      %6270 = vrot.lane.b32.xlu0 %v6103, 120
      %v6271 = vpop.permute.xlu0 %6270
      %6272 = vrot.lane.b32.xlu0 %v6104, 120
      %v6273 = vpop.permute.xlu0 %6272
      %6274 = vrot.lane.b32.xlu0 %v6105, 120
      %v6275 = vpop.permute.xlu0 %6274
      %6276 = vrot.lane.b32.xlu0 %v6106, 120
      %v6277 = vpop.permute.xlu0 %6276
      %6278 = vrot.lane.b32.xlu0 %v6107, 120
      %v6279 = vpop.permute.xlu0 %6278
      %6280 = vrot.lane.b32.xlu0 %v6108, 120
      %v6281 = vpop.permute.xlu0 %6280
      %6282 = vrot.lane.b32.xlu0 %v6109, 120
      %v6283 = vpop.permute.xlu0 %6282
      %6284 = vrot.lane.b32.xlu0 %v6110, 120
      %v6285 = vpop.permute.xlu0 %6284
      %6286 = vrot.lane.b32.xlu0 %v6111, 120
      %v6287 = vpop.permute.xlu0 %6286
      %6288 = vrot.lane.b32.xlu0 %v6112, 120
      %v6289 = vpop.permute.xlu0 %6288
      %6290 = vrot.lane.b32.xlu0 %v6113, 120
      %v6291 = vpop.permute.xlu0 %6290
      %6292 = vrot.lane.b32.xlu0 %v6114, 120
      %v6293 = vpop.permute.xlu0 %6292
      %6294 = vrot.lane.b32.xlu0 %v6115, 120
      %v6295 = vpop.permute.xlu0 %6294
      %6296 = vrot.lane.b32.xlu0 %v6116, 120
      %v6297 = vpop.permute.xlu0 %6296
      %6298 = vrot.lane.b32.xlu0 %v6117, 120
      %v6299 = vpop.permute.xlu0 %6298
      %6300 = vrot.lane.b32.xlu0 %v6118, 120
      %v6301 = vpop.permute.xlu0 %6300
      %6302 = vrot.lane.b32.xlu0 %v6119, 120
      %v6303 = vpop.permute.xlu0 %6302
      %6304 = vrot.lane.b32.xlu0 %v6120, 120
      %v6305 = vpop.permute.xlu0 %6304
      %6306 = vrot.lane.b32.xlu0 %v6121, 120
      %v6307 = vpop.permute.xlu0 %6306
      %6308 = vrot.lane.b32.xlu0 %v6122, 120
      %v6309 = vpop.permute.xlu0 %6308
      %6310 = vrot.lane.b32.xlu0 %v6123, 120
      %v6311 = vpop.permute.xlu0 %6310
      %6312 = vrot.lane.b32.xlu0 %v6124, 120
      %v6313 = vpop.permute.xlu0 %6312
      %6314 = vrot.lane.b32.xlu0 %v6125, 120
      %v6315 = vpop.permute.xlu0 %6314
      %6316 = vrot.lane.b32.xlu0 %v6126, 120
      %v6317 = vpop.permute.xlu0 %6316
      %6318 = vrot.lane.b32.xlu0 %v6127, 120
      %v6319 = vpop.permute.xlu0 %6318
      %v6384 = vadd.f32 %v6000, %v6193
      %v6385 = vadd.f32 %v6001, %v6195
      %v6386 = vadd.f32 %v6002, %v6197
      %v6387 = vadd.f32 %v6003, %v6199
      %v6388 = vadd.f32 %v6004, %v6201
      %v6389 = vadd.f32 %v6005, %v6203
      %v6390 = vadd.f32 %v6006, %v6205
      %v6391 = vadd.f32 %v6007, %v6207
      %v6392 = vadd.f32 %v6008, %v6209
      %v6393 = vadd.f32 %v6009, %v6211
      %v6394 = vadd.f32 %v6010, %v6213
      %v6395 = vadd.f32 %v6011, %v6215
      %v6396 = vadd.f32 %v6012, %v6217
      %v6397 = vadd.f32 %v6013, %v6219
      %v6398 = vadd.f32 %v6014, %v6221
      %v6399 = vadd.f32 %v6015, %v6223
      %v6400 = vadd.f32 %v6016, %v6225
      %v6401 = vadd.f32 %v6017, %v6227
      %v6402 = vadd.f32 %v6018, %v6229
      %v6403 = vadd.f32 %v6019, %v6231
      %v6404 = vadd.f32 %v6020, %v6233
      %v6405 = vadd.f32 %v6021, %v6235
      %v6406 = vadd.f32 %v6022, %v6237
      %v6407 = vadd.f32 %v6023, %v6239
      %v6408 = vadd.f32 %v6024, %v6241
      %v6409 = vadd.f32 %v6025, %v6243
      %v6410 = vadd.f32 %v6026, %v6245
      %v6411 = vadd.f32 %v6027, %v6247
      %v6412 = vadd.f32 %v6028, %v6249
      %v6413 = vadd.f32 %v6029, %v6251
      %v6414 = vadd.f32 %v6030, %v6253
      %v6415 = vadd.f32 %v6031, %v6255
      %v6416 = vadd.f32 %v6032, %v6257
      %v6417 = vadd.f32 %v6033, %v6259
      %v6418 = vadd.f32 %v6034, %v6261
      %v6419 = vadd.f32 %v6035, %v6263
      %v6420 = vadd.f32 %v6036, %v6265
      %v6421 = vadd.f32 %v6037, %v6267
      %v6422 = vadd.f32 %v6038, %v6269
      %v6423 = vadd.f32 %v6039, %v6271
      %v6424 = vadd.f32 %v6040, %v6273
      %v6425 = vadd.f32 %v6041, %v6275
      %v6426 = vadd.f32 %v6042, %v6277
      %v6427 = vadd.f32 %v6043, %v6279
      %v6428 = vadd.f32 %v6044, %v6281
      %v6429 = vadd.f32 %v6045, %v6283
      %v6430 = vadd.f32 %v6046, %v6285
      %v6431 = vadd.f32 %v6047, %v6287
      %v6432 = vadd.f32 %v6048, %v6289
      %v6433 = vadd.f32 %v6049, %v6291
      %v6434 = vadd.f32 %v6050, %v6293
      %v6435 = vadd.f32 %v6051, %v6295
      %v6436 = vadd.f32 %v6052, %v6297
      %v6437 = vadd.f32 %v6053, %v6299
      %v6438 = vadd.f32 %v6054, %v6301
      %v6439 = vadd.f32 %v6055, %v6303
      %v6440 = vadd.f32 %v6056, %v6305
      %v6441 = vadd.f32 %v6057, %v6307
      %v6442 = vadd.f32 %v6058, %v6309
      %v6443 = vadd.f32 %v6059, %v6311
      %v6444 = vadd.f32 %v6060, %v6313
      %v6445 = vadd.f32 %v6061, %v6315
      %v6446 = vadd.f32 %v6062, %v6317
      %v6447 = vadd.f32 %v6063, %v6319
      %v6448 = vld [vmem:[#allocation4 + $0x9] sm:$0xff]
      %v6449 = vld [vmem:[#allocation4 + $0x11] sm:$0xff]
      %v6450 = vld [vmem:[#allocation4 + $0x19] sm:$0xff]
      %v6451 = vld [vmem:[#allocation4 + $0x21] sm:$0xff]
      %v6452 = vld [vmem:[#allocation4 + $0x29] sm:$0xff]
      %v6453 = vld [vmem:[#allocation4 + $0x31] sm:$0xff]
      %v6454 = vld [vmem:[#allocation4 + $0x39] sm:$0xff]
      %v6455 = vld [vmem:[#allocation4 + $0x41] sm:$0xff]
      %v6456 = vld [vmem:[#allocation4 + $0x49] sm:$0xff]
      %v6457 = vld [vmem:[#allocation4 + $0x51] sm:$0xff]
      %v6458 = vld [vmem:[#allocation4 + $0x59] sm:$0xff]
      %v6459 = vld [vmem:[#allocation4 + $0x61] sm:$0xff]
      %v6460 = vld [vmem:[#allocation4 + $0x69] sm:$0xff]
      %v6461 = vld [vmem:[#allocation4 + $0x71] sm:$0xff]
      %v6462 = vld [vmem:[#allocation4 + $0x79] sm:$0xff]
      %v6463 = vld [vmem:[#allocation4 + $0x81] sm:$0xff]
      %v6464 = vld [vmem:[#allocation4 + $0x89] sm:$0xff]
      %v6465 = vld [vmem:[#allocation4 + $0x91] sm:$0xff]
      %v6466 = vld [vmem:[#allocation4 + $0x99] sm:$0xff]
      %v6467 = vld [vmem:[#allocation4 + $0xa1] sm:$0xff]
      %v6468 = vld [vmem:[#allocation4 + $0xa9] sm:$0xff]
      %v6469 = vld [vmem:[#allocation4 + $0xb1] sm:$0xff]
      %v6470 = vld [vmem:[#allocation4 + $0xb9] sm:$0xff]
      %v6471 = vld [vmem:[#allocation4 + $0xc1] sm:$0xff]
      %v6472 = vld [vmem:[#allocation4 + $0xc9] sm:$0xff]
      %v6473 = vld [vmem:[#allocation4 + $0xd1] sm:$0xff]
      %v6474 = vld [vmem:[#allocation4 + $0xd9] sm:$0xff]
      %v6475 = vld [vmem:[#allocation4 + $0xe1] sm:$0xff]
      %v6476 = vld [vmem:[#allocation4 + $0xe9] sm:$0xff]
      %v6477 = vld [vmem:[#allocation4 + $0xf1] sm:$0xff]
      %v6478 = vld [vmem:[#allocation4 + $0xf9] sm:$0xff]
      %v6479 = vld [vmem:[#allocation4 + $0x101] sm:$0xff]
      %v6480 = vld [vmem:[#allocation4 + $0x109] sm:$0xff]
      %v6481 = vld [vmem:[#allocation4 + $0x111] sm:$0xff]
      %v6482 = vld [vmem:[#allocation4 + $0x119] sm:$0xff]
      %v6483 = vld [vmem:[#allocation4 + $0x121] sm:$0xff]
      %v6484 = vld [vmem:[#allocation4 + $0x129] sm:$0xff]
      %v6485 = vld [vmem:[#allocation4 + $0x131] sm:$0xff]
      %v6486 = vld [vmem:[#allocation4 + $0x139] sm:$0xff]
      %v6487 = vld [vmem:[#allocation4 + $0x141] sm:$0xff]
      %v6488 = vld [vmem:[#allocation4 + $0x149] sm:$0xff]
      %v6489 = vld [vmem:[#allocation4 + $0x151] sm:$0xff]
      %v6490 = vld [vmem:[#allocation4 + $0x159] sm:$0xff]
      %v6491 = vld [vmem:[#allocation4 + $0x161] sm:$0xff]
      %v6492 = vld [vmem:[#allocation4 + $0x169] sm:$0xff]
      %v6493 = vld [vmem:[#allocation4 + $0x171] sm:$0xff]
      %v6494 = vld [vmem:[#allocation4 + $0x179] sm:$0xff]
      %v6495 = vld [vmem:[#allocation4 + $0x181] sm:$0xff]
      %v6496 = vld [vmem:[#allocation4 + $0x189] sm:$0xff]
      %v6497 = vld [vmem:[#allocation4 + $0x191] sm:$0xff]
      %v6498 = vld [vmem:[#allocation4 + $0x199] sm:$0xff]
      %v6499 = vld [vmem:[#allocation4 + $0x1a1] sm:$0xff]
      %v6500 = vld [vmem:[#allocation4 + $0x1a9] sm:$0xff]
      %v6501 = vld [vmem:[#allocation4 + $0x1b1] sm:$0xff]
      %v6502 = vld [vmem:[#allocation4 + $0x1b9] sm:$0xff]
      %v6503 = vld [vmem:[#allocation4 + $0x1c1] sm:$0xff]
      %v6504 = vld [vmem:[#allocation4 + $0x1c9] sm:$0xff]
      %v6505 = vld [vmem:[#allocation4 + $0x1d1] sm:$0xff]
      %v6506 = vld [vmem:[#allocation4 + $0x1d9] sm:$0xff]
      %v6507 = vld [vmem:[#allocation4 + $0x1e1] sm:$0xff]
      %v6508 = vld [vmem:[#allocation4 + $0x1e9] sm:$0xff]
      %v6509 = vld [vmem:[#allocation4 + $0x1f1] sm:$0xff]
      %v6510 = vld [vmem:[#allocation4 + $0x1f9] sm:$0xff]
      %v6511 = vld [vmem:[#allocation4 + $0x201] sm:$0xff]
      %6576 = vrot.lane.b32.xlu0 %v6448, 112
      %v6577 = vpop.permute.xlu0 %6576
      %6578 = vrot.lane.b32.xlu0 %v6449, 112
      %v6579 = vpop.permute.xlu0 %6578
      %6580 = vrot.lane.b32.xlu0 %v6450, 112
      %v6581 = vpop.permute.xlu0 %6580
      %6582 = vrot.lane.b32.xlu0 %v6451, 112
      %v6583 = vpop.permute.xlu0 %6582
      %6584 = vrot.lane.b32.xlu0 %v6452, 112
      %v6585 = vpop.permute.xlu0 %6584
      %6586 = vrot.lane.b32.xlu0 %v6453, 112
      %v6587 = vpop.permute.xlu0 %6586
      %6588 = vrot.lane.b32.xlu0 %v6454, 112
      %v6589 = vpop.permute.xlu0 %6588
      %6590 = vrot.lane.b32.xlu0 %v6455, 112
      %v6591 = vpop.permute.xlu0 %6590
      %6592 = vrot.lane.b32.xlu0 %v6456, 112
      %v6593 = vpop.permute.xlu0 %6592
      %6594 = vrot.lane.b32.xlu0 %v6457, 112
      %v6595 = vpop.permute.xlu0 %6594
      %6596 = vrot.lane.b32.xlu0 %v6458, 112
      %v6597 = vpop.permute.xlu0 %6596
      %6598 = vrot.lane.b32.xlu0 %v6459, 112
      %v6599 = vpop.permute.xlu0 %6598
      %6600 = vrot.lane.b32.xlu0 %v6460, 112
      %v6601 = vpop.permute.xlu0 %6600
      %6602 = vrot.lane.b32.xlu0 %v6461, 112
      %v6603 = vpop.permute.xlu0 %6602
      %6604 = vrot.lane.b32.xlu0 %v6462, 112
      %v6605 = vpop.permute.xlu0 %6604
      %6606 = vrot.lane.b32.xlu0 %v6463, 112
      %v6607 = vpop.permute.xlu0 %6606
      %6608 = vrot.lane.b32.xlu0 %v6464, 112
      %v6609 = vpop.permute.xlu0 %6608
      %6610 = vrot.lane.b32.xlu0 %v6465, 112
      %v6611 = vpop.permute.xlu0 %6610
      %6612 = vrot.lane.b32.xlu0 %v6466, 112
      %v6613 = vpop.permute.xlu0 %6612
      %6614 = vrot.lane.b32.xlu0 %v6467, 112
      %v6615 = vpop.permute.xlu0 %6614
      %6616 = vrot.lane.b32.xlu0 %v6468, 112
      %v6617 = vpop.permute.xlu0 %6616
      %6618 = vrot.lane.b32.xlu0 %v6469, 112
      %v6619 = vpop.permute.xlu0 %6618
      %6620 = vrot.lane.b32.xlu0 %v6470, 112
      %v6621 = vpop.permute.xlu0 %6620
      %6622 = vrot.lane.b32.xlu0 %v6471, 112
      %v6623 = vpop.permute.xlu0 %6622
      %6624 = vrot.lane.b32.xlu0 %v6472, 112
      %v6625 = vpop.permute.xlu0 %6624
      %6626 = vrot.lane.b32.xlu0 %v6473, 112
      %v6627 = vpop.permute.xlu0 %6626
      %6628 = vrot.lane.b32.xlu0 %v6474, 112
      %v6629 = vpop.permute.xlu0 %6628
      %6630 = vrot.lane.b32.xlu0 %v6475, 112
      %v6631 = vpop.permute.xlu0 %6630
      %6632 = vrot.lane.b32.xlu0 %v6476, 112
      %v6633 = vpop.permute.xlu0 %6632
      %6634 = vrot.lane.b32.xlu0 %v6477, 112
      %v6635 = vpop.permute.xlu0 %6634
      %6636 = vrot.lane.b32.xlu0 %v6478, 112
      %v6637 = vpop.permute.xlu0 %6636
      %6638 = vrot.lane.b32.xlu0 %v6479, 112
      %v6639 = vpop.permute.xlu0 %6638
      %6640 = vrot.lane.b32.xlu0 %v6480, 112
      %v6641 = vpop.permute.xlu0 %6640
      %6642 = vrot.lane.b32.xlu0 %v6481, 112
      %v6643 = vpop.permute.xlu0 %6642
      %6644 = vrot.lane.b32.xlu0 %v6482, 112
      %v6645 = vpop.permute.xlu0 %6644
      %6646 = vrot.lane.b32.xlu0 %v6483, 112
      %v6647 = vpop.permute.xlu0 %6646
      %6648 = vrot.lane.b32.xlu0 %v6484, 112
      %v6649 = vpop.permute.xlu0 %6648
      %6650 = vrot.lane.b32.xlu0 %v6485, 112
      %v6651 = vpop.permute.xlu0 %6650
      %6652 = vrot.lane.b32.xlu0 %v6486, 112
      %v6653 = vpop.permute.xlu0 %6652
      %6654 = vrot.lane.b32.xlu0 %v6487, 112
      %v6655 = vpop.permute.xlu0 %6654
      %6656 = vrot.lane.b32.xlu0 %v6488, 112
      %v6657 = vpop.permute.xlu0 %6656
      %6658 = vrot.lane.b32.xlu0 %v6489, 112
      %v6659 = vpop.permute.xlu0 %6658
      %6660 = vrot.lane.b32.xlu0 %v6490, 112
      %v6661 = vpop.permute.xlu0 %6660
      %6662 = vrot.lane.b32.xlu0 %v6491, 112
      %v6663 = vpop.permute.xlu0 %6662
      %6664 = vrot.lane.b32.xlu0 %v6492, 112
      %v6665 = vpop.permute.xlu0 %6664
      %6666 = vrot.lane.b32.xlu0 %v6493, 112
      %v6667 = vpop.permute.xlu0 %6666
      %6668 = vrot.lane.b32.xlu0 %v6494, 112
      %v6669 = vpop.permute.xlu0 %6668
      %6670 = vrot.lane.b32.xlu0 %v6495, 112
      %v6671 = vpop.permute.xlu0 %6670
      %6672 = vrot.lane.b32.xlu0 %v6496, 112
      %v6673 = vpop.permute.xlu0 %6672
      %6674 = vrot.lane.b32.xlu0 %v6497, 112
      %v6675 = vpop.permute.xlu0 %6674
      %6676 = vrot.lane.b32.xlu0 %v6498, 112
      %v6677 = vpop.permute.xlu0 %6676
      %6678 = vrot.lane.b32.xlu0 %v6499, 112
      %v6679 = vpop.permute.xlu0 %6678
      %6680 = vrot.lane.b32.xlu0 %v6500, 112
      %v6681 = vpop.permute.xlu0 %6680
      %6682 = vrot.lane.b32.xlu0 %v6501, 112
      %v6683 = vpop.permute.xlu0 %6682
      %6684 = vrot.lane.b32.xlu0 %v6502, 112
      %v6685 = vpop.permute.xlu0 %6684
      %6686 = vrot.lane.b32.xlu0 %v6503, 112
      %v6687 = vpop.permute.xlu0 %6686
      %6688 = vrot.lane.b32.xlu0 %v6504, 112
      %v6689 = vpop.permute.xlu0 %6688
      %6690 = vrot.lane.b32.xlu0 %v6505, 112
      %v6691 = vpop.permute.xlu0 %6690
      %6692 = vrot.lane.b32.xlu0 %v6506, 112
      %v6693 = vpop.permute.xlu0 %6692
      %6694 = vrot.lane.b32.xlu0 %v6507, 112
      %v6695 = vpop.permute.xlu0 %6694
      %6696 = vrot.lane.b32.xlu0 %v6508, 112
      %v6697 = vpop.permute.xlu0 %6696
      %6698 = vrot.lane.b32.xlu0 %v6509, 112
      %v6699 = vpop.permute.xlu0 %6698
      %6700 = vrot.lane.b32.xlu0 %v6510, 112
      %v6701 = vpop.permute.xlu0 %6700
      %6702 = vrot.lane.b32.xlu0 %v6511, 112
      %v6703 = vpop.permute.xlu0 %6702
      %v6768 = vadd.f32 %v6384, %v6577
      %v6769 = vadd.f32 %v6385, %v6579
      %v6770 = vadd.f32 %v6386, %v6581
      %v6771 = vadd.f32 %v6387, %v6583
      %v6772 = vadd.f32 %v6388, %v6585
      %v6773 = vadd.f32 %v6389, %v6587
      %v6774 = vadd.f32 %v6390, %v6589
      %v6775 = vadd.f32 %v6391, %v6591
      %v6776 = vadd.f32 %v6392, %v6593
      %v6777 = vadd.f32 %v6393, %v6595
      %v6778 = vadd.f32 %v6394, %v6597
      %v6779 = vadd.f32 %v6395, %v6599
      %v6780 = vadd.f32 %v6396, %v6601
      %v6781 = vadd.f32 %v6397, %v6603
      %v6782 = vadd.f32 %v6398, %v6605
      %v6783 = vadd.f32 %v6399, %v6607
      %v6784 = vadd.f32 %v6400, %v6609
      %v6785 = vadd.f32 %v6401, %v6611
      %v6786 = vadd.f32 %v6402, %v6613
      %v6787 = vadd.f32 %v6403, %v6615
      %v6788 = vadd.f32 %v6404, %v6617
      %v6789 = vadd.f32 %v6405, %v6619
      %v6790 = vadd.f32 %v6406, %v6621
      %v6791 = vadd.f32 %v6407, %v6623
      %v6792 = vadd.f32 %v6408, %v6625
      %v6793 = vadd.f32 %v6409, %v6627
      %v6794 = vadd.f32 %v6410, %v6629
      %v6795 = vadd.f32 %v6411, %v6631
      %v6796 = vadd.f32 %v6412, %v6633
      %v6797 = vadd.f32 %v6413, %v6635
      %v6798 = vadd.f32 %v6414, %v6637
      %v6799 = vadd.f32 %v6415, %v6639
      %v6800 = vadd.f32 %v6416, %v6641
      %v6801 = vadd.f32 %v6417, %v6643
      %v6802 = vadd.f32 %v6418, %v6645
      %v6803 = vadd.f32 %v6419, %v6647
      %v6804 = vadd.f32 %v6420, %v6649
      %v6805 = vadd.f32 %v6421, %v6651
      %v6806 = vadd.f32 %v6422, %v6653
      %v6807 = vadd.f32 %v6423, %v6655
      %v6808 = vadd.f32 %v6424, %v6657
      %v6809 = vadd.f32 %v6425, %v6659
      %v6810 = vadd.f32 %v6426, %v6661
      %v6811 = vadd.f32 %v6427, %v6663
      %v6812 = vadd.f32 %v6428, %v6665
      %v6813 = vadd.f32 %v6429, %v6667
      %v6814 = vadd.f32 %v6430, %v6669
      %v6815 = vadd.f32 %v6431, %v6671
      %v6816 = vadd.f32 %v6432, %v6673
      %v6817 = vadd.f32 %v6433, %v6675
      %v6818 = vadd.f32 %v6434, %v6677
      %v6819 = vadd.f32 %v6435, %v6679
      %v6820 = vadd.f32 %v6436, %v6681
      %v6821 = vadd.f32 %v6437, %v6683
      %v6822 = vadd.f32 %v6438, %v6685
      %v6823 = vadd.f32 %v6439, %v6687
      %v6824 = vadd.f32 %v6440, %v6689
      %v6825 = vadd.f32 %v6441, %v6691
      %v6826 = vadd.f32 %v6442, %v6693
      %v6827 = vadd.f32 %v6443, %v6695
      %v6828 = vadd.f32 %v6444, %v6697
      %v6829 = vadd.f32 %v6445, %v6699
      %v6830 = vadd.f32 %v6446, %v6701
      %v6831 = vadd.f32 %v6447, %v6703
      %v6832 = vld [vmem:[#allocation4 + $0x207] sm:$0xff]
      %v6833 = vld [vmem:[#allocation4 + $0x20f] sm:$0xff]
      %v6834 = vld [vmem:[#allocation4 + $0x217] sm:$0xff]
      %v6835 = vld [vmem:[#allocation4 + $0x21f] sm:$0xff]
      %6900 = vrot.lane.b32.xlu0 %v6004, 104
      %v6901 = vpop.permute.xlu0 %6900
      %6902 = vrot.lane.b32.xlu0 %v6005, 104
      %v6903 = vpop.permute.xlu0 %6902
      %6904 = vrot.lane.b32.xlu0 %v6006, 104
      %v6905 = vpop.permute.xlu0 %6904
      %6906 = vrot.lane.b32.xlu0 %v6007, 104
      %v6907 = vpop.permute.xlu0 %6906
      %6908 = vrot.lane.b32.xlu0 %v6008, 104
      %v6909 = vpop.permute.xlu0 %6908
      %6910 = vrot.lane.b32.xlu0 %v6009, 104
      %v6911 = vpop.permute.xlu0 %6910
      %6912 = vrot.lane.b32.xlu0 %v6010, 104
      %v6913 = vpop.permute.xlu0 %6912
      %6914 = vrot.lane.b32.xlu0 %v6011, 104
      %v6915 = vpop.permute.xlu0 %6914
      %6916 = vrot.lane.b32.xlu0 %v6012, 104
      %v6917 = vpop.permute.xlu0 %6916
      %6918 = vrot.lane.b32.xlu0 %v6013, 104
      %v6919 = vpop.permute.xlu0 %6918
      %6920 = vrot.lane.b32.xlu0 %v6014, 104
      %v6921 = vpop.permute.xlu0 %6920
      %6922 = vrot.lane.b32.xlu0 %v6015, 104
      %v6923 = vpop.permute.xlu0 %6922
      %6924 = vrot.lane.b32.xlu0 %v6016, 104
      %v6925 = vpop.permute.xlu0 %6924
      %6926 = vrot.lane.b32.xlu0 %v6017, 104
      %v6927 = vpop.permute.xlu0 %6926
      %6928 = vrot.lane.b32.xlu0 %v6018, 104
      %v6929 = vpop.permute.xlu0 %6928
      %6930 = vrot.lane.b32.xlu0 %v6019, 104
      %v6931 = vpop.permute.xlu0 %6930
      %6932 = vrot.lane.b32.xlu0 %v6020, 104
      %v6933 = vpop.permute.xlu0 %6932
      %6934 = vrot.lane.b32.xlu0 %v6021, 104
      %v6935 = vpop.permute.xlu0 %6934
      %6936 = vrot.lane.b32.xlu0 %v6022, 104
      %v6937 = vpop.permute.xlu0 %6936
      %6938 = vrot.lane.b32.xlu0 %v6023, 104
      %v6939 = vpop.permute.xlu0 %6938
      %6940 = vrot.lane.b32.xlu0 %v6024, 104
      %v6941 = vpop.permute.xlu0 %6940
      %6942 = vrot.lane.b32.xlu0 %v6025, 104
      %v6943 = vpop.permute.xlu0 %6942
      %6944 = vrot.lane.b32.xlu0 %v6026, 104
      %v6945 = vpop.permute.xlu0 %6944
      %6946 = vrot.lane.b32.xlu0 %v6027, 104
      %v6947 = vpop.permute.xlu0 %6946
      %6948 = vrot.lane.b32.xlu0 %v6028, 104
      %v6949 = vpop.permute.xlu0 %6948
      %6950 = vrot.lane.b32.xlu0 %v6029, 104
      %v6951 = vpop.permute.xlu0 %6950
      %6952 = vrot.lane.b32.xlu0 %v6030, 104
      %v6953 = vpop.permute.xlu0 %6952
      %6954 = vrot.lane.b32.xlu0 %v6031, 104
      %v6955 = vpop.permute.xlu0 %6954
      %6956 = vrot.lane.b32.xlu0 %v6032, 104
      %v6957 = vpop.permute.xlu0 %6956
      %6958 = vrot.lane.b32.xlu0 %v6033, 104
      %v6959 = vpop.permute.xlu0 %6958
      %6960 = vrot.lane.b32.xlu0 %v6034, 104
      %v6961 = vpop.permute.xlu0 %6960
      %6962 = vrot.lane.b32.xlu0 %v6035, 104
      %v6963 = vpop.permute.xlu0 %6962
      %6964 = vrot.lane.b32.xlu0 %v6036, 104
      %v6965 = vpop.permute.xlu0 %6964
      %6966 = vrot.lane.b32.xlu0 %v6037, 104
      %v6967 = vpop.permute.xlu0 %6966
      %6968 = vrot.lane.b32.xlu0 %v6038, 104
      %v6969 = vpop.permute.xlu0 %6968
      %6970 = vrot.lane.b32.xlu0 %v6039, 104
      %v6971 = vpop.permute.xlu0 %6970
      %6972 = vrot.lane.b32.xlu0 %v6040, 104
      %v6973 = vpop.permute.xlu0 %6972
      %6974 = vrot.lane.b32.xlu0 %v6041, 104
      %v6975 = vpop.permute.xlu0 %6974
      %6976 = vrot.lane.b32.xlu0 %v6042, 104
      %v6977 = vpop.permute.xlu0 %6976
      %6978 = vrot.lane.b32.xlu0 %v6043, 104
      %v6979 = vpop.permute.xlu0 %6978
      %6980 = vrot.lane.b32.xlu0 %v6044, 104
      %v6981 = vpop.permute.xlu0 %6980
      %6982 = vrot.lane.b32.xlu0 %v6045, 104
      %v6983 = vpop.permute.xlu0 %6982
      %6984 = vrot.lane.b32.xlu0 %v6046, 104
      %v6985 = vpop.permute.xlu0 %6984
      %6986 = vrot.lane.b32.xlu0 %v6047, 104
      %v6987 = vpop.permute.xlu0 %6986
      %6988 = vrot.lane.b32.xlu0 %v6048, 104
      %v6989 = vpop.permute.xlu0 %6988
      %6990 = vrot.lane.b32.xlu0 %v6049, 104
      %v6991 = vpop.permute.xlu0 %6990
      %6992 = vrot.lane.b32.xlu0 %v6050, 104
      %v6993 = vpop.permute.xlu0 %6992
      %6994 = vrot.lane.b32.xlu0 %v6051, 104
      %v6995 = vpop.permute.xlu0 %6994
      %6996 = vrot.lane.b32.xlu0 %v6052, 104
      %v6997 = vpop.permute.xlu0 %6996
      %6998 = vrot.lane.b32.xlu0 %v6053, 104
      %v6999 = vpop.permute.xlu0 %6998
      %7000 = vrot.lane.b32.xlu0 %v6054, 104
      %v7001 = vpop.permute.xlu0 %7000
      %7002 = vrot.lane.b32.xlu0 %v6055, 104
      %v7003 = vpop.permute.xlu0 %7002
      %7004 = vrot.lane.b32.xlu0 %v6056, 104
      %v7005 = vpop.permute.xlu0 %7004
      %7006 = vrot.lane.b32.xlu0 %v6057, 104
      %v7007 = vpop.permute.xlu0 %7006
      %7008 = vrot.lane.b32.xlu0 %v6058, 104
      %v7009 = vpop.permute.xlu0 %7008
      %7010 = vrot.lane.b32.xlu0 %v6059, 104
      %v7011 = vpop.permute.xlu0 %7010
      %7012 = vrot.lane.b32.xlu0 %v6060, 104
      %v7013 = vpop.permute.xlu0 %7012
      %7014 = vrot.lane.b32.xlu0 %v6061, 104
      %v7015 = vpop.permute.xlu0 %7014
      %7016 = vrot.lane.b32.xlu0 %v6062, 104
      %v7017 = vpop.permute.xlu0 %7016
      %7018 = vrot.lane.b32.xlu0 %v6063, 104
      %v7019 = vpop.permute.xlu0 %7018
      %7020 = vrot.lane.b32.xlu0 %v6832, 104
      %v7021 = vpop.permute.xlu0 %7020
      %7022 = vrot.lane.b32.xlu0 %v6833, 104
      %v7023 = vpop.permute.xlu0 %7022
      %7024 = vrot.lane.b32.xlu0 %v6834, 104
      %v7025 = vpop.permute.xlu0 %7024
      %7026 = vrot.lane.b32.xlu0 %v6835, 104
      %v7027 = vpop.permute.xlu0 %7026
      %v7092 = vadd.f32 %v6768, %v6901
      %v7093 = vadd.f32 %v6769, %v6903
      %v7094 = vadd.f32 %v6770, %v6905
      %v7095 = vadd.f32 %v6771, %v6907
      %v7096 = vadd.f32 %v6772, %v6909
      %v7097 = vadd.f32 %v6773, %v6911
      %v7098 = vadd.f32 %v6774, %v6913
      %v7099 = vadd.f32 %v6775, %v6915
      %v7100 = vadd.f32 %v6776, %v6917
      %v7101 = vadd.f32 %v6777, %v6919
      %v7102 = vadd.f32 %v6778, %v6921
      %v7103 = vadd.f32 %v6779, %v6923
      %v7104 = vadd.f32 %v6780, %v6925
      %v7105 = vadd.f32 %v6781, %v6927
      %v7106 = vadd.f32 %v6782, %v6929
      %v7107 = vadd.f32 %v6783, %v6931
      %v7108 = vadd.f32 %v6784, %v6933
      %v7109 = vadd.f32 %v6785, %v6935
      %v7110 = vadd.f32 %v6786, %v6937
      %v7111 = vadd.f32 %v6787, %v6939
      %v7112 = vadd.f32 %v6788, %v6941
      %v7113 = vadd.f32 %v6789, %v6943
      %v7114 = vadd.f32 %v6790, %v6945
      %v7115 = vadd.f32 %v6791, %v6947
      %v7116 = vadd.f32 %v6792, %v6949
      %v7117 = vadd.f32 %v6793, %v6951
      %v7118 = vadd.f32 %v6794, %v6953
      %v7119 = vadd.f32 %v6795, %v6955
      %v7120 = vadd.f32 %v6796, %v6957
      %v7121 = vadd.f32 %v6797, %v6959
      %v7122 = vadd.f32 %v6798, %v6961
      %v7123 = vadd.f32 %v6799, %v6963
      %v7124 = vadd.f32 %v6800, %v6965
      %v7125 = vadd.f32 %v6801, %v6967
      %v7126 = vadd.f32 %v6802, %v6969
      %v7127 = vadd.f32 %v6803, %v6971
      %v7128 = vadd.f32 %v6804, %v6973
      %v7129 = vadd.f32 %v6805, %v6975
      %v7130 = vadd.f32 %v6806, %v6977
      %v7131 = vadd.f32 %v6807, %v6979
      %v7132 = vadd.f32 %v6808, %v6981
      %v7133 = vadd.f32 %v6809, %v6983
      %v7134 = vadd.f32 %v6810, %v6985
      %v7135 = vadd.f32 %v6811, %v6987
      %v7136 = vadd.f32 %v6812, %v6989
      %v7137 = vadd.f32 %v6813, %v6991
      %v7138 = vadd.f32 %v6814, %v6993
      %v7139 = vadd.f32 %v6815, %v6995
      %v7140 = vadd.f32 %v6816, %v6997
      %v7141 = vadd.f32 %v6817, %v6999
      %v7142 = vadd.f32 %v6818, %v7001
      %v7143 = vadd.f32 %v6819, %v7003
      %v7144 = vadd.f32 %v6820, %v7005
      %v7145 = vadd.f32 %v6821, %v7007
      %v7146 = vadd.f32 %v6822, %v7009
      %v7147 = vadd.f32 %v6823, %v7011
      %v7148 = vadd.f32 %v6824, %v7013
      %v7149 = vadd.f32 %v6825, %v7015
      %v7150 = vadd.f32 %v6826, %v7017
      %v7151 = vadd.f32 %v6827, %v7019
      %v7152 = vadd.f32 %v6828, %v7021
      %v7153 = vadd.f32 %v6829, %v7023
      %v7154 = vadd.f32 %v6830, %v7025
      %v7155 = vadd.f32 %v6831, %v7027
      %v7156 = vld [vmem:[#allocation4 + $0x208] sm:$0xff]
      %v7157 = vld [vmem:[#allocation4 + $0x210] sm:$0xff]
      %v7158 = vld [vmem:[#allocation4 + $0x218] sm:$0xff]
      %v7159 = vld [vmem:[#allocation4 + $0x220] sm:$0xff]
      %7164 = vrot.lane.b32.xlu0 %v6068, 96
      %v7165 = vpop.permute.xlu0 %7164
      %7166 = vrot.lane.b32.xlu0 %v6069, 96
      %v7167 = vpop.permute.xlu0 %7166
      %7168 = vrot.lane.b32.xlu0 %v6070, 96
      %v7169 = vpop.permute.xlu0 %7168
      %7170 = vrot.lane.b32.xlu0 %v6071, 96
      %v7171 = vpop.permute.xlu0 %7170
      %7172 = vrot.lane.b32.xlu0 %v6072, 96
      %v7173 = vpop.permute.xlu0 %7172
      %7174 = vrot.lane.b32.xlu0 %v6073, 96
      %v7175 = vpop.permute.xlu0 %7174
      %7176 = vrot.lane.b32.xlu0 %v6074, 96
      %v7177 = vpop.permute.xlu0 %7176
      %7178 = vrot.lane.b32.xlu0 %v6075, 96
      %v7179 = vpop.permute.xlu0 %7178
      %7180 = vrot.lane.b32.xlu0 %v6076, 96
      %v7181 = vpop.permute.xlu0 %7180
      %7182 = vrot.lane.b32.xlu0 %v6077, 96
      %v7183 = vpop.permute.xlu0 %7182
      %7184 = vrot.lane.b32.xlu0 %v6078, 96
      %v7185 = vpop.permute.xlu0 %7184
      %7186 = vrot.lane.b32.xlu0 %v6079, 96
      %v7187 = vpop.permute.xlu0 %7186
      %7188 = vrot.lane.b32.xlu0 %v6080, 96
      %v7189 = vpop.permute.xlu0 %7188
      %7190 = vrot.lane.b32.xlu0 %v6081, 96
      %v7191 = vpop.permute.xlu0 %7190
      %7192 = vrot.lane.b32.xlu0 %v6082, 96
      %v7193 = vpop.permute.xlu0 %7192
      %7194 = vrot.lane.b32.xlu0 %v6083, 96
      %v7195 = vpop.permute.xlu0 %7194
      %7196 = vrot.lane.b32.xlu0 %v6084, 96
      %v7197 = vpop.permute.xlu0 %7196
      %7198 = vrot.lane.b32.xlu0 %v6085, 96
      %v7199 = vpop.permute.xlu0 %7198
      %7200 = vrot.lane.b32.xlu0 %v6086, 96
      %v7201 = vpop.permute.xlu0 %7200
      %7202 = vrot.lane.b32.xlu0 %v6087, 96
      %v7203 = vpop.permute.xlu0 %7202
      %7204 = vrot.lane.b32.xlu0 %v6088, 96
      %v7205 = vpop.permute.xlu0 %7204
      %7206 = vrot.lane.b32.xlu0 %v6089, 96
      %v7207 = vpop.permute.xlu0 %7206
      %7208 = vrot.lane.b32.xlu0 %v6090, 96
      %v7209 = vpop.permute.xlu0 %7208
      %7210 = vrot.lane.b32.xlu0 %v6091, 96
      %v7211 = vpop.permute.xlu0 %7210
      %7212 = vrot.lane.b32.xlu0 %v6092, 96
      %v7213 = vpop.permute.xlu0 %7212
      %7214 = vrot.lane.b32.xlu0 %v6093, 96
      %v7215 = vpop.permute.xlu0 %7214
      %7216 = vrot.lane.b32.xlu0 %v6094, 96
      %v7217 = vpop.permute.xlu0 %7216
      %7218 = vrot.lane.b32.xlu0 %v6095, 96
      %v7219 = vpop.permute.xlu0 %7218
      %7220 = vrot.lane.b32.xlu0 %v6096, 96
      %v7221 = vpop.permute.xlu0 %7220
      %7222 = vrot.lane.b32.xlu0 %v6097, 96
      %v7223 = vpop.permute.xlu0 %7222
      %7224 = vrot.lane.b32.xlu0 %v6098, 96
      %v7225 = vpop.permute.xlu0 %7224
      %7226 = vrot.lane.b32.xlu0 %v6099, 96
      %v7227 = vpop.permute.xlu0 %7226
      %7228 = vrot.lane.b32.xlu0 %v6100, 96
      %v7229 = vpop.permute.xlu0 %7228
      %7230 = vrot.lane.b32.xlu0 %v6101, 96
      %v7231 = vpop.permute.xlu0 %7230
      %7232 = vrot.lane.b32.xlu0 %v6102, 96
      %v7233 = vpop.permute.xlu0 %7232
      %7234 = vrot.lane.b32.xlu0 %v6103, 96
      %v7235 = vpop.permute.xlu0 %7234
      %7236 = vrot.lane.b32.xlu0 %v6104, 96
      %v7237 = vpop.permute.xlu0 %7236
      %7238 = vrot.lane.b32.xlu0 %v6105, 96
      %v7239 = vpop.permute.xlu0 %7238
      %7240 = vrot.lane.b32.xlu0 %v6106, 96
      %v7241 = vpop.permute.xlu0 %7240
      %7242 = vrot.lane.b32.xlu0 %v6107, 96
      %v7243 = vpop.permute.xlu0 %7242
      %7244 = vrot.lane.b32.xlu0 %v6108, 96
      %v7245 = vpop.permute.xlu0 %7244
      %7246 = vrot.lane.b32.xlu0 %v6109, 96
      %v7247 = vpop.permute.xlu0 %7246
      %7248 = vrot.lane.b32.xlu0 %v6110, 96
      %v7249 = vpop.permute.xlu0 %7248
      %7250 = vrot.lane.b32.xlu0 %v6111, 96
      %v7251 = vpop.permute.xlu0 %7250
      %7252 = vrot.lane.b32.xlu0 %v6112, 96
      %v7253 = vpop.permute.xlu0 %7252
      %7254 = vrot.lane.b32.xlu0 %v6113, 96
      %v7255 = vpop.permute.xlu0 %7254
      %7256 = vrot.lane.b32.xlu0 %v6114, 96
      %v7257 = vpop.permute.xlu0 %7256
      %7258 = vrot.lane.b32.xlu0 %v6115, 96
      %v7259 = vpop.permute.xlu0 %7258
      %7260 = vrot.lane.b32.xlu0 %v6116, 96
      %v7261 = vpop.permute.xlu0 %7260
      %7262 = vrot.lane.b32.xlu0 %v6117, 96
      %v7263 = vpop.permute.xlu0 %7262
      %7264 = vrot.lane.b32.xlu0 %v6118, 96
      %v7265 = vpop.permute.xlu0 %7264
      %7266 = vrot.lane.b32.xlu0 %v6119, 96
      %v7267 = vpop.permute.xlu0 %7266
      %7268 = vrot.lane.b32.xlu0 %v6120, 96
      %v7269 = vpop.permute.xlu0 %7268
      %7270 = vrot.lane.b32.xlu0 %v6121, 96
      %v7271 = vpop.permute.xlu0 %7270
      %7272 = vrot.lane.b32.xlu0 %v6122, 96
      %v7273 = vpop.permute.xlu0 %7272
      %7274 = vrot.lane.b32.xlu0 %v6123, 96
      %v7275 = vpop.permute.xlu0 %7274
      %7276 = vrot.lane.b32.xlu0 %v6124, 96
      %v7277 = vpop.permute.xlu0 %7276
      %7278 = vrot.lane.b32.xlu0 %v6125, 96
      %v7279 = vpop.permute.xlu0 %7278
      %7280 = vrot.lane.b32.xlu0 %v6126, 96
      %v7281 = vpop.permute.xlu0 %7280
      %7282 = vrot.lane.b32.xlu0 %v6127, 96
      %v7283 = vpop.permute.xlu0 %7282
      %7284 = vrot.lane.b32.xlu0 %v7156, 96
      %v7285 = vpop.permute.xlu0 %7284
      %7286 = vrot.lane.b32.xlu0 %v7157, 96
      %v7287 = vpop.permute.xlu0 %7286
      %7288 = vrot.lane.b32.xlu0 %v7158, 96
      %v7289 = vpop.permute.xlu0 %7288
      %7290 = vrot.lane.b32.xlu0 %v7159, 96
      %v7291 = vpop.permute.xlu0 %7290
      %v7356 = vadd.f32 %v7092, %v7165
      %v7357 = vadd.f32 %v7093, %v7167
      %v7358 = vadd.f32 %v7094, %v7169
      %v7359 = vadd.f32 %v7095, %v7171
      %v7360 = vadd.f32 %v7096, %v7173
      %v7361 = vadd.f32 %v7097, %v7175
      %v7362 = vadd.f32 %v7098, %v7177
      %v7363 = vadd.f32 %v7099, %v7179
      %v7364 = vadd.f32 %v7100, %v7181
      %v7365 = vadd.f32 %v7101, %v7183
      %v7366 = vadd.f32 %v7102, %v7185
      %v7367 = vadd.f32 %v7103, %v7187
      %v7368 = vadd.f32 %v7104, %v7189
      %v7369 = vadd.f32 %v7105, %v7191
      %v7370 = vadd.f32 %v7106, %v7193
      %v7371 = vadd.f32 %v7107, %v7195
      %v7372 = vadd.f32 %v7108, %v7197
      %v7373 = vadd.f32 %v7109, %v7199
      %v7374 = vadd.f32 %v7110, %v7201
      %v7375 = vadd.f32 %v7111, %v7203
      %v7376 = vadd.f32 %v7112, %v7205
      %v7377 = vadd.f32 %v7113, %v7207
      %v7378 = vadd.f32 %v7114, %v7209
      %v7379 = vadd.f32 %v7115, %v7211
      %v7380 = vadd.f32 %v7116, %v7213
      %v7381 = vadd.f32 %v7117, %v7215
      %v7382 = vadd.f32 %v7118, %v7217
      %v7383 = vadd.f32 %v7119, %v7219
      %v7384 = vadd.f32 %v7120, %v7221
      %v7385 = vadd.f32 %v7121, %v7223
      %v7386 = vadd.f32 %v7122, %v7225
      %v7387 = vadd.f32 %v7123, %v7227
      %v7388 = vadd.f32 %v7124, %v7229
      %v7389 = vadd.f32 %v7125, %v7231
      %v7390 = vadd.f32 %v7126, %v7233
      %v7391 = vadd.f32 %v7127, %v7235
      %v7392 = vadd.f32 %v7128, %v7237
      %v7393 = vadd.f32 %v7129, %v7239
      %v7394 = vadd.f32 %v7130, %v7241
      %v7395 = vadd.f32 %v7131, %v7243
      %v7396 = vadd.f32 %v7132, %v7245
      %v7397 = vadd.f32 %v7133, %v7247
      %v7398 = vadd.f32 %v7134, %v7249
      %v7399 = vadd.f32 %v7135, %v7251
      %v7400 = vadd.f32 %v7136, %v7253
      %v7401 = vadd.f32 %v7137, %v7255
      %v7402 = vadd.f32 %v7138, %v7257
      %v7403 = vadd.f32 %v7139, %v7259
      %v7404 = vadd.f32 %v7140, %v7261
      %v7405 = vadd.f32 %v7141, %v7263
      %v7406 = vadd.f32 %v7142, %v7265
      %v7407 = vadd.f32 %v7143, %v7267
      %v7408 = vadd.f32 %v7144, %v7269
      %v7409 = vadd.f32 %v7145, %v7271
      %v7410 = vadd.f32 %v7146, %v7273
      %v7411 = vadd.f32 %v7147, %v7275
      %v7412 = vadd.f32 %v7148, %v7277
      %v7413 = vadd.f32 %v7149, %v7279
      %v7414 = vadd.f32 %v7150, %v7281
      %v7415 = vadd.f32 %v7151, %v7283
      %v7416 = vadd.f32 %v7152, %v7285
      %v7417 = vadd.f32 %v7153, %v7287
      %v7418 = vadd.f32 %v7154, %v7289
      %v7419 = vadd.f32 %v7155, %v7291
      %v7420 = vld [vmem:[#allocation4 + $0x209] sm:$0xff]
      %v7421 = vld [vmem:[#allocation4 + $0x211] sm:$0xff]
      %v7422 = vld [vmem:[#allocation4 + $0x219] sm:$0xff]
      %v7423 = vld [vmem:[#allocation4 + $0x221] sm:$0xff]
      %7428 = vrot.lane.b32.xlu0 %v6452, 88
      %v7429 = vpop.permute.xlu0 %7428
      %7430 = vrot.lane.b32.xlu0 %v6453, 88
      %v7431 = vpop.permute.xlu0 %7430
      %7432 = vrot.lane.b32.xlu0 %v6454, 88
      %v7433 = vpop.permute.xlu0 %7432
      %7434 = vrot.lane.b32.xlu0 %v6455, 88
      %v7435 = vpop.permute.xlu0 %7434
      %7436 = vrot.lane.b32.xlu0 %v6456, 88
      %v7437 = vpop.permute.xlu0 %7436
      %7438 = vrot.lane.b32.xlu0 %v6457, 88
      %v7439 = vpop.permute.xlu0 %7438
      %7440 = vrot.lane.b32.xlu0 %v6458, 88
      %v7441 = vpop.permute.xlu0 %7440
      %7442 = vrot.lane.b32.xlu0 %v6459, 88
      %v7443 = vpop.permute.xlu0 %7442
      %7444 = vrot.lane.b32.xlu0 %v6460, 88
      %v7445 = vpop.permute.xlu0 %7444
      %7446 = vrot.lane.b32.xlu0 %v6461, 88
      %v7447 = vpop.permute.xlu0 %7446
      %7448 = vrot.lane.b32.xlu0 %v6462, 88
      %v7449 = vpop.permute.xlu0 %7448
      %7450 = vrot.lane.b32.xlu0 %v6463, 88
      %v7451 = vpop.permute.xlu0 %7450
      %7452 = vrot.lane.b32.xlu0 %v6464, 88
      %v7453 = vpop.permute.xlu0 %7452
      %7454 = vrot.lane.b32.xlu0 %v6465, 88
      %v7455 = vpop.permute.xlu0 %7454
      %7456 = vrot.lane.b32.xlu0 %v6466, 88
      %v7457 = vpop.permute.xlu0 %7456
      %7458 = vrot.lane.b32.xlu0 %v6467, 88
      %v7459 = vpop.permute.xlu0 %7458
      %7460 = vrot.lane.b32.xlu0 %v6468, 88
      %v7461 = vpop.permute.xlu0 %7460
      %7462 = vrot.lane.b32.xlu0 %v6469, 88
      %v7463 = vpop.permute.xlu0 %7462
      %7464 = vrot.lane.b32.xlu0 %v6470, 88
      %v7465 = vpop.permute.xlu0 %7464
      %7466 = vrot.lane.b32.xlu0 %v6471, 88
      %v7467 = vpop.permute.xlu0 %7466
      %7468 = vrot.lane.b32.xlu0 %v6472, 88
      %v7469 = vpop.permute.xlu0 %7468
      %7470 = vrot.lane.b32.xlu0 %v6473, 88
      %v7471 = vpop.permute.xlu0 %7470
      %7472 = vrot.lane.b32.xlu0 %v6474, 88
      %v7473 = vpop.permute.xlu0 %7472
      %7474 = vrot.lane.b32.xlu0 %v6475, 88
      %v7475 = vpop.permute.xlu0 %7474
      %7476 = vrot.lane.b32.xlu0 %v6476, 88
      %v7477 = vpop.permute.xlu0 %7476
      %7478 = vrot.lane.b32.xlu0 %v6477, 88
      %v7479 = vpop.permute.xlu0 %7478
      %7480 = vrot.lane.b32.xlu0 %v6478, 88
      %v7481 = vpop.permute.xlu0 %7480
      %7482 = vrot.lane.b32.xlu0 %v6479, 88
      %v7483 = vpop.permute.xlu0 %7482
      %7484 = vrot.lane.b32.xlu0 %v6480, 88
      %v7485 = vpop.permute.xlu0 %7484
      %7486 = vrot.lane.b32.xlu0 %v6481, 88
      %v7487 = vpop.permute.xlu0 %7486
      %7488 = vrot.lane.b32.xlu0 %v6482, 88
      %v7489 = vpop.permute.xlu0 %7488
      %7490 = vrot.lane.b32.xlu0 %v6483, 88
      %v7491 = vpop.permute.xlu0 %7490
      %7492 = vrot.lane.b32.xlu0 %v6484, 88
      %v7493 = vpop.permute.xlu0 %7492
      %7494 = vrot.lane.b32.xlu0 %v6485, 88
      %v7495 = vpop.permute.xlu0 %7494
      %7496 = vrot.lane.b32.xlu0 %v6486, 88
      %v7497 = vpop.permute.xlu0 %7496
      %7498 = vrot.lane.b32.xlu0 %v6487, 88
      %v7499 = vpop.permute.xlu0 %7498
      %7500 = vrot.lane.b32.xlu0 %v6488, 88
      %v7501 = vpop.permute.xlu0 %7500
      %7502 = vrot.lane.b32.xlu0 %v6489, 88
      %v7503 = vpop.permute.xlu0 %7502
      %7504 = vrot.lane.b32.xlu0 %v6490, 88
      %v7505 = vpop.permute.xlu0 %7504
      %7506 = vrot.lane.b32.xlu0 %v6491, 88
      %v7507 = vpop.permute.xlu0 %7506
      %7508 = vrot.lane.b32.xlu0 %v6492, 88
      %v7509 = vpop.permute.xlu0 %7508
      %7510 = vrot.lane.b32.xlu0 %v6493, 88
      %v7511 = vpop.permute.xlu0 %7510
      %7512 = vrot.lane.b32.xlu0 %v6494, 88
      %v7513 = vpop.permute.xlu0 %7512
      %7514 = vrot.lane.b32.xlu0 %v6495, 88
      %v7515 = vpop.permute.xlu0 %7514
      %7516 = vrot.lane.b32.xlu0 %v6496, 88
      %v7517 = vpop.permute.xlu0 %7516
      %7518 = vrot.lane.b32.xlu0 %v6497, 88
      %v7519 = vpop.permute.xlu0 %7518
      %7520 = vrot.lane.b32.xlu0 %v6498, 88
      %v7521 = vpop.permute.xlu0 %7520
      %7522 = vrot.lane.b32.xlu0 %v6499, 88
      %v7523 = vpop.permute.xlu0 %7522
      %7524 = vrot.lane.b32.xlu0 %v6500, 88
      %v7525 = vpop.permute.xlu0 %7524
      %7526 = vrot.lane.b32.xlu0 %v6501, 88
      %v7527 = vpop.permute.xlu0 %7526
      %7528 = vrot.lane.b32.xlu0 %v6502, 88
      %v7529 = vpop.permute.xlu0 %7528
      %7530 = vrot.lane.b32.xlu0 %v6503, 88
      %v7531 = vpop.permute.xlu0 %7530
      %7532 = vrot.lane.b32.xlu0 %v6504, 88
      %v7533 = vpop.permute.xlu0 %7532
      %7534 = vrot.lane.b32.xlu0 %v6505, 88
      %v7535 = vpop.permute.xlu0 %7534
      %7536 = vrot.lane.b32.xlu0 %v6506, 88
      %v7537 = vpop.permute.xlu0 %7536
      %7538 = vrot.lane.b32.xlu0 %v6507, 88
      %v7539 = vpop.permute.xlu0 %7538
      %7540 = vrot.lane.b32.xlu0 %v6508, 88
      %v7541 = vpop.permute.xlu0 %7540
      %7542 = vrot.lane.b32.xlu0 %v6509, 88
      %v7543 = vpop.permute.xlu0 %7542
      %7544 = vrot.lane.b32.xlu0 %v6510, 88
      %v7545 = vpop.permute.xlu0 %7544
      %7546 = vrot.lane.b32.xlu0 %v6511, 88
      %v7547 = vpop.permute.xlu0 %7546
      %7548 = vrot.lane.b32.xlu0 %v7420, 88
      %v7549 = vpop.permute.xlu0 %7548
      %7550 = vrot.lane.b32.xlu0 %v7421, 88
      %v7551 = vpop.permute.xlu0 %7550
      %7552 = vrot.lane.b32.xlu0 %v7422, 88
      %v7553 = vpop.permute.xlu0 %7552
      %7554 = vrot.lane.b32.xlu0 %v7423, 88
      %v7555 = vpop.permute.xlu0 %7554
      %v7620 = vadd.f32 %v7356, %v7429
      %v7621 = vadd.f32 %v7357, %v7431
      %v7622 = vadd.f32 %v7358, %v7433
      %v7623 = vadd.f32 %v7359, %v7435
      %v7624 = vadd.f32 %v7360, %v7437
      %v7625 = vadd.f32 %v7361, %v7439
      %v7626 = vadd.f32 %v7362, %v7441
      %v7627 = vadd.f32 %v7363, %v7443
      %v7628 = vadd.f32 %v7364, %v7445
      %v7629 = vadd.f32 %v7365, %v7447
      %v7630 = vadd.f32 %v7366, %v7449
      %v7631 = vadd.f32 %v7367, %v7451
      %v7632 = vadd.f32 %v7368, %v7453
      %v7633 = vadd.f32 %v7369, %v7455
      %v7634 = vadd.f32 %v7370, %v7457
      %v7635 = vadd.f32 %v7371, %v7459
      %v7636 = vadd.f32 %v7372, %v7461
      %v7637 = vadd.f32 %v7373, %v7463
      %v7638 = vadd.f32 %v7374, %v7465
      %v7639 = vadd.f32 %v7375, %v7467
      %v7640 = vadd.f32 %v7376, %v7469
      %v7641 = vadd.f32 %v7377, %v7471
      %v7642 = vadd.f32 %v7378, %v7473
      %v7643 = vadd.f32 %v7379, %v7475
      %v7644 = vadd.f32 %v7380, %v7477
      %v7645 = vadd.f32 %v7381, %v7479
      %v7646 = vadd.f32 %v7382, %v7481
      %v7647 = vadd.f32 %v7383, %v7483
      %v7648 = vadd.f32 %v7384, %v7485
      %v7649 = vadd.f32 %v7385, %v7487
      %v7650 = vadd.f32 %v7386, %v7489
      %v7651 = vadd.f32 %v7387, %v7491
      %v7652 = vadd.f32 %v7388, %v7493
      %v7653 = vadd.f32 %v7389, %v7495
      %v7654 = vadd.f32 %v7390, %v7497
      %v7655 = vadd.f32 %v7391, %v7499
      %v7656 = vadd.f32 %v7392, %v7501
      %v7657 = vadd.f32 %v7393, %v7503
      %v7658 = vadd.f32 %v7394, %v7505
      %v7659 = vadd.f32 %v7395, %v7507
      %v7660 = vadd.f32 %v7396, %v7509
      %v7661 = vadd.f32 %v7397, %v7511
      %v7662 = vadd.f32 %v7398, %v7513
      %v7663 = vadd.f32 %v7399, %v7515
      %v7664 = vadd.f32 %v7400, %v7517
      %v7665 = vadd.f32 %v7401, %v7519
      %v7666 = vadd.f32 %v7402, %v7521
      %v7667 = vadd.f32 %v7403, %v7523
      %v7668 = vadd.f32 %v7404, %v7525
      %v7669 = vadd.f32 %v7405, %v7527
      %v7670 = vadd.f32 %v7406, %v7529
      %v7671 = vadd.f32 %v7407, %v7531
      %v7672 = vadd.f32 %v7408, %v7533
      %v7673 = vadd.f32 %v7409, %v7535
      %v7674 = vadd.f32 %v7410, %v7537
      %v7675 = vadd.f32 %v7411, %v7539
      %v7676 = vadd.f32 %v7412, %v7541
      %v7677 = vadd.f32 %v7413, %v7543
      %v7678 = vadd.f32 %v7414, %v7545
      %v7679 = vadd.f32 %v7415, %v7547
      %v7680 = vadd.f32 %v7416, %v7549
      %v7681 = vadd.f32 %v7417, %v7551
      %v7682 = vadd.f32 %v7418, %v7553
      %v7683 = vadd.f32 %v7419, %v7555
      %v7684 = vld [vmem:[#allocation4 + $0x227] sm:$0xff]
      %v7685 = vld [vmem:[#allocation4 + $0x22f] sm:$0xff]
      %v7686 = vld [vmem:[#allocation4 + $0x237] sm:$0xff]
      %v7687 = vld [vmem:[#allocation4 + $0x23f] sm:$0xff]
      %7692 = vrot.lane.b32.xlu0 %v6008, 80
      %v7693 = vpop.permute.xlu0 %7692
      %7694 = vrot.lane.b32.xlu0 %v6009, 80
      %v7695 = vpop.permute.xlu0 %7694
      %7696 = vrot.lane.b32.xlu0 %v6010, 80
      %v7697 = vpop.permute.xlu0 %7696
      %7698 = vrot.lane.b32.xlu0 %v6011, 80
      %v7699 = vpop.permute.xlu0 %7698
      %7700 = vrot.lane.b32.xlu0 %v6012, 80
      %v7701 = vpop.permute.xlu0 %7700
      %7702 = vrot.lane.b32.xlu0 %v6013, 80
      %v7703 = vpop.permute.xlu0 %7702
      %7704 = vrot.lane.b32.xlu0 %v6014, 80
      %v7705 = vpop.permute.xlu0 %7704
      %7706 = vrot.lane.b32.xlu0 %v6015, 80
      %v7707 = vpop.permute.xlu0 %7706
      %7708 = vrot.lane.b32.xlu0 %v6016, 80
      %v7709 = vpop.permute.xlu0 %7708
      %7710 = vrot.lane.b32.xlu0 %v6017, 80
      %v7711 = vpop.permute.xlu0 %7710
      %7712 = vrot.lane.b32.xlu0 %v6018, 80
      %v7713 = vpop.permute.xlu0 %7712
      %7714 = vrot.lane.b32.xlu0 %v6019, 80
      %v7715 = vpop.permute.xlu0 %7714
      %7716 = vrot.lane.b32.xlu0 %v6020, 80
      %v7717 = vpop.permute.xlu0 %7716
      %7718 = vrot.lane.b32.xlu0 %v6021, 80
      %v7719 = vpop.permute.xlu0 %7718
      %7720 = vrot.lane.b32.xlu0 %v6022, 80
      %v7721 = vpop.permute.xlu0 %7720
      %7722 = vrot.lane.b32.xlu0 %v6023, 80
      %v7723 = vpop.permute.xlu0 %7722
      %7724 = vrot.lane.b32.xlu0 %v6024, 80
      %v7725 = vpop.permute.xlu0 %7724
      %7726 = vrot.lane.b32.xlu0 %v6025, 80
      %v7727 = vpop.permute.xlu0 %7726
      %7728 = vrot.lane.b32.xlu0 %v6026, 80
      %v7729 = vpop.permute.xlu0 %7728
      %7730 = vrot.lane.b32.xlu0 %v6027, 80
      %v7731 = vpop.permute.xlu0 %7730
      %7732 = vrot.lane.b32.xlu0 %v6028, 80
      %v7733 = vpop.permute.xlu0 %7732
      %7734 = vrot.lane.b32.xlu0 %v6029, 80
      %v7735 = vpop.permute.xlu0 %7734
      %7736 = vrot.lane.b32.xlu0 %v6030, 80
      %v7737 = vpop.permute.xlu0 %7736
      %7738 = vrot.lane.b32.xlu0 %v6031, 80
      %v7739 = vpop.permute.xlu0 %7738
      %7740 = vrot.lane.b32.xlu0 %v6032, 80
      %v7741 = vpop.permute.xlu0 %7740
      %7742 = vrot.lane.b32.xlu0 %v6033, 80
      %v7743 = vpop.permute.xlu0 %7742
      %7744 = vrot.lane.b32.xlu0 %v6034, 80
      %v7745 = vpop.permute.xlu0 %7744
      %7746 = vrot.lane.b32.xlu0 %v6035, 80
      %v7747 = vpop.permute.xlu0 %7746
      %7748 = vrot.lane.b32.xlu0 %v6036, 80
      %v7749 = vpop.permute.xlu0 %7748
      %7750 = vrot.lane.b32.xlu0 %v6037, 80
      %v7751 = vpop.permute.xlu0 %7750
      %7752 = vrot.lane.b32.xlu0 %v6038, 80
      %v7753 = vpop.permute.xlu0 %7752
      %7754 = vrot.lane.b32.xlu0 %v6039, 80
      %v7755 = vpop.permute.xlu0 %7754
      %7756 = vrot.lane.b32.xlu0 %v6040, 80
      %v7757 = vpop.permute.xlu0 %7756
      %7758 = vrot.lane.b32.xlu0 %v6041, 80
      %v7759 = vpop.permute.xlu0 %7758
      %7760 = vrot.lane.b32.xlu0 %v6042, 80
      %v7761 = vpop.permute.xlu0 %7760
      %7762 = vrot.lane.b32.xlu0 %v6043, 80
      %v7763 = vpop.permute.xlu0 %7762
      %7764 = vrot.lane.b32.xlu0 %v6044, 80
      %v7765 = vpop.permute.xlu0 %7764
      %7766 = vrot.lane.b32.xlu0 %v6045, 80
      %v7767 = vpop.permute.xlu0 %7766
      %7768 = vrot.lane.b32.xlu0 %v6046, 80
      %v7769 = vpop.permute.xlu0 %7768
      %7770 = vrot.lane.b32.xlu0 %v6047, 80
      %v7771 = vpop.permute.xlu0 %7770
      %7772 = vrot.lane.b32.xlu0 %v6048, 80
      %v7773 = vpop.permute.xlu0 %7772
      %7774 = vrot.lane.b32.xlu0 %v6049, 80
      %v7775 = vpop.permute.xlu0 %7774
      %7776 = vrot.lane.b32.xlu0 %v6050, 80
      %v7777 = vpop.permute.xlu0 %7776
      %7778 = vrot.lane.b32.xlu0 %v6051, 80
      %v7779 = vpop.permute.xlu0 %7778
      %7780 = vrot.lane.b32.xlu0 %v6052, 80
      %v7781 = vpop.permute.xlu0 %7780
      %7782 = vrot.lane.b32.xlu0 %v6053, 80
      %v7783 = vpop.permute.xlu0 %7782
      %7784 = vrot.lane.b32.xlu0 %v6054, 80
      %v7785 = vpop.permute.xlu0 %7784
      %7786 = vrot.lane.b32.xlu0 %v6055, 80
      %v7787 = vpop.permute.xlu0 %7786
      %7788 = vrot.lane.b32.xlu0 %v6056, 80
      %v7789 = vpop.permute.xlu0 %7788
      %7790 = vrot.lane.b32.xlu0 %v6057, 80
      %v7791 = vpop.permute.xlu0 %7790
      %7792 = vrot.lane.b32.xlu0 %v6058, 80
      %v7793 = vpop.permute.xlu0 %7792
      %7794 = vrot.lane.b32.xlu0 %v6059, 80
      %v7795 = vpop.permute.xlu0 %7794
      %7796 = vrot.lane.b32.xlu0 %v6060, 80
      %v7797 = vpop.permute.xlu0 %7796
      %7798 = vrot.lane.b32.xlu0 %v6061, 80
      %v7799 = vpop.permute.xlu0 %7798
      %7800 = vrot.lane.b32.xlu0 %v6062, 80
      %v7801 = vpop.permute.xlu0 %7800
      %7802 = vrot.lane.b32.xlu0 %v6063, 80
      %v7803 = vpop.permute.xlu0 %7802
      %7804 = vrot.lane.b32.xlu0 %v6832, 80
      %v7805 = vpop.permute.xlu0 %7804
      %7806 = vrot.lane.b32.xlu0 %v6833, 80
      %v7807 = vpop.permute.xlu0 %7806
      %7808 = vrot.lane.b32.xlu0 %v6834, 80
      %v7809 = vpop.permute.xlu0 %7808
      %7810 = vrot.lane.b32.xlu0 %v6835, 80
      %v7811 = vpop.permute.xlu0 %7810
      %7812 = vrot.lane.b32.xlu0 %v7684, 80
      %v7813 = vpop.permute.xlu0 %7812
      %7814 = vrot.lane.b32.xlu0 %v7685, 80
      %v7815 = vpop.permute.xlu0 %7814
      %7816 = vrot.lane.b32.xlu0 %v7686, 80
      %v7817 = vpop.permute.xlu0 %7816
      %7818 = vrot.lane.b32.xlu0 %v7687, 80
      %v7819 = vpop.permute.xlu0 %7818
      %v7884 = vadd.f32 %v7620, %v7693
      %v7885 = vadd.f32 %v7621, %v7695
      %v7886 = vadd.f32 %v7622, %v7697
      %v7887 = vadd.f32 %v7623, %v7699
      %v7888 = vadd.f32 %v7624, %v7701
      %v7889 = vadd.f32 %v7625, %v7703
      %v7890 = vadd.f32 %v7626, %v7705
      %v7891 = vadd.f32 %v7627, %v7707
      %v7892 = vadd.f32 %v7628, %v7709
      %v7893 = vadd.f32 %v7629, %v7711
      %v7894 = vadd.f32 %v7630, %v7713
      %v7895 = vadd.f32 %v7631, %v7715
      %v7896 = vadd.f32 %v7632, %v7717
      %v7897 = vadd.f32 %v7633, %v7719
      %v7898 = vadd.f32 %v7634, %v7721
      %v7899 = vadd.f32 %v7635, %v7723
      %v7900 = vadd.f32 %v7636, %v7725
      %v7901 = vadd.f32 %v7637, %v7727
      %v7902 = vadd.f32 %v7638, %v7729
      %v7903 = vadd.f32 %v7639, %v7731
      %v7904 = vadd.f32 %v7640, %v7733
      %v7905 = vadd.f32 %v7641, %v7735
      %v7906 = vadd.f32 %v7642, %v7737
      %v7907 = vadd.f32 %v7643, %v7739
      %v7908 = vadd.f32 %v7644, %v7741
      %v7909 = vadd.f32 %v7645, %v7743
      %v7910 = vadd.f32 %v7646, %v7745
      %v7911 = vadd.f32 %v7647, %v7747
      %v7912 = vadd.f32 %v7648, %v7749
      %v7913 = vadd.f32 %v7649, %v7751
      %v7914 = vadd.f32 %v7650, %v7753
      %v7915 = vadd.f32 %v7651, %v7755
      %v7916 = vadd.f32 %v7652, %v7757
      %v7917 = vadd.f32 %v7653, %v7759
      %v7918 = vadd.f32 %v7654, %v7761
      %v7919 = vadd.f32 %v7655, %v7763
      %v7920 = vadd.f32 %v7656, %v7765
      %v7921 = vadd.f32 %v7657, %v7767
      %v7922 = vadd.f32 %v7658, %v7769
      %v7923 = vadd.f32 %v7659, %v7771
      %v7924 = vadd.f32 %v7660, %v7773
      %v7925 = vadd.f32 %v7661, %v7775
      %v7926 = vadd.f32 %v7662, %v7777
      %v7927 = vadd.f32 %v7663, %v7779
      %v7928 = vadd.f32 %v7664, %v7781
      %v7929 = vadd.f32 %v7665, %v7783
      %v7930 = vadd.f32 %v7666, %v7785
      %v7931 = vadd.f32 %v7667, %v7787
      %v7932 = vadd.f32 %v7668, %v7789
      %v7933 = vadd.f32 %v7669, %v7791
      %v7934 = vadd.f32 %v7670, %v7793
      %v7935 = vadd.f32 %v7671, %v7795
      %v7936 = vadd.f32 %v7672, %v7797
      %v7937 = vadd.f32 %v7673, %v7799
      %v7938 = vadd.f32 %v7674, %v7801
      %v7939 = vadd.f32 %v7675, %v7803
      %v7940 = vadd.f32 %v7676, %v7805
      %v7941 = vadd.f32 %v7677, %v7807
      %v7942 = vadd.f32 %v7678, %v7809
      %v7943 = vadd.f32 %v7679, %v7811
      %v7944 = vadd.f32 %v7680, %v7813
      %v7945 = vadd.f32 %v7681, %v7815
      %v7946 = vadd.f32 %v7682, %v7817
      %v7947 = vadd.f32 %v7683, %v7819
      %v7948 = vld [vmem:[#allocation4 + $0x228] sm:$0xff]
      %v7949 = vld [vmem:[#allocation4 + $0x230] sm:$0xff]
      %v7950 = vld [vmem:[#allocation4 + $0x238] sm:$0xff]
      %v7951 = vld [vmem:[#allocation4 + $0x240] sm:$0xff]
      %7956 = vrot.lane.b32.xlu0 %v6072, 72
      %v7957 = vpop.permute.xlu0 %7956
      %7958 = vrot.lane.b32.xlu0 %v6073, 72
      %v7959 = vpop.permute.xlu0 %7958
      %7960 = vrot.lane.b32.xlu0 %v6074, 72
      %v7961 = vpop.permute.xlu0 %7960
      %7962 = vrot.lane.b32.xlu0 %v6075, 72
      %v7963 = vpop.permute.xlu0 %7962
      %7964 = vrot.lane.b32.xlu0 %v6076, 72
      %v7965 = vpop.permute.xlu0 %7964
      %7966 = vrot.lane.b32.xlu0 %v6077, 72
      %v7967 = vpop.permute.xlu0 %7966
      %7968 = vrot.lane.b32.xlu0 %v6078, 72
      %v7969 = vpop.permute.xlu0 %7968
      %7970 = vrot.lane.b32.xlu0 %v6079, 72
      %v7971 = vpop.permute.xlu0 %7970
      %7972 = vrot.lane.b32.xlu0 %v6080, 72
      %v7973 = vpop.permute.xlu0 %7972
      %7974 = vrot.lane.b32.xlu0 %v6081, 72
      %v7975 = vpop.permute.xlu0 %7974
      %7976 = vrot.lane.b32.xlu0 %v6082, 72
      %v7977 = vpop.permute.xlu0 %7976
      %7978 = vrot.lane.b32.xlu0 %v6083, 72
      %v7979 = vpop.permute.xlu0 %7978
      %7980 = vrot.lane.b32.xlu0 %v6084, 72
      %v7981 = vpop.permute.xlu0 %7980
      %7982 = vrot.lane.b32.xlu0 %v6085, 72
      %v7983 = vpop.permute.xlu0 %7982
      %7984 = vrot.lane.b32.xlu0 %v6086, 72
      %v7985 = vpop.permute.xlu0 %7984
      %7986 = vrot.lane.b32.xlu0 %v6087, 72
      %v7987 = vpop.permute.xlu0 %7986
      %7988 = vrot.lane.b32.xlu0 %v6088, 72
      %v7989 = vpop.permute.xlu0 %7988
      %7990 = vrot.lane.b32.xlu0 %v6089, 72
      %v7991 = vpop.permute.xlu0 %7990
      %7992 = vrot.lane.b32.xlu0 %v6090, 72
      %v7993 = vpop.permute.xlu0 %7992
      %7994 = vrot.lane.b32.xlu0 %v6091, 72
      %v7995 = vpop.permute.xlu0 %7994
      %7996 = vrot.lane.b32.xlu0 %v6092, 72
      %v7997 = vpop.permute.xlu0 %7996
      %7998 = vrot.lane.b32.xlu0 %v6093, 72
      %v7999 = vpop.permute.xlu0 %7998
      %8000 = vrot.lane.b32.xlu0 %v6094, 72
      %v8001 = vpop.permute.xlu0 %8000
      %8002 = vrot.lane.b32.xlu0 %v6095, 72
      %v8003 = vpop.permute.xlu0 %8002
      %8004 = vrot.lane.b32.xlu0 %v6096, 72
      %v8005 = vpop.permute.xlu0 %8004
      %8006 = vrot.lane.b32.xlu0 %v6097, 72
      %v8007 = vpop.permute.xlu0 %8006
      %8008 = vrot.lane.b32.xlu0 %v6098, 72
      %v8009 = vpop.permute.xlu0 %8008
      %8010 = vrot.lane.b32.xlu0 %v6099, 72
      %v8011 = vpop.permute.xlu0 %8010
      %8012 = vrot.lane.b32.xlu0 %v6100, 72
      %v8013 = vpop.permute.xlu0 %8012
      %8014 = vrot.lane.b32.xlu0 %v6101, 72
      %v8015 = vpop.permute.xlu0 %8014
      %8016 = vrot.lane.b32.xlu0 %v6102, 72
      %v8017 = vpop.permute.xlu0 %8016
      %8018 = vrot.lane.b32.xlu0 %v6103, 72
      %v8019 = vpop.permute.xlu0 %8018
      %8020 = vrot.lane.b32.xlu0 %v6104, 72
      %v8021 = vpop.permute.xlu0 %8020
      %8022 = vrot.lane.b32.xlu0 %v6105, 72
      %v8023 = vpop.permute.xlu0 %8022
      %8024 = vrot.lane.b32.xlu0 %v6106, 72
      %v8025 = vpop.permute.xlu0 %8024
      %8026 = vrot.lane.b32.xlu0 %v6107, 72
      %v8027 = vpop.permute.xlu0 %8026
      %8028 = vrot.lane.b32.xlu0 %v6108, 72
      %v8029 = vpop.permute.xlu0 %8028
      %8030 = vrot.lane.b32.xlu0 %v6109, 72
      %v8031 = vpop.permute.xlu0 %8030
      %8032 = vrot.lane.b32.xlu0 %v6110, 72
      %v8033 = vpop.permute.xlu0 %8032
      %8034 = vrot.lane.b32.xlu0 %v6111, 72
      %v8035 = vpop.permute.xlu0 %8034
      %8036 = vrot.lane.b32.xlu0 %v6112, 72
      %v8037 = vpop.permute.xlu0 %8036
      %8038 = vrot.lane.b32.xlu0 %v6113, 72
      %v8039 = vpop.permute.xlu0 %8038
      %8040 = vrot.lane.b32.xlu0 %v6114, 72
      %v8041 = vpop.permute.xlu0 %8040
      %8042 = vrot.lane.b32.xlu0 %v6115, 72
      %v8043 = vpop.permute.xlu0 %8042
      %8044 = vrot.lane.b32.xlu0 %v6116, 72
      %v8045 = vpop.permute.xlu0 %8044
      %8046 = vrot.lane.b32.xlu0 %v6117, 72
      %v8047 = vpop.permute.xlu0 %8046
      %8048 = vrot.lane.b32.xlu0 %v6118, 72
      %v8049 = vpop.permute.xlu0 %8048
      %8050 = vrot.lane.b32.xlu0 %v6119, 72
      %v8051 = vpop.permute.xlu0 %8050
      %8052 = vrot.lane.b32.xlu0 %v6120, 72
      %v8053 = vpop.permute.xlu0 %8052
      %8054 = vrot.lane.b32.xlu0 %v6121, 72
      %v8055 = vpop.permute.xlu0 %8054
      %8056 = vrot.lane.b32.xlu0 %v6122, 72
      %v8057 = vpop.permute.xlu0 %8056
      %8058 = vrot.lane.b32.xlu0 %v6123, 72
      %v8059 = vpop.permute.xlu0 %8058
      %8060 = vrot.lane.b32.xlu0 %v6124, 72
      %v8061 = vpop.permute.xlu0 %8060
      %8062 = vrot.lane.b32.xlu0 %v6125, 72
      %v8063 = vpop.permute.xlu0 %8062
      %8064 = vrot.lane.b32.xlu0 %v6126, 72
      %v8065 = vpop.permute.xlu0 %8064
      %8066 = vrot.lane.b32.xlu0 %v6127, 72
      %v8067 = vpop.permute.xlu0 %8066
      %8068 = vrot.lane.b32.xlu0 %v7156, 72
      %v8069 = vpop.permute.xlu0 %8068
      %8070 = vrot.lane.b32.xlu0 %v7157, 72
      %v8071 = vpop.permute.xlu0 %8070
      %8072 = vrot.lane.b32.xlu0 %v7158, 72
      %v8073 = vpop.permute.xlu0 %8072
      %8074 = vrot.lane.b32.xlu0 %v7159, 72
      %v8075 = vpop.permute.xlu0 %8074
      %8076 = vrot.lane.b32.xlu0 %v7948, 72
      %v8077 = vpop.permute.xlu0 %8076
      %8078 = vrot.lane.b32.xlu0 %v7949, 72
      %v8079 = vpop.permute.xlu0 %8078
      %8080 = vrot.lane.b32.xlu0 %v7950, 72
      %v8081 = vpop.permute.xlu0 %8080
      %8082 = vrot.lane.b32.xlu0 %v7951, 72
      %v8083 = vpop.permute.xlu0 %8082
      %v8148 = vadd.f32 %v7884, %v7957
      %v8149 = vadd.f32 %v7885, %v7959
      %v8150 = vadd.f32 %v7886, %v7961
      %v8151 = vadd.f32 %v7887, %v7963
      %v8152 = vadd.f32 %v7888, %v7965
      %v8153 = vadd.f32 %v7889, %v7967
      %v8154 = vadd.f32 %v7890, %v7969
      %v8155 = vadd.f32 %v7891, %v7971
      %v8156 = vadd.f32 %v7892, %v7973
      %v8157 = vadd.f32 %v7893, %v7975
      %v8158 = vadd.f32 %v7894, %v7977
      %v8159 = vadd.f32 %v7895, %v7979
      %v8160 = vadd.f32 %v7896, %v7981
      %v8161 = vadd.f32 %v7897, %v7983
      %v8162 = vadd.f32 %v7898, %v7985
      %v8163 = vadd.f32 %v7899, %v7987
      %v8164 = vadd.f32 %v7900, %v7989
      %v8165 = vadd.f32 %v7901, %v7991
      %v8166 = vadd.f32 %v7902, %v7993
      %v8167 = vadd.f32 %v7903, %v7995
      %v8168 = vadd.f32 %v7904, %v7997
      %v8169 = vadd.f32 %v7905, %v7999
      %v8170 = vadd.f32 %v7906, %v8001
      %v8171 = vadd.f32 %v7907, %v8003
      %v8172 = vadd.f32 %v7908, %v8005
      %v8173 = vadd.f32 %v7909, %v8007
      %v8174 = vadd.f32 %v7910, %v8009
      %v8175 = vadd.f32 %v7911, %v8011
      %v8176 = vadd.f32 %v7912, %v8013
      %v8177 = vadd.f32 %v7913, %v8015
      %v8178 = vadd.f32 %v7914, %v8017
      %v8179 = vadd.f32 %v7915, %v8019
      %v8180 = vadd.f32 %v7916, %v8021
      %v8181 = vadd.f32 %v7917, %v8023
      %v8182 = vadd.f32 %v7918, %v8025
      %v8183 = vadd.f32 %v7919, %v8027
      %v8184 = vadd.f32 %v7920, %v8029
      %v8185 = vadd.f32 %v7921, %v8031
      %v8186 = vadd.f32 %v7922, %v8033
      %v8187 = vadd.f32 %v7923, %v8035
      %v8188 = vadd.f32 %v7924, %v8037
      %v8189 = vadd.f32 %v7925, %v8039
      %v8190 = vadd.f32 %v7926, %v8041
      %v8191 = vadd.f32 %v7927, %v8043
      %v8192 = vadd.f32 %v7928, %v8045
      %v8193 = vadd.f32 %v7929, %v8047
      %v8194 = vadd.f32 %v7930, %v8049
      %v8195 = vadd.f32 %v7931, %v8051
      %v8196 = vadd.f32 %v7932, %v8053
      %v8197 = vadd.f32 %v7933, %v8055
      %v8198 = vadd.f32 %v7934, %v8057
      %v8199 = vadd.f32 %v7935, %v8059
      %v8200 = vadd.f32 %v7936, %v8061
      %v8201 = vadd.f32 %v7937, %v8063
      %v8202 = vadd.f32 %v7938, %v8065
      %v8203 = vadd.f32 %v7939, %v8067
      %v8204 = vadd.f32 %v7940, %v8069
      %v8205 = vadd.f32 %v7941, %v8071
      %v8206 = vadd.f32 %v7942, %v8073
      %v8207 = vadd.f32 %v7943, %v8075
      %v8208 = vadd.f32 %v7944, %v8077
      %v8209 = vadd.f32 %v7945, %v8079
      %v8210 = vadd.f32 %v7946, %v8081
      %v8211 = vadd.f32 %v7947, %v8083
      %v8212 = vld [vmem:[#allocation4 + $0x229] sm:$0xff]
      %v8213 = vld [vmem:[#allocation4 + $0x231] sm:$0xff]
      %v8214 = vld [vmem:[#allocation4 + $0x239] sm:$0xff]
      %v8215 = vld [vmem:[#allocation4 + $0x241] sm:$0xff]
      %8220 = vrot.lane.b32.xlu0 %v6456, 64
      %v8221 = vpop.permute.xlu0 %8220
      %8222 = vrot.lane.b32.xlu0 %v6457, 64
      %v8223 = vpop.permute.xlu0 %8222
      %8224 = vrot.lane.b32.xlu0 %v6458, 64
      %v8225 = vpop.permute.xlu0 %8224
      %8226 = vrot.lane.b32.xlu0 %v6459, 64
      %v8227 = vpop.permute.xlu0 %8226
      %8228 = vrot.lane.b32.xlu0 %v6460, 64
      %v8229 = vpop.permute.xlu0 %8228
      %8230 = vrot.lane.b32.xlu0 %v6461, 64
      %v8231 = vpop.permute.xlu0 %8230
      %8232 = vrot.lane.b32.xlu0 %v6462, 64
      %v8233 = vpop.permute.xlu0 %8232
      %8234 = vrot.lane.b32.xlu0 %v6463, 64
      %v8235 = vpop.permute.xlu0 %8234
      %8236 = vrot.lane.b32.xlu0 %v6464, 64
      %v8237 = vpop.permute.xlu0 %8236
      %8238 = vrot.lane.b32.xlu0 %v6465, 64
      %v8239 = vpop.permute.xlu0 %8238
      %8240 = vrot.lane.b32.xlu0 %v6466, 64
      %v8241 = vpop.permute.xlu0 %8240
      %8242 = vrot.lane.b32.xlu0 %v6467, 64
      %v8243 = vpop.permute.xlu0 %8242
      %8244 = vrot.lane.b32.xlu0 %v6468, 64
      %v8245 = vpop.permute.xlu0 %8244
      %8246 = vrot.lane.b32.xlu0 %v6469, 64
      %v8247 = vpop.permute.xlu0 %8246
      %8248 = vrot.lane.b32.xlu0 %v6470, 64
      %v8249 = vpop.permute.xlu0 %8248
      %8250 = vrot.lane.b32.xlu0 %v6471, 64
      %v8251 = vpop.permute.xlu0 %8250
      %8252 = vrot.lane.b32.xlu0 %v6472, 64
      %v8253 = vpop.permute.xlu0 %8252
      %8254 = vrot.lane.b32.xlu0 %v6473, 64
      %v8255 = vpop.permute.xlu0 %8254
      %8256 = vrot.lane.b32.xlu0 %v6474, 64
      %v8257 = vpop.permute.xlu0 %8256
      %8258 = vrot.lane.b32.xlu0 %v6475, 64
      %v8259 = vpop.permute.xlu0 %8258
      %8260 = vrot.lane.b32.xlu0 %v6476, 64
      %v8261 = vpop.permute.xlu0 %8260
      %8262 = vrot.lane.b32.xlu0 %v6477, 64
      %v8263 = vpop.permute.xlu0 %8262
      %8264 = vrot.lane.b32.xlu0 %v6478, 64
      %v8265 = vpop.permute.xlu0 %8264
      %8266 = vrot.lane.b32.xlu0 %v6479, 64
      %v8267 = vpop.permute.xlu0 %8266
      %8268 = vrot.lane.b32.xlu0 %v6480, 64
      %v8269 = vpop.permute.xlu0 %8268
      %8270 = vrot.lane.b32.xlu0 %v6481, 64
      %v8271 = vpop.permute.xlu0 %8270
      %8272 = vrot.lane.b32.xlu0 %v6482, 64
      %v8273 = vpop.permute.xlu0 %8272
      %8274 = vrot.lane.b32.xlu0 %v6483, 64
      %v8275 = vpop.permute.xlu0 %8274
      %8276 = vrot.lane.b32.xlu0 %v6484, 64
      %v8277 = vpop.permute.xlu0 %8276
      %8278 = vrot.lane.b32.xlu0 %v6485, 64
      %v8279 = vpop.permute.xlu0 %8278
      %8280 = vrot.lane.b32.xlu0 %v6486, 64
      %v8281 = vpop.permute.xlu0 %8280
      %8282 = vrot.lane.b32.xlu0 %v6487, 64
      %v8283 = vpop.permute.xlu0 %8282
      %8284 = vrot.lane.b32.xlu0 %v6488, 64
      %v8285 = vpop.permute.xlu0 %8284
      %8286 = vrot.lane.b32.xlu0 %v6489, 64
      %v8287 = vpop.permute.xlu0 %8286
      %8288 = vrot.lane.b32.xlu0 %v6490, 64
      %v8289 = vpop.permute.xlu0 %8288
      %8290 = vrot.lane.b32.xlu0 %v6491, 64
      %v8291 = vpop.permute.xlu0 %8290
      %8292 = vrot.lane.b32.xlu0 %v6492, 64
      %v8293 = vpop.permute.xlu0 %8292
      %8294 = vrot.lane.b32.xlu0 %v6493, 64
      %v8295 = vpop.permute.xlu0 %8294
      %8296 = vrot.lane.b32.xlu0 %v6494, 64
      %v8297 = vpop.permute.xlu0 %8296
      %8298 = vrot.lane.b32.xlu0 %v6495, 64
      %v8299 = vpop.permute.xlu0 %8298
      %8300 = vrot.lane.b32.xlu0 %v6496, 64
      %v8301 = vpop.permute.xlu0 %8300
      %8302 = vrot.lane.b32.xlu0 %v6497, 64
      %v8303 = vpop.permute.xlu0 %8302
      %8304 = vrot.lane.b32.xlu0 %v6498, 64
      %v8305 = vpop.permute.xlu0 %8304
      %8306 = vrot.lane.b32.xlu0 %v6499, 64
      %v8307 = vpop.permute.xlu0 %8306
      %8308 = vrot.lane.b32.xlu0 %v6500, 64
      %v8309 = vpop.permute.xlu0 %8308
      %8310 = vrot.lane.b32.xlu0 %v6501, 64
      %v8311 = vpop.permute.xlu0 %8310
      %8312 = vrot.lane.b32.xlu0 %v6502, 64
      %v8313 = vpop.permute.xlu0 %8312
      %8314 = vrot.lane.b32.xlu0 %v6503, 64
      %v8315 = vpop.permute.xlu0 %8314
      %8316 = vrot.lane.b32.xlu0 %v6504, 64
      %v8317 = vpop.permute.xlu0 %8316
      %8318 = vrot.lane.b32.xlu0 %v6505, 64
      %v8319 = vpop.permute.xlu0 %8318
      %8320 = vrot.lane.b32.xlu0 %v6506, 64
      %v8321 = vpop.permute.xlu0 %8320
      %8322 = vrot.lane.b32.xlu0 %v6507, 64
      %v8323 = vpop.permute.xlu0 %8322
      %8324 = vrot.lane.b32.xlu0 %v6508, 64
      %v8325 = vpop.permute.xlu0 %8324
      %8326 = vrot.lane.b32.xlu0 %v6509, 64
      %v8327 = vpop.permute.xlu0 %8326
      %8328 = vrot.lane.b32.xlu0 %v6510, 64
      %v8329 = vpop.permute.xlu0 %8328
      %8330 = vrot.lane.b32.xlu0 %v6511, 64
      %v8331 = vpop.permute.xlu0 %8330
      %8332 = vrot.lane.b32.xlu0 %v7420, 64
      %v8333 = vpop.permute.xlu0 %8332
      %8334 = vrot.lane.b32.xlu0 %v7421, 64
      %v8335 = vpop.permute.xlu0 %8334
      %8336 = vrot.lane.b32.xlu0 %v7422, 64
      %v8337 = vpop.permute.xlu0 %8336
      %8338 = vrot.lane.b32.xlu0 %v7423, 64
      %v8339 = vpop.permute.xlu0 %8338
      %8340 = vrot.lane.b32.xlu0 %v8212, 64
      %v8341 = vpop.permute.xlu0 %8340
      %8342 = vrot.lane.b32.xlu0 %v8213, 64
      %v8343 = vpop.permute.xlu0 %8342
      %8344 = vrot.lane.b32.xlu0 %v8214, 64
      %v8345 = vpop.permute.xlu0 %8344
      %8346 = vrot.lane.b32.xlu0 %v8215, 64
      %v8347 = vpop.permute.xlu0 %8346
      %v8412 = vadd.f32 %v8148, %v8221
      %v8413 = vadd.f32 %v8149, %v8223
      %v8414 = vadd.f32 %v8150, %v8225
      %v8415 = vadd.f32 %v8151, %v8227
      %v8416 = vadd.f32 %v8152, %v8229
      %v8417 = vadd.f32 %v8153, %v8231
      %v8418 = vadd.f32 %v8154, %v8233
      %v8419 = vadd.f32 %v8155, %v8235
      %v8420 = vadd.f32 %v8156, %v8237
      %v8421 = vadd.f32 %v8157, %v8239
      %v8422 = vadd.f32 %v8158, %v8241
      %v8423 = vadd.f32 %v8159, %v8243
      %v8424 = vadd.f32 %v8160, %v8245
      %v8425 = vadd.f32 %v8161, %v8247
      %v8426 = vadd.f32 %v8162, %v8249
      %v8427 = vadd.f32 %v8163, %v8251
      %v8428 = vadd.f32 %v8164, %v8253
      %v8429 = vadd.f32 %v8165, %v8255
      %v8430 = vadd.f32 %v8166, %v8257
      %v8431 = vadd.f32 %v8167, %v8259
      %v8432 = vadd.f32 %v8168, %v8261
      %v8433 = vadd.f32 %v8169, %v8263
      %v8434 = vadd.f32 %v8170, %v8265
      %v8435 = vadd.f32 %v8171, %v8267
      %v8436 = vadd.f32 %v8172, %v8269
      %v8437 = vadd.f32 %v8173, %v8271
      %v8438 = vadd.f32 %v8174, %v8273
      %v8439 = vadd.f32 %v8175, %v8275
      %v8440 = vadd.f32 %v8176, %v8277
      %v8441 = vadd.f32 %v8177, %v8279
      %v8442 = vadd.f32 %v8178, %v8281
      %v8443 = vadd.f32 %v8179, %v8283
      %v8444 = vadd.f32 %v8180, %v8285
      %v8445 = vadd.f32 %v8181, %v8287
      %v8446 = vadd.f32 %v8182, %v8289
      %v8447 = vadd.f32 %v8183, %v8291
      %v8448 = vadd.f32 %v8184, %v8293
      %v8449 = vadd.f32 %v8185, %v8295
      %v8450 = vadd.f32 %v8186, %v8297
      %v8451 = vadd.f32 %v8187, %v8299
      %v8452 = vadd.f32 %v8188, %v8301
      %v8453 = vadd.f32 %v8189, %v8303
      %v8454 = vadd.f32 %v8190, %v8305
      %v8455 = vadd.f32 %v8191, %v8307
      %v8456 = vadd.f32 %v8192, %v8309
      %v8457 = vadd.f32 %v8193, %v8311
      %v8458 = vadd.f32 %v8194, %v8313
      %v8459 = vadd.f32 %v8195, %v8315
      %v8460 = vadd.f32 %v8196, %v8317
      %v8461 = vadd.f32 %v8197, %v8319
      %v8462 = vadd.f32 %v8198, %v8321
      %v8463 = vadd.f32 %v8199, %v8323
      %v8464 = vadd.f32 %v8200, %v8325
      %v8465 = vadd.f32 %v8201, %v8327
      %v8466 = vadd.f32 %v8202, %v8329
      %v8467 = vadd.f32 %v8203, %v8331
      %v8468 = vadd.f32 %v8204, %v8333
      %v8469 = vadd.f32 %v8205, %v8335
      %v8470 = vadd.f32 %v8206, %v8337
      %v8471 = vadd.f32 %v8207, %v8339
      %v8472 = vadd.f32 %v8208, %v8341
      %v8473 = vadd.f32 %v8209, %v8343
      %v8474 = vadd.f32 %v8210, %v8345
      %v8475 = vadd.f32 %v8211, %v8347
      %v8476 = vld [vmem:[%s6] sm:$0x1]
      %v8478 = vlaneseq
      %v8479 = vshrl.u32 %v8478, 7
      %v8480 = vsub.s32 0, %v8479
      %v8481 = vrot.slane %v8476, %v8480
      %v8483 = vmul.f32 %v8412, %v8481
      %v8484 = vmul.f32 %v8413, %v8481
      %v8485 = vmul.f32 %v8414, %v8481
      %v8486 = vmul.f32 %v8415, %v8481
      %v8487 = vmul.f32 %v8416, %v8481
      %v8488 = vmul.f32 %v8417, %v8481
      %v8489 = vmul.f32 %v8418, %v8481
      %v8490 = vmul.f32 %v8419, %v8481
      %v8491 = vmul.f32 %v8420, %v8481
      %v8492 = vmul.f32 %v8421, %v8481
      %v8493 = vmul.f32 %v8422, %v8481
      %v8494 = vmul.f32 %v8423, %v8481
      %v8495 = vmul.f32 %v8424, %v8481
      %v8496 = vmul.f32 %v8425, %v8481
      %v8497 = vmul.f32 %v8426, %v8481
      %v8498 = vmul.f32 %v8427, %v8481
      %v8499 = vmul.f32 %v8428, %v8481
      %v8500 = vmul.f32 %v8429, %v8481
      %v8501 = vmul.f32 %v8430, %v8481
      %v8502 = vmul.f32 %v8431, %v8481
      %v8503 = vmul.f32 %v8432, %v8481
      %v8504 = vmul.f32 %v8433, %v8481
      %v8505 = vmul.f32 %v8434, %v8481
      %v8506 = vmul.f32 %v8435, %v8481
      %v8507 = vmul.f32 %v8436, %v8481
      %v8508 = vmul.f32 %v8437, %v8481
      %v8509 = vmul.f32 %v8438, %v8481
      %v8510 = vmul.f32 %v8439, %v8481
      %v8511 = vmul.f32 %v8440, %v8481
      %v8512 = vmul.f32 %v8441, %v8481
      %v8513 = vmul.f32 %v8442, %v8481
      %v8514 = vmul.f32 %v8443, %v8481
      %v8515 = vmul.f32 %v8444, %v8481
      %v8516 = vmul.f32 %v8445, %v8481
      %v8517 = vmul.f32 %v8446, %v8481
      %v8518 = vmul.f32 %v8447, %v8481
      %v8519 = vmul.f32 %v8448, %v8481
      %v8520 = vmul.f32 %v8449, %v8481
      %v8521 = vmul.f32 %v8450, %v8481
      %v8522 = vmul.f32 %v8451, %v8481
      %v8523 = vmul.f32 %v8452, %v8481
      %v8524 = vmul.f32 %v8453, %v8481
      %v8525 = vmul.f32 %v8454, %v8481
      %v8526 = vmul.f32 %v8455, %v8481
      %v8527 = vmul.f32 %v8456, %v8481
      %v8528 = vmul.f32 %v8457, %v8481
      %v8529 = vmul.f32 %v8458, %v8481
      %v8530 = vmul.f32 %v8459, %v8481
      %v8531 = vmul.f32 %v8460, %v8481
      %v8532 = vmul.f32 %v8461, %v8481
      %v8533 = vmul.f32 %v8462, %v8481
      %v8534 = vmul.f32 %v8463, %v8481
      %v8535 = vmul.f32 %v8464, %v8481
      %v8536 = vmul.f32 %v8465, %v8481
      %v8537 = vmul.f32 %v8466, %v8481
      %v8538 = vmul.f32 %v8467, %v8481
      %v8539 = vmul.f32 %v8468, %v8481
      %v8540 = vmul.f32 %v8469, %v8481
      %v8541 = vmul.f32 %v8470, %v8481
      %v8542 = vmul.f32 %v8471, %v8481
      %v8543 = vmul.f32 %v8472, %v8481
      %v8544 = vmul.f32 %v8473, %v8481
      %v8545 = vmul.f32 %v8474, %v8481
      %v8546 = vmul.f32 %v8475, %v8481
      %v8547 = vld [vmem:[%s7] sm:$0x1]
      %v8549 = vlaneseq
      %v8550 = vshrl.u32 %v8549, 7
      %v8551 = vsub.s32 0, %v8550
      %v8552 = vrot.slane %v8547, %v8551
      %v8554 = vadd.f32 %v8483, %v8552
      %v8555 = vadd.f32 %v8484, %v8552
      %v8556 = vadd.f32 %v8485, %v8552
      %v8557 = vadd.f32 %v8486, %v8552
      %v8558 = vadd.f32 %v8487, %v8552
      %v8559 = vadd.f32 %v8488, %v8552
      %v8560 = vadd.f32 %v8489, %v8552
      %v8561 = vadd.f32 %v8490, %v8552
      %v8562 = vadd.f32 %v8491, %v8552
      %v8563 = vadd.f32 %v8492, %v8552
      %v8564 = vadd.f32 %v8493, %v8552
      %v8565 = vadd.f32 %v8494, %v8552
      %v8566 = vadd.f32 %v8495, %v8552
      %v8567 = vadd.f32 %v8496, %v8552
      %v8568 = vadd.f32 %v8497, %v8552
      %v8569 = vadd.f32 %v8498, %v8552
      %v8570 = vadd.f32 %v8499, %v8552
      %v8571 = vadd.f32 %v8500, %v8552
      %v8572 = vadd.f32 %v8501, %v8552
      %v8573 = vadd.f32 %v8502, %v8552
      %v8574 = vadd.f32 %v8503, %v8552
      %v8575 = vadd.f32 %v8504, %v8552
      %v8576 = vadd.f32 %v8505, %v8552
      %v8577 = vadd.f32 %v8506, %v8552
      %v8578 = vadd.f32 %v8507, %v8552
      %v8579 = vadd.f32 %v8508, %v8552
      %v8580 = vadd.f32 %v8509, %v8552
      %v8581 = vadd.f32 %v8510, %v8552
      %v8582 = vadd.f32 %v8511, %v8552
      %v8583 = vadd.f32 %v8512, %v8552
      %v8584 = vadd.f32 %v8513, %v8552
      %v8585 = vadd.f32 %v8514, %v8552
      %v8586 = vadd.f32 %v8515, %v8552
      %v8587 = vadd.f32 %v8516, %v8552
      %v8588 = vadd.f32 %v8517, %v8552
      %v8589 = vadd.f32 %v8518, %v8552
      %v8590 = vadd.f32 %v8519, %v8552
      %v8591 = vadd.f32 %v8520, %v8552
      %v8592 = vadd.f32 %v8521, %v8552
      %v8593 = vadd.f32 %v8522, %v8552
      %v8594 = vadd.f32 %v8523, %v8552
      %v8595 = vadd.f32 %v8524, %v8552
      %v8596 = vadd.f32 %v8525, %v8552
      %v8597 = vadd.f32 %v8526, %v8552
      %v8598 = vadd.f32 %v8527, %v8552
      %v8599 = vadd.f32 %v8528, %v8552
      %v8600 = vadd.f32 %v8529, %v8552
      %v8601 = vadd.f32 %v8530, %v8552
      %v8602 = vadd.f32 %v8531, %v8552
      %v8603 = vadd.f32 %v8532, %v8552
      %v8604 = vadd.f32 %v8533, %v8552
      %v8605 = vadd.f32 %v8534, %v8552
      %v8606 = vadd.f32 %v8535, %v8552
      %v8607 = vadd.f32 %v8536, %v8552
      %v8608 = vadd.f32 %v8537, %v8552
      %v8609 = vadd.f32 %v8538, %v8552
      %v8610 = vadd.f32 %v8539, %v8552
      %v8611 = vadd.f32 %v8540, %v8552
      %v8612 = vadd.f32 %v8541, %v8552
      %v8613 = vadd.f32 %v8542, %v8552
      %v8614 = vadd.f32 %v8543, %v8552
      %v8615 = vadd.f32 %v8544, %v8552
      %v8616 = vadd.f32 %v8545, %v8552
      %v8617 = vadd.f32 %v8546, %v8552
      %v8618 = vld [vmem:[%s354 + $0x28] sm:$0xf]
      %v8619 = vld [vmem:[%s354 + $0x2c] sm:$0xf]
      %v8620 = vld [vmem:[%s354 + $0x30] sm:$0xf]
      %v8621 = vld [vmem:[%s354 + $0x34] sm:$0xf]
      %v8622 = vld [vmem:[%s354 + $0x38] sm:$0xf]
      %v8623 = vld [vmem:[%s354 + $0x3c] sm:$0xf]
      %v8624 = vld [vmem:[%s354 + $0x40] sm:$0xf]
      %v8625 = vld [vmem:[%s354 + $0x44] sm:$0xf]
      %v8626 = vld [vmem:[%s354 + $0x48] sm:$0xf]
      %v8627 = vld [vmem:[%s354 + $0x4c] sm:$0xf]
      %v8628 = vld [vmem:[%s354 + $0x50] sm:$0xf]
      %v8629 = vld [vmem:[%s354 + $0x54] sm:$0xf]
      %v8630 = vld [vmem:[%s354 + $0x58] sm:$0xf]
      %v8631 = vld [vmem:[%s354 + $0x5c] sm:$0xf]
      %v8632 = vld [vmem:[%s354 + $0x60] sm:$0xf]
      %v8633 = vld [vmem:[%s354 + $0x64] sm:$0xf]
      %v8634 = vld [vmem:[%s354 + $0x68] sm:$0xf]
      %v8635 = vld [vmem:[%s354 + $0x6c] sm:$0xf]
      %v8636 = vld [vmem:[%s354 + $0x70] sm:$0xf]
      %v8637 = vld [vmem:[%s354 + $0x74] sm:$0xf]
      %v8638 = vld [vmem:[%s354 + $0x78] sm:$0xf]
      %v8639 = vld [vmem:[%s354 + $0x7c] sm:$0xf]
      %v8640 = vld [vmem:[%s354 + $0x80] sm:$0xf]
      %v8641 = vld [vmem:[%s354 + $0x84] sm:$0xf]
      %v8642 = vld [vmem:[%s354 + $0x88] sm:$0xf]
      %v8643 = vld [vmem:[%s354 + $0x8c] sm:$0xf]
      %v8644 = vld [vmem:[%s354 + $0x90] sm:$0xf]
      %v8645 = vld [vmem:[%s354 + $0x94] sm:$0xf]
      %v8646 = vld [vmem:[%s354 + $0x98] sm:$0xf]
      %v8647 = vld [vmem:[%s354 + $0x9c] sm:$0xf]
      %v8648 = vld [vmem:[%s354 + $0xa0] sm:$0xf]
      %v8649 = vld [vmem:[%s354 + $0xa4] sm:$0xf]
      %v8650 = vld [vmem:[%s354 + $0xa8] sm:$0xf]
      %v8651 = vld [vmem:[%s354 + $0xac] sm:$0xf]
      %v8652 = vld [vmem:[%s354 + $0xb0] sm:$0xf]
      %v8653 = vld [vmem:[%s354 + $0xb4] sm:$0xf]
      %v8654 = vld [vmem:[%s354 + $0xb8] sm:$0xf]
      %v8655 = vld [vmem:[%s354 + $0xbc] sm:$0xf]
      %v8656 = vld [vmem:[%s354 + $0xc0] sm:$0xf]
      %v8657 = vld [vmem:[%s354 + $0xc4] sm:$0xf]
      %v8658 = vld [vmem:[%s354 + $0xc8] sm:$0xf]
      %v8659 = vld [vmem:[%s354 + $0xcc] sm:$0xf]
      %v8660 = vld [vmem:[%s354 + $0xd0] sm:$0xf]
      %v8661 = vld [vmem:[%s354 + $0xd4] sm:$0xf]
      %v8662 = vld [vmem:[%s354 + $0xd8] sm:$0xf]
      %v8663 = vld [vmem:[%s354 + $0xdc] sm:$0xf]
      %v8664 = vld [vmem:[%s354 + $0xe0] sm:$0xf]
      %v8665 = vld [vmem:[%s354 + $0xe4] sm:$0xf]
      %v8666 = vld [vmem:[%s354 + $0xe8] sm:$0xf]
      %v8667 = vld [vmem:[%s354 + $0xec] sm:$0xf]
      %v8668 = vld [vmem:[%s354 + $0xf0] sm:$0xf]
      %v8669 = vld [vmem:[%s354 + $0xf4] sm:$0xf]
      %v8670 = vld [vmem:[%s354 + $0xf8] sm:$0xf]
      %v8671 = vld [vmem:[%s354 + $0xfc] sm:$0xf]
      %v8672 = vld [vmem:[%s354 + $0x100] sm:$0xf]
      %v8673 = vld [vmem:[%s354 + $0x104] sm:$0xf]
      %v8674 = vld [vmem:[%s354 + $0x108] sm:$0xf]
      %v8675 = vld [vmem:[%s354 + $0x10c] sm:$0xf]
      %v8676 = vld [vmem:[%s354 + $0x110] sm:$0xf]
      %v8677 = vld [vmem:[%s354 + $0x114] sm:$0xf]
      %v8678 = vld [vmem:[%s354 + $0x118] sm:$0xf]
      %v8679 = vld [vmem:[%s354 + $0x11c] sm:$0xf]
      %v8680 = vld [vmem:[%s354 + $0x120] sm:$0xf]
      %v8681 = vld [vmem:[%s354 + $0x124] sm:$0xf]
      %v8682 = vld [vmem:[%s3] sm:$0x3]
      %v8747 = vunpack.c.l.b16 %v8618
      %v8748 = vunpack.c.l.b16 %v8619
      %v8749 = vunpack.c.l.b16 %v8620
      %v8750 = vunpack.c.l.b16 %v8621
      %v8751 = vunpack.c.l.b16 %v8622
      %v8752 = vunpack.c.l.b16 %v8623
      %v8753 = vunpack.c.l.b16 %v8624
      %v8754 = vunpack.c.l.b16 %v8625
      %v8755 = vunpack.c.l.b16 %v8626
      %v8756 = vunpack.c.l.b16 %v8627
      %v8757 = vunpack.c.l.b16 %v8628
      %v8758 = vunpack.c.l.b16 %v8629
      %v8759 = vunpack.c.l.b16 %v8630
      %v8760 = vunpack.c.l.b16 %v8631
      %v8761 = vunpack.c.l.b16 %v8632
      %v8762 = vunpack.c.l.b16 %v8633
      %v8763 = vunpack.c.l.b16 %v8634
      %v8764 = vunpack.c.l.b16 %v8635
      %v8765 = vunpack.c.l.b16 %v8636
      %v8766 = vunpack.c.l.b16 %v8637
      %v8767 = vunpack.c.l.b16 %v8638
      %v8768 = vunpack.c.l.b16 %v8639
      %v8769 = vunpack.c.l.b16 %v8640
      %v8770 = vunpack.c.l.b16 %v8641
      %v8771 = vunpack.c.l.b16 %v8642
      %v8772 = vunpack.c.l.b16 %v8643
      %v8773 = vunpack.c.l.b16 %v8644
      %v8774 = vunpack.c.l.b16 %v8645
      %v8775 = vunpack.c.l.b16 %v8646
      %v8776 = vunpack.c.l.b16 %v8647
      %v8777 = vunpack.c.l.b16 %v8648
      %v8778 = vunpack.c.l.b16 %v8649
      %v8779 = vunpack.c.l.b16 %v8650
      %v8780 = vunpack.c.l.b16 %v8651
      %v8781 = vunpack.c.l.b16 %v8652
      %v8782 = vunpack.c.l.b16 %v8653
      %v8783 = vunpack.c.l.b16 %v8654
      %v8784 = vunpack.c.l.b16 %v8655
      %v8785 = vunpack.c.l.b16 %v8656
      %v8786 = vunpack.c.l.b16 %v8657
      %v8787 = vunpack.c.l.b16 %v8658
      %v8788 = vunpack.c.l.b16 %v8659
      %v8789 = vunpack.c.l.b16 %v8660
      %v8790 = vunpack.c.l.b16 %v8661
      %v8791 = vunpack.c.l.b16 %v8662
      %v8792 = vunpack.c.l.b16 %v8663
      %v8793 = vunpack.c.l.b16 %v8664
      %v8794 = vunpack.c.l.b16 %v8665
      %v8795 = vunpack.c.l.b16 %v8666
      %v8796 = vunpack.c.l.b16 %v8667
      %v8797 = vunpack.c.l.b16 %v8668
      %v8798 = vunpack.c.l.b16 %v8669
      %v8799 = vunpack.c.l.b16 %v8670
      %v8800 = vunpack.c.l.b16 %v8671
      %v8801 = vunpack.c.l.b16 %v8672
      %v8802 = vunpack.c.l.b16 %v8673
      %v8803 = vunpack.c.l.b16 %v8674
      %v8804 = vunpack.c.l.b16 %v8675
      %v8805 = vunpack.c.l.b16 %v8676
      %v8806 = vunpack.c.l.b16 %v8677
      %v8807 = vunpack.c.l.b16 %v8678
      %v8808 = vunpack.c.l.b16 %v8679
      %v8809 = vunpack.c.l.b16 %v8680
      %v8810 = vunpack.c.l.b16 %v8681
      %v8811 = vpack.c.b16 %v8748, %v8747
      %v8812 = vpack.c.b16 %v8750, %v8749
      %v8813 = vpack.c.b16 %v8752, %v8751
      %v8814 = vpack.c.b16 %v8754, %v8753
      %v8815 = vpack.c.b16 %v8756, %v8755
      %v8816 = vpack.c.b16 %v8758, %v8757
      %v8817 = vpack.c.b16 %v8760, %v8759
      %v8818 = vpack.c.b16 %v8762, %v8761
      %v8819 = vpack.c.b16 %v8764, %v8763
      %v8820 = vpack.c.b16 %v8766, %v8765
      %v8821 = vpack.c.b16 %v8768, %v8767
      %v8822 = vpack.c.b16 %v8770, %v8769
      %v8823 = vpack.c.b16 %v8772, %v8771
      %v8824 = vpack.c.b16 %v8774, %v8773
      %v8825 = vpack.c.b16 %v8776, %v8775
      %v8826 = vpack.c.b16 %v8778, %v8777
      %v8827 = vpack.c.b16 %v8780, %v8779
      %v8828 = vpack.c.b16 %v8782, %v8781
      %v8829 = vpack.c.b16 %v8784, %v8783
      %v8830 = vpack.c.b16 %v8786, %v8785
      %v8831 = vpack.c.b16 %v8788, %v8787
      %v8832 = vpack.c.b16 %v8790, %v8789
      %v8833 = vpack.c.b16 %v8792, %v8791
      %v8834 = vpack.c.b16 %v8794, %v8793
      %v8835 = vpack.c.b16 %v8796, %v8795
      %v8836 = vpack.c.b16 %v8798, %v8797
      %v8837 = vpack.c.b16 %v8800, %v8799
      %v8838 = vpack.c.b16 %v8802, %v8801
      %v8839 = vpack.c.b16 %v8804, %v8803
      %v8840 = vpack.c.b16 %v8806, %v8805
      %v8841 = vpack.c.b16 %v8808, %v8807
      %v8842 = vpack.c.b16 %v8810, %v8809
      %v8844 = vsel %vm656, %v8811, 0
      %v8847 = vsel %vm656, %v8812, 0
      %v8850 = vsel %vm656, %v8813, 0
      %v8853 = vsel %vm656, %v8814, 0
      %v8856 = vsel %vm656, %v8815, 0
      %v8859 = vsel %vm656, %v8816, 0
      %v8862 = vsel %vm656, %v8817, 0
      %v8865 = vsel %vm656, %v8818, 0
      %v8868 = vsel %vm656, %v8819, 0
      %v8871 = vsel %vm656, %v8820, 0
      %v8874 = vsel %vm656, %v8821, 0
      %v8877 = vsel %vm656, %v8822, 0
      %v8880 = vsel %vm656, %v8823, 0
      %v8883 = vsel %vm656, %v8824, 0
      %v8886 = vsel %vm656, %v8825, 0
      %v8889 = vsel %vm656, %v8826, 0
      %v8892 = vsel %vm656, %v8827, 0
      %v8895 = vsel %vm656, %v8828, 0
      %v8898 = vsel %vm656, %v8829, 0
      %v8901 = vsel %vm656, %v8830, 0
      %v8904 = vsel %vm656, %v8831, 0
      %v8907 = vsel %vm656, %v8832, 0
      %v8910 = vsel %vm656, %v8833, 0
      %v8913 = vsel %vm656, %v8834, 0
      %v8916 = vsel %vm656, %v8835, 0
      %v8919 = vsel %vm656, %v8836, 0
      %v8922 = vsel %vm656, %v8837, 0
      %v8925 = vsel %vm656, %v8838, 0
      %v8928 = vsel %vm656, %v8839, 0
      %v8931 = vsel %vm656, %v8840, 0
      %v8934 = vsel %vm656, %v8841, 0
      %v8937 = vsel %vm656, %v8842, 0
      %v8940 = vsel %vm783, %v8682, 0
      %8942 = vmatprep.subr.bf16.mxu0 0
      %8943 = vmatpush1.bf16.msra.mxu0 %v8940
      %8944 = vmatprep.subr.bf16.mxu0 0
      %8945 = vmatpush1.bf16.msra.mxu0 0
      %8946 = vmatprep.subr.bf16.mxu0 0
      %8947 = vmatpush1.bf16.msra.mxu0 0
      %8948 = vmatprep.subr.bf16.mxu0 0
      %8949 = vmatpush1.bf16.msra.mxu0 0
      %8950 = vmatprep.subr.bf16.mxu0 0
      %8951 = vmatpush1.bf16.msra.mxu0 0
      %8952 = vmatprep.subr.bf16.mxu0 0
      %8953 = vmatpush1.bf16.msra.mxu0 0
      %8954 = vmatprep.subr.bf16.mxu0 0
      %8955 = vmatpush1.bf16.msra.mxu0 0
      %8956 = vmatprep.subr.bf16.mxu0 0
      %8957 = vmatpush1.bf16.msra.mxu0 0
      %8958 = vmatprep.subr.bf16.mxu0 0
      %8959 = vmatpush1.bf16.msra.mxu0 0
      %8960 = vmatprep.subr.bf16.mxu0 0
      %8961 = vmatpush1.bf16.msra.mxu0 0
      %8962 = vmatprep.subr.bf16.mxu0 0
      %8963 = vmatpush1.bf16.msra.mxu0 0
      %8964 = vmatprep.subr.bf16.mxu0 0
      %8965 = vmatpush1.bf16.msra.mxu0 0
      %8966 = vmatprep.subr.bf16.mxu0 0
      %8967 = vmatpush1.bf16.msra.mxu0 0
      %8968 = vmatprep.subr.bf16.mxu0 0
      %8969 = vmatpush1.bf16.msra.mxu0 0
      %8970 = vmatprep.subr.bf16.mxu0 0
      %8971 = vmatpush1.bf16.msra.mxu0 0
      %8972 = vmatprep.subr.bf16.mxu0 0
      %8973 = vmatpush1.bf16.msra.mxu0 0
      %8974 = vmatprep.mubr.bf16.mxu0 0
      %8975 = vmatmul.mubr.bf16.gmra.mrb[0].mxu0 %v8844
      %v8976 = vpop.f32.mrb[0].mxu0
      %v8977 = vadd.f32 0.0, %v8976
      %v8978 = vpop.f32.mrb[0].mxu0
      %v8979 = vpop.f32.mrb[0].mxu0
      %v8980 = vadd.f32 0.0, %v8979
      %v8981 = vpop.f32.mrb[0].mxu0
      %8982 = vmatprep.mubr.bf16.mxu0 0
      %8983 = vmatmul.mubr.bf16.gmra.mrb[0].mxu0 %v8847
      %v8984 = vpop.f32.mrb[0].mxu0
      %v8985 = vadd.f32 0.0, %v8984
      %v8986 = vpop.f32.mrb[0].mxu0
      %v8987 = vpop.f32.mrb[0].mxu0
      %v8988 = vadd.f32 0.0, %v8987
      %v8989 = vpop.f32.mrb[0].mxu0
      %8990 = vmatprep.mubr.bf16.mxu0 0
      %8991 = vmatmul.mubr.bf16.gmra.mrb[0].mxu0 %v8850
      %v8992 = vpop.f32.mrb[0].mxu0
      %v8993 = vadd.f32 0.0, %v8992
      %v8994 = vpop.f32.mrb[0].mxu0
      %v8995 = vpop.f32.mrb[0].mxu0
      %v8996 = vadd.f32 0.0, %v8995
      %v8997 = vpop.f32.mrb[0].mxu0
      %8998 = vmatprep.mubr.bf16.mxu0 0
      %8999 = vmatmul.mubr.bf16.gmra.mrb[0].mxu0 %v8853
      %v9000 = vpop.f32.mrb[0].mxu0
      %v9001 = vadd.f32 0.0, %v9000
      %v9002 = vpop.f32.mrb[0].mxu0
      %v9003 = vpop.f32.mrb[0].mxu0
      %v9004 = vadd.f32 0.0, %v9003
      %v9005 = vpop.f32.mrb[0].mxu0
      %9006 = vmatprep.mubr.bf16.mxu0 0
      %9007 = vmatmul.mubr.bf16.gmra.mrb[0].mxu0 %v8856
      %v9008 = vpop.f32.mrb[0].mxu0
      %v9009 = vadd.f32 0.0, %v9008
      %v9010 = vpop.f32.mrb[0].mxu0
      %v9011 = vpop.f32.mrb[0].mxu0
      %v9012 = vadd.f32 0.0, %v9011
      %v9013 = vpop.f32.mrb[0].mxu0
      %9014 = vmatprep.mubr.bf16.mxu0 0
      %9015 = vmatmul.mubr.bf16.gmra.mrb[0].mxu0 %v8859
      %v9016 = vpop.f32.mrb[0].mxu0
      %v9017 = vadd.f32 0.0, %v9016
      %v9018 = vpop.f32.mrb[0].mxu0
      %v9019 = vpop.f32.mrb[0].mxu0
      %v9020 = vadd.f32 0.0, %v9019
      %v9021 = vpop.f32.mrb[0].mxu0
      %9022 = vmatprep.mubr.bf16.mxu0 0
      %9023 = vmatmul.mubr.bf16.gmra.mrb[0].mxu0 %v8862
      %v9024 = vpop.f32.mrb[0].mxu0
      %v9025 = vadd.f32 0.0, %v9024
      %v9026 = vpop.f32.mrb[0].mxu0
      %v9027 = vpop.f32.mrb[0].mxu0
      %v9028 = vadd.f32 0.0, %v9027
      %v9029 = vpop.f32.mrb[0].mxu0
      %9030 = vmatprep.mubr.bf16.mxu0 0
      %9031 = vmatmul.mubr.bf16.gmra.mrb[0].mxu0 %v8865
      %v9032 = vpop.f32.mrb[0].mxu0
      %v9033 = vadd.f32 0.0, %v9032
      %v9034 = vpop.f32.mrb[0].mxu0
      %v9035 = vpop.f32.mrb[0].mxu0
      %v9036 = vadd.f32 0.0, %v9035
      %v9037 = vpop.f32.mrb[0].mxu0
      %9038 = vmatprep.mubr.bf16.mxu0 0
      %9039 = vmatmul.mubr.bf16.gmra.mrb[0].mxu0 %v8868
      %v9040 = vpop.f32.mrb[0].mxu0
      %v9041 = vadd.f32 0.0, %v9040
      %v9042 = vpop.f32.mrb[0].mxu0
      %v9043 = vpop.f32.mrb[0].mxu0
      %v9044 = vadd.f32 0.0, %v9043
      %v9045 = vpop.f32.mrb[0].mxu0
      %9046 = vmatprep.mubr.bf16.mxu0 0
      %9047 = vmatmul.mubr.bf16.gmra.mrb[0].mxu0 %v8871
      %v9048 = vpop.f32.mrb[0].mxu0
      %v9049 = vadd.f32 0.0, %v9048
      %v9050 = vpop.f32.mrb[0].mxu0
      %v9051 = vpop.f32.mrb[0].mxu0
      %v9052 = vadd.f32 0.0, %v9051
      %v9053 = vpop.f32.mrb[0].mxu0
      %9054 = vmatprep.mubr.bf16.mxu0 0
      %9055 = vmatmul.mubr.bf16.gmra.mrb[0].mxu0 %v8874
      %v9056 = vpop.f32.mrb[0].mxu0
      %v9057 = vadd.f32 0.0, %v9056
      %v9058 = vpop.f32.mrb[0].mxu0
      %v9059 = vpop.f32.mrb[0].mxu0
      %v9060 = vadd.f32 0.0, %v9059
      %v9061 = vpop.f32.mrb[0].mxu0
      %9062 = vmatprep.mubr.bf16.mxu0 0
      %9063 = vmatmul.mubr.bf16.gmra.mrb[0].mxu0 %v8877
      %v9064 = vpop.f32.mrb[0].mxu0
      %v9065 = vadd.f32 0.0, %v9064
      %v9066 = vpop.f32.mrb[0].mxu0
      %v9067 = vpop.f32.mrb[0].mxu0
      %v9068 = vadd.f32 0.0, %v9067
      %v9069 = vpop.f32.mrb[0].mxu0
      %9070 = vmatprep.mubr.bf16.mxu0 0
      %9071 = vmatmul.mubr.bf16.gmra.mrb[0].mxu0 %v8880
      %v9072 = vpop.f32.mrb[0].mxu0
      %v9073 = vadd.f32 0.0, %v9072
      %v9074 = vpop.f32.mrb[0].mxu0
      %v9075 = vpop.f32.mrb[0].mxu0
      %v9076 = vadd.f32 0.0, %v9075
      %v9077 = vpop.f32.mrb[0].mxu0
      %9078 = vmatprep.mubr.bf16.mxu0 0
      %9079 = vmatmul.mubr.bf16.gmra.mrb[0].mxu0 %v8883
      %v9080 = vpop.f32.mrb[0].mxu0
      %v9081 = vadd.f32 0.0, %v9080
      %v9082 = vpop.f32.mrb[0].mxu0
      %v9083 = vpop.f32.mrb[0].mxu0
      %v9084 = vadd.f32 0.0, %v9083
      %v9085 = vpop.f32.mrb[0].mxu0
      %9086 = vmatprep.mubr.bf16.mxu0 0
      %9087 = vmatmul.mubr.bf16.gmra.mrb[0].mxu0 %v8886
      %v9088 = vpop.f32.mrb[0].mxu0
      %v9089 = vadd.f32 0.0, %v9088
      %v9090 = vpop.f32.mrb[0].mxu0
      %v9091 = vpop.f32.mrb[0].mxu0
      %v9092 = vadd.f32 0.0, %v9091
      %v9093 = vpop.f32.mrb[0].mxu0
      %9094 = vmatprep.mubr.bf16.mxu0 0
      %9095 = vmatmul.mubr.bf16.gmra.mrb[0].mxu0 %v8889
      %v9096 = vpop.f32.mrb[0].mxu0
      %v9097 = vadd.f32 0.0, %v9096
      %v9098 = vpop.f32.mrb[0].mxu0
      %v9099 = vpop.f32.mrb[0].mxu0
      %v9100 = vadd.f32 0.0, %v9099
      %v9101 = vpop.f32.mrb[0].mxu0
      %9102 = vmatprep.mubr.bf16.mxu0 0
      %9103 = vmatmul.mubr.bf16.gmra.mrb[0].mxu0 %v8892
      %v9104 = vpop.f32.mrb[0].mxu0
      %v9105 = vadd.f32 0.0, %v9104
      %v9106 = vpop.f32.mrb[0].mxu0
      %v9107 = vpop.f32.mrb[0].mxu0
      %v9108 = vadd.f32 0.0, %v9107
      %v9109 = vpop.f32.mrb[0].mxu0
      %9110 = vmatprep.mubr.bf16.mxu0 0
      %9111 = vmatmul.mubr.bf16.gmra.mrb[0].mxu0 %v8895
      %v9112 = vpop.f32.mrb[0].mxu0
      %v9113 = vadd.f32 0.0, %v9112
      %v9114 = vpop.f32.mrb[0].mxu0
      %v9115 = vpop.f32.mrb[0].mxu0
      %v9116 = vadd.f32 0.0, %v9115
      %v9117 = vpop.f32.mrb[0].mxu0
      %9118 = vmatprep.mubr.bf16.mxu0 0
      %9119 = vmatmul.mubr.bf16.gmra.mrb[0].mxu0 %v8898
      %v9120 = vpop.f32.mrb[0].mxu0
      %v9121 = vadd.f32 0.0, %v9120
      %v9122 = vpop.f32.mrb[0].mxu0
      %v9123 = vpop.f32.mrb[0].mxu0
      %v9124 = vadd.f32 0.0, %v9123
      %v9125 = vpop.f32.mrb[0].mxu0
      %9126 = vmatprep.mubr.bf16.mxu0 0
      %9127 = vmatmul.mubr.bf16.gmra.mrb[0].mxu0 %v8901
      %v9128 = vpop.f32.mrb[0].mxu0
      %v9129 = vadd.f32 0.0, %v9128
      %v9130 = vpop.f32.mrb[0].mxu0
      %v9131 = vpop.f32.mrb[0].mxu0
      %v9132 = vadd.f32 0.0, %v9131
      %v9133 = vpop.f32.mrb[0].mxu0
      %9134 = vmatprep.mubr.bf16.mxu0 0
      %9135 = vmatmul.mubr.bf16.gmra.mrb[0].mxu0 %v8904
      %v9136 = vpop.f32.mrb[0].mxu0
      %v9137 = vadd.f32 0.0, %v9136
      %v9138 = vpop.f32.mrb[0].mxu0
      %v9139 = vpop.f32.mrb[0].mxu0
      %v9140 = vadd.f32 0.0, %v9139
      %v9141 = vpop.f32.mrb[0].mxu0
      %9142 = vmatprep.mubr.bf16.mxu0 0
      %9143 = vmatmul.mubr.bf16.gmra.mrb[0].mxu0 %v8907
      %v9144 = vpop.f32.mrb[0].mxu0
      %v9145 = vadd.f32 0.0, %v9144
      %v9146 = vpop.f32.mrb[0].mxu0
      %v9147 = vpop.f32.mrb[0].mxu0
      %v9148 = vadd.f32 0.0, %v9147
      %v9149 = vpop.f32.mrb[0].mxu0
      %9150 = vmatprep.mubr.bf16.mxu0 0
      %9151 = vmatmul.mubr.bf16.gmra.mrb[0].mxu0 %v8910
      %v9152 = vpop.f32.mrb[0].mxu0
      %v9153 = vadd.f32 0.0, %v9152
      %v9154 = vpop.f32.mrb[0].mxu0
      %v9155 = vpop.f32.mrb[0].mxu0
      %v9156 = vadd.f32 0.0, %v9155
      %v9157 = vpop.f32.mrb[0].mxu0
      %9158 = vmatprep.mubr.bf16.mxu0 0
      %9159 = vmatmul.mubr.bf16.gmra.mrb[0].mxu0 %v8913
      %v9160 = vpop.f32.mrb[0].mxu0
      %v9161 = vadd.f32 0.0, %v9160
      %v9162 = vpop.f32.mrb[0].mxu0
      %v9163 = vpop.f32.mrb[0].mxu0
      %v9164 = vadd.f32 0.0, %v9163
      %v9165 = vpop.f32.mrb[0].mxu0
      %9166 = vmatprep.mubr.bf16.mxu0 0
      %9167 = vmatmul.mubr.bf16.gmra.mrb[0].mxu0 %v8916
      %v9168 = vpop.f32.mrb[0].mxu0
      %v9169 = vadd.f32 0.0, %v9168
      %v9170 = vpop.f32.mrb[0].mxu0
      %v9171 = vpop.f32.mrb[0].mxu0
      %v9172 = vadd.f32 0.0, %v9171
      %v9173 = vpop.f32.mrb[0].mxu0
      %9174 = vmatprep.mubr.bf16.mxu0 0
      %9175 = vmatmul.mubr.bf16.gmra.mrb[0].mxu0 %v8919
      %v9176 = vpop.f32.mrb[0].mxu0
      %v9177 = vadd.f32 0.0, %v9176
      %v9178 = vpop.f32.mrb[0].mxu0
      %v9179 = vpop.f32.mrb[0].mxu0
      %v9180 = vadd.f32 0.0, %v9179
      %v9181 = vpop.f32.mrb[0].mxu0
      %9182 = vmatprep.mubr.bf16.mxu0 0
      %9183 = vmatmul.mubr.bf16.gmra.mrb[0].mxu0 %v8922
      %v9184 = vpop.f32.mrb[0].mxu0
      %v9185 = vadd.f32 0.0, %v9184
      %v9186 = vpop.f32.mrb[0].mxu0
      %v9187 = vpop.f32.mrb[0].mxu0
      %v9188 = vadd.f32 0.0, %v9187
      %v9189 = vpop.f32.mrb[0].mxu0
      %9190 = vmatprep.mubr.bf16.mxu0 0
      %9191 = vmatmul.mubr.bf16.gmra.mrb[0].mxu0 %v8925
      %v9192 = vpop.f32.mrb[0].mxu0
      %v9193 = vadd.f32 0.0, %v9192
      %v9194 = vpop.f32.mrb[0].mxu0
      %v9195 = vpop.f32.mrb[0].mxu0
      %v9196 = vadd.f32 0.0, %v9195
      %v9197 = vpop.f32.mrb[0].mxu0
      %9198 = vmatprep.mubr.bf16.mxu0 0
      %9199 = vmatmul.mubr.bf16.gmra.mrb[0].mxu0 %v8928
      %v9200 = vpop.f32.mrb[0].mxu0
      %v9201 = vadd.f32 0.0, %v9200
      %v9202 = vpop.f32.mrb[0].mxu0
      %v9203 = vpop.f32.mrb[0].mxu0
      %v9204 = vadd.f32 0.0, %v9203
      %v9205 = vpop.f32.mrb[0].mxu0
      %9206 = vmatprep.mubr.bf16.mxu0 0
      %9207 = vmatmul.mubr.bf16.gmra.mrb[0].mxu0 %v8931
      %v9208 = vpop.f32.mrb[0].mxu0
      %v9209 = vadd.f32 0.0, %v9208
      %v9210 = vpop.f32.mrb[0].mxu0
      %v9211 = vpop.f32.mrb[0].mxu0
      %v9212 = vadd.f32 0.0, %v9211
      %v9213 = vpop.f32.mrb[0].mxu0
      %9214 = vmatprep.mubr.bf16.mxu0 0
      %9215 = vmatmul.mubr.bf16.gmra.mrb[0].mxu0 %v8934
      %v9216 = vpop.f32.mrb[0].mxu0
      %v9217 = vadd.f32 0.0, %v9216
      %v9218 = vpop.f32.mrb[0].mxu0
      %v9219 = vpop.f32.mrb[0].mxu0
      %v9220 = vadd.f32 0.0, %v9219
      %v9221 = vpop.f32.mrb[0].mxu0
      %9222 = vmatprep.mubr.bf16.mxu0 0
      %9223 = vmatmul.mubr.bf16.gmra.mrb[0].mxu0 %v8937
      %v9224 = vpop.f32.mrb[0].mxu0
      %v9225 = vadd.f32 0.0, %v9224
      %v9226 = vpop.f32.mrb[0].mxu0
      %v9227 = vpop.f32.mrb[0].mxu0
      %v9228 = vadd.f32 0.0, %v9227
      %v9229 = vpop.f32.mrb[0].mxu0
      %9230 = vdwg.mxu0
      %v9231 = vld [vmem:[%s8] sm:$0x1]
      %v9233 = vlaneseq
      %v9234 = vshrl.u32 %v9233, 7
      %v9235 = vsub.s32 0, %v9234
      %v9236 = vrot.slane %v9231, %v9235
      %v9238 = vmul.f32 %v8977, %v9236
      %v9239 = vmul.f32 %v8980, %v9236
      %v9240 = vmul.f32 %v8985, %v9236
      %v9241 = vmul.f32 %v8988, %v9236
      %v9242 = vmul.f32 %v8993, %v9236
      %v9243 = vmul.f32 %v8996, %v9236
      %v9244 = vmul.f32 %v9001, %v9236
      %v9245 = vmul.f32 %v9004, %v9236
      %v9246 = vmul.f32 %v9009, %v9236
      %v9247 = vmul.f32 %v9012, %v9236
      %v9248 = vmul.f32 %v9017, %v9236
      %v9249 = vmul.f32 %v9020, %v9236
      %v9250 = vmul.f32 %v9025, %v9236
      %v9251 = vmul.f32 %v9028, %v9236
      %v9252 = vmul.f32 %v9033, %v9236
      %v9253 = vmul.f32 %v9036, %v9236
      %v9254 = vmul.f32 %v9041, %v9236
      %v9255 = vmul.f32 %v9044, %v9236
      %v9256 = vmul.f32 %v9049, %v9236
      %v9257 = vmul.f32 %v9052, %v9236
      %v9258 = vmul.f32 %v9057, %v9236
      %v9259 = vmul.f32 %v9060, %v9236
      %v9260 = vmul.f32 %v9065, %v9236
      %v9261 = vmul.f32 %v9068, %v9236
      %v9262 = vmul.f32 %v9073, %v9236
      %v9263 = vmul.f32 %v9076, %v9236
      %v9264 = vmul.f32 %v9081, %v9236
      %v9265 = vmul.f32 %v9084, %v9236
      %v9266 = vmul.f32 %v9089, %v9236
      %v9267 = vmul.f32 %v9092, %v9236
      %v9268 = vmul.f32 %v9097, %v9236
      %v9269 = vmul.f32 %v9100, %v9236
      %v9270 = vmul.f32 %v9105, %v9236
      %v9271 = vmul.f32 %v9108, %v9236
      %v9272 = vmul.f32 %v9113, %v9236
      %v9273 = vmul.f32 %v9116, %v9236
      %v9274 = vmul.f32 %v9121, %v9236
      %v9275 = vmul.f32 %v9124, %v9236
      %v9276 = vmul.f32 %v9129, %v9236
      %v9277 = vmul.f32 %v9132, %v9236
      %v9278 = vmul.f32 %v9137, %v9236
      %v9279 = vmul.f32 %v9140, %v9236
      %v9280 = vmul.f32 %v9145, %v9236
      %v9281 = vmul.f32 %v9148, %v9236
      %v9282 = vmul.f32 %v9153, %v9236
      %v9283 = vmul.f32 %v9156, %v9236
      %v9284 = vmul.f32 %v9161, %v9236
      %v9285 = vmul.f32 %v9164, %v9236
      %v9286 = vmul.f32 %v9169, %v9236
      %v9287 = vmul.f32 %v9172, %v9236
      %v9288 = vmul.f32 %v9177, %v9236
      %v9289 = vmul.f32 %v9180, %v9236
      %v9290 = vmul.f32 %v9185, %v9236
      %v9291 = vmul.f32 %v9188, %v9236
      %v9292 = vmul.f32 %v9193, %v9236
      %v9293 = vmul.f32 %v9196, %v9236
      %v9294 = vmul.f32 %v9201, %v9236
      %v9295 = vmul.f32 %v9204, %v9236
      %v9296 = vmul.f32 %v9209, %v9236
      %v9297 = vmul.f32 %v9212, %v9236
      %v9298 = vmul.f32 %v9217, %v9236
      %v9299 = vmul.f32 %v9220, %v9236
      %v9300 = vmul.f32 %v9225, %v9236
      %v9301 = vmul.f32 %v9228, %v9236
      %v9302 = vld [vmem:[%s9] sm:$0x1]
      %v9304 = vlaneseq
      %v9305 = vshrl.u32 %v9304, 7
      %v9306 = vsub.s32 0, %v9305
      %v9307 = vrot.slane %v9302, %v9306
      %v9309 = vadd.f32 %v9238, %v9307
      %v9310 = vadd.f32 %v9239, %v9307
      %v9311 = vadd.f32 %v9240, %v9307
      %v9312 = vadd.f32 %v9241, %v9307
      %v9313 = vadd.f32 %v9242, %v9307
      %v9314 = vadd.f32 %v9243, %v9307
      %v9315 = vadd.f32 %v9244, %v9307
      %v9316 = vadd.f32 %v9245, %v9307
      %v9317 = vadd.f32 %v9246, %v9307
      %v9318 = vadd.f32 %v9247, %v9307
      %v9319 = vadd.f32 %v9248, %v9307
      %v9320 = vadd.f32 %v9249, %v9307
      %v9321 = vadd.f32 %v9250, %v9307
      %v9322 = vadd.f32 %v9251, %v9307
      %v9323 = vadd.f32 %v9252, %v9307
      %v9324 = vadd.f32 %v9253, %v9307
      %v9325 = vadd.f32 %v9254, %v9307
      %v9326 = vadd.f32 %v9255, %v9307
      %v9327 = vadd.f32 %v9256, %v9307
      %v9328 = vadd.f32 %v9257, %v9307
      %v9329 = vadd.f32 %v9258, %v9307
      %v9330 = vadd.f32 %v9259, %v9307
      %v9331 = vadd.f32 %v9260, %v9307
      %v9332 = vadd.f32 %v9261, %v9307
      %v9333 = vadd.f32 %v9262, %v9307
      %v9334 = vadd.f32 %v9263, %v9307
      %v9335 = vadd.f32 %v9264, %v9307
      %v9336 = vadd.f32 %v9265, %v9307
      %v9337 = vadd.f32 %v9266, %v9307
      %v9338 = vadd.f32 %v9267, %v9307
      %v9339 = vadd.f32 %v9268, %v9307
      %v9340 = vadd.f32 %v9269, %v9307
      %v9341 = vadd.f32 %v9270, %v9307
      %v9342 = vadd.f32 %v9271, %v9307
      %v9343 = vadd.f32 %v9272, %v9307
      %v9344 = vadd.f32 %v9273, %v9307
      %v9345 = vadd.f32 %v9274, %v9307
      %v9346 = vadd.f32 %v9275, %v9307
      %v9347 = vadd.f32 %v9276, %v9307
      %v9348 = vadd.f32 %v9277, %v9307
      %v9349 = vadd.f32 %v9278, %v9307
      %v9350 = vadd.f32 %v9279, %v9307
      %v9351 = vadd.f32 %v9280, %v9307
      %v9352 = vadd.f32 %v9281, %v9307
      %v9353 = vadd.f32 %v9282, %v9307
      %v9354 = vadd.f32 %v9283, %v9307
      %v9355 = vadd.f32 %v9284, %v9307
      %v9356 = vadd.f32 %v9285, %v9307
      %v9357 = vadd.f32 %v9286, %v9307
      %v9358 = vadd.f32 %v9287, %v9307
      %v9359 = vadd.f32 %v9288, %v9307
      %v9360 = vadd.f32 %v9289, %v9307
      %v9361 = vadd.f32 %v9290, %v9307
      %v9362 = vadd.f32 %v9291, %v9307
      %v9363 = vadd.f32 %v9292, %v9307
      %v9364 = vadd.f32 %v9293, %v9307
      %v9365 = vadd.f32 %v9294, %v9307
      %v9366 = vadd.f32 %v9295, %v9307
      %v9367 = vadd.f32 %v9296, %v9307
      %v9368 = vadd.f32 %v9297, %v9307
      %v9369 = vadd.f32 %v9298, %v9307
      %v9370 = vadd.f32 %v9299, %v9307
      %v9371 = vadd.f32 %v9300, %v9307
      %v9372 = vadd.f32 %v9301, %v9307
      %v9373 = vadd.f32 %v8554, %v9309
      %v9374 = vadd.f32 %v8555, %v9310
      %v9375 = vadd.f32 %v8556, %v9311
      %v9376 = vadd.f32 %v8557, %v9312
      %v9377 = vadd.f32 %v8558, %v9313
      %v9378 = vadd.f32 %v8559, %v9314
      %v9379 = vadd.f32 %v8560, %v9315
      %v9380 = vadd.f32 %v8561, %v9316
      %v9381 = vadd.f32 %v8562, %v9317
      %v9382 = vadd.f32 %v8563, %v9318
      %v9383 = vadd.f32 %v8564, %v9319
      %v9384 = vadd.f32 %v8565, %v9320
      %v9385 = vadd.f32 %v8566, %v9321
      %v9386 = vadd.f32 %v8567, %v9322
      %v9387 = vadd.f32 %v8568, %v9323
      %v9388 = vadd.f32 %v8569, %v9324
      %v9389 = vadd.f32 %v8570, %v9325
      %v9390 = vadd.f32 %v8571, %v9326
      %v9391 = vadd.f32 %v8572, %v9327
      %v9392 = vadd.f32 %v8573, %v9328
      %v9393 = vadd.f32 %v8574, %v9329
      %v9394 = vadd.f32 %v8575, %v9330
      %v9395 = vadd.f32 %v8576, %v9331
      %v9396 = vadd.f32 %v8577, %v9332
      %v9397 = vadd.f32 %v8578, %v9333
      %v9398 = vadd.f32 %v8579, %v9334
      %v9399 = vadd.f32 %v8580, %v9335
      %v9400 = vadd.f32 %v8581, %v9336
      %v9401 = vadd.f32 %v8582, %v9337
      %v9402 = vadd.f32 %v8583, %v9338
      %v9403 = vadd.f32 %v8584, %v9339
      %v9404 = vadd.f32 %v8585, %v9340
      %v9405 = vadd.f32 %v8586, %v9341
      %v9406 = vadd.f32 %v8587, %v9342
      %v9407 = vadd.f32 %v8588, %v9343
      %v9408 = vadd.f32 %v8589, %v9344
      %v9409 = vadd.f32 %v8590, %v9345
      %v9410 = vadd.f32 %v8591, %v9346
      %v9411 = vadd.f32 %v8592, %v9347
      %v9412 = vadd.f32 %v8593, %v9348
      %v9413 = vadd.f32 %v8594, %v9349
      %v9414 = vadd.f32 %v8595, %v9350
      %v9415 = vadd.f32 %v8596, %v9351
      %v9416 = vadd.f32 %v8597, %v9352
      %v9417 = vadd.f32 %v8598, %v9353
      %v9418 = vadd.f32 %v8599, %v9354
      %v9419 = vadd.f32 %v8600, %v9355
      %v9420 = vadd.f32 %v8601, %v9356
      %v9421 = vadd.f32 %v8602, %v9357
      %v9422 = vadd.f32 %v8603, %v9358
      %v9423 = vadd.f32 %v8604, %v9359
      %v9424 = vadd.f32 %v8605, %v9360
      %v9425 = vadd.f32 %v8606, %v9361
      %v9426 = vadd.f32 %v8607, %v9362
      %v9427 = vadd.f32 %v8608, %v9363
      %v9428 = vadd.f32 %v8609, %v9364
      %v9429 = vadd.f32 %v8610, %v9365
      %v9430 = vadd.f32 %v8611, %v9366
      %v9431 = vadd.f32 %v8612, %v9367
      %v9432 = vadd.f32 %v8613, %v9368
      %v9433 = vadd.f32 %v8614, %v9369
      %v9434 = vadd.f32 %v8615, %v9370
      %v9435 = vadd.f32 %v8616, %v9371
      %v9436 = vadd.f32 %v8617, %v9372
      %v9437 = vmax.f32 %v9373, 0.0
      %v9438 = vmax.f32 %v9374, 0.0
      %v9439 = vmax.f32 %v9375, 0.0
      %v9440 = vmax.f32 %v9376, 0.0
      %v9441 = vmax.f32 %v9377, 0.0
      %v9442 = vmax.f32 %v9378, 0.0
      %v9443 = vmax.f32 %v9379, 0.0
      %v9444 = vmax.f32 %v9380, 0.0
      %v9445 = vmax.f32 %v9381, 0.0
      %v9446 = vmax.f32 %v9382, 0.0
      %v9447 = vmax.f32 %v9383, 0.0
      %v9448 = vmax.f32 %v9384, 0.0
      %v9449 = vmax.f32 %v9385, 0.0
      %v9450 = vmax.f32 %v9386, 0.0
      %v9451 = vmax.f32 %v9387, 0.0
      %v9452 = vmax.f32 %v9388, 0.0
      %v9453 = vmax.f32 %v9389, 0.0
      %v9454 = vmax.f32 %v9390, 0.0
      %v9455 = vmax.f32 %v9391, 0.0
      %v9456 = vmax.f32 %v9392, 0.0
      %v9457 = vmax.f32 %v9393, 0.0
      %v9458 = vmax.f32 %v9394, 0.0
      %v9459 = vmax.f32 %v9395, 0.0
      %v9460 = vmax.f32 %v9396, 0.0
      %v9461 = vmax.f32 %v9397, 0.0
      %v9462 = vmax.f32 %v9398, 0.0
      %v9463 = vmax.f32 %v9399, 0.0
      %v9464 = vmax.f32 %v9400, 0.0
      %v9465 = vmax.f32 %v9401, 0.0
      %v9466 = vmax.f32 %v9402, 0.0
      %v9467 = vmax.f32 %v9403, 0.0
      %v9468 = vmax.f32 %v9404, 0.0
      %v9469 = vmax.f32 %v9405, 0.0
      %v9470 = vmax.f32 %v9406, 0.0
      %v9471 = vmax.f32 %v9407, 0.0
      %v9472 = vmax.f32 %v9408, 0.0
      %v9473 = vmax.f32 %v9409, 0.0
      %v9474 = vmax.f32 %v9410, 0.0
      %v9475 = vmax.f32 %v9411, 0.0
      %v9476 = vmax.f32 %v9412, 0.0
      %v9477 = vmax.f32 %v9413, 0.0
      %v9478 = vmax.f32 %v9414, 0.0
      %v9479 = vmax.f32 %v9415, 0.0
      %v9480 = vmax.f32 %v9416, 0.0
      %v9481 = vmax.f32 %v9417, 0.0
      %v9482 = vmax.f32 %v9418, 0.0
      %v9483 = vmax.f32 %v9419, 0.0
      %v9484 = vmax.f32 %v9420, 0.0
      %v9485 = vmax.f32 %v9421, 0.0
      %v9486 = vmax.f32 %v9422, 0.0
      %v9487 = vmax.f32 %v9423, 0.0
      %v9488 = vmax.f32 %v9424, 0.0
      %v9489 = vmax.f32 %v9425, 0.0
      %v9490 = vmax.f32 %v9426, 0.0
      %v9491 = vmax.f32 %v9427, 0.0
      %v9492 = vmax.f32 %v9428, 0.0
      %v9493 = vmax.f32 %v9429, 0.0
      %v9494 = vmax.f32 %v9430, 0.0
      %v9495 = vmax.f32 %v9431, 0.0
      %v9496 = vmax.f32 %v9432, 0.0
      %v9497 = vmax.f32 %v9433, 0.0
      %v9498 = vmax.f32 %v9434, 0.0
      %v9499 = vmax.f32 %v9435, 0.0
      %v9500 = vmax.f32 %v9436, 0.0
      %9501 = vst.msk [vmem:[%s359] sm:$0xff] %vm5406, %v9437
      %9502 = vst.msk [vmem:[%s359 + $0x8] sm:$0xff] %vm5406, %v9438
      %9503 = vst.msk [vmem:[%s359 + $0x10] sm:$0xff] %vm5406, %v9439
      %9504 = vst.msk [vmem:[%s359 + $0x18] sm:$0xff] %vm5406, %v9440
      %9505 = vst.msk [vmem:[%s359 + $0x20] sm:$0xff] %vm5406, %v9441
      %9506 = vst.msk [vmem:[%s359 + $0x28] sm:$0xff] %vm5406, %v9442
      %9507 = vst.msk [vmem:[%s359 + $0x30] sm:$0xff] %vm5406, %v9443
      %9508 = vst.msk [vmem:[%s359 + $0x38] sm:$0xff] %vm5406, %v9444
      %9509 = vst.msk [vmem:[%s359 + $0x40] sm:$0xff] %vm5406, %v9445
      %9510 = vst.msk [vmem:[%s359 + $0x48] sm:$0xff] %vm5406, %v9446
      %9511 = vst.msk [vmem:[%s359 + $0x50] sm:$0xff] %vm5406, %v9447
      %9512 = vst.msk [vmem:[%s359 + $0x58] sm:$0xff] %vm5406, %v9448
      %9513 = vst.msk [vmem:[%s359 + $0x60] sm:$0xff] %vm5406, %v9449
      %9514 = vst.msk [vmem:[%s359 + $0x68] sm:$0xff] %vm5406, %v9450
      %9515 = vst.msk [vmem:[%s359 + $0x70] sm:$0xff] %vm5406, %v9451
      %9516 = vst.msk [vmem:[%s359 + $0x78] sm:$0xff] %vm5406, %v9452
      %9517 = vst.msk [vmem:[%s359 + $0x80] sm:$0xff] %vm5406, %v9453
      %9518 = vst.msk [vmem:[%s359 + $0x88] sm:$0xff] %vm5406, %v9454
      %9519 = vst.msk [vmem:[%s359 + $0x90] sm:$0xff] %vm5406, %v9455
      %9520 = vst.msk [vmem:[%s359 + $0x98] sm:$0xff] %vm5406, %v9456
      %9521 = vst.msk [vmem:[%s359 + $0xa0] sm:$0xff] %vm5406, %v9457
      %9522 = vst.msk [vmem:[%s359 + $0xa8] sm:$0xff] %vm5406, %v9458
      %9523 = vst.msk [vmem:[%s359 + $0xb0] sm:$0xff] %vm5406, %v9459
      %9524 = vst.msk [vmem:[%s359 + $0xb8] sm:$0xff] %vm5406, %v9460
      %9525 = vst.msk [vmem:[%s359 + $0xc0] sm:$0xff] %vm5406, %v9461
      %9526 = vst.msk [vmem:[%s359 + $0xc8] sm:$0xff] %vm5406, %v9462
      %9527 = vst.msk [vmem:[%s359 + $0xd0] sm:$0xff] %vm5406, %v9463
      %9528 = vst.msk [vmem:[%s359 + $0xd8] sm:$0xff] %vm5406, %v9464
      %9529 = vst.msk [vmem:[%s359 + $0xe0] sm:$0xff] %vm5406, %v9465
      %9530 = vst.msk [vmem:[%s359 + $0xe8] sm:$0xff] %vm5406, %v9466
      %9531 = vst.msk [vmem:[%s359 + $0xf0] sm:$0xff] %vm5406, %v9467
      %9532 = vst.msk [vmem:[%s359 + $0xf8] sm:$0xff] %vm5406, %v9468
      %9533 = vst.msk [vmem:[%s359 + $0x100] sm:$0xff] %vm5406, %v9469
      %9534 = vst.msk [vmem:[%s359 + $0x108] sm:$0xff] %vm5406, %v9470
      %9535 = vst.msk [vmem:[%s359 + $0x110] sm:$0xff] %vm5406, %v9471
      %9536 = vst.msk [vmem:[%s359 + $0x118] sm:$0xff] %vm5406, %v9472
      %9537 = vst.msk [vmem:[%s359 + $0x120] sm:$0xff] %vm5406, %v9473
      %9538 = vst.msk [vmem:[%s359 + $0x128] sm:$0xff] %vm5406, %v9474
      %9539 = vst.msk [vmem:[%s359 + $0x130] sm:$0xff] %vm5406, %v9475
      %9540 = vst.msk [vmem:[%s359 + $0x138] sm:$0xff] %vm5406, %v9476
      %9541 = vst.msk [vmem:[%s359 + $0x140] sm:$0xff] %vm5406, %v9477
      %9542 = vst.msk [vmem:[%s359 + $0x148] sm:$0xff] %vm5406, %v9478
      %9543 = vst.msk [vmem:[%s359 + $0x150] sm:$0xff] %vm5406, %v9479
      %9544 = vst.msk [vmem:[%s359 + $0x158] sm:$0xff] %vm5406, %v9480
      %9545 = vst.msk [vmem:[%s359 + $0x160] sm:$0xff] %vm5406, %v9481
      %9546 = vst.msk [vmem:[%s359 + $0x168] sm:$0xff] %vm5406, %v9482
      %9547 = vst.msk [vmem:[%s359 + $0x170] sm:$0xff] %vm5406, %v9483
      %9548 = vst.msk [vmem:[%s359 + $0x178] sm:$0xff] %vm5406, %v9484
      %9549 = vst.msk [vmem:[%s359 + $0x180] sm:$0xff] %vm5406, %v9485
      %9550 = vst.msk [vmem:[%s359 + $0x188] sm:$0xff] %vm5406, %v9486
      %9551 = vst.msk [vmem:[%s359 + $0x190] sm:$0xff] %vm5406, %v9487
      %9552 = vst.msk [vmem:[%s359 + $0x198] sm:$0xff] %vm5406, %v9488
      %9553 = vst.msk [vmem:[%s359 + $0x1a0] sm:$0xff] %vm5406, %v9489
      %9554 = vst.msk [vmem:[%s359 + $0x1a8] sm:$0xff] %vm5406, %v9490
      %9555 = vst.msk [vmem:[%s359 + $0x1b0] sm:$0xff] %vm5406, %v9491
      %9556 = vst.msk [vmem:[%s359 + $0x1b8] sm:$0xff] %vm5406, %v9492
      %9557 = vst.msk [vmem:[%s359 + $0x1c0] sm:$0xff] %vm5406, %v9493
      %9558 = vst.msk [vmem:[%s359 + $0x1c8] sm:$0xff] %vm5406, %v9494
      %9559 = vst.msk [vmem:[%s359 + $0x1d0] sm:$0xff] %vm5406, %v9495
      %9560 = vst.msk [vmem:[%s359 + $0x1d8] sm:$0xff] %vm5406, %v9496
      %9561 = vst.msk [vmem:[%s359 + $0x1e0] sm:$0xff] %vm5406, %v9497
      %9562 = vst.msk [vmem:[%s359 + $0x1e8] sm:$0xff] %vm5406, %v9498
      %9563 = vst.msk [vmem:[%s359 + $0x1f0] sm:$0xff] %vm5406, %v9499
      %9564 = vst.msk [vmem:[%s359 + $0x1f8] sm:$0xff] %vm5406, %v9500
      %p9565 = scmp.lt.s32.totalorder %s21, 1
      %s9566 = scalar_select %p9565, %s21, 1
      %s9567 = smul.addr %s9566, 64
      %s9568 = smul.addr %s9567, 8
      %s9569 = scalar_lea.vmem %s10, %s9568
      // Predicated region
      $region61: #{basic_block_forward.1} parent=59 // pred_check
        %p9570 = pneg %p254
      $region62: #{basic_block_forward.1} parent=59 // pred_check_branch
        %9572 = sbr.rel (%p9570) target = $region64
      $region63: #{basic_block_forward.1} parent=59 // pred_region
        _
      $region64: #{basic_block_forward.1} parent=59 // pred_fallthru
        _
    $region60: #{basic_block_forward.1} parent=5 // pred_fallthru
      _
    %p9573 = scmp.le.s32.totalorder 2, %s16
    // Predicated region
    $region65: #{basic_block_forward.1} parent=5 // pred_check
      %p9574 = pneg %p9573
    $region66: #{basic_block_forward.1} parent=5 // pred_check_branch
      %9576 = sbr.rel (%p9574) target = $region68
    $region67: #{basic_block_forward.1} parent=5 // pred_region
      %s9577 = ssub.s32 %s16, 2
      // Predicated region
      $region69: #{basic_block_forward.1} parent=67 // pred_check
        %p9578 = pneg %p260
      $region70: #{basic_block_forward.1} parent=67 // pred_check_branch
        %9580 = sbr.rel (%p9578) target = $region72
      $region71: #{basic_block_forward.1} parent=67 // pred_region
        %p9581 = scmp.lt.s32.totalorder %s22, 1
        %s9582 = scalar_select %p9581, %s22, 1
        %s9583 = smul.addr %s9582, 64
        %s9584 = smul.addr %s9583, 8
        %s9585 = scalar_lea.vmem %s10, %s9584
      $region72: #{basic_block_forward.1} parent=67 // pred_fallthru
        _
    $region68: #{basic_block_forward.1} parent=5 // pred_fallthru
      _
  $region6: #{basic_block_forward.1} parent=0 // loop_footer
    %s20 = sadd.s32 1, %s16
  $region7: #{basic_block_forward.1} parent=0 // loop_footer_branch
    %15 = sbr.rel target = $region3
  $region8: #{basic_block_forward.1} parent=0 // loop_exit
    _

</llo_original>
